<compile_context>
chip_gen: v6e
topology: v6e:2x2x1
jax: 0.10.0
libtpu: 0.0.40
codegen_flags: <defaults>
</compile_context>

<pallas_src>
import functools
import math

import jax
import jax.numpy as jnp
from jax import lax
from jax.experimental import pallas as pl
from jax.experimental.pallas import tpu as pltpu

EPS = 1e-6          # python float -> never captured as a traced constant
NEG_INF = -1e9      # python float


# ----------------------------- in-kernel helpers ----------------------------

def _layer_norm(x, alpha, beta):
    # alpha*(x-mean)/(std+eps)+beta, torch-style unbiased std (ddof=1). Exact divide.
    d = x.shape[-1]
    mean = jnp.mean(x, axis=-1, keepdims=True)
    c = x - mean
    var = jnp.sum(c * c, axis=-1, keepdims=True) * (1.0 / (d - 1))
    inv = 1.0 / (jnp.sqrt(var) + EPS)
    return alpha * c * inv + beta


def _attention_heads(q, k, v, masked, attn_ref, num_heads):
    # q: (Sq, D) PRE-SCALED, k/v: (Sk, D) laid out as H heads of Dh contiguous columns.
    # masked: (Sq, Sk) bool (True => masked out).
    # Writes concat-of-heads attention output into attn_ref (Sq, D) f32 VMEM scratch;
    # caller does ONE (Sq,D)x(D,D) matmul with Wo afterwards.
    d = q.shape[-1]
    dh = d // num_heads
    for h in range(num_heads):
        lo, hi = h * dh, (h + 1) * dh
        qh = q[:, lo:hi].astype(jnp.bfloat16)
        kh = k[:, lo:hi].astype(jnp.bfloat16)
        vh = v[:, lo:hi].astype(jnp.bfloat16)
        # scores = qh @ kh^T without materializing a transpose.
        s = lax.dot_general(qh, kh, (((1,), (1,)), ((), ())),
                            preferred_element_type=jnp.float32)
        s = jnp.where(masked, NEG_INF, s)              # masked_fill(mask==0, -1e9)
        s = s - jnp.max(s, axis=-1, keepdims=True)
        p = jnp.exp(s)
        p = p * pl.reciprocal(jnp.sum(p, axis=-1, keepdims=True), approx=True)
        attn_ref[:, lo:hi] = jnp.dot(p.astype(jnp.bfloat16), vh,
                                     preferred_element_type=jnp.float32)


# ----------------------------- Pallas kernels ------------------------------

def _self_attn_kernel(x_ref, a_ref, b_ref, wqkv_ref, bqkv_ref, wo_ref, bo_ref,
                      m_ref, o_ref, attn_ref, *, num_heads, scale):
    # Fused: out = x + Wo(attention(LN(x) @ Wqkv)) + bo   (one batch per grid step)
    x = x_ref[...].astype(jnp.float32)                         # (Sq, D)
    d = x.shape[-1]
    h = _layer_norm(x, a_ref[...], b_ref[...])
    qkv = jnp.dot(h.astype(jnp.bfloat16), wqkv_ref[...],
                  preferred_element_type=jnp.float32) + bqkv_ref[...]
    q, k, v = qkv[:, :d], qkv[:, d:2 * d], qkv[:, 2 * d:]
    q = q * scale                                              # pre-scale once
    masked = m_ref[...] == 0.0
    _attention_heads(q, k, v, masked, attn_ref, num_heads)
    proj = jnp.dot(attn_ref[...].astype(jnp.bfloat16), wo_ref[...],
                   preferred_element_type=jnp.float32)
    o_ref[...] = (x + proj + bo_ref[...]).astype(o_ref.dtype)


def _cross_attn_kernel(x_ref, enc_ref, a_ref, b_ref, wq_ref, bq_ref,
                       wkv_ref, bkv_ref, wo_ref, bo_ref, m_ref, o_ref, attn_ref,
                       *, num_heads, scale):
    # Fused: out = x + Wo(attention(LN(x)@Wq, enc@Wk, enc@Wv)) + bo
    x = x_ref[...].astype(jnp.float32)                         # (Sq, D)
    e = enc_ref[...].astype(jnp.float32)                       # (Sk, D)
    d = x.shape[-1]
    hq = _layer_norm(x, a_ref[...], b_ref[...])
    q = jnp.dot(hq.astype(jnp.bfloat16), wq_ref[...],
                preferred_element_type=jnp.float32) + bq_ref[...]
    q = q * scale
    kv = jnp.dot(e.astype(jnp.bfloat16), wkv_ref[...],
                 preferred_element_type=jnp.float32) + bkv_ref[...]
    k, v = kv[:, :d], kv[:, d:]
    masked = m_ref[...] == 0.0
    _attention_heads(q, k, v, masked, attn_ref, num_heads)
    proj = jnp.dot(attn_ref[...].astype(jnp.bfloat16), wo_ref[...],
                   preferred_element_type=jnp.float32)
    o_ref[...] = (x + proj + bo_ref[...]).astype(o_ref.dtype)


def _ffn_res_kernel(x_ref, a_ref, b_ref, w1_ref, b1_ref, w2_ref, b2_ref, o_ref):
    # Fused: out = x + W2(relu(W1(LN(x)) + b1)) + b2
    x = x_ref[...].astype(jnp.float32)                         # (S, D)
    h = _layer_norm(x, a_ref[...], b_ref[...])
    f = jnp.dot(h.astype(jnp.bfloat16), w1_ref[...],
                preferred_element_type=jnp.float32) + b1_ref[...]
    f = jnp.maximum(f, 0.0)
    o = jnp.dot(f.astype(jnp.bfloat16), w2_ref[...],
                preferred_element_type=jnp.float32) + b2_ref[...]
    o_ref[...] = (x + o).astype(o_ref.dtype)


def _layernorm_kernel(x_ref, a_ref, b_ref, o_ref):
    x = x_ref[...].astype(jnp.float32)
    o_ref[...] = _layer_norm(x, a_ref[...], b_ref[...]).astype(o_ref.dtype)


# ----------------------------- wrappers ------------------------------------

def _const2d(shape):
    # whole-array, constant-index block: fetched once; single-buffered since the
    # index_map never changes (double-buffering weights only doubles resident VMEM).
    return pl.BlockSpec(shape, lambda b: (0, 0), pipeline_mode=pl.Buffered(1))


_COMPILER_PARAMS = pltpu.CompilerParams(
    dimension_semantics=("parallel",),
    vmem_limit_bytes=64 * 1024 * 1024,
)


def self_attention_sublayer(x, mask, p, num_heads):
    B, S, D = x.shape
    Sk = mask.shape[-1]
    scale = 1.0 / math.sqrt(D // num_heads)
    kern = functools.partial(_self_attn_kernel, num_heads=num_heads, scale=scale)
    return pl.pallas_call(
        kern,
        out_shape=jax.ShapeDtypeStruct((B, S, D), x.dtype),
        grid=(B,),
        in_specs=[
            pl.BlockSpec((None, S, D), lambda b: (b, 0, 0)),               # x
            _const2d((1, D)), _const2d((1, D)),                            # ln alpha/bias
            _const2d((D, 3 * D)), _const2d((1, 3 * D)),                    # Wqkv, bqkv
            _const2d((D, D)), _const2d((1, D)),                            # Wo, bo
            pl.BlockSpec((None, None, S, Sk), lambda b: (b, 0, 0, 0)),     # target mask
        ],
        out_specs=pl.BlockSpec((None, S, D), lambda b: (b, 0, 0)),
        scratch_shapes=[pltpu.VMEM((S, D), jnp.float32)],                  # concat heads
        compiler_params=_COMPILER_PARAMS,
    )(x, p["ln_a"], p["ln_b"], p["wqkv"], p["bqkv"], p["wo"], p["bo"], mask)


def cross_attention_sublayer(x, enc, mask, p, num_heads):
    B, S, D = x.shape
    Sk = enc.shape[1]
    scale = 1.0 / math.sqrt(D // num_heads)
    kern = functools.partial(_cross_attn_kernel, num_heads=num_heads, scale=scale)
    return pl.pallas_call(
        kern,
        out_shape=jax.ShapeDtypeStruct((B, S, D), x.dtype),
        grid=(B,),
        in_specs=[
            pl.BlockSpec((None, S, D), lambda b: (b, 0, 0)),               # x
            pl.BlockSpec((None, Sk, D), lambda b: (b, 0, 0)),              # encoder out
            _const2d((1, D)), _const2d((1, D)),                            # ln alpha/bias
            _const2d((D, D)), _const2d((1, D)),                            # Wq, bq
            _const2d((D, 2 * D)), _const2d((1, 2 * D)),                    # Wkv, bkv
            _const2d((D, D)), _const2d((1, D)),                            # Wo, bo
            pl.BlockSpec((None, None, S, Sk), lambda b: (b, 0, 0, 0)),     # src mask
        ],
        out_specs=pl.BlockSpec((None, S, D), lambda b: (b, 0, 0)),
        scratch_shapes=[pltpu.VMEM((S, D), jnp.float32)],
        compiler_params=_COMPILER_PARAMS,
    )(x, enc, p["ln_a"], p["ln_b"], p["wq"], p["bq"], p["wkv"], p["bkv"],
      p["wo"], p["bo"], mask)


def ffn_sublayer(x, p):
    B, S, D = x.shape
    F = p["w1"].shape[1]
    return pl.pallas_call(
        _ffn_res_kernel,
        out_shape=jax.ShapeDtypeStruct((B, S, D), x.dtype),
        grid=(B,),
        in_specs=[
            pl.BlockSpec((None, S, D), lambda b: (b, 0, 0)),
            _const2d((1, D)), _const2d((1, D)),
            _const2d((D, F)), _const2d((1, F)),
            _const2d((F, D)), _const2d((1, D)),
        ],
        out_specs=pl.BlockSpec((None, S, D), lambda b: (b, 0, 0)),
        compiler_params=_COMPILER_PARAMS,
    )(x, p["ln_a"], p["ln_b"], p["w1"], p["b1"], p["w2"], p["b2"])


def final_layernorm(x, alpha, beta):
    B, S, D = x.shape
    return pl.pallas_call(
        _layernorm_kernel,
        out_shape=jax.ShapeDtypeStruct((B, S, D), x.dtype),
        grid=(B,),
        in_specs=[
            pl.BlockSpec((None, S, D), lambda b: (b, 0, 0)),
            _const2d((1, D)), _const2d((1, D)),
        ],
        out_specs=pl.BlockSpec((None, S, D), lambda b: (b, 0, 0)),
        compiler_params=_COMPILER_PARAMS,
    )(x, alpha, beta)


# ----------------------------- model glue -----------------------------------

def decoder_forward(params, x, encoder_output, mask, target_mask, num_heads):
    # Mirrors Decoder.forward: loop over DecoderBlocks, then final LayerNormalization.
    for lp in params["layers"]:
        x = self_attention_sublayer(x, target_mask, lp["self_attn"], num_heads)
        x = cross_attention_sublayer(x, encoder_output, mask, lp["cross_attn"], num_heads)
        x = ffn_sublayer(x, lp["ffn"])
    return final_layernorm(x, params["norm_a"], params["norm_b"])


# ----------------------------- param init -----------------------------------

def init_params(key, num_layers, d_model, d_ff):
    def dense(k, fi, fo):
        # weights stored in bf16 (matmul inputs); biases / LN params stay f32
        return (0.02 * jax.random.normal(k, (fi, fo), jnp.float32)).astype(jnp.bfloat16)

    def zeros_row(n):
        return jnp.zeros((1, n), jnp.float32)

    def ones_row(n):
        return jnp.ones((1, n), jnp.float32)

    layers = []
    keys = jax.random.split(key, num_layers)
    for li in range(num_layers):
        ks = jax.random.split(keys[li], 10)
        self_attn = {
            "ln_a": ones_row(d_model), "ln_b": zeros_row(d_model),
            "wqkv": jnp.concatenate([dense(ks[0], d_model, d_model),
                                     dense(ks[1], d_model, d_model),
                                     dense(ks[2], d_model, d_model)], axis=1),
            "bqkv": zeros_row(3 * d_model),
            "wo": dense(ks[3], d_model, d_model), "bo": zeros_row(d_model),
        }
        cross_attn = {
            "ln_a": ones_row(d_model), "ln_b": zeros_row(d_model),
            "wq": dense(ks[4], d_model, d_model), "bq": zeros_row(d_model),
            "wkv": jnp.concatenate([dense(ks[5], d_model, d_model),
                                    dense(ks[6], d_model, d_model)], axis=1),
            "bkv": zeros_row(2 * d_model),
            "wo": dense(ks[7], d_model, d_model), "bo": zeros_row(d_model),
        }
        ffn = {
            "ln_a": ones_row(d_model), "ln_b": zeros_row(d_model),
            "w1": dense(ks[8], d_model, d_ff), "b1": zeros_row(d_ff),
            "w2": dense(ks[9], d_ff, d_model), "b2": zeros_row(d_model),
        }
        layers.append({"self_attn": self_attn, "cross_attn": cross_attn, "ffn": ffn})

    return {
        "layers": layers,
        "norm_a": jnp.ones((1, d_model), jnp.float32),
        "norm_b": jnp.zeros((1, d_model), jnp.float32),
    }


# TODO(synk): dropout inside ResidualConnection / attention is omitted (eval-mode identity).

if __name__ == "__main__":
    B, S_TGT, S_SRC = 2, 8, 8
    D_MODEL, N_HEADS, D_FF, N_LAYERS = 32, 4, 64, 2

    root = jax.random.PRNGKey(0)
    k_x, k_enc, k_p = jax.random.split(root, 3)

    x = jax.random.normal(k_x, (B, S_TGT, D_MODEL), jnp.float32)
    encoder_output = jax.random.normal(k_enc, (B, S_SRC, D_MODEL), jnp.float32)

    # target (causal) mask and source (all-visible) mask, float 1.0/0.0 (torch semantics)
    causal = jnp.tril(jnp.ones((S_TGT, S_TGT), jnp.float32))
    target_mask = jnp.broadcast_to(causal[None, None, :, :], (B, 1, S_TGT, S_TGT))
    mask = jnp.ones((B, 1, S_TGT, S_SRC), jnp.float32)

    params = init_params(k_p, N_LAYERS, D_MODEL, D_FF)

    fwd = jax.jit(functools.partial(decoder_forward, num_heads=N_HEADS))
    out = fwd(params, x, encoder_output, mask, target_mask)
    out = jax.block_until_ready(out)

    assert out.shape == (B, S_TGT, D_MODEL) and out.dtype == jnp.float32
    assert bool(jnp.all(jnp.isfinite(out)))
    print("KERNEL_OK")
</pallas_src>

<mosaic_0001>
module attributes {stable_mosaic.version = 11 : i64} {
  func.func @_ffn_res_kernel(%arg0: i32, %arg1: memref<1x8x32xf32, #tpu.memory_space<vmem>>, %arg2: memref<1x32xf32, #tpu.memory_space<vmem>>, %arg3: memref<1x32xf32, #tpu.memory_space<vmem>>, %arg4: memref<32x64xbf16, #tpu.memory_space<vmem>>, %arg5: memref<1x64xf32, #tpu.memory_space<vmem>>, %arg6: memref<64x32xbf16, #tpu.memory_space<vmem>>, %arg7: memref<1x32xf32, #tpu.memory_space<vmem>>, %arg8: memref<1x8x32xf32, #tpu.memory_space<vmem>>) attributes {dimension_semantics = [#tpu.dimension_semantics<parallel>], iteration_bounds = array<i64: 2>, scalar_prefetch = 0 : i64, scratch_operands = 0 : i64, tpu.core_type = #tpu.core_type<tc>, window_params = [{transform_indices = @transform_0, window_bounds = array<i64: 1, 8, 32>}, {pipeline_mode = #tpu.pipeline_mode<synchronous>, transform_indices = @transform_1, window_bounds = array<i64: 1, 32>}, {pipeline_mode = #tpu.pipeline_mode<synchronous>, transform_indices = @transform_2, window_bounds = array<i64: 1, 32>}, {pipeline_mode = #tpu.pipeline_mode<synchronous>, transform_indices = @transform_3, window_bounds = array<i64: 32, 64>}, {pipeline_mode = #tpu.pipeline_mode<synchronous>, transform_indices = @transform_4, window_bounds = array<i64: 1, 64>}, {pipeline_mode = #tpu.pipeline_mode<synchronous>, transform_indices = @transform_5, window_bounds = array<i64: 64, 32>}, {pipeline_mode = #tpu.pipeline_mode<synchronous>, transform_indices = @transform_6, window_bounds = array<i64: 1, 32>}, {transform_indices = @transform_7, window_bounds = array<i64: 1, 8, 32>}]} {
    %c0 = arith.constant 0 : index
    %c0_0 = arith.constant 0 : index
    %c0_1 = arith.constant 0 : index
    %0 = vector.load %arg1[%c0, %c0_0, %c0_1] : memref<1x8x32xf32, #tpu.memory_space<vmem>>, vector<1x8x32xf32>
    %1 = vector.shape_cast %0 : vector<1x8x32xf32> to vector<8x32xf32>
    %c0_2 = arith.constant 0 : index
    %c0_3 = arith.constant 0 : index
    %2 = vector.load %arg2[%c0_2, %c0_3] : memref<1x32xf32, #tpu.memory_space<vmem>>, vector<1x32xf32>
    %c0_4 = arith.constant 0 : index
    %c0_5 = arith.constant 0 : index
    %3 = vector.load %arg3[%c0_4, %c0_5] : memref<1x32xf32, #tpu.memory_space<vmem>>, vector<1x32xf32>
    %cst = arith.constant dense<0.000000e+00> : vector<8xf32>
    %4 = vector.multi_reduction <add>, %1, %cst [1] : vector<8x32xf32> to vector<8xf32>
    %5 = vector.shape_cast %4 : vector<8xf32> to vector<8x1xf32>
    %cst_6 = arith.constant 3.200000e+01 : f32
    %6 = vector.broadcast %cst_6 : f32 to vector<8x1xf32>
    %7 = arith.divf %5, %6 : vector<8x1xf32>
    %8 = vector.broadcast %7 : vector<8x1xf32> to vector<8x32xf32>
    %9 = arith.subf %1, %8 : vector<8x32xf32>
    %10 = arith.mulf %9, %9 : vector<8x32xf32>
    %cst_7 = arith.constant dense<0.000000e+00> : vector<8xf32>
    %11 = vector.multi_reduction <add>, %10, %cst_7 [1] : vector<8x32xf32> to vector<8xf32>
    %12 = vector.shape_cast %11 : vector<8xf32> to vector<8x1xf32>
    %cst_8 = arith.constant 0.0322580636 : f32
    %13 = vector.broadcast %cst_8 : f32 to vector<8x1xf32>
    %14 = arith.mulf %12, %13 : vector<8x1xf32>
    %15 = math.sqrt %14 : vector<8x1xf32>
    %cst_9 = arith.constant 9.99999997E-7 : f32
    %16 = vector.broadcast %cst_9 : f32 to vector<8x1xf32>
    %17 = arith.addf %15, %16 : vector<8x1xf32>
    %cst_10 = arith.constant 1.000000e+00 : f32
    %18 = vector.broadcast %cst_10 : f32 to vector<8x1xf32>
    %19 = arith.divf %18, %17 : vector<8x1xf32>
    %20 = vector.broadcast %2 : vector<1x32xf32> to vector<8x32xf32>
    %21 = arith.mulf %20, %9 : vector<8x32xf32>
    %22 = vector.broadcast %19 : vector<8x1xf32> to vector<8x32xf32>
    %23 = arith.mulf %21, %22 : vector<8x32xf32>
    %24 = vector.broadcast %3 : vector<1x32xf32> to vector<8x32xf32>
    %25 = arith.addf %23, %24 : vector<8x32xf32>
    %26 = arith.truncf %25 : vector<8x32xf32> to vector<8x32xbf16>
    %c0_11 = arith.constant 0 : index
    %c0_12 = arith.constant 0 : index
    %27 = vector.load %arg4[%c0_11, %c0_12] : memref<32x64xbf16, #tpu.memory_space<vmem>>, vector<32x64xbf16>
    %cst_13 = arith.constant dense<0.000000e+00> : vector<8x64xf32>
    %28 = tpu.matmul %26, %27, %cst_13 {dimension_numbers = #tpu.dot_dimension_numbers<[1], [0], [0], [1], [0, 0, 1, 1], [], []>} : vector<8x32xbf16>, vector<32x64xbf16>, vector<8x64xf32> -> vector<8x64xf32>
    %c0_14 = arith.constant 0 : index
    %c0_15 = arith.constant 0 : index
    %29 = vector.load %arg5[%c0_14, %c0_15] : memref<1x64xf32, #tpu.memory_space<vmem>>, vector<1x64xf32>
    %30 = vector.broadcast %29 : vector<1x64xf32> to vector<8x64xf32>
    %31 = arith.addf %28, %30 : vector<8x64xf32>
    %cst_16 = arith.constant 0.000000e+00 : f32
    %32 = vector.broadcast %cst_16 : f32 to vector<8x64xf32>
    %33 = arith.maximumf %31, %32 : vector<8x64xf32>
    %34 = arith.truncf %33 : vector<8x64xf32> to vector<8x64xbf16>
    %c0_17 = arith.constant 0 : index
    %c0_18 = arith.constant 0 : index
    %35 = vector.load %arg6[%c0_17, %c0_18] : memref<64x32xbf16, #tpu.memory_space<vmem>>, vector<64x32xbf16>
    %cst_19 = arith.constant dense<0.000000e+00> : vector<8x32xf32>
    %36 = tpu.matmul %34, %35, %cst_19 {dimension_numbers = #tpu.dot_dimension_numbers<[1], [0], [0], [1], [0, 0, 1, 1], [], []>} : vector<8x64xbf16>, vector<64x32xbf16>, vector<8x32xf32> -> vector<8x32xf32>
    %c0_20 = arith.constant 0 : index
    %c0_21 = arith.constant 0 : index
    %37 = vector.load %arg7[%c0_20, %c0_21] : memref<1x32xf32, #tpu.memory_space<vmem>>, vector<1x32xf32>
    %38 = vector.broadcast %37 : vector<1x32xf32> to vector<8x32xf32>
    %39 = arith.addf %36, %38 : vector<8x32xf32>
    %40 = arith.addf %1, %39 : vector<8x32xf32>
    %c0_22 = arith.constant 0 : index
    %c0_23 = arith.constant 0 : index
    %c0_24 = arith.constant 0 : index
    %41 = vector.load %arg8[%c0_22, %c0_23, %c0_24] : memref<1x8x32xf32, #tpu.memory_space<vmem>>, vector<1x8x32xf32>
    %42 = vector.shape_cast %41 : vector<1x8x32xf32> to vector<8x32xf32>
    %43 = vector.shape_cast %40 : vector<8x32xf32> to vector<1x8x32xf32>
    tpu.vector_store %arg8[%c0_22, %c0_23, %c0_24], %43 {strides = array<i32>} : memref<1x8x32xf32, #tpu.memory_space<vmem>>, vector<1x8x32xf32>,
    return
  }
  func.func @transform_0(%arg0: i32) -> (i32, i32, i32) {
    %c0_i32 = arith.constant 0 : i32
    %c0_i32_0 = arith.constant 0 : i32
    %c0_i32_1 = arith.constant 0 : i32
    return %arg0, %c0_i32, %c0_i32_0 : i32, i32, i32
  }
  func.func @transform_1(%arg0: i32) -> (i32, i32) {
    %c0_i32 = arith.constant 0 : i32
    %c0_i32_0 = arith.constant 0 : i32
    %c0_i32_1 = arith.constant 0 : i32
    return %c0_i32, %c0_i32_0 : i32, i32
  }
  func.func @transform_2(%arg0: i32) -> (i32, i32) {
    %c0_i32 = arith.constant 0 : i32
    %c0_i32_0 = arith.constant 0 : i32
    %c0_i32_1 = arith.constant 0 : i32
    return %c0_i32, %c0_i32_0 : i32, i32
  }
  func.func @transform_3(%arg0: i32) -> (i32, i32) {
    %c0_i32 = arith.constant 0 : i32
    %c0_i32_0 = arith.constant 0 : i32
    %c0_i32_1 = arith.constant 0 : i32
    return %c0_i32, %c0_i32_0 : i32, i32
  }
  func.func @transform_4(%arg0: i32) -> (i32, i32) {
    %c0_i32 = arith.constant 0 : i32
    %c0_i32_0 = arith.constant 0 : i32
    %c0_i32_1 = arith.constant 0 : i32
    return %c0_i32, %c0_i32_0 : i32, i32
  }
  func.func @transform_5(%arg0: i32) -> (i32, i32) {
    %c0_i32 = arith.constant 0 : i32
    %c0_i32_0 = arith.constant 0 : i32
    %c0_i32_1 = arith.constant 0 : i32
    return %c0_i32, %c0_i32_0 : i32, i32
  }
  func.func @transform_6(%arg0: i32) -> (i32, i32) {
    %c0_i32 = arith.constant 0 : i32
    %c0_i32_0 = arith.constant 0 : i32
    %c0_i32_1 = arith.constant 0 : i32
    return %c0_i32, %c0_i32_0 : i32, i32
  }
  func.func @transform_7(%arg0: i32) -> (i32, i32, i32) {
    %c0_i32 = arith.constant 0 : i32
    %c0_i32_0 = arith.constant 0 : i32
    %c0_i32_1 = arith.constant 0 : i32
    return %arg0, %c0_i32, %c0_i32_0 : i32, i32, i32
  }
}

module attributes {stable_mosaic.version = 11 : i64} {
  func.func @_cross_attn_kernel(%arg0: i32, %arg1: memref<1x8x32xf32, #tpu.memory_space<vmem>>, %arg2: memref<1x8x32xf32, #tpu.memory_space<vmem>>, %arg3: memref<1x32xf32, #tpu.memory_space<vmem>>, %arg4: memref<1x32xf32, #tpu.memory_space<vmem>>, %arg5: memref<32x32xbf16, #tpu.memory_space<vmem>>, %arg6: memref<1x32xf32, #tpu.memory_space<vmem>>, %arg7: memref<32x64xbf16, #tpu.memory_space<vmem>>, %arg8: memref<1x64xf32, #tpu.memory_space<vmem>>, %arg9: memref<32x32xbf16, #tpu.memory_space<vmem>>, %arg10: memref<1x32xf32, #tpu.memory_space<vmem>>, %arg11: memref<1x1x8x8xf32, #tpu.memory_space<vmem>>, %arg12: memref<1x8x32xf32, #tpu.memory_space<vmem>>, %arg13: memref<8x32xf32, #tpu.memory_space<vmem>>) attributes {dimension_semantics = [#tpu.dimension_semantics<parallel>], iteration_bounds = array<i64: 2>, scalar_prefetch = 0 : i64, scratch_operands = 1 : i64, tpu.core_type = #tpu.core_type<tc>, window_params = [{transform_indices = @transform_0, window_bounds = array<i64: 1, 8, 32>}, {transform_indices = @transform_1, window_bounds = array<i64: 1, 8, 32>}, {pipeline_mode = #tpu.pipeline_mode<synchronous>, transform_indices = @transform_2, window_bounds = array<i64: 1, 32>}, {pipeline_mode = #tpu.pipeline_mode<synchronous>, transform_indices = @transform_3, window_bounds = array<i64: 1, 32>}, {pipeline_mode = #tpu.pipeline_mode<synchronous>, transform_indices = @transform_4, window_bounds = array<i64: 32, 32>}, {pipeline_mode = #tpu.pipeline_mode<synchronous>, transform_indices = @transform_5, window_bounds = array<i64: 1, 32>}, {pipeline_mode = #tpu.pipeline_mode<synchronous>, transform_indices = @transform_6, window_bounds = array<i64: 32, 64>}, {pipeline_mode = #tpu.pipeline_mode<synchronous>, transform_indices = @transform_7, window_bounds = array<i64: 1, 64>}, {pipeline_mode = #tpu.pipeline_mode<synchronous>, transform_indices = @transform_8, window_bounds = array<i64: 32, 32>}, {pipeline_mode = #tpu.pipeline_mode<synchronous>, transform_indices = @transform_9, window_bounds = array<i64: 1, 32>}, {transform_indices = @transform_10, window_bounds = array<i64: 1, 1, 8, 8>}, {transform_indices = @transform_11, window_bounds = array<i64: 1, 8, 32>}]} {
    %c0 = arith.constant 0 : index
    %c0_0 = arith.constant 0 : index
    %c0_1 = arith.constant 0 : index
    %0 = vector.load %arg1[%c0, %c0_0, %c0_1] : memref<1x8x32xf32, #tpu.memory_space<vmem>>, vector<1x8x32xf32>
    %1 = vector.shape_cast %0 : vector<1x8x32xf32> to vector<8x32xf32>
    %c0_2 = arith.constant 0 : index
    %c0_3 = arith.constant 0 : index
    %c0_4 = arith.constant 0 : index
    %2 = vector.load %arg2[%c0_2, %c0_3, %c0_4] : memref<1x8x32xf32, #tpu.memory_space<vmem>>, vector<1x8x32xf32>
    %3 = vector.shape_cast %2 : vector<1x8x32xf32> to vector<8x32xf32>
    %c0_5 = arith.constant 0 : index
    %c0_6 = arith.constant 0 : index
    %4 = vector.load %arg3[%c0_5, %c0_6] : memref<1x32xf32, #tpu.memory_space<vmem>>, vector<1x32xf32>
    %c0_7 = arith.constant 0 : index
    %c0_8 = arith.constant 0 : index
    %5 = vector.load %arg4[%c0_7, %c0_8] : memref<1x32xf32, #tpu.memory_space<vmem>>, vector<1x32xf32>
    %cst = arith.constant dense<0.000000e+00> : vector<8xf32>
    %6 = vector.multi_reduction <add>, %1, %cst [1] : vector<8x32xf32> to vector<8xf32>
    %7 = vector.shape_cast %6 : vector<8xf32> to vector<8x1xf32>
    %cst_9 = arith.constant 3.200000e+01 : f32
    %8 = vector.broadcast %cst_9 : f32 to vector<8x1xf32>
    %9 = arith.divf %7, %8 : vector<8x1xf32>
    %10 = vector.broadcast %9 : vector<8x1xf32> to vector<8x32xf32>
    %11 = arith.subf %1, %10 : vector<8x32xf32>
    %12 = arith.mulf %11, %11 : vector<8x32xf32>
    %cst_10 = arith.constant dense<0.000000e+00> : vector<8xf32>
    %13 = vector.multi_reduction <add>, %12, %cst_10 [1] : vector<8x32xf32> to vector<8xf32>
    %14 = vector.shape_cast %13 : vector<8xf32> to vector<8x1xf32>
    %cst_11 = arith.constant 0.0322580636 : f32
    %15 = vector.broadcast %cst_11 : f32 to vector<8x1xf32>
    %16 = arith.mulf %14, %15 : vector<8x1xf32>
    %17 = math.sqrt %16 : vector<8x1xf32>
    %cst_12 = arith.constant 9.99999997E-7 : f32
    %18 = vector.broadcast %cst_12 : f32 to vector<8x1xf32>
    %19 = arith.addf %17, %18 : vector<8x1xf32>
    %cst_13 = arith.constant 1.000000e+00 : f32
    %20 = vector.broadcast %cst_13 : f32 to vector<8x1xf32>
    %21 = arith.divf %20, %19 : vector<8x1xf32>
    %22 = vector.broadcast %4 : vector<1x32xf32> to vector<8x32xf32>
    %23 = arith.mulf %22, %11 : vector<8x32xf32>
    %24 = vector.broadcast %21 : vector<8x1xf32> to vector<8x32xf32>
    %25 = arith.mulf %23, %24 : vector<8x32xf32>
    %26 = vector.broadcast %5 : vector<1x32xf32> to vector<8x32xf32>
    %27 = arith.addf %25, %26 : vector<8x32xf32>
    %28 = arith.truncf %27 : vector<8x32xf32> to vector<8x32xbf16>
    %c0_14 = arith.constant 0 : index
    %c0_15 = arith.constant 0 : index
    %29 = vector.load %arg5[%c0_14, %c0_15] : memref<32x32xbf16, #tpu.memory_space<vmem>>, vector<32x32xbf16>
    %cst_16 = arith.constant dense<0.000000e+00> : vector<8x32xf32>
    %30 = tpu.matmul %28, %29, %cst_16 {dimension_numbers = #tpu.dot_dimension_numbers<[1], [0], [0], [1], [0, 0, 1, 1], [], []>} : vector<8x32xbf16>, vector<32x32xbf16>, vector<8x32xf32> -> vector<8x32xf32>
    %c0_17 = arith.constant 0 : index
    %c0_18 = arith.constant 0 : index
    %31 = vector.load %arg6[%c0_17, %c0_18] : memref<1x32xf32, #tpu.memory_space<vmem>>, vector<1x32xf32>
    %32 = vector.broadcast %31 : vector<1x32xf32> to vector<8x32xf32>
    %33 = arith.addf %30, %32 : vector<8x32xf32>
    %cst_19 = arith.constant 0.353553385 : f32
    %34 = vector.broadcast %cst_19 : f32 to vector<8x32xf32>
    %35 = arith.mulf %33, %34 : vector<8x32xf32>
    %36 = arith.truncf %3 : vector<8x32xf32> to vector<8x32xbf16>
    %c0_20 = arith.constant 0 : index
    %c0_21 = arith.constant 0 : index
    %37 = vector.load %arg7[%c0_20, %c0_21] : memref<32x64xbf16, #tpu.memory_space<vmem>>, vector<32x64xbf16>
    %cst_22 = arith.constant dense<0.000000e+00> : vector<8x64xf32>
    %38 = tpu.matmul %36, %37, %cst_22 {dimension_numbers = #tpu.dot_dimension_numbers<[1], [0], [0], [1], [0, 0, 1, 1], [], []>} : vector<8x32xbf16>, vector<32x64xbf16>, vector<8x64xf32> -> vector<8x64xf32>
    %c0_23 = arith.constant 0 : index
    %c0_24 = arith.constant 0 : index
    %39 = vector.load %arg8[%c0_23, %c0_24] : memref<1x64xf32, #tpu.memory_space<vmem>>, vector<1x64xf32>
    %40 = vector.broadcast %39 : vector<1x64xf32> to vector<8x64xf32>
    %41 = arith.addf %38, %40 : vector<8x64xf32>
    %42 = vector.extract_strided_slice %41 {offsets = [0, 0], sizes = [8, 32], strides = [1, 1]} : vector<8x64xf32> to vector<8x32xf32>
    %43 = vector.extract_strided_slice %41 {offsets = [0, 32], sizes = [8, 32], strides = [1, 1]} : vector<8x64xf32> to vector<8x32xf32>
    %c0_25 = arith.constant 0 : index
    %c0_26 = arith.constant 0 : index
    %c0_27 = arith.constant 0 : index
    %c0_28 = arith.constant 0 : index
    %44 = vector.load %arg11[%c0_25, %c0_26, %c0_27, %c0_28] : memref<1x1x8x8xf32, #tpu.memory_space<vmem>>, vector<1x1x8x8xf32>
    %45 = vector.shape_cast %44 : vector<1x1x8x8xf32> to vector<8x8xf32>
    %cst_29 = arith.constant 0.000000e+00 : f32
    %46 = vector.broadcast %cst_29 : f32 to vector<8x8xf32>
    %47 = arith.cmpf oeq, %45, %46 : vector<8x8xf32>
    %48 = vector.extract_strided_slice %35 {offsets = [0, 0], sizes = [8, 8], strides = [1, 1]} : vector<8x32xf32> to vector<8x8xf32>
    %49 = arith.truncf %48 : vector<8x8xf32> to vector<8x8xbf16>
    %50 = vector.extract_strided_slice %42 {offsets = [0, 0], sizes = [8, 8], strides = [1, 1]} : vector<8x32xf32> to vector<8x8xf32>
    %51 = arith.truncf %50 : vector<8x8xf32> to vector<8x8xbf16>
    %52 = vector.extract_strided_slice %43 {offsets = [0, 0], sizes = [8, 8], strides = [1, 1]} : vector<8x32xf32> to vector<8x8xf32>
    %53 = arith.truncf %52 : vector<8x8xf32> to vector<8x8xbf16>
    %cst_30 = arith.constant dense<0.000000e+00> : vector<8x8xf32>
    %54 = tpu.matmul %49, %51, %cst_30 {dimension_numbers = #tpu.dot_dimension_numbers<[1], [1], [0], [0], [0, 0, 1, 0], [], []>} : vector<8x8xbf16>, vector<8x8xbf16>, vector<8x8xf32> -> vector<8x8xf32>
    %cst_31 = arith.constant -1.000000e+09 : f32
    %55 = vector.broadcast %cst_31 : f32 to vector<8x8xf32>
    %56 = arith.select %47, %55, %54 : vector<8x8xi1>, vector<8x8xf32>
    %cst_32 = arith.constant dense<0xFF800000> : vector<8xf32>
    %57 = vector.multi_reduction <maximumf>, %56, %cst_32 [1] : vector<8x8xf32> to vector<8xf32>
    %58 = vector.shape_cast %57 : vector<8xf32> to vector<8x1xf32>
    %59 = vector.broadcast %58 : vector<8x1xf32> to vector<8x8xf32>
    %60 = arith.subf %56, %59 : vector<8x8xf32>
    %61 = math.exp %60 : vector<8x8xf32>
    %cst_33 = arith.constant dense<0.000000e+00> : vector<8xf32>
    %62 = vector.multi_reduction <add>, %61, %cst_33 [1] : vector<8x8xf32> to vector<8xf32>
    %63 = vector.shape_cast %62 : vector<8xf32> to vector<8x1xf32>
    %64 = tpu.reciprocal %63 {approx = true} : vector<8x1xf32> -> vector<8x1xf32>
    %65 = vector.broadcast %64 : vector<8x1xf32> to vector<8x8xf32>
    %66 = arith.mulf %61, %65 : vector<8x8xf32>
    %67 = arith.truncf %66 : vector<8x8xf32> to vector<8x8xbf16>
    %cst_34 = arith.constant dense<0.000000e+00> : vector<8x8xf32>
    %68 = tpu.matmul %67, %53, %cst_34 {dimension_numbers = #tpu.dot_dimension_numbers<[1], [0], [0], [1], [0, 0, 1, 1], [], []>} : vector<8x8xbf16>, vector<8x8xbf16>, vector<8x8xf32> -> vector<8x8xf32>
    %c0_35 = arith.constant 0 : index
    %c0_36 = arith.constant 0 : index
    %69 = vector.load %arg13[%c0_35, %c0_36] : memref<8x32xf32, #tpu.memory_space<vmem>>, vector<8x8xf32>
    tpu.vector_store %arg13[%c0_35, %c0_36], %68 {strides = array<i32>} : memref<8x32xf32, #tpu.memory_space<vmem>>, vector<8x8xf32>,
    %70 = vector.extract_strided_slice %35 {offsets = [0, 8], sizes = [8, 8], strides = [1, 1]} : vector<8x32xf32> to vector<8x8xf32>
    %71 = arith.truncf %70 : vector<8x8xf32> to vector<8x8xbf16>
    %72 = vector.extract_strided_slice %42 {offsets = [0, 8], sizes = [8, 8], strides = [1, 1]} : vector<8x32xf32> to vector<8x8xf32>
    %73 = arith.truncf %72 : vector<8x8xf32> to vector<8x8xbf16>
    %74 = vector.extract_strided_slice %43 {offsets = [0, 8], sizes = [8, 8], strides = [1, 1]} : vector<8x32xf32> to vector<8x8xf32>
    %75 = arith.truncf %74 : vector<8x8xf32> to vector<8x8xbf16>
    %cst_37 = arith.constant dense<0.000000e+00> : vector<8x8xf32>
    %76 = tpu.matmul %71, %73, %cst_37 {dimension_numbers = #tpu.dot_dimension_numbers<[1], [1], [0], [0], [0, 0, 1, 0], [], []>} : vector<8x8xbf16>, vector<8x8xbf16>, vector<8x8xf32> -> vector<8x8xf32>
    %cst_38 = arith.constant -1.000000e+09 : f32
    %77 = vector.broadcast %cst_38 : f32 to vector<8x8xf32>
    %78 = arith.select %47, %77, %76 : vector<8x8xi1>, vector<8x8xf32>
    %cst_39 = arith.constant dense<0xFF800000> : vector<8xf32>
    %79 = vector.multi_reduction <maximumf>, %78, %cst_39 [1] : vector<8x8xf32> to vector<8xf32>
    %80 = vector.shape_cast %79 : vector<8xf32> to vector<8x1xf32>
    %81 = vector.broadcast %80 : vector<8x1xf32> to vector<8x8xf32>
    %82 = arith.subf %78, %81 : vector<8x8xf32>
    %83 = math.exp %82 : vector<8x8xf32>
    %cst_40 = arith.constant dense<0.000000e+00> : vector<8xf32>
    %84 = vector.multi_reduction <add>, %83, %cst_40 [1] : vector<8x8xf32> to vector<8xf32>
    %85 = vector.shape_cast %84 : vector<8xf32> to vector<8x1xf32>
    %86 = tpu.reciprocal %85 {approx = true} : vector<8x1xf32> -> vector<8x1xf32>
    %87 = vector.broadcast %86 : vector<8x1xf32> to vector<8x8xf32>
    %88 = arith.mulf %83, %87 : vector<8x8xf32>
    %89 = arith.truncf %88 : vector<8x8xf32> to vector<8x8xbf16>
    %cst_41 = arith.constant dense<0.000000e+00> : vector<8x8xf32>
    %90 = tpu.matmul %89, %75, %cst_41 {dimension_numbers = #tpu.dot_dimension_numbers<[1], [0], [0], [1], [0, 0, 1, 1], [], []>} : vector<8x8xbf16>, vector<8x8xbf16>, vector<8x8xf32> -> vector<8x8xf32>
    %c0_42 = arith.constant 0 : index
    %c8 = arith.constant 8 : index
    %91 = vector.load %arg13[%c0_42, %c8] : memref<8x32xf32, #tpu.memory_space<vmem>>, vector<8x8xf32>
    tpu.vector_store %arg13[%c0_42, %c8], %90 {strides = array<i32>} : memref<8x32xf32, #tpu.memory_space<vmem>>, vector<8x8xf32>,
    %92 = vector.extract_strided_slice %35 {offsets = [0, 16], sizes = [8, 8], strides = [1, 1]} : vector<8x32xf32> to vector<8x8xf32>
    %93 = arith.truncf %92 : vector<8x8xf32> to vector<8x8xbf16>
    %94 = vector.extract_strided_slice %42 {offsets = [0, 16], sizes = [8, 8], strides = [1, 1]} : vector<8x32xf32> to vector<8x8xf32>
    %95 = arith.truncf %94 : vector<8x8xf32> to vector<8x8xbf16>
    %96 = vector.extract_strided_slice %43 {offsets = [0, 16], sizes = [8, 8], strides = [1, 1]} : vector<8x32xf32> to vector<8x8xf32>
    %97 = arith.truncf %96 : vector<8x8xf32> to vector<8x8xbf16>
    %cst_43 = arith.constant dense<0.000000e+00> : vector<8x8xf32>
    %98 = tpu.matmul %93, %95, %cst_43 {dimension_numbers = #tpu.dot_dimension_numbers<[1], [1], [0], [0], [0, 0, 1, 0], [], []>} : vector<8x8xbf16>, vector<8x8xbf16>, vector<8x8xf32> -> vector<8x8xf32>
    %cst_44 = arith.constant -1.000000e+09 : f32
    %99 = vector.broadcast %cst_44 : f32 to vector<8x8xf32>
    %100 = arith.select %47, %99, %98 : vector<8x8xi1>, vector<8x8xf32>
    %cst_45 = arith.constant dense<0xFF800000> : vector<8xf32>
    %101 = vector.multi_reduction <maximumf>, %100, %cst_45 [1] : vector<8x8xf32> to vector<8xf32>
    %102 = vector.shape_cast %101 : vector<8xf32> to vector<8x1xf32>
    %103 = vector.broadcast %102 : vector<8x1xf32> to vector<8x8xf32>
    %104 = arith.subf %100, %103 : vector<8x8xf32>
    %105 = math.exp %104 : vector<8x8xf32>
    %cst_46 = arith.constant dense<0.000000e+00> : vector<8xf32>
    %106 = vector.multi_reduction <add>, %105, %cst_46 [1] : vector<8x8xf32> to vector<8xf32>
    %107 = vector.shape_cast %106 : vector<8xf32> to vector<8x1xf32>
    %108 = tpu.reciprocal %107 {approx = true} : vector<8x1xf32> -> vector<8x1xf32>
    %109 = vector.broadcast %108 : vector<8x1xf32> to vector<8x8xf32>
    %110 = arith.mulf %105, %109 : vector<8x8xf32>
    %111 = arith.truncf %110 : vector<8x8xf32> to vector<8x8xbf16>
    %cst_47 = arith.constant dense<0.000000e+00> : vector<8x8xf32>
    %112 = tpu.matmul %111, %97, %cst_47 {dimension_numbers = #tpu.dot_dimension_numbers<[1], [0], [0], [1], [0, 0, 1, 1], [], []>} : vector<8x8xbf16>, vector<8x8xbf16>, vector<8x8xf32> -> vector<8x8xf32>
    %c0_48 = arith.constant 0 : index
    %c16 = arith.constant 16 : index
    %113 = vector.load %arg13[%c0_48, %c16] : memref<8x32xf32, #tpu.memory_space<vmem>>, vector<8x8xf32>
    tpu.vector_store %arg13[%c0_48, %c16], %112 {strides = array<i32>} : memref<8x32xf32, #tpu.memory_space<vmem>>, vector<8x8xf32>,
    %114 = vector.extract_strided_slice %35 {offsets = [0, 24], sizes = [8, 8], strides = [1, 1]} : vector<8x32xf32> to vector<8x8xf32>
    %115 = arith.truncf %114 : vector<8x8xf32> to vector<8x8xbf16>
    %116 = vector.extract_strided_slice %42 {offsets = [0, 24], sizes = [8, 8], strides = [1, 1]} : vector<8x32xf32> to vector<8x8xf32>
    %117 = arith.truncf %116 : vector<8x8xf32> to vector<8x8xbf16>
    %118 = vector.extract_strided_slice %43 {offsets = [0, 24], sizes = [8, 8], strides = [1, 1]} : vector<8x32xf32> to vector<8x8xf32>
    %119 = arith.truncf %118 : vector<8x8xf32> to vector<8x8xbf16>
    %cst_49 = arith.constant dense<0.000000e+00> : vector<8x8xf32>
    %120 = tpu.matmul %115, %117, %cst_49 {dimension_numbers = #tpu.dot_dimension_numbers<[1], [1], [0], [0], [0, 0, 1, 0], [], []>} : vector<8x8xbf16>, vector<8x8xbf16>, vector<8x8xf32> -> vector<8x8xf32>
    %cst_50 = arith.constant -1.000000e+09 : f32
    %121 = vector.broadcast %cst_50 : f32 to vector<8x8xf32>
    %122 = arith.select %47, %121, %120 : vector<8x8xi1>, vector<8x8xf32>
    %cst_51 = arith.constant dense<0xFF800000> : vector<8xf32>
    %123 = vector.multi_reduction <maximumf>, %122, %cst_51 [1] : vector<8x8xf32> to vector<8xf32>
    %124 = vector.shape_cast %123 : vector<8xf32> to vector<8x1xf32>
    %125 = vector.broadcast %124 : vector<8x1xf32> to vector<8x8xf32>
    %126 = arith.subf %122, %125 : vector<8x8xf32>
    %127 = math.exp %126 : vector<8x8xf32>
    %cst_52 = arith.constant dense<0.000000e+00> : vector<8xf32>
    %128 = vector.multi_reduction <add>, %127, %cst_52 [1] : vector<8x8xf32> to vector<8xf32>
    %129 = vector.shape_cast %128 : vector<8xf32> to vector<8x1xf32>
    %130 = tpu.reciprocal %129 {approx = true} : vector<8x1xf32> -> vector<8x1xf32>
    %131 = vector.broadcast %130 : vector<8x1xf32> to vector<8x8xf32>
    %132 = arith.mulf %127, %131 : vector<8x8xf32>
    %133 = arith.truncf %132 : vector<8x8xf32> to vector<8x8xbf16>
    %cst_53 = arith.constant dense<0.000000e+00> : vector<8x8xf32>
    %134 = tpu.matmul %133, %119, %cst_53 {dimension_numbers = #tpu.dot_dimension_numbers<[1], [0], [0], [1], [0, 0, 1, 1], [], []>} : vector<8x8xbf16>, vector<8x8xbf16>, vector<8x8xf32> -> vector<8x8xf32>
    %c0_54 = arith.constant 0 : index
    %c24 = arith.constant 24 : index
    %135 = vector.load %arg13[%c0_54, %c24] : memref<8x32xf32, #tpu.memory_space<vmem>>, vector<8x8xf32>
    tpu.vector_store %arg13[%c0_54, %c24], %134 {strides = array<i32>} : memref<8x32xf32, #tpu.memory_space<vmem>>, vector<8x8xf32>,
    %c0_55 = arith.constant 0 : index
    %c0_56 = arith.constant 0 : index
    %136 = vector.load %arg13[%c0_55, %c0_56] : memref<8x32xf32, #tpu.memory_space<vmem>>, vector<8x32xf32>
    %137 = arith.truncf %136 : vector<8x32xf32> to vector<8x32xbf16>
    %c0_57 = arith.constant 0 : index
    %c0_58 = arith.constant 0 : index
    %138 = vector.load %arg9[%c0_57, %c0_58] : memref<32x32xbf16, #tpu.memory_space<vmem>>, vector<32x32xbf16>
    %cst_59 = arith.constant dense<0.000000e+00> : vector<8x32xf32>
    %139 = tpu.matmul %137, %138, %cst_59 {dimension_numbers = #tpu.dot_dimension_numbers<[1], [0], [0], [1], [0, 0, 1, 1], [], []>} : vector<8x32xbf16>, vector<32x32xbf16>, vector<8x32xf32> -> vector<8x32xf32>
    %140 = arith.addf %1, %139 : vector<8x32xf32>
    %c0_60 = arith.constant 0 : index
    %c0_61 = arith.constant 0 : index
    %141 = vector.load %arg10[%c0_60, %c0_61] : memref<1x32xf32, #tpu.memory_space<vmem>>, vector<1x32xf32>
    %142 = vector.broadcast %141 : vector<1x32xf32> to vector<8x32xf32>
    %143 = arith.addf %140, %142 : vector<8x32xf32>
    %c0_62 = arith.constant 0 : index
    %c0_63 = arith.constant 0 : index
    %c0_64 = arith.constant 0 : index
    %144 = vector.load %arg12[%c0_62, %c0_63, %c0_64] : memref<1x8x32xf32, #tpu.memory_space<vmem>>, vector<1x8x32xf32>
    %145 = vector.shape_cast %144 : vector<1x8x32xf32> to vector<8x32xf32>
    %146 = vector.shape_cast %143 : vector<8x32xf32> to vector<1x8x32xf32>
    tpu.vector_store %arg12[%c0_62, %c0_63, %c0_64], %146 {strides = array<i32>} : memref<1x8x32xf32, #tpu.memory_space<vmem>>, vector<1x8x32xf32>,
    return
  }
  func.func @transform_0(%arg0: i32) -> (i32, i32, i32) {
    %c0_i32 = arith.constant 0 : i32
    %c0_i32_0 = arith.constant 0 : i32
    %c0_i32_1 = arith.constant 0 : i32
    return %arg0, %c0_i32, %c0_i32_0 : i32, i32, i32
  }
  func.func @transform_1(%arg0: i32) -> (i32, i32, i32) {
    %c0_i32 = arith.constant 0 : i32
    %c0_i32_0 = arith.constant 0 : i32
    %c0_i32_1 = arith.constant 0 : i32
    return %arg0, %c0_i32, %c0_i32_0 : i32, i32, i32
  }
  func.func @transform_2(%arg0: i32) -> (i32, i32) {
    %c0_i32 = arith.constant 0 : i32
    %c0_i32_0 = arith.constant 0 : i32
    %c0_i32_1 = arith.constant 0 : i32
    return %c0_i32, %c0_i32_0 : i32, i32
  }
  func.func @transform_3(%arg0: i32) -> (i32, i32) {
    %c0_i32 = arith.constant 0 : i32
    %c0_i32_0 = arith.constant 0 : i32
    %c0_i32_1 = arith.constant 0 : i32
    return %c0_i32, %c0_i32_0 : i32, i32
  }
  func.func @transform_4(%arg0: i32) -> (i32, i32) {
    %c0_i32 = arith.constant 0 : i32
    %c0_i32_0 = arith.constant 0 : i32
    %c0_i32_1 = arith.constant 0 : i32
    return %c0_i32, %c0_i32_0 : i32, i32
  }
  func.func @transform_5(%arg0: i32) -> (i32, i32) {
    %c0_i32 = arith.constant 0 : i32
    %c0_i32_0 = arith.constant 0 : i32
    %c0_i32_1 = arith.constant 0 : i32
    return %c0_i32, %c0_i32_0 : i32, i32
  }
  func.func @transform_6(%arg0: i32) -> (i32, i32) {
    %c0_i32 = arith.constant 0 : i32
    %c0_i32_0 = arith.constant 0 : i32
    %c0_i32_1 = arith.constant 0 : i32
    return %c0_i32, %c0_i32_0 : i32, i32
  }
  func.func @transform_7(%arg0: i32) -> (i32, i32) {
    %c0_i32 = arith.constant 0 : i32
    %c0_i32_0 = arith.constant 0 : i32
    %c0_i32_1 = arith.constant 0 : i32
    return %c0_i32, %c0_i32_0 : i32, i32
  }
  func.func @transform_8(%arg0: i32) -> (i32, i32) {
    %c0_i32 = arith.constant 0 : i32
    %c0_i32_0 = arith.constant 0 : i32
    %c0_i32_1 = arith.constant 0 : i32
    return %c0_i32, %c0_i32_0 : i32, i32
  }
  func.func @transform_9(%arg0: i32) -> (i32, i32) {
    %c0_i32 = arith.constant 0 : i32
    %c0_i32_0 = arith.constant 0 : i32
    %c0_i32_1 = arith.constant 0 : i32
    return %c0_i32, %c0_i32_0 : i32, i32
  }
  func.func @transform_10(%arg0: i32) -> (i32, i32, i32, i32) {
    %c0_i32 = arith.constant 0 : i32
    %c0_i32_0 = arith.constant 0 : i32
    %c0_i32_1 = arith.constant 0 : i32
    %c0_i32_2 = arith.constant 0 : i32
    return %arg0, %c0_i32, %c0_i32_0, %c0_i32_1 : i32, i32, i32, i32
  }
  func.func @transform_11(%arg0: i32) -> (i32, i32, i32) {
    %c0_i32 = arith.constant 0 : i32
    %c0_i32_0 = arith.constant 0 : i32
    %c0_i32_1 = arith.constant 0 : i32
    return %arg0, %c0_i32, %c0_i32_0 : i32, i32, i32
  }
}

module attributes {stable_mosaic.version = 11 : i64} {
  func.func @_self_attn_kernel(%arg0: i32, %arg1: memref<1x8x32xf32, #tpu.memory_space<vmem>>, %arg2: memref<1x32xf32, #tpu.memory_space<vmem>>, %arg3: memref<1x32xf32, #tpu.memory_space<vmem>>, %arg4: memref<32x96xbf16, #tpu.memory_space<vmem>>, %arg5: memref<1x96xf32, #tpu.memory_space<vmem>>, %arg6: memref<32x32xbf16, #tpu.memory_space<vmem>>, %arg7: memref<1x32xf32, #tpu.memory_space<vmem>>, %arg8: memref<1x1x8x8xf32, #tpu.memory_space<vmem>>, %arg9: memref<1x8x32xf32, #tpu.memory_space<vmem>>, %arg10: memref<8x32xf32, #tpu.memory_space<vmem>>) attributes {dimension_semantics = [#tpu.dimension_semantics<parallel>], iteration_bounds = array<i64: 2>, scalar_prefetch = 0 : i64, scratch_operands = 1 : i64, tpu.core_type = #tpu.core_type<tc>, window_params = [{transform_indices = @transform_0, window_bounds = array<i64: 1, 8, 32>}, {pipeline_mode = #tpu.pipeline_mode<synchronous>, transform_indices = @transform_1, window_bounds = array<i64: 1, 32>}, {pipeline_mode = #tpu.pipeline_mode<synchronous>, transform_indices = @transform_2, window_bounds = array<i64: 1, 32>}, {pipeline_mode = #tpu.pipeline_mode<synchronous>, transform_indices = @transform_3, window_bounds = array<i64: 32, 96>}, {pipeline_mode = #tpu.pipeline_mode<synchronous>, transform_indices = @transform_4, window_bounds = array<i64: 1, 96>}, {pipeline_mode = #tpu.pipeline_mode<synchronous>, transform_indices = @transform_5, window_bounds = array<i64: 32, 32>}, {pipeline_mode = #tpu.pipeline_mode<synchronous>, transform_indices = @transform_6, window_bounds = array<i64: 1, 32>}, {transform_indices = @transform_7, window_bounds = array<i64: 1, 1, 8, 8>}, {transform_indices = @transform_8, window_bounds = array<i64: 1, 8, 32>}]} {
    %c0 = arith.constant 0 : index
    %c0_0 = arith.constant 0 : index
    %c0_1 = arith.constant 0 : index
    %0 = vector.load %arg1[%c0, %c0_0, %c0_1] : memref<1x8x32xf32, #tpu.memory_space<vmem>>, vector<1x8x32xf32>
    %1 = vector.shape_cast %0 : vector<1x8x32xf32> to vector<8x32xf32>
    %c0_2 = arith.constant 0 : index
    %c0_3 = arith.constant 0 : index
    %2 = vector.load %arg2[%c0_2, %c0_3] : memref<1x32xf32, #tpu.memory_space<vmem>>, vector<1x32xf32>
    %c0_4 = arith.constant 0 : index
    %c0_5 = arith.constant 0 : index
    %3 = vector.load %arg3[%c0_4, %c0_5] : memref<1x32xf32, #tpu.memory_space<vmem>>, vector<1x32xf32>
    %cst = arith.constant dense<0.000000e+00> : vector<8xf32>
    %4 = vector.multi_reduction <add>, %1, %cst [1] : vector<8x32xf32> to vector<8xf32>
    %5 = vector.shape_cast %4 : vector<8xf32> to vector<8x1xf32>
    %cst_6 = arith.constant 3.200000e+01 : f32
    %6 = vector.broadcast %cst_6 : f32 to vector<8x1xf32>
    %7 = arith.divf %5, %6 : vector<8x1xf32>
    %8 = vector.broadcast %7 : vector<8x1xf32> to vector<8x32xf32>
    %9 = arith.subf %1, %8 : vector<8x32xf32>
    %10 = arith.mulf %9, %9 : vector<8x32xf32>
    %cst_7 = arith.constant dense<0.000000e+00> : vector<8xf32>
    %11 = vector.multi_reduction <add>, %10, %cst_7 [1] : vector<8x32xf32> to vector<8xf32>
    %12 = vector.shape_cast %11 : vector<8xf32> to vector<8x1xf32>
    %cst_8 = arith.constant 0.0322580636 : f32
    %13 = vector.broadcast %cst_8 : f32 to vector<8x1xf32>
    %14 = arith.mulf %12, %13 : vector<8x1xf32>
    %15 = math.sqrt %14 : vector<8x1xf32>
    %cst_9 = arith.constant 9.99999997E-7 : f32
    %16 = vector.broadcast %cst_9 : f32 to vector<8x1xf32>
    %17 = arith.addf %15, %16 : vector<8x1xf32>
    %cst_10 = arith.constant 1.000000e+00 : f32
    %18 = vector.broadcast %cst_10 : f32 to vector<8x1xf32>
    %19 = arith.divf %18, %17 : vector<8x1xf32>
    %20 = vector.broadcast %2 : vector<1x32xf32> to vector<8x32xf32>
    %21 = arith.mulf %20, %9 : vector<8x32xf32>
    %22 = vector.broadcast %19 : vector<8x1xf32> to vector<8x32xf32>
    %23 = arith.mulf %21, %22 : vector<8x32xf32>
    %24 = vector.broadcast %3 : vector<1x32xf32> to vector<8x32xf32>
    %25 = arith.addf %23, %24 : vector<8x32xf32>
    %26 = arith.truncf %25 : vector<8x32xf32> to vector<8x32xbf16>
    %c0_11 = arith.constant 0 : index
    %c0_12 = arith.constant 0 : index
    %27 = vector.load %arg4[%c0_11, %c0_12] : memref<32x96xbf16, #tpu.memory_space<vmem>>, vector<32x96xbf16>
    %cst_13 = arith.constant dense<0.000000e+00> : vector<8x96xf32>
    %28 = tpu.matmul %26, %27, %cst_13 {dimension_numbers = #tpu.dot_dimension_numbers<[1], [0], [0], [1], [0, 0, 1, 1], [], []>} : vector<8x32xbf16>, vector<32x96xbf16>, vector<8x96xf32> -> vector<8x96xf32>
    %c0_14 = arith.constant 0 : index
    %c0_15 = arith.constant 0 : index
    %29 = vector.load %arg5[%c0_14, %c0_15] : memref<1x96xf32, #tpu.memory_space<vmem>>, vector<1x96xf32>
    %30 = vector.broadcast %29 : vector<1x96xf32> to vector<8x96xf32>
    %31 = arith.addf %28, %30 : vector<8x96xf32>
    %32 = vector.extract_strided_slice %31 {offsets = [0, 0], sizes = [8, 32], strides = [1, 1]} : vector<8x96xf32> to vector<8x32xf32>
    %33 = vector.extract_strided_slice %31 {offsets = [0, 32], sizes = [8, 32], strides = [1, 1]} : vector<8x96xf32> to vector<8x32xf32>
    %34 = vector.extract_strided_slice %31 {offsets = [0, 64], sizes = [8, 32], strides = [1, 1]} : vector<8x96xf32> to vector<8x32xf32>
    %cst_16 = arith.constant 0.353553385 : f32
    %35 = vector.broadcast %cst_16 : f32 to vector<8x32xf32>
    %36 = arith.mulf %32, %35 : vector<8x32xf32>
    %c0_17 = arith.constant 0 : index
    %c0_18 = arith.constant 0 : index
    %c0_19 = arith.constant 0 : index
    %c0_20 = arith.constant 0 : index
    %37 = vector.load %arg8[%c0_17, %c0_18, %c0_19, %c0_20] : memref<1x1x8x8xf32, #tpu.memory_space<vmem>>, vector<1x1x8x8xf32>
    %38 = vector.shape_cast %37 : vector<1x1x8x8xf32> to vector<8x8xf32>
    %cst_21 = arith.constant 0.000000e+00 : f32
    %39 = vector.broadcast %cst_21 : f32 to vector<8x8xf32>
    %40 = arith.cmpf oeq, %38, %39 : vector<8x8xf32>
    %41 = vector.extract_strided_slice %36 {offsets = [0, 0], sizes = [8, 8], strides = [1, 1]} : vector<8x32xf32> to vector<8x8xf32>
    %42 = arith.truncf %41 : vector<8x8xf32> to vector<8x8xbf16>
    %43 = vector.extract_strided_slice %33 {offsets = [0, 0], sizes = [8, 8], strides = [1, 1]} : vector<8x32xf32> to vector<8x8xf32>
    %44 = arith.truncf %43 : vector<8x8xf32> to vector<8x8xbf16>
    %45 = vector.extract_strided_slice %34 {offsets = [0, 0], sizes = [8, 8], strides = [1, 1]} : vector<8x32xf32> to vector<8x8xf32>
    %46 = arith.truncf %45 : vector<8x8xf32> to vector<8x8xbf16>
    %cst_22 = arith.constant dense<0.000000e+00> : vector<8x8xf32>
    %47 = tpu.matmul %42, %44, %cst_22 {dimension_numbers = #tpu.dot_dimension_numbers<[1], [1], [0], [0], [0, 0, 1, 0], [], []>} : vector<8x8xbf16>, vector<8x8xbf16>, vector<8x8xf32> -> vector<8x8xf32>
    %cst_23 = arith.constant -1.000000e+09 : f32
    %48 = vector.broadcast %cst_23 : f32 to vector<8x8xf32>
    %49 = arith.select %40, %48, %47 : vector<8x8xi1>, vector<8x8xf32>
    %cst_24 = arith.constant dense<0xFF800000> : vector<8xf32>
    %50 = vector.multi_reduction <maximumf>, %49, %cst_24 [1] : vector<8x8xf32> to vector<8xf32>
    %51 = vector.shape_cast %50 : vector<8xf32> to vector<8x1xf32>
    %52 = vector.broadcast %51 : vector<8x1xf32> to vector<8x8xf32>
    %53 = arith.subf %49, %52 : vector<8x8xf32>
    %54 = math.exp %53 : vector<8x8xf32>
    %cst_25 = arith.constant dense<0.000000e+00> : vector<8xf32>
    %55 = vector.multi_reduction <add>, %54, %cst_25 [1] : vector<8x8xf32> to vector<8xf32>
    %56 = vector.shape_cast %55 : vector<8xf32> to vector<8x1xf32>
    %57 = tpu.reciprocal %56 {approx = true} : vector<8x1xf32> -> vector<8x1xf32>
    %58 = vector.broadcast %57 : vector<8x1xf32> to vector<8x8xf32>
    %59 = arith.mulf %54, %58 : vector<8x8xf32>
    %60 = arith.truncf %59 : vector<8x8xf32> to vector<8x8xbf16>
    %cst_26 = arith.constant dense<0.000000e+00> : vector<8x8xf32>
    %61 = tpu.matmul %60, %46, %cst_26 {dimension_numbers = #tpu.dot_dimension_numbers<[1], [0], [0], [1], [0, 0, 1, 1], [], []>} : vector<8x8xbf16>, vector<8x8xbf16>, vector<8x8xf32> -> vector<8x8xf32>
    %c0_27 = arith.constant 0 : index
    %c0_28 = arith.constant 0 : index
    %62 = vector.load %arg10[%c0_27, %c0_28] : memref<8x32xf32, #tpu.memory_space<vmem>>, vector<8x8xf32>
    tpu.vector_store %arg10[%c0_27, %c0_28], %61 {strides = array<i32>} : memref<8x32xf32, #tpu.memory_space<vmem>>, vector<8x8xf32>,
    %63 = vector.extract_strided_slice %36 {offsets = [0, 8], sizes = [8, 8], strides = [1, 1]} : vector<8x32xf32> to vector<8x8xf32>
    %64 = arith.truncf %63 : vector<8x8xf32> to vector<8x8xbf16>
    %65 = vector.extract_strided_slice %33 {offsets = [0, 8], sizes = [8, 8], strides = [1, 1]} : vector<8x32xf32> to vector<8x8xf32>
    %66 = arith.truncf %65 : vector<8x8xf32> to vector<8x8xbf16>
    %67 = vector.extract_strided_slice %34 {offsets = [0, 8], sizes = [8, 8], strides = [1, 1]} : vector<8x32xf32> to vector<8x8xf32>
    %68 = arith.truncf %67 : vector<8x8xf32> to vector<8x8xbf16>
    %cst_29 = arith.constant dense<0.000000e+00> : vector<8x8xf32>
    %69 = tpu.matmul %64, %66, %cst_29 {dimension_numbers = #tpu.dot_dimension_numbers<[1], [1], [0], [0], [0, 0, 1, 0], [], []>} : vector<8x8xbf16>, vector<8x8xbf16>, vector<8x8xf32> -> vector<8x8xf32>
    %cst_30 = arith.constant -1.000000e+09 : f32
    %70 = vector.broadcast %cst_30 : f32 to vector<8x8xf32>
    %71 = arith.select %40, %70, %69 : vector<8x8xi1>, vector<8x8xf32>
    %cst_31 = arith.constant dense<0xFF800000> : vector<8xf32>
    %72 = vector.multi_reduction <maximumf>, %71, %cst_31 [1] : vector<8x8xf32> to vector<8xf32>
    %73 = vector.shape_cast %72 : vector<8xf32> to vector<8x1xf32>
    %74 = vector.broadcast %73 : vector<8x1xf32> to vector<8x8xf32>
    %75 = arith.subf %71, %74 : vector<8x8xf32>
    %76 = math.exp %75 : vector<8x8xf32>
    %cst_32 = arith.constant dense<0.000000e+00> : vector<8xf32>
    %77 = vector.multi_reduction <add>, %76, %cst_32 [1] : vector<8x8xf32> to vector<8xf32>
    %78 = vector.shape_cast %77 : vector<8xf32> to vector<8x1xf32>
    %79 = tpu.reciprocal %78 {approx = true} : vector<8x1xf32> -> vector<8x1xf32>
    %80 = vector.broadcast %79 : vector<8x1xf32> to vector<8x8xf32>
    %81 = arith.mulf %76, %80 : vector<8x8xf32>
    %82 = arith.truncf %81 : vector<8x8xf32> to vector<8x8xbf16>
    %cst_33 = arith.constant dense<0.000000e+00> : vector<8x8xf32>
    %83 = tpu.matmul %82, %68, %cst_33 {dimension_numbers = #tpu.dot_dimension_numbers<[1], [0], [0], [1], [0, 0, 1, 1], [], []>} : vector<8x8xbf16>, vector<8x8xbf16>, vector<8x8xf32> -> vector<8x8xf32>
    %c0_34 = arith.constant 0 : index
    %c8 = arith.constant 8 : index
    %84 = vector.load %arg10[%c0_34, %c8] : memref<8x32xf32, #tpu.memory_space<vmem>>, vector<8x8xf32>
    tpu.vector_store %arg10[%c0_34, %c8], %83 {strides = array<i32>} : memref<8x32xf32, #tpu.memory_space<vmem>>, vector<8x8xf32>,
    %85 = vector.extract_strided_slice %36 {offsets = [0, 16], sizes = [8, 8], strides = [1, 1]} : vector<8x32xf32> to vector<8x8xf32>
    %86 = arith.truncf %85 : vector<8x8xf32> to vector<8x8xbf16>
    %87 = vector.extract_strided_slice %33 {offsets = [0, 16], sizes = [8, 8], strides = [1, 1]} : vector<8x32xf32> to vector<8x8xf32>
    %88 = arith.truncf %87 : vector<8x8xf32> to vector<8x8xbf16>
    %89 = vector.extract_strided_slice %34 {offsets = [0, 16], sizes = [8, 8], strides = [1, 1]} : vector<8x32xf32> to vector<8x8xf32>
    %90 = arith.truncf %89 : vector<8x8xf32> to vector<8x8xbf16>
    %cst_35 = arith.constant dense<0.000000e+00> : vector<8x8xf32>
    %91 = tpu.matmul %86, %88, %cst_35 {dimension_numbers = #tpu.dot_dimension_numbers<[1], [1], [0], [0], [0, 0, 1, 0], [], []>} : vector<8x8xbf16>, vector<8x8xbf16>, vector<8x8xf32> -> vector<8x8xf32>
    %cst_36 = arith.constant -1.000000e+09 : f32
    %92 = vector.broadcast %cst_36 : f32 to vector<8x8xf32>
    %93 = arith.select %40, %92, %91 : vector<8x8xi1>, vector<8x8xf32>
    %cst_37 = arith.constant dense<0xFF800000> : vector<8xf32>
    %94 = vector.multi_reduction <maximumf>, %93, %cst_37 [1] : vector<8x8xf32> to vector<8xf32>
    %95 = vector.shape_cast %94 : vector<8xf32> to vector<8x1xf32>
    %96 = vector.broadcast %95 : vector<8x1xf32> to vector<8x8xf32>
    %97 = arith.subf %93, %96 : vector<8x8xf32>
    %98 = math.exp %97 : vector<8x8xf32>
    %cst_38 = arith.constant dense<0.000000e+00> : vector<8xf32>
    %99 = vector.multi_reduction <add>, %98, %cst_38 [1] : vector<8x8xf32> to vector<8xf32>
    %100 = vector.shape_cast %99 : vector<8xf32> to vector<8x1xf32>
    %101 = tpu.reciprocal %100 {approx = true} : vector<8x1xf32> -> vector<8x1xf32>
    %102 = vector.broadcast %101 : vector<8x1xf32> to vector<8x8xf32>
    %103 = arith.mulf %98, %102 : vector<8x8xf32>
    %104 = arith.truncf %103 : vector<8x8xf32> to vector<8x8xbf16>
    %cst_39 = arith.constant dense<0.000000e+00> : vector<8x8xf32>
    %105 = tpu.matmul %104, %90, %cst_39 {dimension_numbers = #tpu.dot_dimension_numbers<[1], [0], [0], [1], [0, 0, 1, 1], [], []>} : vector<8x8xbf16>, vector<8x8xbf16>, vector<8x8xf32> -> vector<8x8xf32>
    %c0_40 = arith.constant 0 : index
    %c16 = arith.constant 16 : index
    %106 = vector.load %arg10[%c0_40, %c16] : memref<8x32xf32, #tpu.memory_space<vmem>>, vector<8x8xf32>
    tpu.vector_store %arg10[%c0_40, %c16], %105 {strides = array<i32>} : memref<8x32xf32, #tpu.memory_space<vmem>>, vector<8x8xf32>,
    %107 = vector.extract_strided_slice %36 {offsets = [0, 24], sizes = [8, 8], strides = [1, 1]} : vector<8x32xf32> to vector<8x8xf32>
    %108 = arith.truncf %107 : vector<8x8xf32> to vector<8x8xbf16>
    %109 = vector.extract_strided_slice %33 {offsets = [0, 24], sizes = [8, 8], strides = [1, 1]} : vector<8x32xf32> to vector<8x8xf32>
    %110 = arith.truncf %109 : vector<8x8xf32> to vector<8x8xbf16>
    %111 = vector.extract_strided_slice %34 {offsets = [0, 24], sizes = [8, 8], strides = [1, 1]} : vector<8x32xf32> to vector<8x8xf32>
    %112 = arith.truncf %111 : vector<8x8xf32> to vector<8x8xbf16>
    %cst_41 = arith.constant dense<0.000000e+00> : vector<8x8xf32>
    %113 = tpu.matmul %108, %110, %cst_41 {dimension_numbers = #tpu.dot_dimension_numbers<[1], [1], [0], [0], [0, 0, 1, 0], [], []>} : vector<8x8xbf16>, vector<8x8xbf16>, vector<8x8xf32> -> vector<8x8xf32>
    %cst_42 = arith.constant -1.000000e+09 : f32
    %114 = vector.broadcast %cst_42 : f32 to vector<8x8xf32>
    %115 = arith.select %40, %114, %113 : vector<8x8xi1>, vector<8x8xf32>
    %cst_43 = arith.constant dense<0xFF800000> : vector<8xf32>
    %116 = vector.multi_reduction <maximumf>, %115, %cst_43 [1] : vector<8x8xf32> to vector<8xf32>
    %117 = vector.shape_cast %116 : vector<8xf32> to vector<8x1xf32>
    %118 = vector.broadcast %117 : vector<8x1xf32> to vector<8x8xf32>
    %119 = arith.subf %115, %118 : vector<8x8xf32>
    %120 = math.exp %119 : vector<8x8xf32>
    %cst_44 = arith.constant dense<0.000000e+00> : vector<8xf32>
    %121 = vector.multi_reduction <add>, %120, %cst_44 [1] : vector<8x8xf32> to vector<8xf32>
    %122 = vector.shape_cast %121 : vector<8xf32> to vector<8x1xf32>
    %123 = tpu.reciprocal %122 {approx = true} : vector<8x1xf32> -> vector<8x1xf32>
    %124 = vector.broadcast %123 : vector<8x1xf32> to vector<8x8xf32>
    %125 = arith.mulf %120, %124 : vector<8x8xf32>
    %126 = arith.truncf %125 : vector<8x8xf32> to vector<8x8xbf16>
    %cst_45 = arith.constant dense<0.000000e+00> : vector<8x8xf32>
    %127 = tpu.matmul %126, %112, %cst_45 {dimension_numbers = #tpu.dot_dimension_numbers<[1], [0], [0], [1], [0, 0, 1, 1], [], []>} : vector<8x8xbf16>, vector<8x8xbf16>, vector<8x8xf32> -> vector<8x8xf32>
    %c0_46 = arith.constant 0 : index
    %c24 = arith.constant 24 : index
    %128 = vector.load %arg10[%c0_46, %c24] : memref<8x32xf32, #tpu.memory_space<vmem>>, vector<8x8xf32>
    tpu.vector_store %arg10[%c0_46, %c24], %127 {strides = array<i32>} : memref<8x32xf32, #tpu.memory_space<vmem>>, vector<8x8xf32>,
    %c0_47 = arith.constant 0 : index
    %c0_48 = arith.constant 0 : index
    %129 = vector.load %arg10[%c0_47, %c0_48] : memref<8x32xf32, #tpu.memory_space<vmem>>, vector<8x32xf32>
    %130 = arith.truncf %129 : vector<8x32xf32> to vector<8x32xbf16>
    %c0_49 = arith.constant 0 : index
    %c0_50 = arith.constant 0 : index
    %131 = vector.load %arg6[%c0_49, %c0_50] : memref<32x32xbf16, #tpu.memory_space<vmem>>, vector<32x32xbf16>
    %cst_51 = arith.constant dense<0.000000e+00> : vector<8x32xf32>
    %132 = tpu.matmul %130, %131, %cst_51 {dimension_numbers = #tpu.dot_dimension_numbers<[1], [0], [0], [1], [0, 0, 1, 1], [], []>} : vector<8x32xbf16>, vector<32x32xbf16>, vector<8x32xf32> -> vector<8x32xf32>
    %133 = arith.addf %1, %132 : vector<8x32xf32>
    %c0_52 = arith.constant 0 : index
    %c0_53 = arith.constant 0 : index
    %134 = vector.load %arg7[%c0_52, %c0_53] : memref<1x32xf32, #tpu.memory_space<vmem>>, vector<1x32xf32>
    %135 = vector.broadcast %134 : vector<1x32xf32> to vector<8x32xf32>
    %136 = arith.addf %133, %135 : vector<8x32xf32>
    %c0_54 = arith.constant 0 : index
    %c0_55 = arith.constant 0 : index
    %c0_56 = arith.constant 0 : index
    %137 = vector.load %arg9[%c0_54, %c0_55, %c0_56] : memref<1x8x32xf32, #tpu.memory_space<vmem>>, vector<1x8x32xf32>
    %138 = vector.shape_cast %137 : vector<1x8x32xf32> to vector<8x32xf32>
    %139 = vector.shape_cast %136 : vector<8x32xf32> to vector<1x8x32xf32>
    tpu.vector_store %arg9[%c0_54, %c0_55, %c0_56], %139 {strides = array<i32>} : memref<1x8x32xf32, #tpu.memory_space<vmem>>, vector<1x8x32xf32>,
    return
  }
  func.func @transform_0(%arg0: i32) -> (i32, i32, i32) {
    %c0_i32 = arith.constant 0 : i32
    %c0_i32_0 = arith.constant 0 : i32
    %c0_i32_1 = arith.constant 0 : i32
    return %arg0, %c0_i32, %c0_i32_0 : i32, i32, i32
  }
  func.func @transform_1(%arg0: i32) -> (i32, i32) {
    %c0_i32 = arith.constant 0 : i32
    %c0_i32_0 = arith.constant 0 : i32
    %c0_i32_1 = arith.constant 0 : i32
    return %c0_i32, %c0_i32_0 : i32, i32
  }
  func.func @transform_2(%arg0: i32) -> (i32, i32) {
    %c0_i32 = arith.constant 0 : i32
    %c0_i32_0 = arith.constant 0 : i32
    %c0_i32_1 = arith.constant 0 : i32
    return %c0_i32, %c0_i32_0 : i32, i32
  }
  func.func @transform_3(%arg0: i32) -> (i32, i32) {
    %c0_i32 = arith.constant 0 : i32
    %c0_i32_0 = arith.constant 0 : i32
    %c0_i32_1 = arith.constant 0 : i32
    return %c0_i32, %c0_i32_0 : i32, i32
  }
  func.func @transform_4(%arg0: i32) -> (i32, i32) {
    %c0_i32 = arith.constant 0 : i32
    %c0_i32_0 = arith.constant 0 : i32
    %c0_i32_1 = arith.constant 0 : i32
    return %c0_i32, %c0_i32_0 : i32, i32
  }
  func.func @transform_5(%arg0: i32) -> (i32, i32) {
    %c0_i32 = arith.constant 0 : i32
    %c0_i32_0 = arith.constant 0 : i32
    %c0_i32_1 = arith.constant 0 : i32
    return %c0_i32, %c0_i32_0 : i32, i32
  }
  func.func @transform_6(%arg0: i32) -> (i32, i32) {
    %c0_i32 = arith.constant 0 : i32
    %c0_i32_0 = arith.constant 0 : i32
    %c0_i32_1 = arith.constant 0 : i32
    return %c0_i32, %c0_i32_0 : i32, i32
  }
  func.func @transform_7(%arg0: i32) -> (i32, i32, i32, i32) {
    %c0_i32 = arith.constant 0 : i32
    %c0_i32_0 = arith.constant 0 : i32
    %c0_i32_1 = arith.constant 0 : i32
    %c0_i32_2 = arith.constant 0 : i32
    return %arg0, %c0_i32, %c0_i32_0, %c0_i32_1 : i32, i32, i32, i32
  }
  func.func @transform_8(%arg0: i32) -> (i32, i32, i32) {
    %c0_i32 = arith.constant 0 : i32
    %c0_i32_0 = arith.constant 0 : i32
    %c0_i32_1 = arith.constant 0 : i32
    return %arg0, %c0_i32, %c0_i32_0 : i32, i32, i32
  }
}

module attributes {stable_mosaic.version = 11 : i64} {
  func.func @_self_attn_kernel(%arg0: i32, %arg1: memref<1x8x32xf32, #tpu.memory_space<vmem>>, %arg2: memref<1x32xf32, #tpu.memory_space<vmem>>, %arg3: memref<1x32xf32, #tpu.memory_space<vmem>>, %arg4: memref<32x96xbf16, #tpu.memory_space<vmem>>, %arg5: memref<1x96xf32, #tpu.memory_space<vmem>>, %arg6: memref<32x32xbf16, #tpu.memory_space<vmem>>, %arg7: memref<1x32xf32, #tpu.memory_space<vmem>>, %arg8: memref<1x1x8x8xf32, #tpu.memory_space<vmem>>, %arg9: memref<1x8x32xf32, #tpu.memory_space<vmem>>, %arg10: memref<8x32xf32, #tpu.memory_space<vmem>>) attributes {dimension_semantics = [#tpu.dimension_semantics<parallel>], iteration_bounds = array<i64: 2>, scalar_prefetch = 0 : i64, scratch_operands = 1 : i64, tpu.core_type = #tpu.core_type<tc>, window_params = [{transform_indices = @transform_0, window_bounds = array<i64: 1, 8, 32>}, {pipeline_mode = #tpu.pipeline_mode<synchronous>, transform_indices = @transform_1, window_bounds = array<i64: 1, 32>}, {pipeline_mode = #tpu.pipeline_mode<synchronous>, transform_indices = @transform_2, window_bounds = array<i64: 1, 32>}, {pipeline_mode = #tpu.pipeline_mode<synchronous>, transform_indices = @transform_3, window_bounds = array<i64: 32, 96>}, {pipeline_mode = #tpu.pipeline_mode<synchronous>, transform_indices = @transform_4, window_bounds = array<i64: 1, 96>}, {pipeline_mode = #tpu.pipeline_mode<synchronous>, transform_indices = @transform_5, window_bounds = array<i64: 32, 32>}, {pipeline_mode = #tpu.pipeline_mode<synchronous>, transform_indices = @transform_6, window_bounds = array<i64: 1, 32>}, {transform_indices = @transform_7, window_bounds = array<i64: 1, 1, 8, 8>}, {transform_indices = @transform_8, window_bounds = array<i64: 1, 8, 32>}]} {
    %c0 = arith.constant 0 : index
    %c0_0 = arith.constant 0 : index
    %c0_1 = arith.constant 0 : index
    %0 = vector.load %arg1[%c0, %c0_0, %c0_1] : memref<1x8x32xf32, #tpu.memory_space<vmem>>, vector<1x8x32xf32>
    %1 = vector.shape_cast %0 : vector<1x8x32xf32> to vector<8x32xf32>
    %c0_2 = arith.constant 0 : index
    %c0_3 = arith.constant 0 : index
    %2 = vector.load %arg2[%c0_2, %c0_3] : memref<1x32xf32, #tpu.memory_space<vmem>>, vector<1x32xf32>
    %c0_4 = arith.constant 0 : index
    %c0_5 = arith.constant 0 : index
    %3 = vector.load %arg3[%c0_4, %c0_5] : memref<1x32xf32, #tpu.memory_space<vmem>>, vector<1x32xf32>
    %cst = arith.constant dense<0.000000e+00> : vector<8xf32>
    %4 = vector.multi_reduction <add>, %1, %cst [1] : vector<8x32xf32> to vector<8xf32>
    %5 = vector.shape_cast %4 : vector<8xf32> to vector<8x1xf32>
    %cst_6 = arith.constant 3.200000e+01 : f32
    %6 = vector.broadcast %cst_6 : f32 to vector<8x1xf32>
    %7 = arith.divf %5, %6 : vector<8x1xf32>
    %8 = vector.broadcast %7 : vector<8x1xf32> to vector<8x32xf32>
    %9 = arith.subf %1, %8 : vector<8x32xf32>
    %10 = arith.mulf %9, %9 : vector<8x32xf32>
    %cst_7 = arith.constant dense<0.000000e+00> : vector<8xf32>
    %11 = vector.multi_reduction <add>, %10, %cst_7 [1] : vector<8x32xf32> to vector<8xf32>
    %12 = vector.shape_cast %11 : vector<8xf32> to vector<8x1xf32>
    %cst_8 = arith.constant 0.0322580636 : f32
    %13 = vector.broadcast %cst_8 : f32 to vector<8x1xf32>
    %14 = arith.mulf %12, %13 : vector<8x1xf32>
    %15 = math.sqrt %14 : vector<8x1xf32>
    %cst_9 = arith.constant 9.99999997E-7 : f32
    %16 = vector.broadcast %cst_9 : f32 to vector<8x1xf32>
    %17 = arith.addf %15, %16 : vector<8x1xf32>
    %cst_10 = arith.constant 1.000000e+00 : f32
    %18 = vector.broadcast %cst_10 : f32 to vector<8x1xf32>
    %19 = arith.divf %18, %17 : vector<8x1xf32>
    %20 = vector.broadcast %2 : vector<1x32xf32> to vector<8x32xf32>
    %21 = arith.mulf %20, %9 : vector<8x32xf32>
    %22 = vector.broadcast %19 : vector<8x1xf32> to vector<8x32xf32>
    %23 = arith.mulf %21, %22 : vector<8x32xf32>
    %24 = vector.broadcast %3 : vector<1x32xf32> to vector<8x32xf32>
    %25 = arith.addf %23, %24 : vector<8x32xf32>
    %26 = arith.truncf %25 : vector<8x32xf32> to vector<8x32xbf16>
    %c0_11 = arith.constant 0 : index
    %c0_12 = arith.constant 0 : index
    %27 = vector.load %arg4[%c0_11, %c0_12] : memref<32x96xbf16, #tpu.memory_space<vmem>>, vector<32x96xbf16>
    %cst_13 = arith.constant dense<0.000000e+00> : vector<8x96xf32>
    %28 = tpu.matmul %26, %27, %cst_13 {dimension_numbers = #tpu.dot_dimension_numbers<[1], [0], [0], [1], [0, 0, 1, 1], [], []>} : vector<8x32xbf16>, vector<32x96xbf16>, vector<8x96xf32> -> vector<8x96xf32>
    %c0_14 = arith.constant 0 : index
    %c0_15 = arith.constant 0 : index
    %29 = vector.load %arg5[%c0_14, %c0_15] : memref<1x96xf32, #tpu.memory_space<vmem>>, vector<1x96xf32>
    %30 = vector.broadcast %29 : vector<1x96xf32> to vector<8x96xf32>
    %31 = arith.addf %28, %30 : vector<8x96xf32>
    %32 = vector.extract_strided_slice %31 {offsets = [0, 0], sizes = [8, 32], strides = [1, 1]} : vector<8x96xf32> to vector<8x32xf32>
    %33 = vector.extract_strided_slice %31 {offsets = [0, 32], sizes = [8, 32], strides = [1, 1]} : vector<8x96xf32> to vector<8x32xf32>
    %34 = vector.extract_strided_slice %31 {offsets = [0, 64], sizes = [8, 32], strides = [1, 1]} : vector<8x96xf32> to vector<8x32xf32>
    %cst_16 = arith.constant 0.353553385 : f32
    %35 = vector.broadcast %cst_16 : f32 to vector<8x32xf32>
    %36 = arith.mulf %32, %35 : vector<8x32xf32>
    %c0_17 = arith.constant 0 : index
    %c0_18 = arith.constant 0 : index
    %c0_19 = arith.constant 0 : index
    %c0_20 = arith.constant 0 : index
    %37 = vector.load %arg8[%c0_17, %c0_18, %c0_19, %c0_20] : memref<1x1x8x8xf32, #tpu.memory_space<vmem>>, vector<1x1x8x8xf32>
    %38 = vector.shape_cast %37 : vector<1x1x8x8xf32> to vector<8x8xf32>
    %cst_21 = arith.constant 0.000000e+00 : f32
    %39 = vector.broadcast %cst_21 : f32 to vector<8x8xf32>
    %40 = arith.cmpf oeq, %38, %39 : vector<8x8xf32>
    %41 = vector.extract_strided_slice %36 {offsets = [0, 0], sizes = [8, 8], strides = [1, 1]} : vector<8x32xf32> to vector<8x8xf32>
    %42 = arith.truncf %41 : vector<8x8xf32> to vector<8x8xbf16>
    %43 = vector.extract_strided_slice %33 {offsets = [0, 0], sizes = [8, 8], strides = [1, 1]} : vector<8x32xf32> to vector<8x8xf32>
    %44 = arith.truncf %43 : vector<8x8xf32> to vector<8x8xbf16>
    %45 = vector.extract_strided_slice %34 {offsets = [0, 0], sizes = [8, 8], strides = [1, 1]} : vector<8x32xf32> to vector<8x8xf32>
    %46 = arith.truncf %45 : vector<8x8xf32> to vector<8x8xbf16>
    %cst_22 = arith.constant dense<0.000000e+00> : vector<8x8xf32>
    %47 = tpu.matmul %42, %44, %cst_22 {dimension_numbers = #tpu.dot_dimension_numbers<[1], [1], [0], [0], [0, 0, 1, 0], [], []>} : vector<8x8xbf16>, vector<8x8xbf16>, vector<8x8xf32> -> vector<8x8xf32>
    %cst_23 = arith.constant -1.000000e+09 : f32
    %48 = vector.broadcast %cst_23 : f32 to vector<8x8xf32>
    %49 = arith.select %40, %48, %47 : vector<8x8xi1>, vector<8x8xf32>
    %cst_24 = arith.constant dense<0xFF800000> : vector<8xf32>
    %50 = vector.multi_reduction <maximumf>, %49, %cst_24 [1] : vector<8x8xf32> to vector<8xf32>
    %51 = vector.shape_cast %50 : vector<8xf32> to vector<8x1xf32>
    %52 = vector.broadcast %51 : vector<8x1xf32> to vector<8x8xf32>
    %53 = arith.subf %49, %52 : vector<8x8xf32>
    %54 = math.exp %53 : vector<8x8xf32>
    %cst_25 = arith.constant dense<0.000000e+00> : vector<8xf32>
    %55 = vector.multi_reduction <add>, %54, %cst_25 [1] : vector<8x8xf32> to vector<8xf32>
    %56 = vector.shape_cast %55 : vector<8xf32> to vector<8x1xf32>
    %57 = tpu.reciprocal %56 {approx = true} : vector<8x1xf32> -> vector<8x1xf32>
    %58 = vector.broadcast %57 : vector<8x1xf32> to vector<8x8xf32>
    %59 = arith.mulf %54, %58 : vector<8x8xf32>
    %60 = arith.truncf %59 : vector<8x8xf32> to vector<8x8xbf16>
    %cst_26 = arith.constant dense<0.000000e+00> : vector<8x8xf32>
    %61 = tpu.matmul %60, %46, %cst_26 {dimension_numbers = #tpu.dot_dimension_numbers<[1], [0], [0], [1], [0, 0, 1, 1], [], []>} : vector<8x8xbf16>, vector<8x8xbf16>, vector<8x8xf32> -> vector<8x8xf32>
    %c0_27 = arith.constant 0 : index
    %c0_28 = arith.constant 0 : index
    %62 = vector.load %arg10[%c0_27, %c0_28] : memref<8x32xf32, #tpu.memory_space<vmem>>, vector<8x8xf32>
    tpu.vector_store %arg10[%c0_27, %c0_28], %61 {strides = array<i32>} : memref<8x32xf32, #tpu.memory_space<vmem>>, vector<8x8xf32>,
    %63 = vector.extract_strided_slice %36 {offsets = [0, 8], sizes = [8, 8], strides = [1, 1]} : vector<8x32xf32> to vector<8x8xf32>
    %64 = arith.truncf %63 : vector<8x8xf32> to vector<8x8xbf16>
    %65 = vector.extract_strided_slice %33 {offsets = [0, 8], sizes = [8, 8], strides = [1, 1]} : vector<8x32xf32> to vector<8x8xf32>
    %66 = arith.truncf %65 : vector<8x8xf32> to vector<8x8xbf16>
    %67 = vector.extract_strided_slice %34 {offsets = [0, 8], sizes = [8, 8], strides = [1, 1]} : vector<8x32xf32> to vector<8x8xf32>
    %68 = arith.truncf %67 : vector<8x8xf32> to vector<8x8xbf16>
    %cst_29 = arith.constant dense<0.000000e+00> : vector<8x8xf32>
    %69 = tpu.matmul %64, %66, %cst_29 {dimension_numbers = #tpu.dot_dimension_numbers<[1], [1], [0], [0], [0, 0, 1, 0], [], []>} : vector<8x8xbf16>, vector<8x8xbf16>, vector<8x8xf32> -> vector<8x8xf32>
    %cst_30 = arith.constant -1.000000e+09 : f32
    %70 = vector.broadcast %cst_30 : f32 to vector<8x8xf32>
    %71 = arith.select %40, %70, %69 : vector<8x8xi1>, vector<8x8xf32>
    %cst_31 = arith.constant dense<0xFF800000> : vector<8xf32>
    %72 = vector.multi_reduction <maximumf>, %71, %cst_31 [1] : vector<8x8xf32> to vector<8xf32>
    %73 = vector.shape_cast %72 : vector<8xf32> to vector<8x1xf32>
    %74 = vector.broadcast %73 : vector<8x1xf32> to vector<8x8xf32>
    %75 = arith.subf %71, %74 : vector<8x8xf32>
    %76 = math.exp %75 : vector<8x8xf32>
    %cst_32 = arith.constant dense<0.000000e+00> : vector<8xf32>
    %77 = vector.multi_reduction <add>, %76, %cst_32 [1] : vector<8x8xf32> to vector<8xf32>
    %78 = vector.shape_cast %77 : vector<8xf32> to vector<8x1xf32>
    %79 = tpu.reciprocal %78 {approx = true} : vector<8x1xf32> -> vector<8x1xf32>
    %80 = vector.broadcast %79 : vector<8x1xf32> to vector<8x8xf32>
    %81 = arith.mulf %76, %80 : vector<8x8xf32>
    %82 = arith.truncf %81 : vector<8x8xf32> to vector<8x8xbf16>
    %cst_33 = arith.constant dense<0.000000e+00> : vector<8x8xf32>
    %83 = tpu.matmul %82, %68, %cst_33 {dimension_numbers = #tpu.dot_dimension_numbers<[1], [0], [0], [1], [0, 0, 1, 1], [], []>} : vector<8x8xbf16>, vector<8x8xbf16>, vector<8x8xf32> -> vector<8x8xf32>
    %c0_34 = arith.constant 0 : index
    %c8 = arith.constant 8 : index
    %84 = vector.load %arg10[%c0_34, %c8] : memref<8x32xf32, #tpu.memory_space<vmem>>, vector<8x8xf32>
    tpu.vector_store %arg10[%c0_34, %c8], %83 {strides = array<i32>} : memref<8x32xf32, #tpu.memory_space<vmem>>, vector<8x8xf32>,
    %85 = vector.extract_strided_slice %36 {offsets = [0, 16], sizes = [8, 8], strides = [1, 1]} : vector<8x32xf32> to vector<8x8xf32>
    %86 = arith.truncf %85 : vector<8x8xf32> to vector<8x8xbf16>
    %87 = vector.extract_strided_slice %33 {offsets = [0, 16], sizes = [8, 8], strides = [1, 1]} : vector<8x32xf32> to vector<8x8xf32>
    %88 = arith.truncf %87 : vector<8x8xf32> to vector<8x8xbf16>
    %89 = vector.extract_strided_slice %34 {offsets = [0, 16], sizes = [8, 8], strides = [1, 1]} : vector<8x32xf32> to vector<8x8xf32>
    %90 = arith.truncf %89 : vector<8x8xf32> to vector<8x8xbf16>
    %cst_35 = arith.constant dense<0.000000e+00> : vector<8x8xf32>
    %91 = tpu.matmul %86, %88, %cst_35 {dimension_numbers = #tpu.dot_dimension_numbers<[1], [1], [0], [0], [0, 0, 1, 0], [], []>} : vector<8x8xbf16>, vector<8x8xbf16>, vector<8x8xf32> -> vector<8x8xf32>
    %cst_36 = arith.constant -1.000000e+09 : f32
    %92 = vector.broadcast %cst_36 : f32 to vector<8x8xf32>
    %93 = arith.select %40, %92, %91 : vector<8x8xi1>, vector<8x8xf32>
    %cst_37 = arith.constant dense<0xFF800000> : vector<8xf32>
    %94 = vector.multi_reduction <maximumf>, %93, %cst_37 [1] : vector<8x8xf32> to vector<8xf32>
    %95 = vector.shape_cast %94 : vector<8xf32> to vector<8x1xf32>
    %96 = vector.broadcast %95 : vector<8x1xf32> to vector<8x8xf32>
    %97 = arith.subf %93, %96 : vector<8x8xf32>
    %98 = math.exp %97 : vector<8x8xf32>
    %cst_38 = arith.constant dense<0.000000e+00> : vector<8xf32>
    %99 = vector.multi_reduction <add>, %98, %cst_38 [1] : vector<8x8xf32> to vector<8xf32>
    %100 = vector.shape_cast %99 : vector<8xf32> to vector<8x1xf32>
    %101 = tpu.reciprocal %100 {approx = true} : vector<8x1xf32> -> vector<8x1xf32>
    %102 = vector.broadcast %101 : vector<8x1xf32> to vector<8x8xf32>
    %103 = arith.mulf %98, %102 : vector<8x8xf32>
    %104 = arith.truncf %103 : vector<8x8xf32> to vector<8x8xbf16>
    %cst_39 = arith.constant dense<0.000000e+00> : vector<8x8xf32>
    %105 = tpu.matmul %104, %90, %cst_39 {dimension_numbers = #tpu.dot_dimension_numbers<[1], [0], [0], [1], [0, 0, 1, 1], [], []>} : vector<8x8xbf16>, vector<8x8xbf16>, vector<8x8xf32> -> vector<8x8xf32>
    %c0_40 = arith.constant 0 : index
    %c16 = arith.constant 16 : index
    %106 = vector.load %arg10[%c0_40, %c16] : memref<8x32xf32, #tpu.memory_space<vmem>>, vector<8x8xf32>
    tpu.vector_store %arg10[%c0_40, %c16], %105 {strides = array<i32>} : memref<8x32xf32, #tpu.memory_space<vmem>>, vector<8x8xf32>,
    %107 = vector.extract_strided_slice %36 {offsets = [0, 24], sizes = [8, 8], strides = [1, 1]} : vector<8x32xf32> to vector<8x8xf32>
    %108 = arith.truncf %107 : vector<8x8xf32> to vector<8x8xbf16>
    %109 = vector.extract_strided_slice %33 {offsets = [0, 24], sizes = [8, 8], strides = [1, 1]} : vector<8x32xf32> to vector<8x8xf32>
    %110 = arith.truncf %109 : vector<8x8xf32> to vector<8x8xbf16>
    %111 = vector.extract_strided_slice %34 {offsets = [0, 24], sizes = [8, 8], strides = [1, 1]} : vector<8x32xf32> to vector<8x8xf32>
    %112 = arith.truncf %111 : vector<8x8xf32> to vector<8x8xbf16>
    %cst_41 = arith.constant dense<0.000000e+00> : vector<8x8xf32>
    %113 = tpu.matmul %108, %110, %cst_41 {dimension_numbers = #tpu.dot_dimension_numbers<[1], [1], [0], [0], [0, 0, 1, 0], [], []>} : vector<8x8xbf16>, vector<8x8xbf16>, vector<8x8xf32> -> vector<8x8xf32>
    %cst_42 = arith.constant -1.000000e+09 : f32
    %114 = vector.broadcast %cst_42 : f32 to vector<8x8xf32>
    %115 = arith.select %40, %114, %113 : vector<8x8xi1>, vector<8x8xf32>
    %cst_43 = arith.constant dense<0xFF800000> : vector<8xf32>
    %116 = vector.multi_reduction <maximumf>, %115, %cst_43 [1] : vector<8x8xf32> to vector<8xf32>
    %117 = vector.shape_cast %116 : vector<8xf32> to vector<8x1xf32>
    %118 = vector.broadcast %117 : vector<8x1xf32> to vector<8x8xf32>
    %119 = arith.subf %115, %118 : vector<8x8xf32>
    %120 = math.exp %119 : vector<8x8xf32>
    %cst_44 = arith.constant dense<0.000000e+00> : vector<8xf32>
    %121 = vector.multi_reduction <add>, %120, %cst_44 [1] : vector<8x8xf32> to vector<8xf32>
    %122 = vector.shape_cast %121 : vector<8xf32> to vector<8x1xf32>
    %123 = tpu.reciprocal %122 {approx = true} : vector<8x1xf32> -> vector<8x1xf32>
    %124 = vector.broadcast %123 : vector<8x1xf32> to vector<8x8xf32>
    %125 = arith.mulf %120, %124 : vector<8x8xf32>
    %126 = arith.truncf %125 : vector<8x8xf32> to vector<8x8xbf16>
    %cst_45 = arith.constant dense<0.000000e+00> : vector<8x8xf32>
    %127 = tpu.matmul %126, %112, %cst_45 {dimension_numbers = #tpu.dot_dimension_numbers<[1], [0], [0], [1], [0, 0, 1, 1], [], []>} : vector<8x8xbf16>, vector<8x8xbf16>, vector<8x8xf32> -> vector<8x8xf32>
    %c0_46 = arith.constant 0 : index
    %c24 = arith.constant 24 : index
    %128 = vector.load %arg10[%c0_46, %c24] : memref<8x32xf32, #tpu.memory_space<vmem>>, vector<8x8xf32>
    tpu.vector_store %arg10[%c0_46, %c24], %127 {strides = array<i32>} : memref<8x32xf32, #tpu.memory_space<vmem>>, vector<8x8xf32>,
    %c0_47 = arith.constant 0 : index
    %c0_48 = arith.constant 0 : index
    %129 = vector.load %arg10[%c0_47, %c0_48] : memref<8x32xf32, #tpu.memory_space<vmem>>, vector<8x32xf32>
    %130 = arith.truncf %129 : vector<8x32xf32> to vector<8x32xbf16>
    %c0_49 = arith.constant 0 : index
    %c0_50 = arith.constant 0 : index
    %131 = vector.load %arg6[%c0_49, %c0_50] : memref<32x32xbf16, #tpu.memory_space<vmem>>, vector<32x32xbf16>
    %cst_51 = arith.constant dense<0.000000e+00> : vector<8x32xf32>
    %132 = tpu.matmul %130, %131, %cst_51 {dimension_numbers = #tpu.dot_dimension_numbers<[1], [0], [0], [1], [0, 0, 1, 1], [], []>} : vector<8x32xbf16>, vector<32x32xbf16>, vector<8x32xf32> -> vector<8x32xf32>
    %133 = arith.addf %1, %132 : vector<8x32xf32>
    %c0_52 = arith.constant 0 : index
    %c0_53 = arith.constant 0 : index
    %134 = vector.load %arg7[%c0_52, %c0_53] : memref<1x32xf32, #tpu.memory_space<vmem>>, vector<1x32xf32>
    %135 = vector.broadcast %134 : vector<1x32xf32> to vector<8x32xf32>
    %136 = arith.addf %133, %135 : vector<8x32xf32>
    %c0_54 = arith.constant 0 : index
    %c0_55 = arith.constant 0 : index
    %c0_56 = arith.constant 0 : index
    %137 = vector.load %arg9[%c0_54, %c0_55, %c0_56] : memref<1x8x32xf32, #tpu.memory_space<vmem>>, vector<1x8x32xf32>
    %138 = vector.shape_cast %137 : vector<1x8x32xf32> to vector<8x32xf32>
    %139 = vector.shape_cast %136 : vector<8x32xf32> to vector<1x8x32xf32>
    tpu.vector_store %arg9[%c0_54, %c0_55, %c0_56], %139 {strides = array<i32>} : memref<1x8x32xf32, #tpu.memory_space<vmem>>, vector<1x8x32xf32>,
    return
  }
  func.func @transform_0(%arg0: i32) -> (i32, i32, i32) {
    %c0_i32 = arith.constant 0 : i32
    %c0_i32_0 = arith.constant 0 : i32
    %c0_i32_1 = arith.constant 0 : i32
    return %arg0, %c0_i32, %c0_i32_0 : i32, i32, i32
  }
  func.func @transform_1(%arg0: i32) -> (i32, i32) {
    %c0_i32 = arith.constant 0 : i32
    %c0_i32_0 = arith.constant 0 : i32
    %c0_i32_1 = arith.constant 0 : i32
    return %c0_i32, %c0_i32_0 : i32, i32
  }
  func.func @transform_2(%arg0: i32) -> (i32, i32) {
    %c0_i32 = arith.constant 0 : i32
    %c0_i32_0 = arith.constant 0 : i32
    %c0_i32_1 = arith.constant 0 : i32
    return %c0_i32, %c0_i32_0 : i32, i32
  }
  func.func @transform_3(%arg0: i32) -> (i32, i32) {
    %c0_i32 = arith.constant 0 : i32
    %c0_i32_0 = arith.constant 0 : i32
    %c0_i32_1 = arith.constant 0 : i32
    return %c0_i32, %c0_i32_0 : i32, i32
  }
  func.func @transform_4(%arg0: i32) -> (i32, i32) {
    %c0_i32 = arith.constant 0 : i32
    %c0_i32_0 = arith.constant 0 : i32
    %c0_i32_1 = arith.constant 0 : i32
    return %c0_i32, %c0_i32_0 : i32, i32
  }
  func.func @transform_5(%arg0: i32) -> (i32, i32) {
    %c0_i32 = arith.constant 0 : i32
    %c0_i32_0 = arith.constant 0 : i32
    %c0_i32_1 = arith.constant 0 : i32
    return %c0_i32, %c0_i32_0 : i32, i32
  }
  func.func @transform_6(%arg0: i32) -> (i32, i32) {
    %c0_i32 = arith.constant 0 : i32
    %c0_i32_0 = arith.constant 0 : i32
    %c0_i32_1 = arith.constant 0 : i32
    return %c0_i32, %c0_i32_0 : i32, i32
  }
  func.func @transform_7(%arg0: i32) -> (i32, i32, i32, i32) {
    %c0_i32 = arith.constant 0 : i32
    %c0_i32_0 = arith.constant 0 : i32
    %c0_i32_1 = arith.constant 0 : i32
    %c0_i32_2 = arith.constant 0 : i32
    return %arg0, %c0_i32, %c0_i32_0, %c0_i32_1 : i32, i32, i32, i32
  }
  func.func @transform_8(%arg0: i32) -> (i32, i32, i32) {
    %c0_i32 = arith.constant 0 : i32
    %c0_i32_0 = arith.constant 0 : i32
    %c0_i32_1 = arith.constant 0 : i32
    return %arg0, %c0_i32, %c0_i32_0 : i32, i32, i32
  }
}

module attributes {stable_mosaic.version = 11 : i64} {
  func.func @_cross_attn_kernel(%arg0: i32, %arg1: memref<1x8x32xf32, #tpu.memory_space<vmem>>, %arg2: memref<1x8x32xf32, #tpu.memory_space<vmem>>, %arg3: memref<1x32xf32, #tpu.memory_space<vmem>>, %arg4: memref<1x32xf32, #tpu.memory_space<vmem>>, %arg5: memref<32x32xbf16, #tpu.memory_space<vmem>>, %arg6: memref<1x32xf32, #tpu.memory_space<vmem>>, %arg7: memref<32x64xbf16, #tpu.memory_space<vmem>>, %arg8: memref<1x64xf32, #tpu.memory_space<vmem>>, %arg9: memref<32x32xbf16, #tpu.memory_space<vmem>>, %arg10: memref<1x32xf32, #tpu.memory_space<vmem>>, %arg11: memref<1x1x8x8xf32, #tpu.memory_space<vmem>>, %arg12: memref<1x8x32xf32, #tpu.memory_space<vmem>>, %arg13: memref<8x32xf32, #tpu.memory_space<vmem>>) attributes {dimension_semantics = [#tpu.dimension_semantics<parallel>], iteration_bounds = array<i64: 2>, scalar_prefetch = 0 : i64, scratch_operands = 1 : i64, tpu.core_type = #tpu.core_type<tc>, window_params = [{transform_indices = @transform_0, window_bounds = array<i64: 1, 8, 32>}, {transform_indices = @transform_1, window_bounds = array<i64: 1, 8, 32>}, {pipeline_mode = #tpu.pipeline_mode<synchronous>, transform_indices = @transform_2, window_bounds = array<i64: 1, 32>}, {pipeline_mode = #tpu.pipeline_mode<synchronous>, transform_indices = @transform_3, window_bounds = array<i64: 1, 32>}, {pipeline_mode = #tpu.pipeline_mode<synchronous>, transform_indices = @transform_4, window_bounds = array<i64: 32, 32>}, {pipeline_mode = #tpu.pipeline_mode<synchronous>, transform_indices = @transform_5, window_bounds = array<i64: 1, 32>}, {pipeline_mode = #tpu.pipeline_mode<synchronous>, transform_indices = @transform_6, window_bounds = array<i64: 32, 64>}, {pipeline_mode = #tpu.pipeline_mode<synchronous>, transform_indices = @transform_7, window_bounds = array<i64: 1, 64>}, {pipeline_mode = #tpu.pipeline_mode<synchronous>, transform_indices = @transform_8, window_bounds = array<i64: 32, 32>}, {pipeline_mode = #tpu.pipeline_mode<synchronous>, transform_indices = @transform_9, window_bounds = array<i64: 1, 32>}, {transform_indices = @transform_10, window_bounds = array<i64: 1, 1, 8, 8>}, {transform_indices = @transform_11, window_bounds = array<i64: 1, 8, 32>}]} {
    %c0 = arith.constant 0 : index
    %c0_0 = arith.constant 0 : index
    %c0_1 = arith.constant 0 : index
    %0 = vector.load %arg1[%c0, %c0_0, %c0_1] : memref<1x8x32xf32, #tpu.memory_space<vmem>>, vector<1x8x32xf32>
    %1 = vector.shape_cast %0 : vector<1x8x32xf32> to vector<8x32xf32>
    %c0_2 = arith.constant 0 : index
    %c0_3 = arith.constant 0 : index
    %c0_4 = arith.constant 0 : index
    %2 = vector.load %arg2[%c0_2, %c0_3, %c0_4] : memref<1x8x32xf32, #tpu.memory_space<vmem>>, vector<1x8x32xf32>
    %3 = vector.shape_cast %2 : vector<1x8x32xf32> to vector<8x32xf32>
    %c0_5 = arith.constant 0 : index
    %c0_6 = arith.constant 0 : index
    %4 = vector.load %arg3[%c0_5, %c0_6] : memref<1x32xf32, #tpu.memory_space<vmem>>, vector<1x32xf32>
    %c0_7 = arith.constant 0 : index
    %c0_8 = arith.constant 0 : index
    %5 = vector.load %arg4[%c0_7, %c0_8] : memref<1x32xf32, #tpu.memory_space<vmem>>, vector<1x32xf32>
    %cst = arith.constant dense<0.000000e+00> : vector<8xf32>
    %6 = vector.multi_reduction <add>, %1, %cst [1] : vector<8x32xf32> to vector<8xf32>
    %7 = vector.shape_cast %6 : vector<8xf32> to vector<8x1xf32>
    %cst_9 = arith.constant 3.200000e+01 : f32
    %8 = vector.broadcast %cst_9 : f32 to vector<8x1xf32>
    %9 = arith.divf %7, %8 : vector<8x1xf32>
    %10 = vector.broadcast %9 : vector<8x1xf32> to vector<8x32xf32>
    %11 = arith.subf %1, %10 : vector<8x32xf32>
    %12 = arith.mulf %11, %11 : vector<8x32xf32>
    %cst_10 = arith.constant dense<0.000000e+00> : vector<8xf32>
    %13 = vector.multi_reduction <add>, %12, %cst_10 [1] : vector<8x32xf32> to vector<8xf32>
    %14 = vector.shape_cast %13 : vector<8xf32> to vector<8x1xf32>
    %cst_11 = arith.constant 0.0322580636 : f32
    %15 = vector.broadcast %cst_11 : f32 to vector<8x1xf32>
    %16 = arith.mulf %14, %15 : vector<8x1xf32>
    %17 = math.sqrt %16 : vector<8x1xf32>
    %cst_12 = arith.constant 9.99999997E-7 : f32
    %18 = vector.broadcast %cst_12 : f32 to vector<8x1xf32>
    %19 = arith.addf %17, %18 : vector<8x1xf32>
    %cst_13 = arith.constant 1.000000e+00 : f32
    %20 = vector.broadcast %cst_13 : f32 to vector<8x1xf32>
    %21 = arith.divf %20, %19 : vector<8x1xf32>
    %22 = vector.broadcast %4 : vector<1x32xf32> to vector<8x32xf32>
    %23 = arith.mulf %22, %11 : vector<8x32xf32>
    %24 = vector.broadcast %21 : vector<8x1xf32> to vector<8x32xf32>
    %25 = arith.mulf %23, %24 : vector<8x32xf32>
    %26 = vector.broadcast %5 : vector<1x32xf32> to vector<8x32xf32>
    %27 = arith.addf %25, %26 : vector<8x32xf32>
    %28 = arith.truncf %27 : vector<8x32xf32> to vector<8x32xbf16>
    %c0_14 = arith.constant 0 : index
    %c0_15 = arith.constant 0 : index
    %29 = vector.load %arg5[%c0_14, %c0_15] : memref<32x32xbf16, #tpu.memory_space<vmem>>, vector<32x32xbf16>
    %cst_16 = arith.constant dense<0.000000e+00> : vector<8x32xf32>
    %30 = tpu.matmul %28, %29, %cst_16 {dimension_numbers = #tpu.dot_dimension_numbers<[1], [0], [0], [1], [0, 0, 1, 1], [], []>} : vector<8x32xbf16>, vector<32x32xbf16>, vector<8x32xf32> -> vector<8x32xf32>
    %c0_17 = arith.constant 0 : index
    %c0_18 = arith.constant 0 : index
    %31 = vector.load %arg6[%c0_17, %c0_18] : memref<1x32xf32, #tpu.memory_space<vmem>>, vector<1x32xf32>
    %32 = vector.broadcast %31 : vector<1x32xf32> to vector<8x32xf32>
    %33 = arith.addf %30, %32 : vector<8x32xf32>
    %cst_19 = arith.constant 0.353553385 : f32
    %34 = vector.broadcast %cst_19 : f32 to vector<8x32xf32>
    %35 = arith.mulf %33, %34 : vector<8x32xf32>
    %36 = arith.truncf %3 : vector<8x32xf32> to vector<8x32xbf16>
    %c0_20 = arith.constant 0 : index
    %c0_21 = arith.constant 0 : index
    %37 = vector.load %arg7[%c0_20, %c0_21] : memref<32x64xbf16, #tpu.memory_space<vmem>>, vector<32x64xbf16>
    %cst_22 = arith.constant dense<0.000000e+00> : vector<8x64xf32>
    %38 = tpu.matmul %36, %37, %cst_22 {dimension_numbers = #tpu.dot_dimension_numbers<[1], [0], [0], [1], [0, 0, 1, 1], [], []>} : vector<8x32xbf16>, vector<32x64xbf16>, vector<8x64xf32> -> vector<8x64xf32>
    %c0_23 = arith.constant 0 : index
    %c0_24 = arith.constant 0 : index
    %39 = vector.load %arg8[%c0_23, %c0_24] : memref<1x64xf32, #tpu.memory_space<vmem>>, vector<1x64xf32>
    %40 = vector.broadcast %39 : vector<1x64xf32> to vector<8x64xf32>
    %41 = arith.addf %38, %40 : vector<8x64xf32>
    %42 = vector.extract_strided_slice %41 {offsets = [0, 0], sizes = [8, 32], strides = [1, 1]} : vector<8x64xf32> to vector<8x32xf32>
    %43 = vector.extract_strided_slice %41 {offsets = [0, 32], sizes = [8, 32], strides = [1, 1]} : vector<8x64xf32> to vector<8x32xf32>
    %c0_25 = arith.constant 0 : index
    %c0_26 = arith.constant 0 : index
    %c0_27 = arith.constant 0 : index
    %c0_28 = arith.constant 0 : index
    %44 = vector.load %arg11[%c0_25, %c0_26, %c0_27, %c0_28] : memref<1x1x8x8xf32, #tpu.memory_space<vmem>>, vector<1x1x8x8xf32>
    %45 = vector.shape_cast %44 : vector<1x1x8x8xf32> to vector<8x8xf32>
    %cst_29 = arith.constant 0.000000e+00 : f32
    %46 = vector.broadcast %cst_29 : f32 to vector<8x8xf32>
    %47 = arith.cmpf oeq, %45, %46 : vector<8x8xf32>
    %48 = vector.extract_strided_slice %35 {offsets = [0, 0], sizes = [8, 8], strides = [1, 1]} : vector<8x32xf32> to vector<8x8xf32>
    %49 = arith.truncf %48 : vector<8x8xf32> to vector<8x8xbf16>
    %50 = vector.extract_strided_slice %42 {offsets = [0, 0], sizes = [8, 8], strides = [1, 1]} : vector<8x32xf32> to vector<8x8xf32>
    %51 = arith.truncf %50 : vector<8x8xf32> to vector<8x8xbf16>
    %52 = vector.extract_strided_slice %43 {offsets = [0, 0], sizes = [8, 8], strides = [1, 1]} : vector<8x32xf32> to vector<8x8xf32>
    %53 = arith.truncf %52 : vector<8x8xf32> to vector<8x8xbf16>
    %cst_30 = arith.constant dense<0.000000e+00> : vector<8x8xf32>
    %54 = tpu.matmul %49, %51, %cst_30 {dimension_numbers = #tpu.dot_dimension_numbers<[1], [1], [0], [0], [0, 0, 1, 0], [], []>} : vector<8x8xbf16>, vector<8x8xbf16>, vector<8x8xf32> -> vector<8x8xf32>
    %cst_31 = arith.constant -1.000000e+09 : f32
    %55 = vector.broadcast %cst_31 : f32 to vector<8x8xf32>
    %56 = arith.select %47, %55, %54 : vector<8x8xi1>, vector<8x8xf32>
    %cst_32 = arith.constant dense<0xFF800000> : vector<8xf32>
    %57 = vector.multi_reduction <maximumf>, %56, %cst_32 [1] : vector<8x8xf32> to vector<8xf32>
    %58 = vector.shape_cast %57 : vector<8xf32> to vector<8x1xf32>
    %59 = vector.broadcast %58 : vector<8x1xf32> to vector<8x8xf32>
    %60 = arith.subf %56, %59 : vector<8x8xf32>
    %61 = math.exp %60 : vector<8x8xf32>
    %cst_33 = arith.constant dense<0.000000e+00> : vector<8xf32>
    %62 = vector.multi_reduction <add>, %61, %cst_33 [1] : vector<8x8xf32> to vector<8xf32>
    %63 = vector.shape_cast %62 : vector<8xf32> to vector<8x1xf32>
    %64 = tpu.reciprocal %63 {approx = true} : vector<8x1xf32> -> vector<8x1xf32>
    %65 = vector.broadcast %64 : vector<8x1xf32> to vector<8x8xf32>
    %66 = arith.mulf %61, %65 : vector<8x8xf32>
    %67 = arith.truncf %66 : vector<8x8xf32> to vector<8x8xbf16>
    %cst_34 = arith.constant dense<0.000000e+00> : vector<8x8xf32>
    %68 = tpu.matmul %67, %53, %cst_34 {dimension_numbers = #tpu.dot_dimension_numbers<[1], [0], [0], [1], [0, 0, 1, 1], [], []>} : vector<8x8xbf16>, vector<8x8xbf16>, vector<8x8xf32> -> vector<8x8xf32>
    %c0_35 = arith.constant 0 : index
    %c0_36 = arith.constant 0 : index
    %69 = vector.load %arg13[%c0_35, %c0_36] : memref<8x32xf32, #tpu.memory_space<vmem>>, vector<8x8xf32>
    tpu.vector_store %arg13[%c0_35, %c0_36], %68 {strides = array<i32>} : memref<8x32xf32, #tpu.memory_space<vmem>>, vector<8x8xf32>,
    %70 = vector.extract_strided_slice %35 {offsets = [0, 8], sizes = [8, 8], strides = [1, 1]} : vector<8x32xf32> to vector<8x8xf32>
    %71 = arith.truncf %70 : vector<8x8xf32> to vector<8x8xbf16>
    %72 = vector.extract_strided_slice %42 {offsets = [0, 8], sizes = [8, 8], strides = [1, 1]} : vector<8x32xf32> to vector<8x8xf32>
    %73 = arith.truncf %72 : vector<8x8xf32> to vector<8x8xbf16>
    %74 = vector.extract_strided_slice %43 {offsets = [0, 8], sizes = [8, 8], strides = [1, 1]} : vector<8x32xf32> to vector<8x8xf32>
    %75 = arith.truncf %74 : vector<8x8xf32> to vector<8x8xbf16>
    %cst_37 = arith.constant dense<0.000000e+00> : vector<8x8xf32>
    %76 = tpu.matmul %71, %73, %cst_37 {dimension_numbers = #tpu.dot_dimension_numbers<[1], [1], [0], [0], [0, 0, 1, 0], [], []>} : vector<8x8xbf16>, vector<8x8xbf16>, vector<8x8xf32> -> vector<8x8xf32>
    %cst_38 = arith.constant -1.000000e+09 : f32
    %77 = vector.broadcast %cst_38 : f32 to vector<8x8xf32>
    %78 = arith.select %47, %77, %76 : vector<8x8xi1>, vector<8x8xf32>
    %cst_39 = arith.constant dense<0xFF800000> : vector<8xf32>
    %79 = vector.multi_reduction <maximumf>, %78, %cst_39 [1] : vector<8x8xf32> to vector<8xf32>
    %80 = vector.shape_cast %79 : vector<8xf32> to vector<8x1xf32>
    %81 = vector.broadcast %80 : vector<8x1xf32> to vector<8x8xf32>
    %82 = arith.subf %78, %81 : vector<8x8xf32>
    %83 = math.exp %82 : vector<8x8xf32>
    %cst_40 = arith.constant dense<0.000000e+00> : vector<8xf32>
    %84 = vector.multi_reduction <add>, %83, %cst_40 [1] : vector<8x8xf32> to vector<8xf32>
    %85 = vector.shape_cast %84 : vector<8xf32> to vector<8x1xf32>
    %86 = tpu.reciprocal %85 {approx = true} : vector<8x1xf32> -> vector<8x1xf32>
    %87 = vector.broadcast %86 : vector<8x1xf32> to vector<8x8xf32>
    %88 = arith.mulf %83, %87 : vector<8x8xf32>
    %89 = arith.truncf %88 : vector<8x8xf32> to vector<8x8xbf16>
    %cst_41 = arith.constant dense<0.000000e+00> : vector<8x8xf32>
    %90 = tpu.matmul %89, %75, %cst_41 {dimension_numbers = #tpu.dot_dimension_numbers<[1], [0], [0], [1], [0, 0, 1, 1], [], []>} : vector<8x8xbf16>, vector<8x8xbf16>, vector<8x8xf32> -> vector<8x8xf32>
    %c0_42 = arith.constant 0 : index
    %c8 = arith.constant 8 : index
    %91 = vector.load %arg13[%c0_42, %c8] : memref<8x32xf32, #tpu.memory_space<vmem>>, vector<8x8xf32>
    tpu.vector_store %arg13[%c0_42, %c8], %90 {strides = array<i32>} : memref<8x32xf32, #tpu.memory_space<vmem>>, vector<8x8xf32>,
    %92 = vector.extract_strided_slice %35 {offsets = [0, 16], sizes = [8, 8], strides = [1, 1]} : vector<8x32xf32> to vector<8x8xf32>
    %93 = arith.truncf %92 : vector<8x8xf32> to vector<8x8xbf16>
    %94 = vector.extract_strided_slice %42 {offsets = [0, 16], sizes = [8, 8], strides = [1, 1]} : vector<8x32xf32> to vector<8x8xf32>
    %95 = arith.truncf %94 : vector<8x8xf32> to vector<8x8xbf16>
    %96 = vector.extract_strided_slice %43 {offsets = [0, 16], sizes = [8, 8], strides = [1, 1]} : vector<8x32xf32> to vector<8x8xf32>
    %97 = arith.truncf %96 : vector<8x8xf32> to vector<8x8xbf16>
    %cst_43 = arith.constant dense<0.000000e+00> : vector<8x8xf32>
    %98 = tpu.matmul %93, %95, %cst_43 {dimension_numbers = #tpu.dot_dimension_numbers<[1], [1], [0], [0], [0, 0, 1, 0], [], []>} : vector<8x8xbf16>, vector<8x8xbf16>, vector<8x8xf32> -> vector<8x8xf32>
    %cst_44 = arith.constant -1.000000e+09 : f32
    %99 = vector.broadcast %cst_44 : f32 to vector<8x8xf32>
    %100 = arith.select %47, %99, %98 : vector<8x8xi1>, vector<8x8xf32>
    %cst_45 = arith.constant dense<0xFF800000> : vector<8xf32>
    %101 = vector.multi_reduction <maximumf>, %100, %cst_45 [1] : vector<8x8xf32> to vector<8xf32>
    %102 = vector.shape_cast %101 : vector<8xf32> to vector<8x1xf32>
    %103 = vector.broadcast %102 : vector<8x1xf32> to vector<8x8xf32>
    %104 = arith.subf %100, %103 : vector<8x8xf32>
    %105 = math.exp %104 : vector<8x8xf32>
    %cst_46 = arith.constant dense<0.000000e+00> : vector<8xf32>
    %106 = vector.multi_reduction <add>, %105, %cst_46 [1] : vector<8x8xf32> to vector<8xf32>
    %107 = vector.shape_cast %106 : vector<8xf32> to vector<8x1xf32>
    %108 = tpu.reciprocal %107 {approx = true} : vector<8x1xf32> -> vector<8x1xf32>
    %109 = vector.broadcast %108 : vector<8x1xf32> to vector<8x8xf32>
    %110 = arith.mulf %105, %109 : vector<8x8xf32>
    %111 = arith.truncf %110 : vector<8x8xf32> to vector<8x8xbf16>
    %cst_47 = arith.constant dense<0.000000e+00> : vector<8x8xf32>
    %112 = tpu.matmul %111, %97, %cst_47 {dimension_numbers = #tpu.dot_dimension_numbers<[1], [0], [0], [1], [0, 0, 1, 1], [], []>} : vector<8x8xbf16>, vector<8x8xbf16>, vector<8x8xf32> -> vector<8x8xf32>
    %c0_48 = arith.constant 0 : index
    %c16 = arith.constant 16 : index
    %113 = vector.load %arg13[%c0_48, %c16] : memref<8x32xf32, #tpu.memory_space<vmem>>, vector<8x8xf32>
    tpu.vector_store %arg13[%c0_48, %c16], %112 {strides = array<i32>} : memref<8x32xf32, #tpu.memory_space<vmem>>, vector<8x8xf32>,
    %114 = vector.extract_strided_slice %35 {offsets = [0, 24], sizes = [8, 8], strides = [1, 1]} : vector<8x32xf32> to vector<8x8xf32>
    %115 = arith.truncf %114 : vector<8x8xf32> to vector<8x8xbf16>
    %116 = vector.extract_strided_slice %42 {offsets = [0, 24], sizes = [8, 8], strides = [1, 1]} : vector<8x32xf32> to vector<8x8xf32>
    %117 = arith.truncf %116 : vector<8x8xf32> to vector<8x8xbf16>
    %118 = vector.extract_strided_slice %43 {offsets = [0, 24], sizes = [8, 8], strides = [1, 1]} : vector<8x32xf32> to vector<8x8xf32>
    %119 = arith.truncf %118 : vector<8x8xf32> to vector<8x8xbf16>
    %cst_49 = arith.constant dense<0.000000e+00> : vector<8x8xf32>
    %120 = tpu.matmul %115, %117, %cst_49 {dimension_numbers = #tpu.dot_dimension_numbers<[1], [1], [0], [0], [0, 0, 1, 0], [], []>} : vector<8x8xbf16>, vector<8x8xbf16>, vector<8x8xf32> -> vector<8x8xf32>
    %cst_50 = arith.constant -1.000000e+09 : f32
    %121 = vector.broadcast %cst_50 : f32 to vector<8x8xf32>
    %122 = arith.select %47, %121, %120 : vector<8x8xi1>, vector<8x8xf32>
    %cst_51 = arith.constant dense<0xFF800000> : vector<8xf32>
    %123 = vector.multi_reduction <maximumf>, %122, %cst_51 [1] : vector<8x8xf32> to vector<8xf32>
    %124 = vector.shape_cast %123 : vector<8xf32> to vector<8x1xf32>
    %125 = vector.broadcast %124 : vector<8x1xf32> to vector<8x8xf32>
    %126 = arith.subf %122, %125 : vector<8x8xf32>
    %127 = math.exp %126 : vector<8x8xf32>
    %cst_52 = arith.constant dense<0.000000e+00> : vector<8xf32>
    %128 = vector.multi_reduction <add>, %127, %cst_52 [1] : vector<8x8xf32> to vector<8xf32>
    %129 = vector.shape_cast %128 : vector<8xf32> to vector<8x1xf32>
    %130 = tpu.reciprocal %129 {approx = true} : vector<8x1xf32> -> vector<8x1xf32>
    %131 = vector.broadcast %130 : vector<8x1xf32> to vector<8x8xf32>
    %132 = arith.mulf %127, %131 : vector<8x8xf32>
    %133 = arith.truncf %132 : vector<8x8xf32> to vector<8x8xbf16>
    %cst_53 = arith.constant dense<0.000000e+00> : vector<8x8xf32>
    %134 = tpu.matmul %133, %119, %cst_53 {dimension_numbers = #tpu.dot_dimension_numbers<[1], [0], [0], [1], [0, 0, 1, 1], [], []>} : vector<8x8xbf16>, vector<8x8xbf16>, vector<8x8xf32> -> vector<8x8xf32>
    %c0_54 = arith.constant 0 : index
    %c24 = arith.constant 24 : index
    %135 = vector.load %arg13[%c0_54, %c24] : memref<8x32xf32, #tpu.memory_space<vmem>>, vector<8x8xf32>
    tpu.vector_store %arg13[%c0_54, %c24], %134 {strides = array<i32>} : memref<8x32xf32, #tpu.memory_space<vmem>>, vector<8x8xf32>,
    %c0_55 = arith.constant 0 : index
    %c0_56 = arith.constant 0 : index
    %136 = vector.load %arg13[%c0_55, %c0_56] : memref<8x32xf32, #tpu.memory_space<vmem>>, vector<8x32xf32>
    %137 = arith.truncf %136 : vector<8x32xf32> to vector<8x32xbf16>
    %c0_57 = arith.constant 0 : index
    %c0_58 = arith.constant 0 : index
    %138 = vector.load %arg9[%c0_57, %c0_58] : memref<32x32xbf16, #tpu.memory_space<vmem>>, vector<32x32xbf16>
    %cst_59 = arith.constant dense<0.000000e+00> : vector<8x32xf32>
    %139 = tpu.matmul %137, %138, %cst_59 {dimension_numbers = #tpu.dot_dimension_numbers<[1], [0], [0], [1], [0, 0, 1, 1], [], []>} : vector<8x32xbf16>, vector<32x32xbf16>, vector<8x32xf32> -> vector<8x32xf32>
    %140 = arith.addf %1, %139 : vector<8x32xf32>
    %c0_60 = arith.constant 0 : index
    %c0_61 = arith.constant 0 : index
    %141 = vector.load %arg10[%c0_60, %c0_61] : memref<1x32xf32, #tpu.memory_space<vmem>>, vector<1x32xf32>
    %142 = vector.broadcast %141 : vector<1x32xf32> to vector<8x32xf32>
    %143 = arith.addf %140, %142 : vector<8x32xf32>
    %c0_62 = arith.constant 0 : index
    %c0_63 = arith.constant 0 : index
    %c0_64 = arith.constant 0 : index
    %144 = vector.load %arg12[%c0_62, %c0_63, %c0_64] : memref<1x8x32xf32, #tpu.memory_space<vmem>>, vector<1x8x32xf32>
    %145 = vector.shape_cast %144 : vector<1x8x32xf32> to vector<8x32xf32>
    %146 = vector.shape_cast %143 : vector<8x32xf32> to vector<1x8x32xf32>
    tpu.vector_store %arg12[%c0_62, %c0_63, %c0_64], %146 {strides = array<i32>} : memref<1x8x32xf32, #tpu.memory_space<vmem>>, vector<1x8x32xf32>,
    return
  }
  func.func @transform_0(%arg0: i32) -> (i32, i32, i32) {
    %c0_i32 = arith.constant 0 : i32
    %c0_i32_0 = arith.constant 0 : i32
    %c0_i32_1 = arith.constant 0 : i32
    return %arg0, %c0_i32, %c0_i32_0 : i32, i32, i32
  }
  func.func @transform_1(%arg0: i32) -> (i32, i32, i32) {
    %c0_i32 = arith.constant 0 : i32
    %c0_i32_0 = arith.constant 0 : i32
    %c0_i32_1 = arith.constant 0 : i32
    return %arg0, %c0_i32, %c0_i32_0 : i32, i32, i32
  }
  func.func @transform_2(%arg0: i32) -> (i32, i32) {
    %c0_i32 = arith.constant 0 : i32
    %c0_i32_0 = arith.constant 0 : i32
    %c0_i32_1 = arith.constant 0 : i32
    return %c0_i32, %c0_i32_0 : i32, i32
  }
  func.func @transform_3(%arg0: i32) -> (i32, i32) {
    %c0_i32 = arith.constant 0 : i32
    %c0_i32_0 = arith.constant 0 : i32
    %c0_i32_1 = arith.constant 0 : i32
    return %c0_i32, %c0_i32_0 : i32, i32
  }
  func.func @transform_4(%arg0: i32) -> (i32, i32) {
    %c0_i32 = arith.constant 0 : i32
    %c0_i32_0 = arith.constant 0 : i32
    %c0_i32_1 = arith.constant 0 : i32
    return %c0_i32, %c0_i32_0 : i32, i32
  }
  func.func @transform_5(%arg0: i32) -> (i32, i32) {
    %c0_i32 = arith.constant 0 : i32
    %c0_i32_0 = arith.constant 0 : i32
    %c0_i32_1 = arith.constant 0 : i32
    return %c0_i32, %c0_i32_0 : i32, i32
  }
  func.func @transform_6(%arg0: i32) -> (i32, i32) {
    %c0_i32 = arith.constant 0 : i32
    %c0_i32_0 = arith.constant 0 : i32
    %c0_i32_1 = arith.constant 0 : i32
    return %c0_i32, %c0_i32_0 : i32, i32
  }
  func.func @transform_7(%arg0: i32) -> (i32, i32) {
    %c0_i32 = arith.constant 0 : i32
    %c0_i32_0 = arith.constant 0 : i32
    %c0_i32_1 = arith.constant 0 : i32
    return %c0_i32, %c0_i32_0 : i32, i32
  }
  func.func @transform_8(%arg0: i32) -> (i32, i32) {
    %c0_i32 = arith.constant 0 : i32
    %c0_i32_0 = arith.constant 0 : i32
    %c0_i32_1 = arith.constant 0 : i32
    return %c0_i32, %c0_i32_0 : i32, i32
  }
  func.func @transform_9(%arg0: i32) -> (i32, i32) {
    %c0_i32 = arith.constant 0 : i32
    %c0_i32_0 = arith.constant 0 : i32
    %c0_i32_1 = arith.constant 0 : i32
    return %c0_i32, %c0_i32_0 : i32, i32
  }
  func.func @transform_10(%arg0: i32) -> (i32, i32, i32, i32) {
    %c0_i32 = arith.constant 0 : i32
    %c0_i32_0 = arith.constant 0 : i32
    %c0_i32_1 = arith.constant 0 : i32
    %c0_i32_2 = arith.constant 0 : i32
    return %arg0, %c0_i32, %c0_i32_0, %c0_i32_1 : i32, i32, i32, i32
  }
  func.func @transform_11(%arg0: i32) -> (i32, i32, i32) {
    %c0_i32 = arith.constant 0 : i32
    %c0_i32_0 = arith.constant 0 : i32
    %c0_i32_1 = arith.constant 0 : i32
    return %arg0, %c0_i32, %c0_i32_0 : i32, i32, i32
  }
}

module attributes {stable_mosaic.version = 11 : i64} {
  func.func @_layernorm_kernel(%arg0: i32, %arg1: memref<1x8x32xf32, #tpu.memory_space<vmem>>, %arg2: memref<1x32xf32, #tpu.memory_space<vmem>>, %arg3: memref<1x32xf32, #tpu.memory_space<vmem>>, %arg4: memref<1x8x32xf32, #tpu.memory_space<vmem>>) attributes {dimension_semantics = [#tpu.dimension_semantics<parallel>], iteration_bounds = array<i64: 2>, scalar_prefetch = 0 : i64, scratch_operands = 0 : i64, tpu.core_type = #tpu.core_type<tc>, window_params = [{transform_indices = @transform_0, window_bounds = array<i64: 1, 8, 32>}, {pipeline_mode = #tpu.pipeline_mode<synchronous>, transform_indices = @transform_1, window_bounds = array<i64: 1, 32>}, {pipeline_mode = #tpu.pipeline_mode<synchronous>, transform_indices = @transform_2, window_bounds = array<i64: 1, 32>}, {transform_indices = @transform_3, window_bounds = array<i64: 1, 8, 32>}]} {
    %c0 = arith.constant 0 : index
    %c0_0 = arith.constant 0 : index
    %c0_1 = arith.constant 0 : index
    %0 = vector.load %arg1[%c0, %c0_0, %c0_1] : memref<1x8x32xf32, #tpu.memory_space<vmem>>, vector<1x8x32xf32>
    %1 = vector.shape_cast %0 : vector<1x8x32xf32> to vector<8x32xf32>
    %c0_2 = arith.constant 0 : index
    %c0_3 = arith.constant 0 : index
    %2 = vector.load %arg2[%c0_2, %c0_3] : memref<1x32xf32, #tpu.memory_space<vmem>>, vector<1x32xf32>
    %c0_4 = arith.constant 0 : index
    %c0_5 = arith.constant 0 : index
    %3 = vector.load %arg3[%c0_4, %c0_5] : memref<1x32xf32, #tpu.memory_space<vmem>>, vector<1x32xf32>
    %cst = arith.constant dense<0.000000e+00> : vector<8xf32>
    %4 = vector.multi_reduction <add>, %1, %cst [1] : vector<8x32xf32> to vector<8xf32>
    %5 = vector.shape_cast %4 : vector<8xf32> to vector<8x1xf32>
    %cst_6 = arith.constant 3.200000e+01 : f32
    %6 = vector.broadcast %cst_6 : f32 to vector<8x1xf32>
    %7 = arith.divf %5, %6 : vector<8x1xf32>
    %8 = vector.broadcast %7 : vector<8x1xf32> to vector<8x32xf32>
    %9 = arith.subf %1, %8 : vector<8x32xf32>
    %10 = arith.mulf %9, %9 : vector<8x32xf32>
    %cst_7 = arith.constant dense<0.000000e+00> : vector<8xf32>
    %11 = vector.multi_reduction <add>, %10, %cst_7 [1] : vector<8x32xf32> to vector<8xf32>
    %12 = vector.shape_cast %11 : vector<8xf32> to vector<8x1xf32>
    %cst_8 = arith.constant 0.0322580636 : f32
    %13 = vector.broadcast %cst_8 : f32 to vector<8x1xf32>
    %14 = arith.mulf %12, %13 : vector<8x1xf32>
    %15 = math.sqrt %14 : vector<8x1xf32>
    %cst_9 = arith.constant 9.99999997E-7 : f32
    %16 = vector.broadcast %cst_9 : f32 to vector<8x1xf32>
    %17 = arith.addf %15, %16 : vector<8x1xf32>
    %cst_10 = arith.constant 1.000000e+00 : f32
    %18 = vector.broadcast %cst_10 : f32 to vector<8x1xf32>
    %19 = arith.divf %18, %17 : vector<8x1xf32>
    %20 = vector.broadcast %2 : vector<1x32xf32> to vector<8x32xf32>
    %21 = arith.mulf %20, %9 : vector<8x32xf32>
    %22 = vector.broadcast %19 : vector<8x1xf32> to vector<8x32xf32>
    %23 = arith.mulf %21, %22 : vector<8x32xf32>
    %24 = vector.broadcast %3 : vector<1x32xf32> to vector<8x32xf32>
    %25 = arith.addf %23, %24 : vector<8x32xf32>
    %c0_11 = arith.constant 0 : index
    %c0_12 = arith.constant 0 : index
    %c0_13 = arith.constant 0 : index
    %26 = vector.load %arg4[%c0_11, %c0_12, %c0_13] : memref<1x8x32xf32, #tpu.memory_space<vmem>>, vector<1x8x32xf32>
    %27 = vector.shape_cast %26 : vector<1x8x32xf32> to vector<8x32xf32>
    %28 = vector.shape_cast %25 : vector<8x32xf32> to vector<1x8x32xf32>
    tpu.vector_store %arg4[%c0_11, %c0_12, %c0_13], %28 {strides = array<i32>} : memref<1x8x32xf32, #tpu.memory_space<vmem>>, vector<1x8x32xf32>,
    return
  }
  func.func @transform_0(%arg0: i32) -> (i32, i32, i32) {
    %c0_i32 = arith.constant 0 : i32
    %c0_i32_0 = arith.constant 0 : i32
    %c0_i32_1 = arith.constant 0 : i32
    return %arg0, %c0_i32, %c0_i32_0 : i32, i32, i32
  }
  func.func @transform_1(%arg0: i32) -> (i32, i32) {
    %c0_i32 = arith.constant 0 : i32
    %c0_i32_0 = arith.constant 0 : i32
    %c0_i32_1 = arith.constant 0 : i32
    return %c0_i32, %c0_i32_0 : i32, i32
  }
  func.func @transform_2(%arg0: i32) -> (i32, i32) {
    %c0_i32 = arith.constant 0 : i32
    %c0_i32_0 = arith.constant 0 : i32
    %c0_i32_1 = arith.constant 0 : i32
    return %c0_i32, %c0_i32_0 : i32, i32
  }
  func.func @transform_3(%arg0: i32) -> (i32, i32, i32) {
    %c0_i32 = arith.constant 0 : i32
    %c0_i32_0 = arith.constant 0 : i32
    %c0_i32_1 = arith.constant 0 : i32
    return %arg0, %c0_i32, %c0_i32_0 : i32, i32, i32
  }
}

</mosaic_0001>

<llo_original>
// kernel: decoder_forward.9
$region0: #{decoder_forward.9}
  #allocation0 [shape = 'u32[]', space=smem, size = 0x4, offset = 0x4, fixed_abs, tag = 'smem constant byte address 0x4 - core index']
  #allocation1 [shape = 'u32[144,128]{1,0:T(1,128)}', space=vmem, size = 0x12000, scoped, tag = 'internal scratch']
  %s0 = inlined_call_operand.vmem [shape: f32[2,8,32], index: 0, kind: input, shape index: {}]
  %s1 = inlined_call_operand.vmem [shape: f32[1,32], index: 1, kind: input, shape index: {}]
  %s2 = inlined_call_operand.vmem [shape: f32[1,32], index: 2, kind: input, shape index: {}]
  %s3 = inlined_call_operand.vmem [shape: bf16[32,64], index: 3, kind: input, shape index: {}]
  %s4 = inlined_call_operand.vmem [shape: f32[1,64], index: 4, kind: input, shape index: {}]
  %s5 = inlined_call_operand.vmem [shape: bf16[64,32], index: 5, kind: input, shape index: {}]
  %s6 = inlined_call_operand.vmem [shape: f32[1,32], index: 6, kind: input, shape index: {}]
  %s7 = inlined_call_operand.vmem [shape: f32[2,8,32], index: 7, kind: output, shape index: {}]
  %s8 = sld [smem:[#allocation0]]
  $region61: #{decoder_forward.9} parent=0
    _
  %s10 = ssub.s32 1, %s8
  %s11 = scalar_select 0, %s10, %s8
  loop: start=0, step=1, limit=4
  $region2: #{decoder_forward.9} parent=0 // loop_pre_header
    _
  $region3: #{decoder_forward.9} parent=0 // loop_header
    %s13 = sphi 0, %s17
    %p14 = scmp.ge.s32.totalorder %s13, 4
    %s23 = sphi 0, %s25
    %s26 = sphi 0, %s23
    %s27 = sphi 0, %s26
    %s43 = sphi 0, %s27
    %s47 = sphi 0, %s47
    %s49 = sphi 0, %s47
    %s50 = sphi 0, %s49
    %s64 = sphi 0, %s50
    %s68 = sphi 0, %s68
    %s70 = sphi 0, %s68
    %s71 = sphi 0, %s70
    %s85 = sphi 0, %s71
    %s89 = sphi 0, %s89
    %s91 = sphi 0, %s89
    %s92 = sphi 0, %s91
    %s106 = sphi 0, %s92
    %s110 = sphi 0, %s110
    %s112 = sphi 0, %s110
    %s113 = sphi 0, %s112
    %s127 = sphi 0, %s113
    %s131 = sphi 0, %s131
    %s133 = sphi 0, %s131
    %s134 = sphi 0, %s133
    %s148 = sphi 0, %s134
    %s152 = sphi 0, %s152
    %s154 = sphi 0, %s152
    %s155 = sphi 0, %s154
    %s169 = sphi 0, %s155
    %s175 = sphi 0, %s177
    %s178 = sphi 0, %s175
    %s179 = sphi 0, %s178
    %s195 = sphi 0, %s179
  $region4: #{decoder_forward.9} parent=0 // loop_header_branch
    %16 = sbr.rel (%p14) target = $region8
  $region5: #{decoder_forward.9} parent=0 // loop_body
    %s18 = ssub.s32 %s13, 1
    %s19 = ssub.s32 %s13, 2
    %s20 = sadd.s32 %s13, 1
    %s21 = ssub.s32 %s13, %s20
    %p22 = scmp.eq.s32.totalorder %s21, 0
    %s24 = sadd.s32 %s23, 1
    %s25 = scalar_select %p22, %s23, %s24
    %p28 = pneg %p22
    %p29 = scmp.eq.s32.totalorder %s13, 1
    %p30 = por %p28, %p29
    %p31 = scmp.ne.s32.totalorder %s23, %s26
    %p32 = scmp.eq.s32.totalorder %s13, 0
    %p33 = por %p31, %p32
    %p34 = scmp.ne.s32.totalorder %s23, %s26
    %p35 = scmp.eq.s32.totalorder %s18, 1
    %p36 = por %p34, %p35
    %p37 = scmp.ne.s32.totalorder %s26, %s27
    %p38 = scmp.eq.s32.totalorder %s18, 0
    %p39 = por %p37, %p38
    %p40 = scmp.ne.s32.totalorder %s26, %s27
    %p41 = scmp.eq.s32.totalorder %s19, 1
    %p42 = por %p40, %p41
    %p44 = scmp.ne.s32.totalorder %s27, %s43
    %p45 = scmp.eq.s32.totalorder %s19, 0
    %p46 = por %p44, %p45
    %s48 = sadd.s32 %s47, 1
    %p51 = scmp.eq.s32.totalorder %s13, 1
    %p52 = scmp.ne.s32.totalorder %s47, %s49
    %p53 = scmp.eq.s32.totalorder %s13, 0
    %p54 = por %p52, %p53
    %p55 = scmp.ne.s32.totalorder %s47, %s49
    %p56 = scmp.eq.s32.totalorder %s18, 1
    %p57 = por %p55, %p56
    %p58 = scmp.ne.s32.totalorder %s49, %s50
    %p59 = scmp.eq.s32.totalorder %s18, 0
    %p60 = por %p58, %p59
    %p61 = scmp.ne.s32.totalorder %s49, %s50
    %p62 = scmp.eq.s32.totalorder %s19, 1
    %p63 = por %p61, %p62
    %p65 = scmp.ne.s32.totalorder %s50, %s64
    %p66 = scmp.eq.s32.totalorder %s19, 0
    %p67 = por %p65, %p66
    %s69 = sadd.s32 %s68, 1
    %p72 = scmp.eq.s32.totalorder %s13, 1
    %p73 = scmp.ne.s32.totalorder %s68, %s70
    %p74 = scmp.eq.s32.totalorder %s13, 0
    %p75 = por %p73, %p74
    %p76 = scmp.ne.s32.totalorder %s68, %s70
    %p77 = scmp.eq.s32.totalorder %s18, 1
    %p78 = por %p76, %p77
    %p79 = scmp.ne.s32.totalorder %s70, %s71
    %p80 = scmp.eq.s32.totalorder %s18, 0
    %p81 = por %p79, %p80
    %p82 = scmp.ne.s32.totalorder %s70, %s71
    %p83 = scmp.eq.s32.totalorder %s19, 1
    %p84 = por %p82, %p83
    %p86 = scmp.ne.s32.totalorder %s71, %s85
    %p87 = scmp.eq.s32.totalorder %s19, 0
    %p88 = por %p86, %p87
    %s90 = sadd.s32 %s89, 1
    %p93 = scmp.eq.s32.totalorder %s13, 1
    %p94 = scmp.ne.s32.totalorder %s89, %s91
    %p95 = scmp.eq.s32.totalorder %s13, 0
    %p96 = por %p94, %p95
    %p97 = scmp.ne.s32.totalorder %s89, %s91
    %p98 = scmp.eq.s32.totalorder %s18, 1
    %p99 = por %p97, %p98
    %p100 = scmp.ne.s32.totalorder %s91, %s92
    %p101 = scmp.eq.s32.totalorder %s18, 0
    %p102 = por %p100, %p101
    %p103 = scmp.ne.s32.totalorder %s91, %s92
    %p104 = scmp.eq.s32.totalorder %s19, 1
    %p105 = por %p103, %p104
    %p107 = scmp.ne.s32.totalorder %s92, %s106
    %p108 = scmp.eq.s32.totalorder %s19, 0
    %p109 = por %p107, %p108
    %s111 = sadd.s32 %s110, 1
    %p114 = scmp.eq.s32.totalorder %s13, 1
    %p115 = scmp.ne.s32.totalorder %s110, %s112
    %p116 = scmp.eq.s32.totalorder %s13, 0
    %p117 = por %p115, %p116
    %p118 = scmp.ne.s32.totalorder %s110, %s112
    %p119 = scmp.eq.s32.totalorder %s18, 1
    %p120 = por %p118, %p119
    %p121 = scmp.ne.s32.totalorder %s112, %s113
    %p122 = scmp.eq.s32.totalorder %s18, 0
    %p123 = por %p121, %p122
    %p124 = scmp.ne.s32.totalorder %s112, %s113
    %p125 = scmp.eq.s32.totalorder %s19, 1
    %p126 = por %p124, %p125
    %p128 = scmp.ne.s32.totalorder %s113, %s127
    %p129 = scmp.eq.s32.totalorder %s19, 0
    %p130 = por %p128, %p129
    %s132 = sadd.s32 %s131, 1
    %p135 = scmp.eq.s32.totalorder %s13, 1
    %p136 = scmp.ne.s32.totalorder %s131, %s133
    %p137 = scmp.eq.s32.totalorder %s13, 0
    %p138 = por %p136, %p137
    %p139 = scmp.ne.s32.totalorder %s131, %s133
    %p140 = scmp.eq.s32.totalorder %s18, 1
    %p141 = por %p139, %p140
    %p142 = scmp.ne.s32.totalorder %s133, %s134
    %p143 = scmp.eq.s32.totalorder %s18, 0
    %p144 = por %p142, %p143
    %p145 = scmp.ne.s32.totalorder %s133, %s134
    %p146 = scmp.eq.s32.totalorder %s19, 1
    %p147 = por %p145, %p146
    %p149 = scmp.ne.s32.totalorder %s134, %s148
    %p150 = scmp.eq.s32.totalorder %s19, 0
    %p151 = por %p149, %p150
    %s153 = sadd.s32 %s152, 1
    %p156 = scmp.eq.s32.totalorder %s13, 1
    %p157 = scmp.ne.s32.totalorder %s152, %s154
    %p158 = scmp.eq.s32.totalorder %s13, 0
    %p159 = por %p157, %p158
    %p160 = scmp.ne.s32.totalorder %s152, %s154
    %p161 = scmp.eq.s32.totalorder %s18, 1
    %p162 = por %p160, %p161
    %p163 = scmp.ne.s32.totalorder %s154, %s155
    %p164 = scmp.eq.s32.totalorder %s18, 0
    %p165 = por %p163, %p164
    %p166 = scmp.ne.s32.totalorder %s154, %s155
    %p167 = scmp.eq.s32.totalorder %s19, 1
    %p168 = por %p166, %p167
    %p170 = scmp.ne.s32.totalorder %s155, %s169
    %p171 = scmp.eq.s32.totalorder %s19, 0
    %p172 = por %p170, %p171
    %s173 = ssub.s32 %s13, %s20
    %p174 = scmp.eq.s32.totalorder %s173, 0
    %s176 = sadd.s32 %s175, 1
    %s177 = scalar_select %p174, %s175, %s176
    %p180 = pneg %p174
    %p181 = scmp.eq.s32.totalorder %s13, 1
    %p182 = por %p180, %p181
    %p183 = scmp.ne.s32.totalorder %s175, %s178
    %p184 = scmp.eq.s32.totalorder %s13, 0
    %p185 = por %p183, %p184
    %p186 = scmp.ne.s32.totalorder %s175, %s178
    %p187 = scmp.eq.s32.totalorder %s18, 1
    %p188 = por %p186, %p187
    %p189 = scmp.ne.s32.totalorder %s178, %s179
    %p190 = scmp.eq.s32.totalorder %s18, 0
    %p191 = por %p189, %p190
    %p192 = scmp.ne.s32.totalorder %s178, %s179
    %p193 = scmp.eq.s32.totalorder %s19, 1
    %p194 = por %p192, %p193
    %p196 = scmp.ne.s32.totalorder %s179, %s195
    %p197 = scmp.eq.s32.totalorder %s19, 0
    %p198 = por %p196, %p197
    %p199 = scmp.le.s32.totalorder 1, %s13
    %p200 = scmp.lt.s32.totalorder %s13, 3
    %p201 = pnand %p199, %p200
    %p202 = pneg %p201
    // Predicated region
    $region9: #{decoder_forward.9} parent=5 // pred_check
      _
    $region10: #{decoder_forward.9} parent=5 // pred_check_branch
      %204 = sbr.rel (%p201) target = $region12
    $region11: #{decoder_forward.9} parent=5 // pred_region
      %s205 = ssub.s32 %s13, 1
      // Predicated region
      $region13: #{decoder_forward.9} parent=11 // pred_check
        %p206 = pneg %p60
      $region14: #{decoder_forward.9} parent=11 // pred_check_branch
        %208 = sbr.rel (%p206) target = $region16
      $region15: #{decoder_forward.9} parent=11 // pred_region
        _
      $region16: #{decoder_forward.9} parent=11 // pred_fallthru
        _
      // Predicated region
      $region17: #{decoder_forward.9} parent=11 // pred_check
        %p209 = pneg %p81
      $region18: #{decoder_forward.9} parent=11 // pred_check_branch
        %211 = sbr.rel (%p209) target = $region20
      $region19: #{decoder_forward.9} parent=11 // pred_region
        _
      $region20: #{decoder_forward.9} parent=11 // pred_fallthru
        _
      // Predicated region
      $region21: #{decoder_forward.9} parent=11 // pred_check
        %p212 = pneg %p102
      $region22: #{decoder_forward.9} parent=11 // pred_check_branch
        %214 = sbr.rel (%p212) target = $region24
      $region23: #{decoder_forward.9} parent=11 // pred_region
        _
      $region24: #{decoder_forward.9} parent=11 // pred_fallthru
        _
      // Predicated region
      $region25: #{decoder_forward.9} parent=11 // pred_check
        %p215 = pneg %p123
      $region26: #{decoder_forward.9} parent=11 // pred_check_branch
        %217 = sbr.rel (%p215) target = $region28
      $region27: #{decoder_forward.9} parent=11 // pred_region
        _
      $region28: #{decoder_forward.9} parent=11 // pred_fallthru
        _
      // Predicated region
      $region29: #{decoder_forward.9} parent=11 // pred_check
        %p218 = pneg %p144
      $region30: #{decoder_forward.9} parent=11 // pred_check_branch
        %220 = sbr.rel (%p218) target = $region32
      $region31: #{decoder_forward.9} parent=11 // pred_region
        _
      $region32: #{decoder_forward.9} parent=11 // pred_fallthru
        _
      // Predicated region
      $region33: #{decoder_forward.9} parent=11 // pred_check
        %p221 = pneg %p165
      $region34: #{decoder_forward.9} parent=11 // pred_check_branch
        %223 = sbr.rel (%p221) target = $region36
      $region35: #{decoder_forward.9} parent=11 // pred_region
        _
      $region36: #{decoder_forward.9} parent=11 // pred_fallthru
        _
    $region12: #{decoder_forward.9} parent=5 // pred_fallthru
      _
    %p224 = scmp.lt.s32.totalorder %s13, 2
    // Predicated region
    $region37: #{decoder_forward.9} parent=5 // pred_check
      %p225 = pneg %p224
    $region38: #{decoder_forward.9} parent=5 // pred_check_branch
      %227 = sbr.rel (%p225) target = $region40
    $region39: #{decoder_forward.9} parent=5 // pred_region
      // Predicated region
      $region41: #{decoder_forward.9} parent=39 // pred_check
        %p228 = pneg %p33
      $region42: #{decoder_forward.9} parent=39 // pred_check_branch
        %230 = sbr.rel (%p228) target = $region44
      $region43: #{decoder_forward.9} parent=39 // pred_region
        %p231 = scmp.lt.s32.totalorder %s13, 1
        %s232 = scalar_select %p231, %s13, 1
        %s233 = smul.addr %s232, 8
        %s234 = scalar_lea.vmem %s0, %s233
      $region44: #{decoder_forward.9} parent=39 // pred_fallthru
        _
    $region40: #{decoder_forward.9} parent=5 // pred_fallthru
      _
    %p235 = scmp.le.s32.totalorder 1, %s13
    %p236 = scmp.lt.s32.totalorder %s13, 3
    %p237 = pnand %p235, %p236
    %p238 = pneg %p237
    // Predicated region
    $region45: #{decoder_forward.9} parent=5 // pred_check
      _
    $region46: #{decoder_forward.9} parent=5 // pred_check_branch
      %240 = sbr.rel (%p237) target = $region48
    $region47: #{decoder_forward.9} parent=5 // pred_region
      %s241 = ssub.s32 %s13, 1
      %p242 = scmp.lt.s32.totalorder %s18, 1
      %s243 = scalar_select %p242, %s18, 1
      %s244 = smul.addr %s243, 8
      %s245 = scalar_lea.vmem %s0, %s244
      %p246 = pneg %p39
      %p247 = pneg %p36
      %p248 = pneg %p60
      %p249 = pneg %p57
      %p250 = pneg %p81
      %p251 = pneg %p78
      %p252 = pneg %p102
      %p253 = pneg %p99
      %p254 = pneg %p123
      %p255 = pneg %p120
      %p256 = pneg %p144
      %p257 = pneg %p141
      %p258 = pneg %p165
      %p259 = pneg %p162
      %p260 = pneg %p191
      %p261 = pneg %p188
      %p262 = scmp.lt.s32.totalorder %s18, 1
      %s263 = scalar_select %p262, %s18, 1
      %s264 = smul.addr %s263, 8
      %s265 = scalar_lea.vmem %s7, %s264
      %p266 = scmp.lt.s32.totalorder %s18, 1
      %s267 = scalar_select %p266, %s18, 1
      %s268 = smul.addr %s267, 8
      %s269 = scalar_lea.vmem %s0, %s268
      %p270 = scmp.lt.s32.totalorder %s18, 1
      %s271 = scalar_select %p270, %s18, 1
      %s272 = smul.addr %s271, 8
      %s273 = scalar_lea.vmem %s7, %s272
      %v275 = vld [vmem:[%s269] sm:$0xff]
      %v276 = vld [vmem:[%s1] sm:$0x1]
      %v277 = vld [vmem:[%s2] sm:$0x1]
      %vm278 = vcmask 261120
      %v279 = vsel %vm278, %v275, 0.0
      %280 = vadd.xlane.f32.xlu0 %v279
      %v281 = vpop.xlane.xlu0 %280
      %v282 = vrcp.pop 32.0
      %v283 = vmul.f32 %v281, %v282
      %v284 = vsub.f32 %v275, %v283
      %v285 = vmul.f32 %v284, %v284
      %v286 = vsel %vm278, %v285, 0.0
      %287 = vadd.xlane.f32.xlu0 %v286
      %v288 = vpop.xlane.xlu0 %287
      %v289 = vmul.f32 %v288, 0.032258064
      %v290 = vrsqrt.pop %v289
      %v291 = vmul.f32 %v289, %v290
      %vm292 = vcmp.eq.f32.partialorder %v289, inf
      %v293 = vsel %vm292, %v289, %v291
      %vm294 = vcmp.eq.f32.partialorder %v289, 0.0
      %v295 = vand.u32 %v289, 2147483648
      %v296 = vsel %vm294, %v295, %v293
      %v297 = vadd.f32 %v296, 1e-06
      %v298 = vrcp.pop %v297
      %v299 = vmul.f32 1.0, %v298
      %v301 = vlaneseq
      %v302 = vshrl.u32 %v301, 7
      %v303 = vsub.s32 0, %v302
      %v304 = vrot.slane %v276, %v303
      %v306 = vmul.f32 %v304, %v284
      %v307 = vmul.f32 %v306, %v299
      %v309 = vlaneseq
      %v310 = vshrl.u32 %v309, 7
      %v311 = vsub.s32 0, %v310
      %v312 = vrot.slane %v277, %v311
      %v314 = vadd.f32 %v307, %v312
      %v315 = vpack.c.bf16 %v314, %v314
      %v316 = vld [vmem:[%s3] sm:$0xf]
      %v317 = vld [vmem:[%s3 + $0x4] sm:$0xf]
      %v318 = vld [vmem:[%s3 + $0x8] sm:$0xf]
      %v319 = vld [vmem:[%s3 + $0xc] sm:$0xf]
      %v320 = vld [vmem:[%s4] sm:$0x1]
      %v322 = vlaneseq
      %v323 = vshrl.u32 %v322, 7
      %v324 = vsub.s32 0, %v323
      %v325 = vrot.slane %v320, %v324
      %v331 = vunpack.c.l.b16 %v316
      %v332 = vunpack.c.l.b16 %v317
      %v333 = vunpack.c.l.b16 %v318
      %v334 = vunpack.c.l.b16 %v319
      %v335 = vpack.c.b16 %v332, %v331
      %v336 = vpack.c.b16 %v334, %v333
      %v340 = vsel %vm278, %v315, 0
      %342 = vmatprep.subr.bf16.mxu0 0
      %343 = vmatpush1.bf16.msra.mxu0 0
      %344 = vmatprep.subr.bf16.mxu0 0
      %345 = vmatpush1.bf16.msra.mxu0 0
      %346 = vmatprep.subr.bf16.mxu0 0
      %347 = vmatpush1.bf16.msra.mxu0 0
      %348 = vmatprep.subr.bf16.mxu0 0
      %349 = vmatpush1.bf16.msra.mxu0 0
      %350 = vmatprep.subr.bf16.mxu0 0
      %351 = vmatpush1.bf16.msra.mxu0 0
      %352 = vmatprep.subr.bf16.mxu0 0
      %353 = vmatpush1.bf16.msra.mxu0 0
      %354 = vmatprep.subr.bf16.mxu0 0
      %355 = vmatpush1.bf16.msra.mxu0 %v336
      %356 = vmatprep.subr.bf16.mxu0 0
      %357 = vmatpush1.bf16.msra.mxu0 %v335
      %358 = vmatprep.subr.bf16.mxu0 0
      %359 = vmatpush2.bf16.msra.mxu0 0
      %360 = vmatprep.subr.bf16.mxu0 0
      %361 = vmatpush2.bf16.msra.mxu0 0
      %362 = vmatprep.subr.bf16.mxu0 0
      %363 = vmatpush2.bf16.msra.mxu0 0
      %364 = vmatprep.subr.bf16.mxu0 0
      %365 = vmatpush2.bf16.msra.mxu0 0
      %366 = vmatprep.subr.bf16.mxu0 0
      %367 = vmatpush2.bf16.msra.mxu0 0
      %368 = vmatprep.subr.bf16.mxu0 0
      %369 = vmatpush2.bf16.msra.mxu0 0
      %370 = vmatprep.subr.bf16.mxu0 0
      %371 = vmatpush2.bf16.msra.mxu0 0
      %372 = vmatprep.subr.bf16.mxu0 0
      %373 = vmatpush2.bf16.msra.mxu0 0
      %374 = vmatprep.mubr.bf16.mxu0 0
      %375 = vmatmul.mubr.bf16.gmra.mxu0 %v340
      %v376 = vpop.f32.mrf.mxu0
      %v377 = vadd.f32 %v325, %v376
      %v378 = vpop.f32.mrf.mxu0
      %v379 = vpop.f32.mrf.mxu0
      %v380 = vpop.f32.mrf.mxu0
      %381 = vdwg.mxu0
      %v382 = vmax.f32 %v377, 0.0
      %v383 = vpack.c.bf16 %v382, %v382
      %v384 = vld [vmem:[%s5] sm:$0xf]
      %v385 = vld [vmem:[%s5 + $0x4] sm:$0xf]
      %v386 = vld [vmem:[%s5 + $0x8] sm:$0xf]
      %v387 = vld [vmem:[%s5 + $0xc] sm:$0xf]
      %v388 = vld [vmem:[%s5 + $0x10] sm:$0xf]
      %v389 = vld [vmem:[%s5 + $0x14] sm:$0xf]
      %v390 = vld [vmem:[%s5 + $0x18] sm:$0xf]
      %v391 = vld [vmem:[%s5 + $0x1c] sm:$0xf]
      %v392 = vld [vmem:[%s6] sm:$0x1]
      %v394 = vlaneseq
      %v395 = vshrl.u32 %v394, 7
      %v396 = vsub.s32 0, %v395
      %v397 = vrot.slane %v392, %v396
      %v407 = vunpack.c.l.b16 %v384
      %v408 = vunpack.c.l.b16 %v385
      %v409 = vunpack.c.l.b16 %v386
      %v410 = vunpack.c.l.b16 %v387
      %v411 = vunpack.c.l.b16 %v388
      %v412 = vunpack.c.l.b16 %v389
      %v413 = vunpack.c.l.b16 %v390
      %v414 = vunpack.c.l.b16 %v391
      %v415 = vpack.c.b16 %v408, %v407
      %v416 = vpack.c.b16 %v410, %v409
      %v417 = vpack.c.b16 %v412, %v411
      %v418 = vpack.c.b16 %v414, %v413
      %vm423 = vcmask 523264
      %v425 = vsel %vm423, %v383, 0
      %427 = vmatprep.subr.bf16.mxu0 0
      %428 = vmatpush1.bf16.msra.mxu0 0
      %429 = vmatprep.subr.bf16.mxu0 0
      %430 = vmatpush1.bf16.msra.mxu0 0
      %431 = vmatprep.subr.bf16.mxu0 0
      %432 = vmatpush1.bf16.msra.mxu0 0
      %433 = vmatprep.subr.bf16.mxu0 0
      %434 = vmatpush1.bf16.msra.mxu0 0
      %435 = vmatprep.subr.bf16.mxu0 0
      %436 = vmatpush1.bf16.msra.mxu0 %v418
      %437 = vmatprep.subr.bf16.mxu0 0
      %438 = vmatpush1.bf16.msra.mxu0 %v417
      %439 = vmatprep.subr.bf16.mxu0 0
      %440 = vmatpush1.bf16.msra.mxu0 %v416
      %441 = vmatprep.subr.bf16.mxu0 0
      %442 = vmatpush1.bf16.msra.mxu0 %v415
      %443 = vmatprep.subr.bf16.mxu0 0
      %444 = vmatpush2.bf16.msra.mxu0 0
      %445 = vmatprep.subr.bf16.mxu0 0
      %446 = vmatpush2.bf16.msra.mxu0 0
      %447 = vmatprep.subr.bf16.mxu0 0
      %448 = vmatpush2.bf16.msra.mxu0 0
      %449 = vmatprep.subr.bf16.mxu0 0
      %450 = vmatpush2.bf16.msra.mxu0 0
      %451 = vmatprep.subr.bf16.mxu0 0
      %452 = vmatpush2.bf16.msra.mxu0 0
      %453 = vmatprep.subr.bf16.mxu0 0
      %454 = vmatpush2.bf16.msra.mxu0 0
      %455 = vmatprep.subr.bf16.mxu0 0
      %456 = vmatpush2.bf16.msra.mxu0 0
      %457 = vmatprep.subr.bf16.mxu0 0
      %458 = vmatpush2.bf16.msra.mxu0 0
      %459 = vmatprep.mubr.bf16.mxu0 0
      %460 = vmatmul.mubr.bf16.gmra.mxu0 %v425
      %v461 = vpop.f32.mrf.mxu0
      %v462 = vadd.f32 %v397, %v461
      %v463 = vpop.f32.mrf.mxu0
      %v464 = vpop.f32.mrf.mxu0
      %v465 = vpop.f32.mrf.mxu0
      %466 = vdwg.mxu0
      %v467 = vadd.f32 %v275, %v462
      %468 = vst.msk [vmem:[%s273] sm:$0xff] %vm278, %v467
      %p469 = scmp.lt.s32.totalorder %s18, 1
      %s470 = scalar_select %p469, %s18, 1
      %s471 = smul.addr %s470, 8
      %s472 = scalar_lea.vmem %s7, %s471
      // Predicated region
      $region49: #{decoder_forward.9} parent=47 // pred_check
        %p473 = pneg %p188
      $region50: #{decoder_forward.9} parent=47 // pred_check_branch
        %475 = sbr.rel (%p473) target = $region52
      $region51: #{decoder_forward.9} parent=47 // pred_region
        _
      $region52: #{decoder_forward.9} parent=47 // pred_fallthru
        _
    $region48: #{decoder_forward.9} parent=5 // pred_fallthru
      _
    %p476 = scmp.le.s32.totalorder 2, %s13
    // Predicated region
    $region53: #{decoder_forward.9} parent=5 // pred_check
      %p477 = pneg %p476
    $region54: #{decoder_forward.9} parent=5 // pred_check_branch
      %479 = sbr.rel (%p477) target = $region56
    $region55: #{decoder_forward.9} parent=5 // pred_region
      %s480 = ssub.s32 %s13, 2
      // Predicated region
      $region57: #{decoder_forward.9} parent=55 // pred_check
        %p481 = pneg %p194
      $region58: #{decoder_forward.9} parent=55 // pred_check_branch
        %483 = sbr.rel (%p481) target = $region60
      $region59: #{decoder_forward.9} parent=55 // pred_region
        %p484 = scmp.lt.s32.totalorder %s19, 1
        %s485 = scalar_select %p484, %s19, 1
        %s486 = smul.addr %s485, 8
        %s487 = scalar_lea.vmem %s7, %s486
      $region60: #{decoder_forward.9} parent=55 // pred_fallthru
        _
    $region56: #{decoder_forward.9} parent=5 // pred_fallthru
      _
  $region6: #{decoder_forward.9} parent=0 // loop_footer
    %s17 = sadd.s32 1, %s13
  $region7: #{decoder_forward.9} parent=0 // loop_footer_branch
    %12 = sbr.rel target = $region3
  $region8: #{decoder_forward.9} parent=0 // loop_exit
    _

// kernel: decoder_forward.7
$region0: #{decoder_forward.7}
  #allocation0 [shape = 'u32[]', space=smem, size = 0x4, offset = 0x4, fixed_abs, tag = 'smem constant byte address 0x4 - core index']
  #allocation1 [shape = 'u32[144,128]{1,0:T(1,128)}', space=vmem, size = 0x12000, scoped, tag = 'internal scratch']
  #allocation2 [shape = 'f32[8,32]{1,0:T(8,128)}', space=vmem, size = 0x1000, scoped, tag = 'scratch operand']
  %s0 = inlined_call_operand.vmem [shape: f32[2,8,32], index: 0, kind: input, shape index: {}]
  %s1 = inlined_call_operand.hbm [shape: f32[1,32], index: 1, kind: input, shape index: {}]
  %s2 = inlined_call_operand.hbm [shape: f32[1,32], index: 2, kind: input, shape index: {}]
  %s3 = inlined_call_operand.hbm [shape: bf16[32,96], index: 3, kind: input, shape index: {}]
  %s4 = inlined_call_operand.hbm [shape: f32[1,96], index: 4, kind: input, shape index: {}]
  %s5 = inlined_call_operand.hbm [shape: bf16[32,32], index: 5, kind: input, shape index: {}]
  %s6 = inlined_call_operand.hbm [shape: f32[1,32], index: 6, kind: input, shape index: {}]
  %s7 = inlined_call_operand.vmem [shape: f32[2,1,8,8], index: 7, kind: input, shape index: {}]
  %s8 = inlined_call_operand.vmem [shape: f32[2,8,32], index: 8, kind: output, shape index: {}]
  %s9 = sld [smem:[#allocation0]]
  $region89: #{decoder_forward.7} parent=0
    _
  %s11 = ssub.s32 1, %s9
  %s12 = scalar_select 0, %s11, %s9
  $region1: #{decoder_forward.7} parent=0
    #allocation3 [shape = 'u8[512]{0}', space=vmem, size = 0x400, scoped, tag = 'input window, operand 1, single buffered']
    #allocation4 [shape = 's32[2]{0}', space=sflag, size = 0x8, scoped, tag = 'scoped memory for decoder_forward.7']
    #allocation5 [shape = 'u8[512]{0}', space=vmem, size = 0x400, scoped, tag = 'input window, operand 2, single buffered']
    #allocation6 [shape = 's32[1]{0}', space=sflag, size = 0x4, scoped, tag = 'scoped memory for decoder_forward.7']
    #allocation7 [shape = 'u8[8192]{0}', space=vmem, size = 0x2000, scoped, tag = 'input window, operand 3, single buffered']
    #allocation8 [shape = 'u8[512]{0}', space=vmem, size = 0x400, scoped, tag = 'input window, operand 4, single buffered']
    #allocation9 [shape = 's32[1]{0}', space=sflag, size = 0x4, scoped, tag = 'scoped memory for decoder_forward.7']
    #allocation10 [shape = 'u8[8192]{0}', space=vmem, size = 0x2000, scoped, tag = 'input window, operand 5, single buffered']
    #allocation11 [shape = 'u8[512]{0}', space=vmem, size = 0x400, scoped, tag = 'input window, operand 6, single buffered']
    #allocation12 [shape = 's32[1]{0}', space=sflag, size = 0x4, scoped, tag = 'scoped memory for decoder_forward.7']
    %13 = vsyncpa [#allocation4], 0
    %14 = vsyncpa [#allocation6], 0
    %15 = vsyncpa [#allocation9], 0
    %16 = vsyncpa [#allocation12], 0
    loop: start=0, step=1, limit=4
    $region2: #{decoder_forward.7} parent=1 // loop_pre_header
      _
    $region3: #{decoder_forward.7} parent=1 // loop_header
      %s18 = sphi 0, %s22
      %p19 = scmp.ge.s32.totalorder %s18, 4
      %s28 = sphi 0, %s30
      %s31 = sphi 0, %s28
      %s32 = sphi 0, %s31
      %s48 = sphi 0, %s32
      %s52 = sphi 0, %s52
      %s54 = sphi 0, %s52
      %s55 = sphi 0, %s54
      %s69 = sphi 0, %s55
      %s73 = sphi 0, %s73
      %s75 = sphi 0, %s73
      %s76 = sphi 0, %s75
      %s90 = sphi 0, %s76
      %s94 = sphi 0, %s94
      %s96 = sphi 0, %s94
      %s97 = sphi 0, %s96
      %s111 = sphi 0, %s97
      %s115 = sphi 0, %s115
      %s117 = sphi 0, %s115
      %s118 = sphi 0, %s117
      %s132 = sphi 0, %s118
      %s136 = sphi 0, %s136
      %s138 = sphi 0, %s136
      %s139 = sphi 0, %s138
      %s153 = sphi 0, %s139
      %s157 = sphi 0, %s157
      %s159 = sphi 0, %s157
      %s160 = sphi 0, %s159
      %s174 = sphi 0, %s160
      %s180 = sphi 0, %s182
      %s183 = sphi 0, %s180
      %s184 = sphi 0, %s183
      %s200 = sphi 0, %s184
      %s206 = sphi 0, %s208
      %s209 = sphi 0, %s206
      %s210 = sphi 0, %s209
      %s226 = sphi 0, %s210
    $region4: #{decoder_forward.7} parent=1 // loop_header_branch
      %21 = sbr.rel (%p19) target = $region8
    $region5: #{decoder_forward.7} parent=1 // loop_body
      %s23 = ssub.s32 %s18, 1
      %s24 = ssub.s32 %s18, 2
      %s25 = sadd.s32 %s18, 1
      %s26 = ssub.s32 %s18, %s25
      %p27 = scmp.eq.s32.totalorder %s26, 0
      %s29 = sadd.s32 %s28, 1
      %s30 = scalar_select %p27, %s28, %s29
      %p33 = pneg %p27
      %p34 = scmp.eq.s32.totalorder %s18, 1
      %p35 = por %p33, %p34
      %p36 = scmp.ne.s32.totalorder %s28, %s31
      %p37 = scmp.eq.s32.totalorder %s18, 0
      %p38 = por %p36, %p37
      %p39 = scmp.ne.s32.totalorder %s28, %s31
      %p40 = scmp.eq.s32.totalorder %s23, 1
      %p41 = por %p39, %p40
      %p42 = scmp.ne.s32.totalorder %s31, %s32
      %p43 = scmp.eq.s32.totalorder %s23, 0
      %p44 = por %p42, %p43
      %p45 = scmp.ne.s32.totalorder %s31, %s32
      %p46 = scmp.eq.s32.totalorder %s24, 1
      %p47 = por %p45, %p46
      %p49 = scmp.ne.s32.totalorder %s32, %s48
      %p50 = scmp.eq.s32.totalorder %s24, 0
      %p51 = por %p49, %p50
      %s53 = sadd.s32 %s52, 1
      %p56 = scmp.eq.s32.totalorder %s18, 1
      %p57 = scmp.ne.s32.totalorder %s52, %s54
      %p58 = scmp.eq.s32.totalorder %s18, 0
      %p59 = por %p57, %p58
      %p60 = scmp.ne.s32.totalorder %s52, %s54
      %p61 = scmp.eq.s32.totalorder %s23, 1
      %p62 = por %p60, %p61
      %p63 = scmp.ne.s32.totalorder %s54, %s55
      %p64 = scmp.eq.s32.totalorder %s23, 0
      %p65 = por %p63, %p64
      %p66 = scmp.ne.s32.totalorder %s54, %s55
      %p67 = scmp.eq.s32.totalorder %s24, 1
      %p68 = por %p66, %p67
      %p70 = scmp.ne.s32.totalorder %s55, %s69
      %p71 = scmp.eq.s32.totalorder %s24, 0
      %p72 = por %p70, %p71
      %s74 = sadd.s32 %s73, 1
      %p77 = scmp.eq.s32.totalorder %s18, 1
      %p78 = scmp.ne.s32.totalorder %s73, %s75
      %p79 = scmp.eq.s32.totalorder %s18, 0
      %p80 = por %p78, %p79
      %p81 = scmp.ne.s32.totalorder %s73, %s75
      %p82 = scmp.eq.s32.totalorder %s23, 1
      %p83 = por %p81, %p82
      %p84 = scmp.ne.s32.totalorder %s75, %s76
      %p85 = scmp.eq.s32.totalorder %s23, 0
      %p86 = por %p84, %p85
      %p87 = scmp.ne.s32.totalorder %s75, %s76
      %p88 = scmp.eq.s32.totalorder %s24, 1
      %p89 = por %p87, %p88
      %p91 = scmp.ne.s32.totalorder %s76, %s90
      %p92 = scmp.eq.s32.totalorder %s24, 0
      %p93 = por %p91, %p92
      %s95 = sadd.s32 %s94, 1
      %p98 = scmp.eq.s32.totalorder %s18, 1
      %p99 = scmp.ne.s32.totalorder %s94, %s96
      %p100 = scmp.eq.s32.totalorder %s18, 0
      %p101 = por %p99, %p100
      %p102 = scmp.ne.s32.totalorder %s94, %s96
      %p103 = scmp.eq.s32.totalorder %s23, 1
      %p104 = por %p102, %p103
      %p105 = scmp.ne.s32.totalorder %s96, %s97
      %p106 = scmp.eq.s32.totalorder %s23, 0
      %p107 = por %p105, %p106
      %p108 = scmp.ne.s32.totalorder %s96, %s97
      %p109 = scmp.eq.s32.totalorder %s24, 1
      %p110 = por %p108, %p109
      %p112 = scmp.ne.s32.totalorder %s97, %s111
      %p113 = scmp.eq.s32.totalorder %s24, 0
      %p114 = por %p112, %p113
      %s116 = sadd.s32 %s115, 1
      %p119 = scmp.eq.s32.totalorder %s18, 1
      %p120 = scmp.ne.s32.totalorder %s115, %s117
      %p121 = scmp.eq.s32.totalorder %s18, 0
      %p122 = por %p120, %p121
      %p123 = scmp.ne.s32.totalorder %s115, %s117
      %p124 = scmp.eq.s32.totalorder %s23, 1
      %p125 = por %p123, %p124
      %p126 = scmp.ne.s32.totalorder %s117, %s118
      %p127 = scmp.eq.s32.totalorder %s23, 0
      %p128 = por %p126, %p127
      %p129 = scmp.ne.s32.totalorder %s117, %s118
      %p130 = scmp.eq.s32.totalorder %s24, 1
      %p131 = por %p129, %p130
      %p133 = scmp.ne.s32.totalorder %s118, %s132
      %p134 = scmp.eq.s32.totalorder %s24, 0
      %p135 = por %p133, %p134
      %s137 = sadd.s32 %s136, 1
      %p140 = scmp.eq.s32.totalorder %s18, 1
      %p141 = scmp.ne.s32.totalorder %s136, %s138
      %p142 = scmp.eq.s32.totalorder %s18, 0
      %p143 = por %p141, %p142
      %p144 = scmp.ne.s32.totalorder %s136, %s138
      %p145 = scmp.eq.s32.totalorder %s23, 1
      %p146 = por %p144, %p145
      %p147 = scmp.ne.s32.totalorder %s138, %s139
      %p148 = scmp.eq.s32.totalorder %s23, 0
      %p149 = por %p147, %p148
      %p150 = scmp.ne.s32.totalorder %s138, %s139
      %p151 = scmp.eq.s32.totalorder %s24, 1
      %p152 = por %p150, %p151
      %p154 = scmp.ne.s32.totalorder %s139, %s153
      %p155 = scmp.eq.s32.totalorder %s24, 0
      %p156 = por %p154, %p155
      %s158 = sadd.s32 %s157, 1
      %p161 = scmp.eq.s32.totalorder %s18, 1
      %p162 = scmp.ne.s32.totalorder %s157, %s159
      %p163 = scmp.eq.s32.totalorder %s18, 0
      %p164 = por %p162, %p163
      %p165 = scmp.ne.s32.totalorder %s157, %s159
      %p166 = scmp.eq.s32.totalorder %s23, 1
      %p167 = por %p165, %p166
      %p168 = scmp.ne.s32.totalorder %s159, %s160
      %p169 = scmp.eq.s32.totalorder %s23, 0
      %p170 = por %p168, %p169
      %p171 = scmp.ne.s32.totalorder %s159, %s160
      %p172 = scmp.eq.s32.totalorder %s24, 1
      %p173 = por %p171, %p172
      %p175 = scmp.ne.s32.totalorder %s160, %s174
      %p176 = scmp.eq.s32.totalorder %s24, 0
      %p177 = por %p175, %p176
      %s178 = ssub.s32 %s18, %s25
      %p179 = scmp.eq.s32.totalorder %s178, 0
      %s181 = sadd.s32 %s180, 1
      %s182 = scalar_select %p179, %s180, %s181
      %p185 = pneg %p179
      %p186 = scmp.eq.s32.totalorder %s18, 1
      %p187 = por %p185, %p186
      %p188 = scmp.ne.s32.totalorder %s180, %s183
      %p189 = scmp.eq.s32.totalorder %s18, 0
      %p190 = por %p188, %p189
      %p191 = scmp.ne.s32.totalorder %s180, %s183
      %p192 = scmp.eq.s32.totalorder %s23, 1
      %p193 = por %p191, %p192
      %p194 = scmp.ne.s32.totalorder %s183, %s184
      %p195 = scmp.eq.s32.totalorder %s23, 0
      %p196 = por %p194, %p195
      %p197 = scmp.ne.s32.totalorder %s183, %s184
      %p198 = scmp.eq.s32.totalorder %s24, 1
      %p199 = por %p197, %p198
      %p201 = scmp.ne.s32.totalorder %s184, %s200
      %p202 = scmp.eq.s32.totalorder %s24, 0
      %p203 = por %p201, %p202
      %s204 = ssub.s32 %s18, %s25
      %p205 = scmp.eq.s32.totalorder %s204, 0
      %s207 = sadd.s32 %s206, 1
      %s208 = scalar_select %p205, %s206, %s207
      %p211 = pneg %p205
      %p212 = scmp.eq.s32.totalorder %s18, 1
      %p213 = por %p211, %p212
      %p214 = scmp.ne.s32.totalorder %s206, %s209
      %p215 = scmp.eq.s32.totalorder %s18, 0
      %p216 = por %p214, %p215
      %p217 = scmp.ne.s32.totalorder %s206, %s209
      %p218 = scmp.eq.s32.totalorder %s23, 1
      %p219 = por %p217, %p218
      %p220 = scmp.ne.s32.totalorder %s209, %s210
      %p221 = scmp.eq.s32.totalorder %s23, 0
      %p222 = por %p220, %p221
      %p223 = scmp.ne.s32.totalorder %s209, %s210
      %p224 = scmp.eq.s32.totalorder %s24, 1
      %p225 = por %p223, %p224
      %p227 = scmp.ne.s32.totalorder %s210, %s226
      %p228 = scmp.eq.s32.totalorder %s24, 0
      %p229 = por %p227, %p228
      %p230 = scmp.le.s32.totalorder 1, %s18
      %p231 = scmp.lt.s32.totalorder %s18, 3
      %p232 = pnand %p230, %p231
      %p233 = pneg %p232
      // Predicated region
      $region9: #{decoder_forward.7} parent=5 // pred_check
        _
      $region10: #{decoder_forward.7} parent=5 // pred_check_branch
        %235 = sbr.rel (%p232) target = $region12
      $region11: #{decoder_forward.7} parent=5 // pred_region
        %s236 = ssub.s32 %s18, 1
        // Predicated region
        $region13: #{decoder_forward.7} parent=11 // pred_check
          %p237 = pneg %p65
        $region14: #{decoder_forward.7} parent=11 // pred_check_branch
          %239 = sbr.rel (%p237) target = $region16
        $region15: #{decoder_forward.7} parent=11 // pred_region
          %s241 = ssub.s32 16, 16
          %242 = vsyncadd [#allocation4], %s241
          %s244 = sshll.u32 [#allocation3], 4
          %s245 = int_to_ptr.vmem [resolvable:$true] %s244
          %247 = dma.hbm_to_vmem [thread:$0]  %s1, 16, %s245, [#allocation4]
        $region16: #{decoder_forward.7} parent=11 // pred_fallthru
          _
        // Predicated region
        $region17: #{decoder_forward.7} parent=11 // pred_check
          %p248 = pneg %p86
        $region18: #{decoder_forward.7} parent=11 // pred_check_branch
          %250 = sbr.rel (%p248) target = $region20
        $region19: #{decoder_forward.7} parent=11 // pred_region
          %s252 = ssub.s32 16, 16
          %253 = vsyncadd [#allocation6], %s252
          %s255 = sshll.u32 [#allocation5], 4
          %s256 = int_to_ptr.vmem [resolvable:$true] %s255
          %258 = dma.hbm_to_vmem [thread:$0]  %s2, 16, %s256, [#allocation6]
        $region20: #{decoder_forward.7} parent=11 // pred_fallthru
          _
        // Predicated region
        $region21: #{decoder_forward.7} parent=11 // pred_check
          %p259 = pneg %p107
        $region22: #{decoder_forward.7} parent=11 // pred_check_branch
          %261 = sbr.rel (%p259) target = $region24
        $region23: #{decoder_forward.7} parent=11 // pred_region
          %s263 = ssub.s32 256, 256
          %264 = vsyncadd [#allocation6], %s263
          %s265 = sshll.u32 [#allocation7], 4
          %s266 = int_to_ptr.vmem [resolvable:$true] %s265
          %271 = dma.hbm_to_vmem [thread:$0]  %s3, 256, %s266, [#allocation6], 64, 64, 4
        $region24: #{decoder_forward.7} parent=11 // pred_fallthru
          _
        // Predicated region
        $region25: #{decoder_forward.7} parent=11 // pred_check
          %p272 = pneg %p128
        $region26: #{decoder_forward.7} parent=11 // pred_check_branch
          %274 = sbr.rel (%p272) target = $region28
        $region27: #{decoder_forward.7} parent=11 // pred_region
          %s276 = ssub.s32 16, 16
          %277 = vsyncadd [#allocation9], %s276
          %s279 = sshll.u32 [#allocation8], 4
          %s280 = int_to_ptr.vmem [resolvable:$true] %s279
          %282 = dma.hbm_to_vmem [thread:$0]  %s4, 16, %s280, [#allocation9]
        $region28: #{decoder_forward.7} parent=11 // pred_fallthru
          _
        // Predicated region
        $region29: #{decoder_forward.7} parent=11 // pred_check
          %p283 = pneg %p149
        $region30: #{decoder_forward.7} parent=11 // pred_check_branch
          %285 = sbr.rel (%p283) target = $region32
        $region31: #{decoder_forward.7} parent=11 // pred_region
          %s287 = ssub.s32 256, 256
          %288 = vsyncadd [#allocation9], %s287
          %s289 = sshll.u32 [#allocation10], 4
          %s290 = int_to_ptr.vmem [resolvable:$true] %s289
          %295 = dma.hbm_to_vmem [thread:$0]  %s5, 256, %s290, [#allocation9], 64, 64, 4
        $region32: #{decoder_forward.7} parent=11 // pred_fallthru
          _
        // Predicated region
        $region33: #{decoder_forward.7} parent=11 // pred_check
          %p296 = pneg %p170
        $region34: #{decoder_forward.7} parent=11 // pred_check_branch
          %298 = sbr.rel (%p296) target = $region36
        $region35: #{decoder_forward.7} parent=11 // pred_region
          %s300 = ssub.s32 16, 16
          %301 = vsyncadd [#allocation12], %s300
          %s303 = sshll.u32 [#allocation11], 4
          %s304 = int_to_ptr.vmem [resolvable:$true] %s303
          %306 = dma.hbm_to_vmem [thread:$0]  %s6, 16, %s304, [#allocation12]
        $region36: #{decoder_forward.7} parent=11 // pred_fallthru
          _
      $region12: #{decoder_forward.7} parent=5 // pred_fallthru
        _
      %p307 = scmp.lt.s32.totalorder %s18, 2
      // Predicated region
      $region37: #{decoder_forward.7} parent=5 // pred_check
        %p308 = pneg %p307
      $region38: #{decoder_forward.7} parent=5 // pred_check_branch
        %310 = sbr.rel (%p308) target = $region40
      $region39: #{decoder_forward.7} parent=5 // pred_region
        // Predicated region
        $region41: #{decoder_forward.7} parent=39 // pred_check
          %p311 = pneg %p38
        $region42: #{decoder_forward.7} parent=39 // pred_check_branch
          %313 = sbr.rel (%p311) target = $region44
        $region43: #{decoder_forward.7} parent=39 // pred_region
          %p314 = scmp.lt.s32.totalorder %s18, 1
          %s315 = scalar_select %p314, %s18, 1
          %s316 = smul.addr %s315, 8
          %s317 = scalar_lea.vmem %s0, %s316
        $region44: #{decoder_forward.7} parent=39 // pred_fallthru
          _
        // Predicated region
        $region45: #{decoder_forward.7} parent=39 // pred_check
          %p318 = pneg %p190
        $region46: #{decoder_forward.7} parent=39 // pred_check_branch
          %320 = sbr.rel (%p318) target = $region48
        $region47: #{decoder_forward.7} parent=39 // pred_region
          %p321 = scmp.lt.s32.totalorder %s18, 1
          %s322 = scalar_select %p321, %s18, 1
          %s323 = smul.addr %s322, 8
          %s324 = scalar_lea.vmem %s7, %s323
        $region48: #{decoder_forward.7} parent=39 // pred_fallthru
          _
      $region40: #{decoder_forward.7} parent=5 // pred_fallthru
        _
      %p325 = scmp.le.s32.totalorder 1, %s18
      %p326 = scmp.lt.s32.totalorder %s18, 3
      %p327 = pnand %p325, %p326
      %p328 = pneg %p327
      // Predicated region
      $region49: #{decoder_forward.7} parent=5 // pred_check
        _
      $region50: #{decoder_forward.7} parent=5 // pred_check_branch
        %330 = sbr.rel (%p327) target = $region52
      $region51: #{decoder_forward.7} parent=5 // pred_region
        %s331 = ssub.s32 %s18, 1
        // Predicated region
        $region53: #{decoder_forward.7} parent=51 // pred_check
          %p332 = pneg %p65
        $region54: #{decoder_forward.7} parent=51 // pred_check_branch
          %334 = sbr.rel (%p332) target = $region56
        $region55: #{decoder_forward.7} parent=51 // pred_region
          %335 = dma.done [#allocation4], 16
        $region56: #{decoder_forward.7} parent=51 // pred_fallthru
          _
        // Predicated region
        $region57: #{decoder_forward.7} parent=51 // pred_check
          %p336 = pneg %p86
        $region58: #{decoder_forward.7} parent=51 // pred_check_branch
          %338 = sbr.rel (%p336) target = $region60
        $region59: #{decoder_forward.7} parent=51 // pred_region
          %339 = dma.done [#allocation6], 16
        $region60: #{decoder_forward.7} parent=51 // pred_fallthru
          _
        // Predicated region
        $region61: #{decoder_forward.7} parent=51 // pred_check
          %p340 = pneg %p107
        $region62: #{decoder_forward.7} parent=51 // pred_check_branch
          %342 = sbr.rel (%p340) target = $region64
        $region63: #{decoder_forward.7} parent=51 // pred_region
          %343 = dma.done [#allocation6], 256
        $region64: #{decoder_forward.7} parent=51 // pred_fallthru
          _
        // Predicated region
        $region65: #{decoder_forward.7} parent=51 // pred_check
          %p344 = pneg %p128
        $region66: #{decoder_forward.7} parent=51 // pred_check_branch
          %346 = sbr.rel (%p344) target = $region68
        $region67: #{decoder_forward.7} parent=51 // pred_region
          %347 = dma.done [#allocation9], 16
        $region68: #{decoder_forward.7} parent=51 // pred_fallthru
          _
        // Predicated region
        $region69: #{decoder_forward.7} parent=51 // pred_check
          %p348 = pneg %p149
        $region70: #{decoder_forward.7} parent=51 // pred_check_branch
          %350 = sbr.rel (%p348) target = $region72
        $region71: #{decoder_forward.7} parent=51 // pred_region
          %351 = dma.done [#allocation9], 256
        $region72: #{decoder_forward.7} parent=51 // pred_fallthru
          _
        // Predicated region
        $region73: #{decoder_forward.7} parent=51 // pred_check
          %p352 = pneg %p170
        $region74: #{decoder_forward.7} parent=51 // pred_check_branch
          %354 = sbr.rel (%p352) target = $region76
        $region75: #{decoder_forward.7} parent=51 // pred_region
          %355 = dma.done [#allocation12], 16
        $region76: #{decoder_forward.7} parent=51 // pred_fallthru
          _
        %p356 = scmp.lt.s32.totalorder %s23, 1
        %s357 = scalar_select %p356, %s23, 1
        %s358 = smul.addr %s357, 8
        %s359 = scalar_lea.vmem %s0, %s358
        %p360 = pneg %p44
        %p361 = pneg %p41
        %p362 = pneg %p65
        %p363 = pneg %p62
        %p364 = pneg %p86
        %p365 = pneg %p83
        %p366 = pneg %p107
        %p367 = pneg %p104
        %p368 = pneg %p128
        %p369 = pneg %p125
        %p370 = pneg %p149
        %p371 = pneg %p146
        %p372 = pneg %p170
        %p373 = pneg %p167
        %p374 = scmp.lt.s32.totalorder %s23, 1
        %s375 = scalar_select %p374, %s23, 1
        %s376 = smul.addr %s375, 8
        %s377 = scalar_lea.vmem %s7, %s376
        %p378 = pneg %p196
        %p379 = pneg %p193
        %p380 = pneg %p222
        %p381 = pneg %p219
        %p382 = scmp.lt.s32.totalorder %s23, 1
        %s383 = scalar_select %p382, %s23, 1
        %s384 = smul.addr %s383, 8
        %s385 = scalar_lea.vmem %s8, %s384
        %p386 = scmp.lt.s32.totalorder %s23, 1
        %s387 = scalar_select %p386, %s23, 1
        %s388 = smul.addr %s387, 8
        %s389 = scalar_lea.vmem %s0, %s388
        %p390 = scmp.lt.s32.totalorder %s23, 1
        %s391 = scalar_select %p390, %s23, 1
        %s392 = smul.addr %s391, 8
        %s393 = scalar_lea.vmem %s7, %s392
        %p394 = scmp.lt.s32.totalorder %s23, 1
        %s395 = scalar_select %p394, %s23, 1
        %s396 = smul.addr %s395, 8
        %s397 = scalar_lea.vmem %s8, %s396
        %v399 = vld [vmem:[%s389] sm:$0xff]
        %v400 = vld [vmem:[#allocation3] sm:$0x1]
        %v401 = vld [vmem:[#allocation5] sm:$0x1]
        %vm402 = vcmask 261120
        %v403 = vsel %vm402, %v399, 0.0
        %404 = vadd.xlane.f32.xlu0 %v403
        %v405 = vpop.xlane.xlu0 %404
        %v406 = vrcp.pop 32.0
        %v407 = vmul.f32 %v405, %v406
        %v408 = vsub.f32 %v399, %v407
        %v409 = vmul.f32 %v408, %v408
        %v410 = vsel %vm402, %v409, 0.0
        %411 = vadd.xlane.f32.xlu0 %v410
        %v412 = vpop.xlane.xlu0 %411
        %v413 = vmul.f32 %v412, 0.032258064
        %v414 = vrsqrt.pop %v413
        %v415 = vmul.f32 %v413, %v414
        %vm416 = vcmp.eq.f32.partialorder %v413, inf
        %v417 = vsel %vm416, %v413, %v415
        %vm418 = vcmp.eq.f32.partialorder %v413, 0.0
        %v419 = vand.u32 %v413, 2147483648
        %v420 = vsel %vm418, %v419, %v417
        %v421 = vadd.f32 %v420, 1e-06
        %v422 = vrcp.pop %v421
        %v423 = vmul.f32 1.0, %v422
        %v425 = vlaneseq
        %v426 = vshrl.u32 %v425, 7
        %v427 = vsub.s32 0, %v426
        %v428 = vrot.slane %v400, %v427
        %v430 = vmul.f32 %v428, %v408
        %v431 = vmul.f32 %v430, %v423
        %v433 = vlaneseq
        %v434 = vshrl.u32 %v433, 7
        %v435 = vsub.s32 0, %v434
        %v436 = vrot.slane %v401, %v435
        %v438 = vadd.f32 %v431, %v436
        %v439 = vpack.c.bf16 %v438, %v438
        %v440 = vld [vmem:[#allocation7] sm:$0xf]
        %v441 = vld [vmem:[#allocation7 + $0x4] sm:$0xf]
        %v442 = vld [vmem:[#allocation7 + $0x8] sm:$0xf]
        %v443 = vld [vmem:[#allocation7 + $0xc] sm:$0xf]
        %v444 = vld [vmem:[#allocation8] sm:$0x1]
        %v446 = vlaneseq
        %v447 = vshrl.u32 %v446, 7
        %v448 = vsub.s32 0, %v447
        %v449 = vrot.slane %v444, %v448
        %v455 = vunpack.c.l.b16 %v440
        %v456 = vunpack.c.l.b16 %v441
        %v457 = vunpack.c.l.b16 %v442
        %v458 = vunpack.c.l.b16 %v443
        %v459 = vpack.c.b16 %v456, %v455
        %v460 = vpack.c.b16 %v458, %v457
        %v464 = vsel %vm402, %v439, 0
        %466 = vmatprep.subr.bf16.mxu0 0
        %467 = vmatpush1.bf16.msra.mxu0 0
        %468 = vmatprep.subr.bf16.mxu0 0
        %469 = vmatpush1.bf16.msra.mxu0 0
        %470 = vmatprep.subr.bf16.mxu0 0
        %471 = vmatpush1.bf16.msra.mxu0 0
        %472 = vmatprep.subr.bf16.mxu0 0
        %473 = vmatpush1.bf16.msra.mxu0 0
        %474 = vmatprep.subr.bf16.mxu0 0
        %475 = vmatpush1.bf16.msra.mxu0 0
        %476 = vmatprep.subr.bf16.mxu0 0
        %477 = vmatpush1.bf16.msra.mxu0 0
        %478 = vmatprep.subr.bf16.mxu0 0
        %479 = vmatpush1.bf16.msra.mxu0 %v460
        %480 = vmatprep.subr.bf16.mxu0 0
        %481 = vmatpush1.bf16.msra.mxu0 %v459
        %482 = vmatprep.subr.bf16.mxu0 0
        %483 = vmatpush2.bf16.msra.mxu0 0
        %484 = vmatprep.subr.bf16.mxu0 0
        %485 = vmatpush2.bf16.msra.mxu0 0
        %486 = vmatprep.subr.bf16.mxu0 0
        %487 = vmatpush2.bf16.msra.mxu0 0
        %488 = vmatprep.subr.bf16.mxu0 0
        %489 = vmatpush2.bf16.msra.mxu0 0
        %490 = vmatprep.subr.bf16.mxu0 0
        %491 = vmatpush2.bf16.msra.mxu0 0
        %492 = vmatprep.subr.bf16.mxu0 0
        %493 = vmatpush2.bf16.msra.mxu0 0
        %494 = vmatprep.subr.bf16.mxu0 0
        %495 = vmatpush2.bf16.msra.mxu0 0
        %496 = vmatprep.subr.bf16.mxu0 0
        %497 = vmatpush2.bf16.msra.mxu0 0
        %498 = vmatprep.mubr.bf16.mxu0 0
        %499 = vmatmul.mubr.bf16.gmra.mxu0 %v464
        %v500 = vpop.f32.mrf.mxu0
        %v501 = vadd.f32 %v449, %v500
        %v502 = vpop.f32.mrf.mxu0
        %v503 = vpop.f32.mrf.mxu0
        %v504 = vpop.f32.mrf.mxu0
        %505 = vdwg.mxu0
        %v506 = vmul.f32 %v501, 0.35355338
        %v507 = vld [vmem:[%s393] sm:$0xff]
        %vm508 = vcmp.eq.f32.partialorder %v507, 0.0
        %v509 = vpack.c.bf16 %v506, %v506
        %v510 = vpack.c.bf16 %v501, %v501
        %512 = vrot.lane.b32.xlu0 %v510, 96
        %v513 = vpop.permute.xlu0 %512
        %vm514 = vcmask 64512
        %v516 = vsel %vm514, %v509, 0
        %v519 = vsel %vm514, %v513, 0
        %521 = vmatprep.subr.bf16.mxu0 0
        %522 = vmatpush1.bf16.xpose.msra.mxu0 0
        %523 = vmatprep.subr.bf16.mxu0 0
        %524 = vmatpush1.bf16.xpose.msra.mxu0 0
        %525 = vmatprep.subr.bf16.mxu0 0
        %526 = vmatpush1.bf16.xpose.msra.mxu0 0
        %527 = vmatprep.subr.bf16.mxu0 0
        %528 = vmatpush1.bf16.xpose.msra.mxu0 0
        %529 = vmatprep.subr.bf16.mxu0 0
        %530 = vmatpush1.bf16.xpose.msra.mxu0 0
        %531 = vmatprep.subr.bf16.mxu0 0
        %532 = vmatpush1.bf16.xpose.msra.mxu0 0
        %533 = vmatprep.subr.bf16.mxu0 0
        %534 = vmatpush1.bf16.xpose.msra.mxu0 0
        %535 = vmatprep.subr.bf16.mxu0 0
        %536 = vmatpush1.bf16.xpose.msra.mxu0 %v519
        %537 = vmatprep.subr.bf16.mxu0 0
        %538 = vmatpush2.bf16.xpose.msra.mxu0 0
        %539 = vmatprep.subr.bf16.mxu0 0
        %540 = vmatpush2.bf16.xpose.msra.mxu0 0
        %541 = vmatprep.subr.bf16.mxu0 0
        %542 = vmatpush2.bf16.xpose.msra.mxu0 0
        %543 = vmatprep.subr.bf16.mxu0 0
        %544 = vmatpush2.bf16.xpose.msra.mxu0 0
        %545 = vmatprep.subr.bf16.mxu0 0
        %546 = vmatpush2.bf16.xpose.msra.mxu0 0
        %547 = vmatprep.subr.bf16.mxu0 0
        %548 = vmatpush2.bf16.xpose.msra.mxu0 0
        %549 = vmatprep.subr.bf16.mxu0 0
        %550 = vmatpush2.bf16.xpose.msra.mxu0 0
        %551 = vmatprep.subr.bf16.mxu0 0
        %552 = vmatpush2.bf16.xpose.msra.mxu0 0
        %553 = vmatprep.mubr.bf16.mxu0 0
        %554 = vmatmul.mubr.bf16.gmra.mxu0 %v516
        %v555 = vpop.f32.mrf.mxu0
        %v556 = vadd.f32 0.0, %v555
        %v557 = vpop.f32.mrf.mxu0
        %v558 = vpop.f32.mrf.mxu0
        %v559 = vpop.f32.mrf.mxu0
        %560 = vdwg.mxu0
        %v561 = vsel %vm508, -1e+09, %v556
        %v562 = vsel %vm514, %v561, -inf
        %563 = vmax.xlane.f32.xlu0 %v562
        %v564 = vpop.xlane.xlu0 %563
        %v565 = vsub.f32 %v561, %v564
        %v566 = vmul.f32 %v565, 1.442695
        %v567 = vpow.pop %v566
        %v568 = vsel %vm514, %v567, 0.0
        %569 = vadd.xlane.f32.xlu0 %v568
        %v570 = vpop.xlane.xlu0 %569
        %v571 = vrcp.pop %v570
        %v572 = vmul.f32 %v567, %v571
        %v573 = vpack.c.bf16 %v572, %v572
        %574 = vrot.lane.b32.xlu0 %v510, 64
        %v575 = vpop.permute.xlu0 %574
        %v577 = vsel %vm514, %v573, 0
        %vm579 = vcmask 1043456
        %v581 = vsel %vm579, %v575, 0
        %583 = vmatprep.subr.bf16.mxu0 0
        %584 = vmatpush1.bf16.msra.mxu0 0
        %585 = vmatprep.subr.bf16.mxu0 0
        %586 = vmatpush1.bf16.msra.mxu0 0
        %587 = vmatprep.subr.bf16.mxu0 0
        %588 = vmatpush1.bf16.msra.mxu0 0
        %589 = vmatprep.subr.bf16.mxu0 0
        %590 = vmatpush1.bf16.msra.mxu0 0
        %591 = vmatprep.subr.bf16.mxu0 0
        %592 = vmatpush1.bf16.msra.mxu0 0
        %593 = vmatprep.subr.bf16.mxu0 0
        %594 = vmatpush1.bf16.msra.mxu0 0
        %595 = vmatprep.subr.bf16.mxu0 0
        %596 = vmatpush1.bf16.msra.mxu0 0
        %597 = vmatprep.subr.bf16.mxu0 0
        %598 = vmatpush1.bf16.msra.mxu0 %v581
        %599 = vmatprep.subr.bf16.mxu0 0
        %600 = vmatpush2.bf16.msra.mxu0 0
        %601 = vmatprep.subr.bf16.mxu0 0
        %602 = vmatpush2.bf16.msra.mxu0 0
        %603 = vmatprep.subr.bf16.mxu0 0
        %604 = vmatpush2.bf16.msra.mxu0 0
        %605 = vmatprep.subr.bf16.mxu0 0
        %606 = vmatpush2.bf16.msra.mxu0 0
        %607 = vmatprep.subr.bf16.mxu0 0
        %608 = vmatpush2.bf16.msra.mxu0 0
        %609 = vmatprep.subr.bf16.mxu0 0
        %610 = vmatpush2.bf16.msra.mxu0 0
        %611 = vmatprep.subr.bf16.mxu0 0
        %612 = vmatpush2.bf16.msra.mxu0 0
        %613 = vmatprep.subr.bf16.mxu0 0
        %614 = vmatpush2.bf16.msra.mxu0 0
        %615 = vmatprep.mubr.bf16.mxu0 0
        %616 = vmatmul.mubr.bf16.gmra.mxu0 %v577
        %v617 = vpop.f32.mrf.mxu0
        %v618 = vadd.f32 0.0, %v617
        %v619 = vpop.f32.mrf.mxu0
        %v620 = vpop.f32.mrf.mxu0
        %v621 = vpop.f32.mrf.mxu0
        %622 = vdwg.mxu0
        %623 = vst.msk [vmem:[#allocation2] sm:$0xff] %vm514, %v618
        %625 = vrot.lane.b32.xlu0 %v509, 120
        %v626 = vpop.permute.xlu0 %625
        %627 = vrot.lane.b32.xlu0 %v510, 88
        %v628 = vpop.permute.xlu0 %627
        %v630 = vsel %vm514, %v626, 0
        %v633 = vsel %vm514, %v628, 0
        %635 = vmatprep.subr.bf16.mxu0 0
        %636 = vmatpush1.bf16.xpose.msra.mxu0 0
        %637 = vmatprep.subr.bf16.mxu0 0
        %638 = vmatpush1.bf16.xpose.msra.mxu0 0
        %639 = vmatprep.subr.bf16.mxu0 0
        %640 = vmatpush1.bf16.xpose.msra.mxu0 0
        %641 = vmatprep.subr.bf16.mxu0 0
        %642 = vmatpush1.bf16.xpose.msra.mxu0 0
        %643 = vmatprep.subr.bf16.mxu0 0
        %644 = vmatpush1.bf16.xpose.msra.mxu0 0
        %645 = vmatprep.subr.bf16.mxu0 0
        %646 = vmatpush1.bf16.xpose.msra.mxu0 0
        %647 = vmatprep.subr.bf16.mxu0 0
        %648 = vmatpush1.bf16.xpose.msra.mxu0 0
        %649 = vmatprep.subr.bf16.mxu0 0
        %650 = vmatpush1.bf16.xpose.msra.mxu0 %v633
        %651 = vmatprep.subr.bf16.mxu0 0
        %652 = vmatpush2.bf16.xpose.msra.mxu0 0
        %653 = vmatprep.subr.bf16.mxu0 0
        %654 = vmatpush2.bf16.xpose.msra.mxu0 0
        %655 = vmatprep.subr.bf16.mxu0 0
        %656 = vmatpush2.bf16.xpose.msra.mxu0 0
        %657 = vmatprep.subr.bf16.mxu0 0
        %658 = vmatpush2.bf16.xpose.msra.mxu0 0
        %659 = vmatprep.subr.bf16.mxu0 0
        %660 = vmatpush2.bf16.xpose.msra.mxu0 0
        %661 = vmatprep.subr.bf16.mxu0 0
        %662 = vmatpush2.bf16.xpose.msra.mxu0 0
        %663 = vmatprep.subr.bf16.mxu0 0
        %664 = vmatpush2.bf16.xpose.msra.mxu0 0
        %665 = vmatprep.subr.bf16.mxu0 0
        %666 = vmatpush2.bf16.xpose.msra.mxu0 0
        %667 = vmatprep.mubr.bf16.mxu0 0
        %668 = vmatmul.mubr.bf16.gmra.mxu0 %v630
        %v669 = vpop.f32.mrf.mxu0
        %v670 = vadd.f32 0.0, %v669
        %v671 = vpop.f32.mrf.mxu0
        %v672 = vpop.f32.mrf.mxu0
        %v673 = vpop.f32.mrf.mxu0
        %674 = vdwg.mxu0
        %v675 = vsel %vm508, -1e+09, %v670
        %v676 = vsel %vm514, %v675, -inf
        %677 = vmax.xlane.f32.xlu0 %v676
        %v678 = vpop.xlane.xlu0 %677
        %v679 = vsub.f32 %v675, %v678
        %v680 = vmul.f32 %v679, 1.442695
        %v681 = vpow.pop %v680
        %v682 = vsel %vm514, %v681, 0.0
        %683 = vadd.xlane.f32.xlu0 %v682
        %v684 = vpop.xlane.xlu0 %683
        %v685 = vrcp.pop %v684
        %v686 = vmul.f32 %v681, %v685
        %v687 = vpack.c.bf16 %v686, %v686
        %688 = vrot.lane.b32.xlu0 %v510, 56
        %v689 = vpop.permute.xlu0 %688
        %v691 = vsel %vm514, %v687, 0
        %v694 = vsel %vm579, %v689, 0
        %696 = vmatprep.subr.bf16.mxu0 0
        %697 = vmatpush1.bf16.msra.mxu0 0
        %698 = vmatprep.subr.bf16.mxu0 0
        %699 = vmatpush1.bf16.msra.mxu0 0
        %700 = vmatprep.subr.bf16.mxu0 0
        %701 = vmatpush1.bf16.msra.mxu0 0
        %702 = vmatprep.subr.bf16.mxu0 0
        %703 = vmatpush1.bf16.msra.mxu0 0
        %704 = vmatprep.subr.bf16.mxu0 0
        %705 = vmatpush1.bf16.msra.mxu0 0
        %706 = vmatprep.subr.bf16.mxu0 0
        %707 = vmatpush1.bf16.msra.mxu0 0
        %708 = vmatprep.subr.bf16.mxu0 0
        %709 = vmatpush1.bf16.msra.mxu0 0
        %710 = vmatprep.subr.bf16.mxu0 0
        %711 = vmatpush1.bf16.msra.mxu0 %v694
        %712 = vmatprep.subr.bf16.mxu0 0
        %713 = vmatpush2.bf16.msra.mxu0 0
        %714 = vmatprep.subr.bf16.mxu0 0
        %715 = vmatpush2.bf16.msra.mxu0 0
        %716 = vmatprep.subr.bf16.mxu0 0
        %717 = vmatpush2.bf16.msra.mxu0 0
        %718 = vmatprep.subr.bf16.mxu0 0
        %719 = vmatpush2.bf16.msra.mxu0 0
        %720 = vmatprep.subr.bf16.mxu0 0
        %721 = vmatpush2.bf16.msra.mxu0 0
        %722 = vmatprep.subr.bf16.mxu0 0
        %723 = vmatpush2.bf16.msra.mxu0 0
        %724 = vmatprep.subr.bf16.mxu0 0
        %725 = vmatpush2.bf16.msra.mxu0 0
        %726 = vmatprep.subr.bf16.mxu0 0
        %727 = vmatpush2.bf16.msra.mxu0 0
        %728 = vmatprep.mubr.bf16.mxu0 0
        %729 = vmatmul.mubr.bf16.gmra.mxu0 %v691
        %v730 = vpop.f32.mrf.mxu0
        %v731 = vadd.f32 0.0, %v730
        %v732 = vpop.f32.mrf.mxu0
        %v733 = vpop.f32.mrf.mxu0
        %v734 = vpop.f32.mrf.mxu0
        %735 = vdwg.mxu0
        %737 = vrot.lane.b32.xlu0 %v731, 8
        %v738 = vpop.permute.xlu0 %737
        %vm740 = vcmask 130112
        %741 = vst.msk [vmem:[#allocation2] sm:$0xff] %vm740, %v738
        %742 = vrot.lane.b32.xlu0 %v509, 112
        %v743 = vpop.permute.xlu0 %742
        %744 = vrot.lane.b32.xlu0 %v510, 80
        %v745 = vpop.permute.xlu0 %744
        %v747 = vsel %vm514, %v743, 0
        %v750 = vsel %vm514, %v745, 0
        %752 = vmatprep.subr.bf16.mxu0 0
        %753 = vmatpush1.bf16.xpose.msra.mxu0 0
        %754 = vmatprep.subr.bf16.mxu0 0
        %755 = vmatpush1.bf16.xpose.msra.mxu0 0
        %756 = vmatprep.subr.bf16.mxu0 0
        %757 = vmatpush1.bf16.xpose.msra.mxu0 0
        %758 = vmatprep.subr.bf16.mxu0 0
        %759 = vmatpush1.bf16.xpose.msra.mxu0 0
        %760 = vmatprep.subr.bf16.mxu0 0
        %761 = vmatpush1.bf16.xpose.msra.mxu0 0
        %762 = vmatprep.subr.bf16.mxu0 0
        %763 = vmatpush1.bf16.xpose.msra.mxu0 0
        %764 = vmatprep.subr.bf16.mxu0 0
        %765 = vmatpush1.bf16.xpose.msra.mxu0 0
        %766 = vmatprep.subr.bf16.mxu0 0
        %767 = vmatpush1.bf16.xpose.msra.mxu0 %v750
        %768 = vmatprep.subr.bf16.mxu0 0
        %769 = vmatpush2.bf16.xpose.msra.mxu0 0
        %770 = vmatprep.subr.bf16.mxu0 0
        %771 = vmatpush2.bf16.xpose.msra.mxu0 0
        %772 = vmatprep.subr.bf16.mxu0 0
        %773 = vmatpush2.bf16.xpose.msra.mxu0 0
        %774 = vmatprep.subr.bf16.mxu0 0
        %775 = vmatpush2.bf16.xpose.msra.mxu0 0
        %776 = vmatprep.subr.bf16.mxu0 0
        %777 = vmatpush2.bf16.xpose.msra.mxu0 0
        %778 = vmatprep.subr.bf16.mxu0 0
        %779 = vmatpush2.bf16.xpose.msra.mxu0 0
        %780 = vmatprep.subr.bf16.mxu0 0
        %781 = vmatpush2.bf16.xpose.msra.mxu0 0
        %782 = vmatprep.subr.bf16.mxu0 0
        %783 = vmatpush2.bf16.xpose.msra.mxu0 0
        %784 = vmatprep.mubr.bf16.mxu0 0
        %785 = vmatmul.mubr.bf16.gmra.mxu0 %v747
        %v786 = vpop.f32.mrf.mxu0
        %v787 = vadd.f32 0.0, %v786
        %v788 = vpop.f32.mrf.mxu0
        %v789 = vpop.f32.mrf.mxu0
        %v790 = vpop.f32.mrf.mxu0
        %791 = vdwg.mxu0
        %v792 = vsel %vm508, -1e+09, %v787
        %v793 = vsel %vm514, %v792, -inf
        %794 = vmax.xlane.f32.xlu0 %v793
        %v795 = vpop.xlane.xlu0 %794
        %v796 = vsub.f32 %v792, %v795
        %v797 = vmul.f32 %v796, 1.442695
        %v798 = vpow.pop %v797
        %v799 = vsel %vm514, %v798, 0.0
        %800 = vadd.xlane.f32.xlu0 %v799
        %v801 = vpop.xlane.xlu0 %800
        %v802 = vrcp.pop %v801
        %v803 = vmul.f32 %v798, %v802
        %v804 = vpack.c.bf16 %v803, %v803
        %805 = vrot.lane.b32.xlu0 %v510, 48
        %v806 = vpop.permute.xlu0 %805
        %v808 = vsel %vm514, %v804, 0
        %v811 = vsel %vm579, %v806, 0
        %813 = vmatprep.subr.bf16.mxu0 0
        %814 = vmatpush1.bf16.msra.mxu0 0
        %815 = vmatprep.subr.bf16.mxu0 0
        %816 = vmatpush1.bf16.msra.mxu0 0
        %817 = vmatprep.subr.bf16.mxu0 0
        %818 = vmatpush1.bf16.msra.mxu0 0
        %819 = vmatprep.subr.bf16.mxu0 0
        %820 = vmatpush1.bf16.msra.mxu0 0
        %821 = vmatprep.subr.bf16.mxu0 0
        %822 = vmatpush1.bf16.msra.mxu0 0
        %823 = vmatprep.subr.bf16.mxu0 0
        %824 = vmatpush1.bf16.msra.mxu0 0
        %825 = vmatprep.subr.bf16.mxu0 0
        %826 = vmatpush1.bf16.msra.mxu0 0
        %827 = vmatprep.subr.bf16.mxu0 0
        %828 = vmatpush1.bf16.msra.mxu0 %v811
        %829 = vmatprep.subr.bf16.mxu0 0
        %830 = vmatpush2.bf16.msra.mxu0 0
        %831 = vmatprep.subr.bf16.mxu0 0
        %832 = vmatpush2.bf16.msra.mxu0 0
        %833 = vmatprep.subr.bf16.mxu0 0
        %834 = vmatpush2.bf16.msra.mxu0 0
        %835 = vmatprep.subr.bf16.mxu0 0
        %836 = vmatpush2.bf16.msra.mxu0 0
        %837 = vmatprep.subr.bf16.mxu0 0
        %838 = vmatpush2.bf16.msra.mxu0 0
        %839 = vmatprep.subr.bf16.mxu0 0
        %840 = vmatpush2.bf16.msra.mxu0 0
        %841 = vmatprep.subr.bf16.mxu0 0
        %842 = vmatpush2.bf16.msra.mxu0 0
        %843 = vmatprep.subr.bf16.mxu0 0
        %844 = vmatpush2.bf16.msra.mxu0 0
        %845 = vmatprep.mubr.bf16.mxu0 0
        %846 = vmatmul.mubr.bf16.gmra.mxu0 %v808
        %v847 = vpop.f32.mrf.mxu0
        %v848 = vadd.f32 0.0, %v847
        %v849 = vpop.f32.mrf.mxu0
        %v850 = vpop.f32.mrf.mxu0
        %v851 = vpop.f32.mrf.mxu0
        %852 = vdwg.mxu0
        %854 = vrot.lane.b32.xlu0 %v848, 16
        %v855 = vpop.permute.xlu0 %854
        %vm857 = vcmask 195712
        %858 = vst.msk [vmem:[#allocation2] sm:$0xff] %vm857, %v855
        %859 = vrot.lane.b32.xlu0 %v509, 104
        %v860 = vpop.permute.xlu0 %859
        %861 = vrot.lane.b32.xlu0 %v510, 72
        %v862 = vpop.permute.xlu0 %861
        %v864 = vsel %vm514, %v860, 0
        %v867 = vsel %vm514, %v862, 0
        %869 = vmatprep.subr.bf16.mxu0 0
        %870 = vmatpush1.bf16.xpose.msra.mxu0 0
        %871 = vmatprep.subr.bf16.mxu0 0
        %872 = vmatpush1.bf16.xpose.msra.mxu0 0
        %873 = vmatprep.subr.bf16.mxu0 0
        %874 = vmatpush1.bf16.xpose.msra.mxu0 0
        %875 = vmatprep.subr.bf16.mxu0 0
        %876 = vmatpush1.bf16.xpose.msra.mxu0 0
        %877 = vmatprep.subr.bf16.mxu0 0
        %878 = vmatpush1.bf16.xpose.msra.mxu0 0
        %879 = vmatprep.subr.bf16.mxu0 0
        %880 = vmatpush1.bf16.xpose.msra.mxu0 0
        %881 = vmatprep.subr.bf16.mxu0 0
        %882 = vmatpush1.bf16.xpose.msra.mxu0 0
        %883 = vmatprep.subr.bf16.mxu0 0
        %884 = vmatpush1.bf16.xpose.msra.mxu0 %v867
        %885 = vmatprep.subr.bf16.mxu0 0
        %886 = vmatpush2.bf16.xpose.msra.mxu0 0
        %887 = vmatprep.subr.bf16.mxu0 0
        %888 = vmatpush2.bf16.xpose.msra.mxu0 0
        %889 = vmatprep.subr.bf16.mxu0 0
        %890 = vmatpush2.bf16.xpose.msra.mxu0 0
        %891 = vmatprep.subr.bf16.mxu0 0
        %892 = vmatpush2.bf16.xpose.msra.mxu0 0
        %893 = vmatprep.subr.bf16.mxu0 0
        %894 = vmatpush2.bf16.xpose.msra.mxu0 0
        %895 = vmatprep.subr.bf16.mxu0 0
        %896 = vmatpush2.bf16.xpose.msra.mxu0 0
        %897 = vmatprep.subr.bf16.mxu0 0
        %898 = vmatpush2.bf16.xpose.msra.mxu0 0
        %899 = vmatprep.subr.bf16.mxu0 0
        %900 = vmatpush2.bf16.xpose.msra.mxu0 0
        %901 = vmatprep.mubr.bf16.mxu0 0
        %902 = vmatmul.mubr.bf16.gmra.mxu0 %v864
        %v903 = vpop.f32.mrf.mxu0
        %v904 = vadd.f32 0.0, %v903
        %v905 = vpop.f32.mrf.mxu0
        %v906 = vpop.f32.mrf.mxu0
        %v907 = vpop.f32.mrf.mxu0
        %908 = vdwg.mxu0
        %v909 = vsel %vm508, -1e+09, %v904
        %v910 = vsel %vm514, %v909, -inf
        %911 = vmax.xlane.f32.xlu0 %v910
        %v912 = vpop.xlane.xlu0 %911
        %v913 = vsub.f32 %v909, %v912
        %v914 = vmul.f32 %v913, 1.442695
        %v915 = vpow.pop %v914
        %v916 = vsel %vm514, %v915, 0.0
        %917 = vadd.xlane.f32.xlu0 %v916
        %v918 = vpop.xlane.xlu0 %917
        %v919 = vrcp.pop %v918
        %v920 = vmul.f32 %v915, %v919
        %v921 = vpack.c.bf16 %v920, %v920
        %922 = vrot.lane.b32.xlu0 %v510, 40
        %v923 = vpop.permute.xlu0 %922
        %v925 = vsel %vm514, %v921, 0
        %v928 = vsel %vm579, %v923, 0
        %930 = vmatprep.subr.bf16.mxu0 0
        %931 = vmatpush1.bf16.msra.mxu0 0
        %932 = vmatprep.subr.bf16.mxu0 0
        %933 = vmatpush1.bf16.msra.mxu0 0
        %934 = vmatprep.subr.bf16.mxu0 0
        %935 = vmatpush1.bf16.msra.mxu0 0
        %936 = vmatprep.subr.bf16.mxu0 0
        %937 = vmatpush1.bf16.msra.mxu0 0
        %938 = vmatprep.subr.bf16.mxu0 0
        %939 = vmatpush1.bf16.msra.mxu0 0
        %940 = vmatprep.subr.bf16.mxu0 0
        %941 = vmatpush1.bf16.msra.mxu0 0
        %942 = vmatprep.subr.bf16.mxu0 0
        %943 = vmatpush1.bf16.msra.mxu0 0
        %944 = vmatprep.subr.bf16.mxu0 0
        %945 = vmatpush1.bf16.msra.mxu0 %v928
        %946 = vmatprep.subr.bf16.mxu0 0
        %947 = vmatpush2.bf16.msra.mxu0 0
        %948 = vmatprep.subr.bf16.mxu0 0
        %949 = vmatpush2.bf16.msra.mxu0 0
        %950 = vmatprep.subr.bf16.mxu0 0
        %951 = vmatpush2.bf16.msra.mxu0 0
        %952 = vmatprep.subr.bf16.mxu0 0
        %953 = vmatpush2.bf16.msra.mxu0 0
        %954 = vmatprep.subr.bf16.mxu0 0
        %955 = vmatpush2.bf16.msra.mxu0 0
        %956 = vmatprep.subr.bf16.mxu0 0
        %957 = vmatpush2.bf16.msra.mxu0 0
        %958 = vmatprep.subr.bf16.mxu0 0
        %959 = vmatpush2.bf16.msra.mxu0 0
        %960 = vmatprep.subr.bf16.mxu0 0
        %961 = vmatpush2.bf16.msra.mxu0 0
        %962 = vmatprep.mubr.bf16.mxu0 0
        %963 = vmatmul.mubr.bf16.gmra.mxu0 %v925
        %v964 = vpop.f32.mrf.mxu0
        %v965 = vadd.f32 0.0, %v964
        %v966 = vpop.f32.mrf.mxu0
        %v967 = vpop.f32.mrf.mxu0
        %v968 = vpop.f32.mrf.mxu0
        %969 = vdwg.mxu0
        %971 = vrot.lane.b32.xlu0 %v965, 24
        %v972 = vpop.permute.xlu0 %971
        %vm974 = vcmask 261312
        %975 = vst.msk [vmem:[#allocation2] sm:$0xff] %vm974, %v972
        %v976 = vld [vmem:[#allocation2] sm:$0xff]
        %v977 = vpack.c.bf16 %v976, %v976
        %v978 = vld [vmem:[#allocation10] sm:$0xf]
        %v979 = vld [vmem:[#allocation10 + $0x4] sm:$0xf]
        %v980 = vld [vmem:[#allocation10 + $0x8] sm:$0xf]
        %v981 = vld [vmem:[#allocation10 + $0xc] sm:$0xf]
        %v986 = vunpack.c.l.b16 %v978
        %v987 = vunpack.c.l.b16 %v979
        %v988 = vunpack.c.l.b16 %v980
        %v989 = vunpack.c.l.b16 %v981
        %v990 = vpack.c.b16 %v987, %v986
        %v991 = vpack.c.b16 %v989, %v988
        %v995 = vsel %vm402, %v977, 0
        %997 = vmatprep.subr.bf16.mxu0 0
        %998 = vmatpush1.bf16.msra.mxu0 0
        %999 = vmatprep.subr.bf16.mxu0 0
        %1000 = vmatpush1.bf16.msra.mxu0 0
        %1001 = vmatprep.subr.bf16.mxu0 0
        %1002 = vmatpush1.bf16.msra.mxu0 0
        %1003 = vmatprep.subr.bf16.mxu0 0
        %1004 = vmatpush1.bf16.msra.mxu0 0
        %1005 = vmatprep.subr.bf16.mxu0 0
        %1006 = vmatpush1.bf16.msra.mxu0 0
        %1007 = vmatprep.subr.bf16.mxu0 0
        %1008 = vmatpush1.bf16.msra.mxu0 0
        %1009 = vmatprep.subr.bf16.mxu0 0
        %1010 = vmatpush1.bf16.msra.mxu0 %v991
        %1011 = vmatprep.subr.bf16.mxu0 0
        %1012 = vmatpush1.bf16.msra.mxu0 %v990
        %1013 = vmatprep.subr.bf16.mxu0 0
        %1014 = vmatpush2.bf16.msra.mxu0 0
        %1015 = vmatprep.subr.bf16.mxu0 0
        %1016 = vmatpush2.bf16.msra.mxu0 0
        %1017 = vmatprep.subr.bf16.mxu0 0
        %1018 = vmatpush2.bf16.msra.mxu0 0
        %1019 = vmatprep.subr.bf16.mxu0 0
        %1020 = vmatpush2.bf16.msra.mxu0 0
        %1021 = vmatprep.subr.bf16.mxu0 0
        %1022 = vmatpush2.bf16.msra.mxu0 0
        %1023 = vmatprep.subr.bf16.mxu0 0
        %1024 = vmatpush2.bf16.msra.mxu0 0
        %1025 = vmatprep.subr.bf16.mxu0 0
        %1026 = vmatpush2.bf16.msra.mxu0 0
        %1027 = vmatprep.subr.bf16.mxu0 0
        %1028 = vmatpush2.bf16.msra.mxu0 0
        %1029 = vmatprep.mubr.bf16.mxu0 0
        %1030 = vmatmul.mubr.bf16.gmra.mxu0 %v995
        %v1031 = vpop.f32.mrf.mxu0
        %v1032 = vadd.f32 0.0, %v1031
        %v1033 = vpop.f32.mrf.mxu0
        %v1034 = vpop.f32.mrf.mxu0
        %v1035 = vpop.f32.mrf.mxu0
        %1036 = vdwg.mxu0
        %v1037 = vadd.f32 %v399, %v1032
        %v1038 = vld [vmem:[#allocation11] sm:$0x1]
        %v1040 = vlaneseq
        %v1041 = vshrl.u32 %v1040, 7
        %v1042 = vsub.s32 0, %v1041
        %v1043 = vrot.slane %v1038, %v1042
        %v1045 = vadd.f32 %v1037, %v1043
        %1046 = vst.msk [vmem:[%s397] sm:$0xff] %vm402, %v1045
        %p1047 = scmp.lt.s32.totalorder %s23, 1
        %s1048 = scalar_select %p1047, %s23, 1
        %s1049 = smul.addr %s1048, 8
        %s1050 = scalar_lea.vmem %s8, %s1049
        // Predicated region
        $region77: #{decoder_forward.7} parent=51 // pred_check
          %p1051 = pneg %p219
        $region78: #{decoder_forward.7} parent=51 // pred_check_branch
          %1053 = sbr.rel (%p1051) target = $region80
        $region79: #{decoder_forward.7} parent=51 // pred_region
          _
        $region80: #{decoder_forward.7} parent=51 // pred_fallthru
          _
      $region52: #{decoder_forward.7} parent=5 // pred_fallthru
        _
      %p1054 = scmp.le.s32.totalorder 2, %s18
      // Predicated region
      $region81: #{decoder_forward.7} parent=5 // pred_check
        %p1055 = pneg %p1054
      $region82: #{decoder_forward.7} parent=5 // pred_check_branch
        %1057 = sbr.rel (%p1055) target = $region84
      $region83: #{decoder_forward.7} parent=5 // pred_region
        %s1058 = ssub.s32 %s18, 2
        // Predicated region
        $region85: #{decoder_forward.7} parent=83 // pred_check
          %p1059 = pneg %p225
        $region86: #{decoder_forward.7} parent=83 // pred_check_branch
          %1061 = sbr.rel (%p1059) target = $region88
        $region87: #{decoder_forward.7} parent=83 // pred_region
          %p1062 = scmp.lt.s32.totalorder %s24, 1
          %s1063 = scalar_select %p1062, %s24, 1
          %s1064 = smul.addr %s1063, 8
          %s1065 = scalar_lea.vmem %s8, %s1064
        $region88: #{decoder_forward.7} parent=83 // pred_fallthru
          _
      $region84: #{decoder_forward.7} parent=5 // pred_fallthru
        _
    $region6: #{decoder_forward.7} parent=1 // loop_footer
      %s22 = sadd.s32 1, %s18
    $region7: #{decoder_forward.7} parent=1 // loop_footer_branch
      %17 = sbr.rel target = $region3
    $region8: #{decoder_forward.7} parent=1 // loop_exit
      _
    %1066 = vsyncpa [#allocation4], 1
    %s1067 = scalar_lea.sflag [#allocation4], 1
    %1068 = vsyncpa %s1067, 1
    %1069 = vsyncpa [#allocation6], 1
    %1070 = vsyncpa [#allocation9], 1
    %1071 = vsyncpa [#allocation12], 1

// kernel: decoder_forward.8
$region0: #{decoder_forward.8}
  #allocation0 [shape = 'u32[]', space=smem, size = 0x4, offset = 0x4, fixed_abs, tag = 'smem constant byte address 0x4 - core index']
  #allocation1 [shape = 'u32[144,128]{1,0:T(1,128)}', space=vmem, size = 0x12000, scoped, tag = 'internal scratch']
  #allocation2 [shape = 'f32[8,32]{1,0:T(8,128)}', space=vmem, size = 0x1000, scoped, tag = 'scratch operand']
  %s0 = inlined_call_operand.vmem [shape: f32[2,8,32], index: 0, kind: input, shape index: {}]
  %s1 = inlined_call_operand.vmem [shape: f32[2,8,32], index: 1, kind: input, shape index: {}]
  %s2 = inlined_call_operand.vmem [shape: f32[1,32], index: 2, kind: input, shape index: {}]
  %s3 = inlined_call_operand.vmem [shape: f32[1,32], index: 3, kind: input, shape index: {}]
  %s4 = inlined_call_operand.vmem [shape: bf16[32,32], index: 4, kind: input, shape index: {}]
  %s5 = inlined_call_operand.vmem [shape: f32[1,32], index: 5, kind: input, shape index: {}]
  %s6 = inlined_call_operand.vmem [shape: bf16[32,64], index: 6, kind: input, shape index: {}]
  %s7 = inlined_call_operand.vmem [shape: f32[1,64], index: 7, kind: input, shape index: {}]
  %s8 = inlined_call_operand.vmem [shape: bf16[32,32], index: 8, kind: input, shape index: {}]
  %s9 = inlined_call_operand.hbm [shape: f32[1,32], index: 9, kind: input, shape index: {}]
  %s10 = inlined_call_operand.vmem [shape: f32[2,1,8,8], index: 10, kind: input, shape index: {}]
  %s11 = inlined_call_operand.vmem [shape: f32[2,8,32], index: 11, kind: output, shape index: {}]
  %s12 = sld [smem:[#allocation0]]
  $region81: #{decoder_forward.8} parent=0
    _
  %s14 = ssub.s32 1, %s12
  %s15 = scalar_select 0, %s14, %s12
  $region1: #{decoder_forward.8} parent=0
    #allocation3 [shape = 'u8[512]{0}', space=vmem, size = 0x400, scoped, tag = 'input window, operand 9, single buffered']
    #allocation4 [shape = 's32[2]{0}', space=sflag, size = 0x8, scoped, tag = 'scoped memory for decoder_forward.8']
    %16 = vsyncpa [#allocation4], 0
    loop: start=0, step=1, limit=4
    $region2: #{decoder_forward.8} parent=1 // loop_pre_header
      _
    $region3: #{decoder_forward.8} parent=1 // loop_header
      %s18 = sphi 0, %s22
      %p19 = scmp.ge.s32.totalorder %s18, 4
      %s28 = sphi 0, %s30
      %s31 = sphi 0, %s28
      %s32 = sphi 0, %s31
      %s48 = sphi 0, %s32
      %s54 = sphi 0, %s56
      %s57 = sphi 0, %s54
      %s58 = sphi 0, %s57
      %s74 = sphi 0, %s58
      %s78 = sphi 0, %s78
      %s80 = sphi 0, %s78
      %s81 = sphi 0, %s80
      %s95 = sphi 0, %s81
      %s99 = sphi 0, %s99
      %s101 = sphi 0, %s99
      %s102 = sphi 0, %s101
      %s116 = sphi 0, %s102
      %s120 = sphi 0, %s120
      %s122 = sphi 0, %s120
      %s123 = sphi 0, %s122
      %s137 = sphi 0, %s123
      %s141 = sphi 0, %s141
      %s143 = sphi 0, %s141
      %s144 = sphi 0, %s143
      %s158 = sphi 0, %s144
      %s162 = sphi 0, %s162
      %s164 = sphi 0, %s162
      %s165 = sphi 0, %s164
      %s179 = sphi 0, %s165
      %s183 = sphi 0, %s183
      %s185 = sphi 0, %s183
      %s186 = sphi 0, %s185
      %s200 = sphi 0, %s186
      %s204 = sphi 0, %s204
      %s206 = sphi 0, %s204
      %s207 = sphi 0, %s206
      %s221 = sphi 0, %s207
      %s225 = sphi 0, %s225
      %s227 = sphi 0, %s225
      %s228 = sphi 0, %s227
      %s242 = sphi 0, %s228
      %s248 = sphi 0, %s250
      %s251 = sphi 0, %s248
      %s252 = sphi 0, %s251
      %s268 = sphi 0, %s252
      %s274 = sphi 0, %s276
      %s277 = sphi 0, %s274
      %s278 = sphi 0, %s277
      %s294 = sphi 0, %s278
    $region4: #{decoder_forward.8} parent=1 // loop_header_branch
      %21 = sbr.rel (%p19) target = $region8
    $region5: #{decoder_forward.8} parent=1 // loop_body
      %s23 = ssub.s32 %s18, 1
      %s24 = ssub.s32 %s18, 2
      %s25 = sadd.s32 %s18, 1
      %s26 = ssub.s32 %s18, %s25
      %p27 = scmp.eq.s32.totalorder %s26, 0
      %s29 = sadd.s32 %s28, 1
      %s30 = scalar_select %p27, %s28, %s29
      %p33 = pneg %p27
      %p34 = scmp.eq.s32.totalorder %s18, 1
      %p35 = por %p33, %p34
      %p36 = scmp.ne.s32.totalorder %s28, %s31
      %p37 = scmp.eq.s32.totalorder %s18, 0
      %p38 = por %p36, %p37
      %p39 = scmp.ne.s32.totalorder %s28, %s31
      %p40 = scmp.eq.s32.totalorder %s23, 1
      %p41 = por %p39, %p40
      %p42 = scmp.ne.s32.totalorder %s31, %s32
      %p43 = scmp.eq.s32.totalorder %s23, 0
      %p44 = por %p42, %p43
      %p45 = scmp.ne.s32.totalorder %s31, %s32
      %p46 = scmp.eq.s32.totalorder %s24, 1
      %p47 = por %p45, %p46
      %p49 = scmp.ne.s32.totalorder %s32, %s48
      %p50 = scmp.eq.s32.totalorder %s24, 0
      %p51 = por %p49, %p50
      %s52 = ssub.s32 %s18, %s25
      %p53 = scmp.eq.s32.totalorder %s52, 0
      %s55 = sadd.s32 %s54, 1
      %s56 = scalar_select %p53, %s54, %s55
      %p59 = pneg %p53
      %p60 = scmp.eq.s32.totalorder %s18, 1
      %p61 = por %p59, %p60
      %p62 = scmp.ne.s32.totalorder %s54, %s57
      %p63 = scmp.eq.s32.totalorder %s18, 0
      %p64 = por %p62, %p63
      %p65 = scmp.ne.s32.totalorder %s54, %s57
      %p66 = scmp.eq.s32.totalorder %s23, 1
      %p67 = por %p65, %p66
      %p68 = scmp.ne.s32.totalorder %s57, %s58
      %p69 = scmp.eq.s32.totalorder %s23, 0
      %p70 = por %p68, %p69
      %p71 = scmp.ne.s32.totalorder %s57, %s58
      %p72 = scmp.eq.s32.totalorder %s24, 1
      %p73 = por %p71, %p72
      %p75 = scmp.ne.s32.totalorder %s58, %s74
      %p76 = scmp.eq.s32.totalorder %s24, 0
      %p77 = por %p75, %p76
      %s79 = sadd.s32 %s78, 1
      %p82 = scmp.eq.s32.totalorder %s18, 1
      %p83 = scmp.ne.s32.totalorder %s78, %s80
      %p84 = scmp.eq.s32.totalorder %s18, 0
      %p85 = por %p83, %p84
      %p86 = scmp.ne.s32.totalorder %s78, %s80
      %p87 = scmp.eq.s32.totalorder %s23, 1
      %p88 = por %p86, %p87
      %p89 = scmp.ne.s32.totalorder %s80, %s81
      %p90 = scmp.eq.s32.totalorder %s23, 0
      %p91 = por %p89, %p90
      %p92 = scmp.ne.s32.totalorder %s80, %s81
      %p93 = scmp.eq.s32.totalorder %s24, 1
      %p94 = por %p92, %p93
      %p96 = scmp.ne.s32.totalorder %s81, %s95
      %p97 = scmp.eq.s32.totalorder %s24, 0
      %p98 = por %p96, %p97
      %s100 = sadd.s32 %s99, 1
      %p103 = scmp.eq.s32.totalorder %s18, 1
      %p104 = scmp.ne.s32.totalorder %s99, %s101
      %p105 = scmp.eq.s32.totalorder %s18, 0
      %p106 = por %p104, %p105
      %p107 = scmp.ne.s32.totalorder %s99, %s101
      %p108 = scmp.eq.s32.totalorder %s23, 1
      %p109 = por %p107, %p108
      %p110 = scmp.ne.s32.totalorder %s101, %s102
      %p111 = scmp.eq.s32.totalorder %s23, 0
      %p112 = por %p110, %p111
      %p113 = scmp.ne.s32.totalorder %s101, %s102
      %p114 = scmp.eq.s32.totalorder %s24, 1
      %p115 = por %p113, %p114
      %p117 = scmp.ne.s32.totalorder %s102, %s116
      %p118 = scmp.eq.s32.totalorder %s24, 0
      %p119 = por %p117, %p118
      %s121 = sadd.s32 %s120, 1
      %p124 = scmp.eq.s32.totalorder %s18, 1
      %p125 = scmp.ne.s32.totalorder %s120, %s122
      %p126 = scmp.eq.s32.totalorder %s18, 0
      %p127 = por %p125, %p126
      %p128 = scmp.ne.s32.totalorder %s120, %s122
      %p129 = scmp.eq.s32.totalorder %s23, 1
      %p130 = por %p128, %p129
      %p131 = scmp.ne.s32.totalorder %s122, %s123
      %p132 = scmp.eq.s32.totalorder %s23, 0
      %p133 = por %p131, %p132
      %p134 = scmp.ne.s32.totalorder %s122, %s123
      %p135 = scmp.eq.s32.totalorder %s24, 1
      %p136 = por %p134, %p135
      %p138 = scmp.ne.s32.totalorder %s123, %s137
      %p139 = scmp.eq.s32.totalorder %s24, 0
      %p140 = por %p138, %p139
      %s142 = sadd.s32 %s141, 1
      %p145 = scmp.eq.s32.totalorder %s18, 1
      %p146 = scmp.ne.s32.totalorder %s141, %s143
      %p147 = scmp.eq.s32.totalorder %s18, 0
      %p148 = por %p146, %p147
      %p149 = scmp.ne.s32.totalorder %s141, %s143
      %p150 = scmp.eq.s32.totalorder %s23, 1
      %p151 = por %p149, %p150
      %p152 = scmp.ne.s32.totalorder %s143, %s144
      %p153 = scmp.eq.s32.totalorder %s23, 0
      %p154 = por %p152, %p153
      %p155 = scmp.ne.s32.totalorder %s143, %s144
      %p156 = scmp.eq.s32.totalorder %s24, 1
      %p157 = por %p155, %p156
      %p159 = scmp.ne.s32.totalorder %s144, %s158
      %p160 = scmp.eq.s32.totalorder %s24, 0
      %p161 = por %p159, %p160
      %s163 = sadd.s32 %s162, 1
      %p166 = scmp.eq.s32.totalorder %s18, 1
      %p167 = scmp.ne.s32.totalorder %s162, %s164
      %p168 = scmp.eq.s32.totalorder %s18, 0
      %p169 = por %p167, %p168
      %p170 = scmp.ne.s32.totalorder %s162, %s164
      %p171 = scmp.eq.s32.totalorder %s23, 1
      %p172 = por %p170, %p171
      %p173 = scmp.ne.s32.totalorder %s164, %s165
      %p174 = scmp.eq.s32.totalorder %s23, 0
      %p175 = por %p173, %p174
      %p176 = scmp.ne.s32.totalorder %s164, %s165
      %p177 = scmp.eq.s32.totalorder %s24, 1
      %p178 = por %p176, %p177
      %p180 = scmp.ne.s32.totalorder %s165, %s179
      %p181 = scmp.eq.s32.totalorder %s24, 0
      %p182 = por %p180, %p181
      %s184 = sadd.s32 %s183, 1
      %p187 = scmp.eq.s32.totalorder %s18, 1
      %p188 = scmp.ne.s32.totalorder %s183, %s185
      %p189 = scmp.eq.s32.totalorder %s18, 0
      %p190 = por %p188, %p189
      %p191 = scmp.ne.s32.totalorder %s183, %s185
      %p192 = scmp.eq.s32.totalorder %s23, 1
      %p193 = por %p191, %p192
      %p194 = scmp.ne.s32.totalorder %s185, %s186
      %p195 = scmp.eq.s32.totalorder %s23, 0
      %p196 = por %p194, %p195
      %p197 = scmp.ne.s32.totalorder %s185, %s186
      %p198 = scmp.eq.s32.totalorder %s24, 1
      %p199 = por %p197, %p198
      %p201 = scmp.ne.s32.totalorder %s186, %s200
      %p202 = scmp.eq.s32.totalorder %s24, 0
      %p203 = por %p201, %p202
      %s205 = sadd.s32 %s204, 1
      %p208 = scmp.eq.s32.totalorder %s18, 1
      %p209 = scmp.ne.s32.totalorder %s204, %s206
      %p210 = scmp.eq.s32.totalorder %s18, 0
      %p211 = por %p209, %p210
      %p212 = scmp.ne.s32.totalorder %s204, %s206
      %p213 = scmp.eq.s32.totalorder %s23, 1
      %p214 = por %p212, %p213
      %p215 = scmp.ne.s32.totalorder %s206, %s207
      %p216 = scmp.eq.s32.totalorder %s23, 0
      %p217 = por %p215, %p216
      %p218 = scmp.ne.s32.totalorder %s206, %s207
      %p219 = scmp.eq.s32.totalorder %s24, 1
      %p220 = por %p218, %p219
      %p222 = scmp.ne.s32.totalorder %s207, %s221
      %p223 = scmp.eq.s32.totalorder %s24, 0
      %p224 = por %p222, %p223
      %s226 = sadd.s32 %s225, 1
      %p229 = scmp.eq.s32.totalorder %s18, 1
      %p230 = scmp.ne.s32.totalorder %s225, %s227
      %p231 = scmp.eq.s32.totalorder %s18, 0
      %p232 = por %p230, %p231
      %p233 = scmp.ne.s32.totalorder %s225, %s227
      %p234 = scmp.eq.s32.totalorder %s23, 1
      %p235 = por %p233, %p234
      %p236 = scmp.ne.s32.totalorder %s227, %s228
      %p237 = scmp.eq.s32.totalorder %s23, 0
      %p238 = por %p236, %p237
      %p239 = scmp.ne.s32.totalorder %s227, %s228
      %p240 = scmp.eq.s32.totalorder %s24, 1
      %p241 = por %p239, %p240
      %p243 = scmp.ne.s32.totalorder %s228, %s242
      %p244 = scmp.eq.s32.totalorder %s24, 0
      %p245 = por %p243, %p244
      %s246 = ssub.s32 %s18, %s25
      %p247 = scmp.eq.s32.totalorder %s246, 0
      %s249 = sadd.s32 %s248, 1
      %s250 = scalar_select %p247, %s248, %s249
      %p253 = pneg %p247
      %p254 = scmp.eq.s32.totalorder %s18, 1
      %p255 = por %p253, %p254
      %p256 = scmp.ne.s32.totalorder %s248, %s251
      %p257 = scmp.eq.s32.totalorder %s18, 0
      %p258 = por %p256, %p257
      %p259 = scmp.ne.s32.totalorder %s248, %s251
      %p260 = scmp.eq.s32.totalorder %s23, 1
      %p261 = por %p259, %p260
      %p262 = scmp.ne.s32.totalorder %s251, %s252
      %p263 = scmp.eq.s32.totalorder %s23, 0
      %p264 = por %p262, %p263
      %p265 = scmp.ne.s32.totalorder %s251, %s252
      %p266 = scmp.eq.s32.totalorder %s24, 1
      %p267 = por %p265, %p266
      %p269 = scmp.ne.s32.totalorder %s252, %s268
      %p270 = scmp.eq.s32.totalorder %s24, 0
      %p271 = por %p269, %p270
      %s272 = ssub.s32 %s18, %s25
      %p273 = scmp.eq.s32.totalorder %s272, 0
      %s275 = sadd.s32 %s274, 1
      %s276 = scalar_select %p273, %s274, %s275
      %p279 = pneg %p273
      %p280 = scmp.eq.s32.totalorder %s18, 1
      %p281 = por %p279, %p280
      %p282 = scmp.ne.s32.totalorder %s274, %s277
      %p283 = scmp.eq.s32.totalorder %s18, 0
      %p284 = por %p282, %p283
      %p285 = scmp.ne.s32.totalorder %s274, %s277
      %p286 = scmp.eq.s32.totalorder %s23, 1
      %p287 = por %p285, %p286
      %p288 = scmp.ne.s32.totalorder %s277, %s278
      %p289 = scmp.eq.s32.totalorder %s23, 0
      %p290 = por %p288, %p289
      %p291 = scmp.ne.s32.totalorder %s277, %s278
      %p292 = scmp.eq.s32.totalorder %s24, 1
      %p293 = por %p291, %p292
      %p295 = scmp.ne.s32.totalorder %s278, %s294
      %p296 = scmp.eq.s32.totalorder %s24, 0
      %p297 = por %p295, %p296
      %p298 = scmp.le.s32.totalorder 1, %s18
      %p299 = scmp.lt.s32.totalorder %s18, 3
      %p300 = pnand %p298, %p299
      %p301 = pneg %p300
      // Predicated region
      $region9: #{decoder_forward.8} parent=5 // pred_check
        _
      $region10: #{decoder_forward.8} parent=5 // pred_check_branch
        %303 = sbr.rel (%p300) target = $region12
      $region11: #{decoder_forward.8} parent=5 // pred_region
        %s304 = ssub.s32 %s18, 1
        // Predicated region
        $region13: #{decoder_forward.8} parent=11 // pred_check
          %p305 = pneg %p91
        $region14: #{decoder_forward.8} parent=11 // pred_check_branch
          %307 = sbr.rel (%p305) target = $region16
        $region15: #{decoder_forward.8} parent=11 // pred_region
          _
        $region16: #{decoder_forward.8} parent=11 // pred_fallthru
          _
        // Predicated region
        $region17: #{decoder_forward.8} parent=11 // pred_check
          %p308 = pneg %p112
        $region18: #{decoder_forward.8} parent=11 // pred_check_branch
          %310 = sbr.rel (%p308) target = $region20
        $region19: #{decoder_forward.8} parent=11 // pred_region
          _
        $region20: #{decoder_forward.8} parent=11 // pred_fallthru
          _
        // Predicated region
        $region21: #{decoder_forward.8} parent=11 // pred_check
          %p311 = pneg %p133
        $region22: #{decoder_forward.8} parent=11 // pred_check_branch
          %313 = sbr.rel (%p311) target = $region24
        $region23: #{decoder_forward.8} parent=11 // pred_region
          _
        $region24: #{decoder_forward.8} parent=11 // pred_fallthru
          _
        // Predicated region
        $region25: #{decoder_forward.8} parent=11 // pred_check
          %p314 = pneg %p154
        $region26: #{decoder_forward.8} parent=11 // pred_check_branch
          %316 = sbr.rel (%p314) target = $region28
        $region27: #{decoder_forward.8} parent=11 // pred_region
          _
        $region28: #{decoder_forward.8} parent=11 // pred_fallthru
          _
        // Predicated region
        $region29: #{decoder_forward.8} parent=11 // pred_check
          %p317 = pneg %p175
        $region30: #{decoder_forward.8} parent=11 // pred_check_branch
          %319 = sbr.rel (%p317) target = $region32
        $region31: #{decoder_forward.8} parent=11 // pred_region
          _
        $region32: #{decoder_forward.8} parent=11 // pred_fallthru
          _
        // Predicated region
        $region33: #{decoder_forward.8} parent=11 // pred_check
          %p320 = pneg %p196
        $region34: #{decoder_forward.8} parent=11 // pred_check_branch
          %322 = sbr.rel (%p320) target = $region36
        $region35: #{decoder_forward.8} parent=11 // pred_region
          _
        $region36: #{decoder_forward.8} parent=11 // pred_fallthru
          _
        // Predicated region
        $region37: #{decoder_forward.8} parent=11 // pred_check
          %p323 = pneg %p217
        $region38: #{decoder_forward.8} parent=11 // pred_check_branch
          %325 = sbr.rel (%p323) target = $region40
        $region39: #{decoder_forward.8} parent=11 // pred_region
          _
        $region40: #{decoder_forward.8} parent=11 // pred_fallthru
          _
        // Predicated region
        $region41: #{decoder_forward.8} parent=11 // pred_check
          %p326 = pneg %p238
        $region42: #{decoder_forward.8} parent=11 // pred_check_branch
          %328 = sbr.rel (%p326) target = $region44
        $region43: #{decoder_forward.8} parent=11 // pred_region
          %s330 = ssub.s32 16, 16
          %331 = vsyncadd [#allocation4], %s330
          %s333 = sshll.u32 [#allocation3], 4
          %s334 = int_to_ptr.vmem [resolvable:$true] %s333
          %336 = dma.hbm_to_vmem [thread:$0]  %s9, 16, %s334, [#allocation4]
        $region44: #{decoder_forward.8} parent=11 // pred_fallthru
          _
      $region12: #{decoder_forward.8} parent=5 // pred_fallthru
        _
      %p337 = scmp.lt.s32.totalorder %s18, 2
      // Predicated region
      $region45: #{decoder_forward.8} parent=5 // pred_check
        %p338 = pneg %p337
      $region46: #{decoder_forward.8} parent=5 // pred_check_branch
        %340 = sbr.rel (%p338) target = $region48
      $region47: #{decoder_forward.8} parent=5 // pred_region
        // Predicated region
        $region49: #{decoder_forward.8} parent=47 // pred_check
          %p341 = pneg %p38
        $region50: #{decoder_forward.8} parent=47 // pred_check_branch
          %343 = sbr.rel (%p341) target = $region52
        $region51: #{decoder_forward.8} parent=47 // pred_region
          %p344 = scmp.lt.s32.totalorder %s18, 1
          %s345 = scalar_select %p344, %s18, 1
          %s346 = smul.addr %s345, 8
          %s347 = scalar_lea.vmem %s0, %s346
        $region52: #{decoder_forward.8} parent=47 // pred_fallthru
          _
        // Predicated region
        $region53: #{decoder_forward.8} parent=47 // pred_check
          %p348 = pneg %p64
        $region54: #{decoder_forward.8} parent=47 // pred_check_branch
          %350 = sbr.rel (%p348) target = $region56
        $region55: #{decoder_forward.8} parent=47 // pred_region
          %p351 = scmp.lt.s32.totalorder %s18, 1
          %s352 = scalar_select %p351, %s18, 1
          %s353 = smul.addr %s352, 8
          %s354 = scalar_lea.vmem %s1, %s353
        $region56: #{decoder_forward.8} parent=47 // pred_fallthru
          _
        // Predicated region
        $region57: #{decoder_forward.8} parent=47 // pred_check
          %p355 = pneg %p258
        $region58: #{decoder_forward.8} parent=47 // pred_check_branch
          %357 = sbr.rel (%p355) target = $region60
        $region59: #{decoder_forward.8} parent=47 // pred_region
          %p358 = scmp.lt.s32.totalorder %s18, 1
          %s359 = scalar_select %p358, %s18, 1
          %s360 = smul.addr %s359, 8
          %s361 = scalar_lea.vmem %s10, %s360
        $region60: #{decoder_forward.8} parent=47 // pred_fallthru
          _
      $region48: #{decoder_forward.8} parent=5 // pred_fallthru
        _
      %p362 = scmp.le.s32.totalorder 1, %s18
      %p363 = scmp.lt.s32.totalorder %s18, 3
      %p364 = pnand %p362, %p363
      %p365 = pneg %p364
      // Predicated region
      $region61: #{decoder_forward.8} parent=5 // pred_check
        _
      $region62: #{decoder_forward.8} parent=5 // pred_check_branch
        %367 = sbr.rel (%p364) target = $region64
      $region63: #{decoder_forward.8} parent=5 // pred_region
        %s368 = ssub.s32 %s18, 1
        // Predicated region
        $region65: #{decoder_forward.8} parent=63 // pred_check
          %p369 = pneg %p238
        $region66: #{decoder_forward.8} parent=63 // pred_check_branch
          %371 = sbr.rel (%p369) target = $region68
        $region67: #{decoder_forward.8} parent=63 // pred_region
          %372 = dma.done [#allocation4], 16
        $region68: #{decoder_forward.8} parent=63 // pred_fallthru
          _
        %p373 = scmp.lt.s32.totalorder %s23, 1
        %s374 = scalar_select %p373, %s23, 1
        %s375 = smul.addr %s374, 8
        %s376 = scalar_lea.vmem %s0, %s375
        %p377 = pneg %p44
        %p378 = pneg %p41
        %p379 = scmp.lt.s32.totalorder %s23, 1
        %s380 = scalar_select %p379, %s23, 1
        %s381 = smul.addr %s380, 8
        %s382 = scalar_lea.vmem %s1, %s381
        %p383 = pneg %p70
        %p384 = pneg %p67
        %p385 = pneg %p91
        %p386 = pneg %p88
        %p387 = pneg %p112
        %p388 = pneg %p109
        %p389 = pneg %p133
        %p390 = pneg %p130
        %p391 = pneg %p154
        %p392 = pneg %p151
        %p393 = pneg %p175
        %p394 = pneg %p172
        %p395 = pneg %p196
        %p396 = pneg %p193
        %p397 = pneg %p217
        %p398 = pneg %p214
        %p399 = pneg %p238
        %p400 = pneg %p235
        %p401 = scmp.lt.s32.totalorder %s23, 1
        %s402 = scalar_select %p401, %s23, 1
        %s403 = smul.addr %s402, 8
        %s404 = scalar_lea.vmem %s10, %s403
        %p405 = pneg %p264
        %p406 = pneg %p261
        %p407 = pneg %p290
        %p408 = pneg %p287
        %p409 = scmp.lt.s32.totalorder %s23, 1
        %s410 = scalar_select %p409, %s23, 1
        %s411 = smul.addr %s410, 8
        %s412 = scalar_lea.vmem %s11, %s411
        %p413 = scmp.lt.s32.totalorder %s23, 1
        %s414 = scalar_select %p413, %s23, 1
        %s415 = smul.addr %s414, 8
        %s416 = scalar_lea.vmem %s0, %s415
        %p417 = scmp.lt.s32.totalorder %s23, 1
        %s418 = scalar_select %p417, %s23, 1
        %s419 = smul.addr %s418, 8
        %s420 = scalar_lea.vmem %s1, %s419
        %p421 = scmp.lt.s32.totalorder %s23, 1
        %s422 = scalar_select %p421, %s23, 1
        %s423 = smul.addr %s422, 8
        %s424 = scalar_lea.vmem %s10, %s423
        %p425 = scmp.lt.s32.totalorder %s23, 1
        %s426 = scalar_select %p425, %s23, 1
        %s427 = smul.addr %s426, 8
        %s428 = scalar_lea.vmem %s11, %s427
        %v430 = vld [vmem:[%s416] sm:$0xff]
        %v431 = vld [vmem:[%s420] sm:$0xff]
        %v432 = vld [vmem:[%s2] sm:$0x1]
        %v433 = vld [vmem:[%s3] sm:$0x1]
        %vm434 = vcmask 261120
        %v435 = vsel %vm434, %v430, 0.0
        %436 = vadd.xlane.f32.xlu0 %v435
        %v437 = vpop.xlane.xlu0 %436
        %v438 = vrcp.pop 32.0
        %v439 = vmul.f32 %v437, %v438
        %v440 = vsub.f32 %v430, %v439
        %v441 = vmul.f32 %v440, %v440
        %v442 = vsel %vm434, %v441, 0.0
        %443 = vadd.xlane.f32.xlu0 %v442
        %v444 = vpop.xlane.xlu0 %443
        %v445 = vmul.f32 %v444, 0.032258064
        %v446 = vrsqrt.pop %v445
        %v447 = vmul.f32 %v445, %v446
        %vm448 = vcmp.eq.f32.partialorder %v445, inf
        %v449 = vsel %vm448, %v445, %v447
        %vm450 = vcmp.eq.f32.partialorder %v445, 0.0
        %v451 = vand.u32 %v445, 2147483648
        %v452 = vsel %vm450, %v451, %v449
        %v453 = vadd.f32 %v452, 1e-06
        %v454 = vrcp.pop %v453
        %v455 = vmul.f32 1.0, %v454
        %v457 = vlaneseq
        %v458 = vshrl.u32 %v457, 7
        %v459 = vsub.s32 0, %v458
        %v460 = vrot.slane %v432, %v459
        %v462 = vmul.f32 %v460, %v440
        %v463 = vmul.f32 %v462, %v455
        %v465 = vlaneseq
        %v466 = vshrl.u32 %v465, 7
        %v467 = vsub.s32 0, %v466
        %v468 = vrot.slane %v433, %v467
        %v470 = vadd.f32 %v463, %v468
        %v471 = vpack.c.bf16 %v470, %v470
        %v472 = vld [vmem:[%s4] sm:$0xf]
        %v473 = vld [vmem:[%s4 + $0x4] sm:$0xf]
        %v474 = vld [vmem:[%s4 + $0x8] sm:$0xf]
        %v475 = vld [vmem:[%s4 + $0xc] sm:$0xf]
        %v476 = vld [vmem:[%s5] sm:$0x1]
        %v478 = vlaneseq
        %v479 = vshrl.u32 %v478, 7
        %v480 = vsub.s32 0, %v479
        %v481 = vrot.slane %v476, %v480
        %v487 = vunpack.c.l.b16 %v472
        %v488 = vunpack.c.l.b16 %v473
        %v489 = vunpack.c.l.b16 %v474
        %v490 = vunpack.c.l.b16 %v475
        %v491 = vpack.c.b16 %v488, %v487
        %v492 = vpack.c.b16 %v490, %v489
        %v496 = vsel %vm434, %v471, 0
        %498 = vmatprep.subr.bf16.mxu0 0
        %499 = vmatpush1.bf16.msra.mxu0 0
        %500 = vmatprep.subr.bf16.mxu0 0
        %501 = vmatpush1.bf16.msra.mxu0 0
        %502 = vmatprep.subr.bf16.mxu0 0
        %503 = vmatpush1.bf16.msra.mxu0 0
        %504 = vmatprep.subr.bf16.mxu0 0
        %505 = vmatpush1.bf16.msra.mxu0 0
        %506 = vmatprep.subr.bf16.mxu0 0
        %507 = vmatpush1.bf16.msra.mxu0 0
        %508 = vmatprep.subr.bf16.mxu0 0
        %509 = vmatpush1.bf16.msra.mxu0 0
        %510 = vmatprep.subr.bf16.mxu0 0
        %511 = vmatpush1.bf16.msra.mxu0 %v492
        %512 = vmatprep.subr.bf16.mxu0 0
        %513 = vmatpush1.bf16.msra.mxu0 %v491
        %514 = vmatprep.subr.bf16.mxu0 0
        %515 = vmatpush2.bf16.msra.mxu0 0
        %516 = vmatprep.subr.bf16.mxu0 0
        %517 = vmatpush2.bf16.msra.mxu0 0
        %518 = vmatprep.subr.bf16.mxu0 0
        %519 = vmatpush2.bf16.msra.mxu0 0
        %520 = vmatprep.subr.bf16.mxu0 0
        %521 = vmatpush2.bf16.msra.mxu0 0
        %522 = vmatprep.subr.bf16.mxu0 0
        %523 = vmatpush2.bf16.msra.mxu0 0
        %524 = vmatprep.subr.bf16.mxu0 0
        %525 = vmatpush2.bf16.msra.mxu0 0
        %526 = vmatprep.subr.bf16.mxu0 0
        %527 = vmatpush2.bf16.msra.mxu0 0
        %528 = vmatprep.subr.bf16.mxu0 0
        %529 = vmatpush2.bf16.msra.mxu0 0
        %530 = vmatprep.mubr.bf16.mxu0 0
        %531 = vmatmul.mubr.bf16.gmra.mxu0 %v496
        %v532 = vpop.f32.mrf.mxu0
        %v533 = vadd.f32 %v481, %v532
        %v534 = vpop.f32.mrf.mxu0
        %v535 = vpop.f32.mrf.mxu0
        %v536 = vpop.f32.mrf.mxu0
        %537 = vdwg.mxu0
        %v538 = vmul.f32 %v533, 0.35355338
        %v539 = vpack.c.bf16 %v431, %v431
        %v540 = vld [vmem:[%s6] sm:$0xf]
        %v541 = vld [vmem:[%s6 + $0x4] sm:$0xf]
        %v542 = vld [vmem:[%s6 + $0x8] sm:$0xf]
        %v543 = vld [vmem:[%s6 + $0xc] sm:$0xf]
        %v544 = vld [vmem:[%s7] sm:$0x1]
        %v546 = vlaneseq
        %v547 = vshrl.u32 %v546, 7
        %v548 = vsub.s32 0, %v547
        %v549 = vrot.slane %v544, %v548
        %v555 = vunpack.c.l.b16 %v540
        %v556 = vunpack.c.l.b16 %v541
        %v557 = vunpack.c.l.b16 %v542
        %v558 = vunpack.c.l.b16 %v543
        %v559 = vpack.c.b16 %v556, %v555
        %v560 = vpack.c.b16 %v558, %v557
        %v564 = vsel %vm434, %v539, 0
        %566 = vmatprep.subr.bf16.mxu0 0
        %567 = vmatpush1.bf16.msra.mxu0 0
        %568 = vmatprep.subr.bf16.mxu0 0
        %569 = vmatpush1.bf16.msra.mxu0 0
        %570 = vmatprep.subr.bf16.mxu0 0
        %571 = vmatpush1.bf16.msra.mxu0 0
        %572 = vmatprep.subr.bf16.mxu0 0
        %573 = vmatpush1.bf16.msra.mxu0 0
        %574 = vmatprep.subr.bf16.mxu0 0
        %575 = vmatpush1.bf16.msra.mxu0 0
        %576 = vmatprep.subr.bf16.mxu0 0
        %577 = vmatpush1.bf16.msra.mxu0 0
        %578 = vmatprep.subr.bf16.mxu0 0
        %579 = vmatpush1.bf16.msra.mxu0 %v560
        %580 = vmatprep.subr.bf16.mxu0 0
        %581 = vmatpush1.bf16.msra.mxu0 %v559
        %582 = vmatprep.subr.bf16.mxu0 0
        %583 = vmatpush2.bf16.msra.mxu0 0
        %584 = vmatprep.subr.bf16.mxu0 0
        %585 = vmatpush2.bf16.msra.mxu0 0
        %586 = vmatprep.subr.bf16.mxu0 0
        %587 = vmatpush2.bf16.msra.mxu0 0
        %588 = vmatprep.subr.bf16.mxu0 0
        %589 = vmatpush2.bf16.msra.mxu0 0
        %590 = vmatprep.subr.bf16.mxu0 0
        %591 = vmatpush2.bf16.msra.mxu0 0
        %592 = vmatprep.subr.bf16.mxu0 0
        %593 = vmatpush2.bf16.msra.mxu0 0
        %594 = vmatprep.subr.bf16.mxu0 0
        %595 = vmatpush2.bf16.msra.mxu0 0
        %596 = vmatprep.subr.bf16.mxu0 0
        %597 = vmatpush2.bf16.msra.mxu0 0
        %598 = vmatprep.mubr.bf16.mxu0 0
        %599 = vmatmul.mubr.bf16.gmra.mxu0 %v564
        %v600 = vpop.f32.mrf.mxu0
        %v601 = vadd.f32 %v549, %v600
        %v602 = vpop.f32.mrf.mxu0
        %v603 = vpop.f32.mrf.mxu0
        %v604 = vpop.f32.mrf.mxu0
        %605 = vdwg.mxu0
        %v606 = vld [vmem:[%s424] sm:$0xff]
        %vm607 = vcmp.eq.f32.partialorder %v606, 0.0
        %v608 = vpack.c.bf16 %v538, %v538
        %v609 = vpack.c.bf16 %v601, %v601
        %vm610 = vcmask 64512
        %v612 = vsel %vm610, %v608, 0
        %v615 = vsel %vm610, %v609, 0
        %617 = vmatprep.subr.bf16.mxu0 0
        %618 = vmatpush1.bf16.xpose.msra.mxu0 0
        %619 = vmatprep.subr.bf16.mxu0 0
        %620 = vmatpush1.bf16.xpose.msra.mxu0 0
        %621 = vmatprep.subr.bf16.mxu0 0
        %622 = vmatpush1.bf16.xpose.msra.mxu0 0
        %623 = vmatprep.subr.bf16.mxu0 0
        %624 = vmatpush1.bf16.xpose.msra.mxu0 0
        %625 = vmatprep.subr.bf16.mxu0 0
        %626 = vmatpush1.bf16.xpose.msra.mxu0 0
        %627 = vmatprep.subr.bf16.mxu0 0
        %628 = vmatpush1.bf16.xpose.msra.mxu0 0
        %629 = vmatprep.subr.bf16.mxu0 0
        %630 = vmatpush1.bf16.xpose.msra.mxu0 0
        %631 = vmatprep.subr.bf16.mxu0 0
        %632 = vmatpush1.bf16.xpose.msra.mxu0 %v615
        %633 = vmatprep.subr.bf16.mxu0 0
        %634 = vmatpush2.bf16.xpose.msra.mxu0 0
        %635 = vmatprep.subr.bf16.mxu0 0
        %636 = vmatpush2.bf16.xpose.msra.mxu0 0
        %637 = vmatprep.subr.bf16.mxu0 0
        %638 = vmatpush2.bf16.xpose.msra.mxu0 0
        %639 = vmatprep.subr.bf16.mxu0 0
        %640 = vmatpush2.bf16.xpose.msra.mxu0 0
        %641 = vmatprep.subr.bf16.mxu0 0
        %642 = vmatpush2.bf16.xpose.msra.mxu0 0
        %643 = vmatprep.subr.bf16.mxu0 0
        %644 = vmatpush2.bf16.xpose.msra.mxu0 0
        %645 = vmatprep.subr.bf16.mxu0 0
        %646 = vmatpush2.bf16.xpose.msra.mxu0 0
        %647 = vmatprep.subr.bf16.mxu0 0
        %648 = vmatpush2.bf16.xpose.msra.mxu0 0
        %649 = vmatprep.mubr.bf16.mxu0 0
        %650 = vmatmul.mubr.bf16.gmra.mxu0 %v612
        %v651 = vpop.f32.mrf.mxu0
        %v652 = vadd.f32 0.0, %v651
        %v653 = vpop.f32.mrf.mxu0
        %v654 = vpop.f32.mrf.mxu0
        %v655 = vpop.f32.mrf.mxu0
        %656 = vdwg.mxu0
        %v657 = vsel %vm607, -1e+09, %v652
        %v658 = vsel %vm610, %v657, -inf
        %659 = vmax.xlane.f32.xlu0 %v658
        %v660 = vpop.xlane.xlu0 %659
        %v661 = vsub.f32 %v657, %v660
        %v662 = vmul.f32 %v661, 1.442695
        %v663 = vpow.pop %v662
        %v664 = vsel %vm610, %v663, 0.0
        %665 = vadd.xlane.f32.xlu0 %v664
        %v666 = vpop.xlane.xlu0 %665
        %v667 = vrcp.pop %v666
        %v668 = vmul.f32 %v663, %v667
        %v669 = vpack.c.bf16 %v668, %v668
        %671 = vrot.lane.b32.xlu0 %v609, 96
        %v672 = vpop.permute.xlu0 %671
        %v674 = vsel %vm610, %v669, 0
        %vm676 = vcmask 1043456
        %v678 = vsel %vm676, %v672, 0
        %680 = vmatprep.subr.bf16.mxu0 0
        %681 = vmatpush1.bf16.msra.mxu0 0
        %682 = vmatprep.subr.bf16.mxu0 0
        %683 = vmatpush1.bf16.msra.mxu0 0
        %684 = vmatprep.subr.bf16.mxu0 0
        %685 = vmatpush1.bf16.msra.mxu0 0
        %686 = vmatprep.subr.bf16.mxu0 0
        %687 = vmatpush1.bf16.msra.mxu0 0
        %688 = vmatprep.subr.bf16.mxu0 0
        %689 = vmatpush1.bf16.msra.mxu0 0
        %690 = vmatprep.subr.bf16.mxu0 0
        %691 = vmatpush1.bf16.msra.mxu0 0
        %692 = vmatprep.subr.bf16.mxu0 0
        %693 = vmatpush1.bf16.msra.mxu0 0
        %694 = vmatprep.subr.bf16.mxu0 0
        %695 = vmatpush1.bf16.msra.mxu0 %v678
        %696 = vmatprep.subr.bf16.mxu0 0
        %697 = vmatpush2.bf16.msra.mxu0 0
        %698 = vmatprep.subr.bf16.mxu0 0
        %699 = vmatpush2.bf16.msra.mxu0 0
        %700 = vmatprep.subr.bf16.mxu0 0
        %701 = vmatpush2.bf16.msra.mxu0 0
        %702 = vmatprep.subr.bf16.mxu0 0
        %703 = vmatpush2.bf16.msra.mxu0 0
        %704 = vmatprep.subr.bf16.mxu0 0
        %705 = vmatpush2.bf16.msra.mxu0 0
        %706 = vmatprep.subr.bf16.mxu0 0
        %707 = vmatpush2.bf16.msra.mxu0 0
        %708 = vmatprep.subr.bf16.mxu0 0
        %709 = vmatpush2.bf16.msra.mxu0 0
        %710 = vmatprep.subr.bf16.mxu0 0
        %711 = vmatpush2.bf16.msra.mxu0 0
        %712 = vmatprep.mubr.bf16.mxu0 0
        %713 = vmatmul.mubr.bf16.gmra.mxu0 %v674
        %v714 = vpop.f32.mrf.mxu0
        %v715 = vadd.f32 0.0, %v714
        %v716 = vpop.f32.mrf.mxu0
        %v717 = vpop.f32.mrf.mxu0
        %v718 = vpop.f32.mrf.mxu0
        %719 = vdwg.mxu0
        %720 = vst.msk [vmem:[#allocation2] sm:$0xff] %vm610, %v715
        %722 = vrot.lane.b32.xlu0 %v608, 120
        %v723 = vpop.permute.xlu0 %722
        %724 = vrot.lane.b32.xlu0 %v609, 120
        %v725 = vpop.permute.xlu0 %724
        %v727 = vsel %vm610, %v723, 0
        %v730 = vsel %vm610, %v725, 0
        %732 = vmatprep.subr.bf16.mxu0 0
        %733 = vmatpush1.bf16.xpose.msra.mxu0 0
        %734 = vmatprep.subr.bf16.mxu0 0
        %735 = vmatpush1.bf16.xpose.msra.mxu0 0
        %736 = vmatprep.subr.bf16.mxu0 0
        %737 = vmatpush1.bf16.xpose.msra.mxu0 0
        %738 = vmatprep.subr.bf16.mxu0 0
        %739 = vmatpush1.bf16.xpose.msra.mxu0 0
        %740 = vmatprep.subr.bf16.mxu0 0
        %741 = vmatpush1.bf16.xpose.msra.mxu0 0
        %742 = vmatprep.subr.bf16.mxu0 0
        %743 = vmatpush1.bf16.xpose.msra.mxu0 0
        %744 = vmatprep.subr.bf16.mxu0 0
        %745 = vmatpush1.bf16.xpose.msra.mxu0 0
        %746 = vmatprep.subr.bf16.mxu0 0
        %747 = vmatpush1.bf16.xpose.msra.mxu0 %v730
        %748 = vmatprep.subr.bf16.mxu0 0
        %749 = vmatpush2.bf16.xpose.msra.mxu0 0
        %750 = vmatprep.subr.bf16.mxu0 0
        %751 = vmatpush2.bf16.xpose.msra.mxu0 0
        %752 = vmatprep.subr.bf16.mxu0 0
        %753 = vmatpush2.bf16.xpose.msra.mxu0 0
        %754 = vmatprep.subr.bf16.mxu0 0
        %755 = vmatpush2.bf16.xpose.msra.mxu0 0
        %756 = vmatprep.subr.bf16.mxu0 0
        %757 = vmatpush2.bf16.xpose.msra.mxu0 0
        %758 = vmatprep.subr.bf16.mxu0 0
        %759 = vmatpush2.bf16.xpose.msra.mxu0 0
        %760 = vmatprep.subr.bf16.mxu0 0
        %761 = vmatpush2.bf16.xpose.msra.mxu0 0
        %762 = vmatprep.subr.bf16.mxu0 0
        %763 = vmatpush2.bf16.xpose.msra.mxu0 0
        %764 = vmatprep.mubr.bf16.mxu0 0
        %765 = vmatmul.mubr.bf16.gmra.mxu0 %v727
        %v766 = vpop.f32.mrf.mxu0
        %v767 = vadd.f32 0.0, %v766
        %v768 = vpop.f32.mrf.mxu0
        %v769 = vpop.f32.mrf.mxu0
        %v770 = vpop.f32.mrf.mxu0
        %771 = vdwg.mxu0
        %v772 = vsel %vm607, -1e+09, %v767
        %v773 = vsel %vm610, %v772, -inf
        %774 = vmax.xlane.f32.xlu0 %v773
        %v775 = vpop.xlane.xlu0 %774
        %v776 = vsub.f32 %v772, %v775
        %v777 = vmul.f32 %v776, 1.442695
        %v778 = vpow.pop %v777
        %v779 = vsel %vm610, %v778, 0.0
        %780 = vadd.xlane.f32.xlu0 %v779
        %v781 = vpop.xlane.xlu0 %780
        %v782 = vrcp.pop %v781
        %v783 = vmul.f32 %v778, %v782
        %v784 = vpack.c.bf16 %v783, %v783
        %785 = vrot.lane.b32.xlu0 %v609, 88
        %v786 = vpop.permute.xlu0 %785
        %v788 = vsel %vm610, %v784, 0
        %v791 = vsel %vm676, %v786, 0
        %793 = vmatprep.subr.bf16.mxu0 0
        %794 = vmatpush1.bf16.msra.mxu0 0
        %795 = vmatprep.subr.bf16.mxu0 0
        %796 = vmatpush1.bf16.msra.mxu0 0
        %797 = vmatprep.subr.bf16.mxu0 0
        %798 = vmatpush1.bf16.msra.mxu0 0
        %799 = vmatprep.subr.bf16.mxu0 0
        %800 = vmatpush1.bf16.msra.mxu0 0
        %801 = vmatprep.subr.bf16.mxu0 0
        %802 = vmatpush1.bf16.msra.mxu0 0
        %803 = vmatprep.subr.bf16.mxu0 0
        %804 = vmatpush1.bf16.msra.mxu0 0
        %805 = vmatprep.subr.bf16.mxu0 0
        %806 = vmatpush1.bf16.msra.mxu0 0
        %807 = vmatprep.subr.bf16.mxu0 0
        %808 = vmatpush1.bf16.msra.mxu0 %v791
        %809 = vmatprep.subr.bf16.mxu0 0
        %810 = vmatpush2.bf16.msra.mxu0 0
        %811 = vmatprep.subr.bf16.mxu0 0
        %812 = vmatpush2.bf16.msra.mxu0 0
        %813 = vmatprep.subr.bf16.mxu0 0
        %814 = vmatpush2.bf16.msra.mxu0 0
        %815 = vmatprep.subr.bf16.mxu0 0
        %816 = vmatpush2.bf16.msra.mxu0 0
        %817 = vmatprep.subr.bf16.mxu0 0
        %818 = vmatpush2.bf16.msra.mxu0 0
        %819 = vmatprep.subr.bf16.mxu0 0
        %820 = vmatpush2.bf16.msra.mxu0 0
        %821 = vmatprep.subr.bf16.mxu0 0
        %822 = vmatpush2.bf16.msra.mxu0 0
        %823 = vmatprep.subr.bf16.mxu0 0
        %824 = vmatpush2.bf16.msra.mxu0 0
        %825 = vmatprep.mubr.bf16.mxu0 0
        %826 = vmatmul.mubr.bf16.gmra.mxu0 %v788
        %v827 = vpop.f32.mrf.mxu0
        %v828 = vadd.f32 0.0, %v827
        %v829 = vpop.f32.mrf.mxu0
        %v830 = vpop.f32.mrf.mxu0
        %v831 = vpop.f32.mrf.mxu0
        %832 = vdwg.mxu0
        %834 = vrot.lane.b32.xlu0 %v828, 8
        %v835 = vpop.permute.xlu0 %834
        %vm837 = vcmask 130112
        %838 = vst.msk [vmem:[#allocation2] sm:$0xff] %vm837, %v835
        %839 = vrot.lane.b32.xlu0 %v608, 112
        %v840 = vpop.permute.xlu0 %839
        %841 = vrot.lane.b32.xlu0 %v609, 112
        %v842 = vpop.permute.xlu0 %841
        %v844 = vsel %vm610, %v840, 0
        %v847 = vsel %vm610, %v842, 0
        %849 = vmatprep.subr.bf16.mxu0 0
        %850 = vmatpush1.bf16.xpose.msra.mxu0 0
        %851 = vmatprep.subr.bf16.mxu0 0
        %852 = vmatpush1.bf16.xpose.msra.mxu0 0
        %853 = vmatprep.subr.bf16.mxu0 0
        %854 = vmatpush1.bf16.xpose.msra.mxu0 0
        %855 = vmatprep.subr.bf16.mxu0 0
        %856 = vmatpush1.bf16.xpose.msra.mxu0 0
        %857 = vmatprep.subr.bf16.mxu0 0
        %858 = vmatpush1.bf16.xpose.msra.mxu0 0
        %859 = vmatprep.subr.bf16.mxu0 0
        %860 = vmatpush1.bf16.xpose.msra.mxu0 0
        %861 = vmatprep.subr.bf16.mxu0 0
        %862 = vmatpush1.bf16.xpose.msra.mxu0 0
        %863 = vmatprep.subr.bf16.mxu0 0
        %864 = vmatpush1.bf16.xpose.msra.mxu0 %v847
        %865 = vmatprep.subr.bf16.mxu0 0
        %866 = vmatpush2.bf16.xpose.msra.mxu0 0
        %867 = vmatprep.subr.bf16.mxu0 0
        %868 = vmatpush2.bf16.xpose.msra.mxu0 0
        %869 = vmatprep.subr.bf16.mxu0 0
        %870 = vmatpush2.bf16.xpose.msra.mxu0 0
        %871 = vmatprep.subr.bf16.mxu0 0
        %872 = vmatpush2.bf16.xpose.msra.mxu0 0
        %873 = vmatprep.subr.bf16.mxu0 0
        %874 = vmatpush2.bf16.xpose.msra.mxu0 0
        %875 = vmatprep.subr.bf16.mxu0 0
        %876 = vmatpush2.bf16.xpose.msra.mxu0 0
        %877 = vmatprep.subr.bf16.mxu0 0
        %878 = vmatpush2.bf16.xpose.msra.mxu0 0
        %879 = vmatprep.subr.bf16.mxu0 0
        %880 = vmatpush2.bf16.xpose.msra.mxu0 0
        %881 = vmatprep.mubr.bf16.mxu0 0
        %882 = vmatmul.mubr.bf16.gmra.mxu0 %v844
        %v883 = vpop.f32.mrf.mxu0
        %v884 = vadd.f32 0.0, %v883
        %v885 = vpop.f32.mrf.mxu0
        %v886 = vpop.f32.mrf.mxu0
        %v887 = vpop.f32.mrf.mxu0
        %888 = vdwg.mxu0
        %v889 = vsel %vm607, -1e+09, %v884
        %v890 = vsel %vm610, %v889, -inf
        %891 = vmax.xlane.f32.xlu0 %v890
        %v892 = vpop.xlane.xlu0 %891
        %v893 = vsub.f32 %v889, %v892
        %v894 = vmul.f32 %v893, 1.442695
        %v895 = vpow.pop %v894
        %v896 = vsel %vm610, %v895, 0.0
        %897 = vadd.xlane.f32.xlu0 %v896
        %v898 = vpop.xlane.xlu0 %897
        %v899 = vrcp.pop %v898
        %v900 = vmul.f32 %v895, %v899
        %v901 = vpack.c.bf16 %v900, %v900
        %902 = vrot.lane.b32.xlu0 %v609, 80
        %v903 = vpop.permute.xlu0 %902
        %v905 = vsel %vm610, %v901, 0
        %v908 = vsel %vm676, %v903, 0
        %910 = vmatprep.subr.bf16.mxu0 0
        %911 = vmatpush1.bf16.msra.mxu0 0
        %912 = vmatprep.subr.bf16.mxu0 0
        %913 = vmatpush1.bf16.msra.mxu0 0
        %914 = vmatprep.subr.bf16.mxu0 0
        %915 = vmatpush1.bf16.msra.mxu0 0
        %916 = vmatprep.subr.bf16.mxu0 0
        %917 = vmatpush1.bf16.msra.mxu0 0
        %918 = vmatprep.subr.bf16.mxu0 0
        %919 = vmatpush1.bf16.msra.mxu0 0
        %920 = vmatprep.subr.bf16.mxu0 0
        %921 = vmatpush1.bf16.msra.mxu0 0
        %922 = vmatprep.subr.bf16.mxu0 0
        %923 = vmatpush1.bf16.msra.mxu0 0
        %924 = vmatprep.subr.bf16.mxu0 0
        %925 = vmatpush1.bf16.msra.mxu0 %v908
        %926 = vmatprep.subr.bf16.mxu0 0
        %927 = vmatpush2.bf16.msra.mxu0 0
        %928 = vmatprep.subr.bf16.mxu0 0
        %929 = vmatpush2.bf16.msra.mxu0 0
        %930 = vmatprep.subr.bf16.mxu0 0
        %931 = vmatpush2.bf16.msra.mxu0 0
        %932 = vmatprep.subr.bf16.mxu0 0
        %933 = vmatpush2.bf16.msra.mxu0 0
        %934 = vmatprep.subr.bf16.mxu0 0
        %935 = vmatpush2.bf16.msra.mxu0 0
        %936 = vmatprep.subr.bf16.mxu0 0
        %937 = vmatpush2.bf16.msra.mxu0 0
        %938 = vmatprep.subr.bf16.mxu0 0
        %939 = vmatpush2.bf16.msra.mxu0 0
        %940 = vmatprep.subr.bf16.mxu0 0
        %941 = vmatpush2.bf16.msra.mxu0 0
        %942 = vmatprep.mubr.bf16.mxu0 0
        %943 = vmatmul.mubr.bf16.gmra.mxu0 %v905
        %v944 = vpop.f32.mrf.mxu0
        %v945 = vadd.f32 0.0, %v944
        %v946 = vpop.f32.mrf.mxu0
        %v947 = vpop.f32.mrf.mxu0
        %v948 = vpop.f32.mrf.mxu0
        %949 = vdwg.mxu0
        %951 = vrot.lane.b32.xlu0 %v945, 16
        %v952 = vpop.permute.xlu0 %951
        %vm954 = vcmask 195712
        %955 = vst.msk [vmem:[#allocation2] sm:$0xff] %vm954, %v952
        %956 = vrot.lane.b32.xlu0 %v608, 104
        %v957 = vpop.permute.xlu0 %956
        %958 = vrot.lane.b32.xlu0 %v609, 104
        %v959 = vpop.permute.xlu0 %958
        %v961 = vsel %vm610, %v957, 0
        %v964 = vsel %vm610, %v959, 0
        %966 = vmatprep.subr.bf16.mxu0 0
        %967 = vmatpush1.bf16.xpose.msra.mxu0 0
        %968 = vmatprep.subr.bf16.mxu0 0
        %969 = vmatpush1.bf16.xpose.msra.mxu0 0
        %970 = vmatprep.subr.bf16.mxu0 0
        %971 = vmatpush1.bf16.xpose.msra.mxu0 0
        %972 = vmatprep.subr.bf16.mxu0 0
        %973 = vmatpush1.bf16.xpose.msra.mxu0 0
        %974 = vmatprep.subr.bf16.mxu0 0
        %975 = vmatpush1.bf16.xpose.msra.mxu0 0
        %976 = vmatprep.subr.bf16.mxu0 0
        %977 = vmatpush1.bf16.xpose.msra.mxu0 0
        %978 = vmatprep.subr.bf16.mxu0 0
        %979 = vmatpush1.bf16.xpose.msra.mxu0 0
        %980 = vmatprep.subr.bf16.mxu0 0
        %981 = vmatpush1.bf16.xpose.msra.mxu0 %v964
        %982 = vmatprep.subr.bf16.mxu0 0
        %983 = vmatpush2.bf16.xpose.msra.mxu0 0
        %984 = vmatprep.subr.bf16.mxu0 0
        %985 = vmatpush2.bf16.xpose.msra.mxu0 0
        %986 = vmatprep.subr.bf16.mxu0 0
        %987 = vmatpush2.bf16.xpose.msra.mxu0 0
        %988 = vmatprep.subr.bf16.mxu0 0
        %989 = vmatpush2.bf16.xpose.msra.mxu0 0
        %990 = vmatprep.subr.bf16.mxu0 0
        %991 = vmatpush2.bf16.xpose.msra.mxu0 0
        %992 = vmatprep.subr.bf16.mxu0 0
        %993 = vmatpush2.bf16.xpose.msra.mxu0 0
        %994 = vmatprep.subr.bf16.mxu0 0
        %995 = vmatpush2.bf16.xpose.msra.mxu0 0
        %996 = vmatprep.subr.bf16.mxu0 0
        %997 = vmatpush2.bf16.xpose.msra.mxu0 0
        %998 = vmatprep.mubr.bf16.mxu0 0
        %999 = vmatmul.mubr.bf16.gmra.mxu0 %v961
        %v1000 = vpop.f32.mrf.mxu0
        %v1001 = vadd.f32 0.0, %v1000
        %v1002 = vpop.f32.mrf.mxu0
        %v1003 = vpop.f32.mrf.mxu0
        %v1004 = vpop.f32.mrf.mxu0
        %1005 = vdwg.mxu0
        %v1006 = vsel %vm607, -1e+09, %v1001
        %v1007 = vsel %vm610, %v1006, -inf
        %1008 = vmax.xlane.f32.xlu0 %v1007
        %v1009 = vpop.xlane.xlu0 %1008
        %v1010 = vsub.f32 %v1006, %v1009
        %v1011 = vmul.f32 %v1010, 1.442695
        %v1012 = vpow.pop %v1011
        %v1013 = vsel %vm610, %v1012, 0.0
        %1014 = vadd.xlane.f32.xlu0 %v1013
        %v1015 = vpop.xlane.xlu0 %1014
        %v1016 = vrcp.pop %v1015
        %v1017 = vmul.f32 %v1012, %v1016
        %v1018 = vpack.c.bf16 %v1017, %v1017
        %1019 = vrot.lane.b32.xlu0 %v609, 72
        %v1020 = vpop.permute.xlu0 %1019
        %v1022 = vsel %vm610, %v1018, 0
        %v1025 = vsel %vm676, %v1020, 0
        %1027 = vmatprep.subr.bf16.mxu0 0
        %1028 = vmatpush1.bf16.msra.mxu0 0
        %1029 = vmatprep.subr.bf16.mxu0 0
        %1030 = vmatpush1.bf16.msra.mxu0 0
        %1031 = vmatprep.subr.bf16.mxu0 0
        %1032 = vmatpush1.bf16.msra.mxu0 0
        %1033 = vmatprep.subr.bf16.mxu0 0
        %1034 = vmatpush1.bf16.msra.mxu0 0
        %1035 = vmatprep.subr.bf16.mxu0 0
        %1036 = vmatpush1.bf16.msra.mxu0 0
        %1037 = vmatprep.subr.bf16.mxu0 0
        %1038 = vmatpush1.bf16.msra.mxu0 0
        %1039 = vmatprep.subr.bf16.mxu0 0
        %1040 = vmatpush1.bf16.msra.mxu0 0
        %1041 = vmatprep.subr.bf16.mxu0 0
        %1042 = vmatpush1.bf16.msra.mxu0 %v1025
        %1043 = vmatprep.subr.bf16.mxu0 0
        %1044 = vmatpush2.bf16.msra.mxu0 0
        %1045 = vmatprep.subr.bf16.mxu0 0
        %1046 = vmatpush2.bf16.msra.mxu0 0
        %1047 = vmatprep.subr.bf16.mxu0 0
        %1048 = vmatpush2.bf16.msra.mxu0 0
        %1049 = vmatprep.subr.bf16.mxu0 0
        %1050 = vmatpush2.bf16.msra.mxu0 0
        %1051 = vmatprep.subr.bf16.mxu0 0
        %1052 = vmatpush2.bf16.msra.mxu0 0
        %1053 = vmatprep.subr.bf16.mxu0 0
        %1054 = vmatpush2.bf16.msra.mxu0 0
        %1055 = vmatprep.subr.bf16.mxu0 0
        %1056 = vmatpush2.bf16.msra.mxu0 0
        %1057 = vmatprep.subr.bf16.mxu0 0
        %1058 = vmatpush2.bf16.msra.mxu0 0
        %1059 = vmatprep.mubr.bf16.mxu0 0
        %1060 = vmatmul.mubr.bf16.gmra.mxu0 %v1022
        %v1061 = vpop.f32.mrf.mxu0
        %v1062 = vadd.f32 0.0, %v1061
        %v1063 = vpop.f32.mrf.mxu0
        %v1064 = vpop.f32.mrf.mxu0
        %v1065 = vpop.f32.mrf.mxu0
        %1066 = vdwg.mxu0
        %1068 = vrot.lane.b32.xlu0 %v1062, 24
        %v1069 = vpop.permute.xlu0 %1068
        %vm1071 = vcmask 261312
        %1072 = vst.msk [vmem:[#allocation2] sm:$0xff] %vm1071, %v1069
        %v1073 = vld [vmem:[#allocation2] sm:$0xff]
        %v1074 = vpack.c.bf16 %v1073, %v1073
        %v1075 = vld [vmem:[%s8] sm:$0xf]
        %v1076 = vld [vmem:[%s8 + $0x4] sm:$0xf]
        %v1077 = vld [vmem:[%s8 + $0x8] sm:$0xf]
        %v1078 = vld [vmem:[%s8 + $0xc] sm:$0xf]
        %v1083 = vunpack.c.l.b16 %v1075
        %v1084 = vunpack.c.l.b16 %v1076
        %v1085 = vunpack.c.l.b16 %v1077
        %v1086 = vunpack.c.l.b16 %v1078
        %v1087 = vpack.c.b16 %v1084, %v1083
        %v1088 = vpack.c.b16 %v1086, %v1085
        %v1092 = vsel %vm434, %v1074, 0
        %1094 = vmatprep.subr.bf16.mxu0 0
        %1095 = vmatpush1.bf16.msra.mxu0 0
        %1096 = vmatprep.subr.bf16.mxu0 0
        %1097 = vmatpush1.bf16.msra.mxu0 0
        %1098 = vmatprep.subr.bf16.mxu0 0
        %1099 = vmatpush1.bf16.msra.mxu0 0
        %1100 = vmatprep.subr.bf16.mxu0 0
        %1101 = vmatpush1.bf16.msra.mxu0 0
        %1102 = vmatprep.subr.bf16.mxu0 0
        %1103 = vmatpush1.bf16.msra.mxu0 0
        %1104 = vmatprep.subr.bf16.mxu0 0
        %1105 = vmatpush1.bf16.msra.mxu0 0
        %1106 = vmatprep.subr.bf16.mxu0 0
        %1107 = vmatpush1.bf16.msra.mxu0 %v1088
        %1108 = vmatprep.subr.bf16.mxu0 0
        %1109 = vmatpush1.bf16.msra.mxu0 %v1087
        %1110 = vmatprep.subr.bf16.mxu0 0
        %1111 = vmatpush2.bf16.msra.mxu0 0
        %1112 = vmatprep.subr.bf16.mxu0 0
        %1113 = vmatpush2.bf16.msra.mxu0 0
        %1114 = vmatprep.subr.bf16.mxu0 0
        %1115 = vmatpush2.bf16.msra.mxu0 0
        %1116 = vmatprep.subr.bf16.mxu0 0
        %1117 = vmatpush2.bf16.msra.mxu0 0
        %1118 = vmatprep.subr.bf16.mxu0 0
        %1119 = vmatpush2.bf16.msra.mxu0 0
        %1120 = vmatprep.subr.bf16.mxu0 0
        %1121 = vmatpush2.bf16.msra.mxu0 0
        %1122 = vmatprep.subr.bf16.mxu0 0
        %1123 = vmatpush2.bf16.msra.mxu0 0
        %1124 = vmatprep.subr.bf16.mxu0 0
        %1125 = vmatpush2.bf16.msra.mxu0 0
        %1126 = vmatprep.mubr.bf16.mxu0 0
        %1127 = vmatmul.mubr.bf16.gmra.mxu0 %v1092
        %v1128 = vpop.f32.mrf.mxu0
        %v1129 = vadd.f32 0.0, %v1128
        %v1130 = vpop.f32.mrf.mxu0
        %v1131 = vpop.f32.mrf.mxu0
        %v1132 = vpop.f32.mrf.mxu0
        %1133 = vdwg.mxu0
        %v1134 = vadd.f32 %v430, %v1129
        %v1135 = vld [vmem:[#allocation3] sm:$0x1]
        %v1137 = vlaneseq
        %v1138 = vshrl.u32 %v1137, 7
        %v1139 = vsub.s32 0, %v1138
        %v1140 = vrot.slane %v1135, %v1139
        %v1142 = vadd.f32 %v1134, %v1140
        %1143 = vst.msk [vmem:[%s428] sm:$0xff] %vm434, %v1142
        %p1144 = scmp.lt.s32.totalorder %s23, 1
        %s1145 = scalar_select %p1144, %s23, 1
        %s1146 = smul.addr %s1145, 8
        %s1147 = scalar_lea.vmem %s11, %s1146
        // Predicated region
        $region69: #{decoder_forward.8} parent=63 // pred_check
          %p1148 = pneg %p287
        $region70: #{decoder_forward.8} parent=63 // pred_check_branch
          %1150 = sbr.rel (%p1148) target = $region72
        $region71: #{decoder_forward.8} parent=63 // pred_region
          _
        $region72: #{decoder_forward.8} parent=63 // pred_fallthru
          _
      $region64: #{decoder_forward.8} parent=5 // pred_fallthru
        _
      %p1151 = scmp.le.s32.totalorder 2, %s18
      // Predicated region
      $region73: #{decoder_forward.8} parent=5 // pred_check
        %p1152 = pneg %p1151
      $region74: #{decoder_forward.8} parent=5 // pred_check_branch
        %1154 = sbr.rel (%p1152) target = $region76
      $region75: #{decoder_forward.8} parent=5 // pred_region
        %s1155 = ssub.s32 %s18, 2
        // Predicated region
        $region77: #{decoder_forward.8} parent=75 // pred_check
          %p1156 = pneg %p293
        $region78: #{decoder_forward.8} parent=75 // pred_check_branch
          %1158 = sbr.rel (%p1156) target = $region80
        $region79: #{decoder_forward.8} parent=75 // pred_region
          %p1159 = scmp.lt.s32.totalorder %s24, 1
          %s1160 = scalar_select %p1159, %s24, 1
          %s1161 = smul.addr %s1160, 8
          %s1162 = scalar_lea.vmem %s11, %s1161
        $region80: #{decoder_forward.8} parent=75 // pred_fallthru
          _
      $region76: #{decoder_forward.8} parent=5 // pred_fallthru
        _
    $region6: #{decoder_forward.8} parent=1 // loop_footer
      %s22 = sadd.s32 1, %s18
    $region7: #{decoder_forward.8} parent=1 // loop_footer_branch
      %17 = sbr.rel target = $region3
    $region8: #{decoder_forward.8} parent=1 // loop_exit
      _
    %1163 = vsyncpa [#allocation4], 1
    %s1164 = scalar_lea.sflag [#allocation4], 1
    %1165 = vsyncpa %s1164, 1

// kernel: decoder_forward.10
$region0: #{decoder_forward.10}
  #allocation0 [shape = 'u32[]', space=smem, size = 0x4, offset = 0x4, fixed_abs, tag = 'smem constant byte address 0x4 - core index']
  #allocation1 [shape = 'u32[144,128]{1,0:T(1,128)}', space=vmem, size = 0x12000, scoped, tag = 'internal scratch']
  #allocation2 [shape = 'f32[8,32]{1,0:T(8,128)}', space=vmem, size = 0x1000, scoped, tag = 'scratch operand']
  %s0 = inlined_call_operand.vmem [shape: f32[2,8,32], index: 0, kind: input, shape index: {}]
  %s1 = inlined_call_operand.vmem [shape: f32[1,32], index: 1, kind: input, shape index: {}]
  %s2 = inlined_call_operand.vmem [shape: f32[1,32], index: 2, kind: input, shape index: {}]
  %s3 = inlined_call_operand.vmem [shape: bf16[32,96], index: 3, kind: input, shape index: {}]
  %s4 = inlined_call_operand.vmem [shape: f32[1,96], index: 4, kind: input, shape index: {}]
  %s5 = inlined_call_operand.vmem [shape: bf16[32,32], index: 5, kind: input, shape index: {}]
  %s6 = inlined_call_operand.vmem [shape: f32[1,32], index: 6, kind: input, shape index: {}]
  %s7 = inlined_call_operand.vmem [shape: f32[2,1,8,8], index: 7, kind: input, shape index: {}]
  %s8 = inlined_call_operand.vmem [shape: f32[2,8,32], index: 8, kind: output, shape index: {}]
  %s9 = sld [smem:[#allocation0]]
  $region65: #{decoder_forward.10} parent=0
    _
  %s11 = ssub.s32 1, %s9
  %s12 = scalar_select 0, %s11, %s9
  loop: start=0, step=1, limit=4
  $region2: #{decoder_forward.10} parent=0 // loop_pre_header
    _
  $region3: #{decoder_forward.10} parent=0 // loop_header
    %s14 = sphi 0, %s18
    %p15 = scmp.ge.s32.totalorder %s14, 4
    %s24 = sphi 0, %s26
    %s27 = sphi 0, %s24
    %s28 = sphi 0, %s27
    %s44 = sphi 0, %s28
    %s48 = sphi 0, %s48
    %s50 = sphi 0, %s48
    %s51 = sphi 0, %s50
    %s65 = sphi 0, %s51
    %s69 = sphi 0, %s69
    %s71 = sphi 0, %s69
    %s72 = sphi 0, %s71
    %s86 = sphi 0, %s72
    %s90 = sphi 0, %s90
    %s92 = sphi 0, %s90
    %s93 = sphi 0, %s92
    %s107 = sphi 0, %s93
    %s111 = sphi 0, %s111
    %s113 = sphi 0, %s111
    %s114 = sphi 0, %s113
    %s128 = sphi 0, %s114
    %s132 = sphi 0, %s132
    %s134 = sphi 0, %s132
    %s135 = sphi 0, %s134
    %s149 = sphi 0, %s135
    %s153 = sphi 0, %s153
    %s155 = sphi 0, %s153
    %s156 = sphi 0, %s155
    %s170 = sphi 0, %s156
    %s176 = sphi 0, %s178
    %s179 = sphi 0, %s176
    %s180 = sphi 0, %s179
    %s196 = sphi 0, %s180
    %s202 = sphi 0, %s204
    %s205 = sphi 0, %s202
    %s206 = sphi 0, %s205
    %s222 = sphi 0, %s206
  $region4: #{decoder_forward.10} parent=0 // loop_header_branch
    %17 = sbr.rel (%p15) target = $region8
  $region5: #{decoder_forward.10} parent=0 // loop_body
    %s19 = ssub.s32 %s14, 1
    %s20 = ssub.s32 %s14, 2
    %s21 = sadd.s32 %s14, 1
    %s22 = ssub.s32 %s14, %s21
    %p23 = scmp.eq.s32.totalorder %s22, 0
    %s25 = sadd.s32 %s24, 1
    %s26 = scalar_select %p23, %s24, %s25
    %p29 = pneg %p23
    %p30 = scmp.eq.s32.totalorder %s14, 1
    %p31 = por %p29, %p30
    %p32 = scmp.ne.s32.totalorder %s24, %s27
    %p33 = scmp.eq.s32.totalorder %s14, 0
    %p34 = por %p32, %p33
    %p35 = scmp.ne.s32.totalorder %s24, %s27
    %p36 = scmp.eq.s32.totalorder %s19, 1
    %p37 = por %p35, %p36
    %p38 = scmp.ne.s32.totalorder %s27, %s28
    %p39 = scmp.eq.s32.totalorder %s19, 0
    %p40 = por %p38, %p39
    %p41 = scmp.ne.s32.totalorder %s27, %s28
    %p42 = scmp.eq.s32.totalorder %s20, 1
    %p43 = por %p41, %p42
    %p45 = scmp.ne.s32.totalorder %s28, %s44
    %p46 = scmp.eq.s32.totalorder %s20, 0
    %p47 = por %p45, %p46
    %s49 = sadd.s32 %s48, 1
    %p52 = scmp.eq.s32.totalorder %s14, 1
    %p53 = scmp.ne.s32.totalorder %s48, %s50
    %p54 = scmp.eq.s32.totalorder %s14, 0
    %p55 = por %p53, %p54
    %p56 = scmp.ne.s32.totalorder %s48, %s50
    %p57 = scmp.eq.s32.totalorder %s19, 1
    %p58 = por %p56, %p57
    %p59 = scmp.ne.s32.totalorder %s50, %s51
    %p60 = scmp.eq.s32.totalorder %s19, 0
    %p61 = por %p59, %p60
    %p62 = scmp.ne.s32.totalorder %s50, %s51
    %p63 = scmp.eq.s32.totalorder %s20, 1
    %p64 = por %p62, %p63
    %p66 = scmp.ne.s32.totalorder %s51, %s65
    %p67 = scmp.eq.s32.totalorder %s20, 0
    %p68 = por %p66, %p67
    %s70 = sadd.s32 %s69, 1
    %p73 = scmp.eq.s32.totalorder %s14, 1
    %p74 = scmp.ne.s32.totalorder %s69, %s71
    %p75 = scmp.eq.s32.totalorder %s14, 0
    %p76 = por %p74, %p75
    %p77 = scmp.ne.s32.totalorder %s69, %s71
    %p78 = scmp.eq.s32.totalorder %s19, 1
    %p79 = por %p77, %p78
    %p80 = scmp.ne.s32.totalorder %s71, %s72
    %p81 = scmp.eq.s32.totalorder %s19, 0
    %p82 = por %p80, %p81
    %p83 = scmp.ne.s32.totalorder %s71, %s72
    %p84 = scmp.eq.s32.totalorder %s20, 1
    %p85 = por %p83, %p84
    %p87 = scmp.ne.s32.totalorder %s72, %s86
    %p88 = scmp.eq.s32.totalorder %s20, 0
    %p89 = por %p87, %p88
    %s91 = sadd.s32 %s90, 1
    %p94 = scmp.eq.s32.totalorder %s14, 1
    %p95 = scmp.ne.s32.totalorder %s90, %s92
    %p96 = scmp.eq.s32.totalorder %s14, 0
    %p97 = por %p95, %p96
    %p98 = scmp.ne.s32.totalorder %s90, %s92
    %p99 = scmp.eq.s32.totalorder %s19, 1
    %p100 = por %p98, %p99
    %p101 = scmp.ne.s32.totalorder %s92, %s93
    %p102 = scmp.eq.s32.totalorder %s19, 0
    %p103 = por %p101, %p102
    %p104 = scmp.ne.s32.totalorder %s92, %s93
    %p105 = scmp.eq.s32.totalorder %s20, 1
    %p106 = por %p104, %p105
    %p108 = scmp.ne.s32.totalorder %s93, %s107
    %p109 = scmp.eq.s32.totalorder %s20, 0
    %p110 = por %p108, %p109
    %s112 = sadd.s32 %s111, 1
    %p115 = scmp.eq.s32.totalorder %s14, 1
    %p116 = scmp.ne.s32.totalorder %s111, %s113
    %p117 = scmp.eq.s32.totalorder %s14, 0
    %p118 = por %p116, %p117
    %p119 = scmp.ne.s32.totalorder %s111, %s113
    %p120 = scmp.eq.s32.totalorder %s19, 1
    %p121 = por %p119, %p120
    %p122 = scmp.ne.s32.totalorder %s113, %s114
    %p123 = scmp.eq.s32.totalorder %s19, 0
    %p124 = por %p122, %p123
    %p125 = scmp.ne.s32.totalorder %s113, %s114
    %p126 = scmp.eq.s32.totalorder %s20, 1
    %p127 = por %p125, %p126
    %p129 = scmp.ne.s32.totalorder %s114, %s128
    %p130 = scmp.eq.s32.totalorder %s20, 0
    %p131 = por %p129, %p130
    %s133 = sadd.s32 %s132, 1
    %p136 = scmp.eq.s32.totalorder %s14, 1
    %p137 = scmp.ne.s32.totalorder %s132, %s134
    %p138 = scmp.eq.s32.totalorder %s14, 0
    %p139 = por %p137, %p138
    %p140 = scmp.ne.s32.totalorder %s132, %s134
    %p141 = scmp.eq.s32.totalorder %s19, 1
    %p142 = por %p140, %p141
    %p143 = scmp.ne.s32.totalorder %s134, %s135
    %p144 = scmp.eq.s32.totalorder %s19, 0
    %p145 = por %p143, %p144
    %p146 = scmp.ne.s32.totalorder %s134, %s135
    %p147 = scmp.eq.s32.totalorder %s20, 1
    %p148 = por %p146, %p147
    %p150 = scmp.ne.s32.totalorder %s135, %s149
    %p151 = scmp.eq.s32.totalorder %s20, 0
    %p152 = por %p150, %p151
    %s154 = sadd.s32 %s153, 1
    %p157 = scmp.eq.s32.totalorder %s14, 1
    %p158 = scmp.ne.s32.totalorder %s153, %s155
    %p159 = scmp.eq.s32.totalorder %s14, 0
    %p160 = por %p158, %p159
    %p161 = scmp.ne.s32.totalorder %s153, %s155
    %p162 = scmp.eq.s32.totalorder %s19, 1
    %p163 = por %p161, %p162
    %p164 = scmp.ne.s32.totalorder %s155, %s156
    %p165 = scmp.eq.s32.totalorder %s19, 0
    %p166 = por %p164, %p165
    %p167 = scmp.ne.s32.totalorder %s155, %s156
    %p168 = scmp.eq.s32.totalorder %s20, 1
    %p169 = por %p167, %p168
    %p171 = scmp.ne.s32.totalorder %s156, %s170
    %p172 = scmp.eq.s32.totalorder %s20, 0
    %p173 = por %p171, %p172
    %s174 = ssub.s32 %s14, %s21
    %p175 = scmp.eq.s32.totalorder %s174, 0
    %s177 = sadd.s32 %s176, 1
    %s178 = scalar_select %p175, %s176, %s177
    %p181 = pneg %p175
    %p182 = scmp.eq.s32.totalorder %s14, 1
    %p183 = por %p181, %p182
    %p184 = scmp.ne.s32.totalorder %s176, %s179
    %p185 = scmp.eq.s32.totalorder %s14, 0
    %p186 = por %p184, %p185
    %p187 = scmp.ne.s32.totalorder %s176, %s179
    %p188 = scmp.eq.s32.totalorder %s19, 1
    %p189 = por %p187, %p188
    %p190 = scmp.ne.s32.totalorder %s179, %s180
    %p191 = scmp.eq.s32.totalorder %s19, 0
    %p192 = por %p190, %p191
    %p193 = scmp.ne.s32.totalorder %s179, %s180
    %p194 = scmp.eq.s32.totalorder %s20, 1
    %p195 = por %p193, %p194
    %p197 = scmp.ne.s32.totalorder %s180, %s196
    %p198 = scmp.eq.s32.totalorder %s20, 0
    %p199 = por %p197, %p198
    %s200 = ssub.s32 %s14, %s21
    %p201 = scmp.eq.s32.totalorder %s200, 0
    %s203 = sadd.s32 %s202, 1
    %s204 = scalar_select %p201, %s202, %s203
    %p207 = pneg %p201
    %p208 = scmp.eq.s32.totalorder %s14, 1
    %p209 = por %p207, %p208
    %p210 = scmp.ne.s32.totalorder %s202, %s205
    %p211 = scmp.eq.s32.totalorder %s14, 0
    %p212 = por %p210, %p211
    %p213 = scmp.ne.s32.totalorder %s202, %s205
    %p214 = scmp.eq.s32.totalorder %s19, 1
    %p215 = por %p213, %p214
    %p216 = scmp.ne.s32.totalorder %s205, %s206
    %p217 = scmp.eq.s32.totalorder %s19, 0
    %p218 = por %p216, %p217
    %p219 = scmp.ne.s32.totalorder %s205, %s206
    %p220 = scmp.eq.s32.totalorder %s20, 1
    %p221 = por %p219, %p220
    %p223 = scmp.ne.s32.totalorder %s206, %s222
    %p224 = scmp.eq.s32.totalorder %s20, 0
    %p225 = por %p223, %p224
    %p226 = scmp.le.s32.totalorder 1, %s14
    %p227 = scmp.lt.s32.totalorder %s14, 3
    %p228 = pnand %p226, %p227
    %p229 = pneg %p228
    // Predicated region
    $region9: #{decoder_forward.10} parent=5 // pred_check
      _
    $region10: #{decoder_forward.10} parent=5 // pred_check_branch
      %231 = sbr.rel (%p228) target = $region12
    $region11: #{decoder_forward.10} parent=5 // pred_region
      %s232 = ssub.s32 %s14, 1
      // Predicated region
      $region13: #{decoder_forward.10} parent=11 // pred_check
        %p233 = pneg %p61
      $region14: #{decoder_forward.10} parent=11 // pred_check_branch
        %235 = sbr.rel (%p233) target = $region16
      $region15: #{decoder_forward.10} parent=11 // pred_region
        _
      $region16: #{decoder_forward.10} parent=11 // pred_fallthru
        _
      // Predicated region
      $region17: #{decoder_forward.10} parent=11 // pred_check
        %p236 = pneg %p82
      $region18: #{decoder_forward.10} parent=11 // pred_check_branch
        %238 = sbr.rel (%p236) target = $region20
      $region19: #{decoder_forward.10} parent=11 // pred_region
        _
      $region20: #{decoder_forward.10} parent=11 // pred_fallthru
        _
      // Predicated region
      $region21: #{decoder_forward.10} parent=11 // pred_check
        %p239 = pneg %p103
      $region22: #{decoder_forward.10} parent=11 // pred_check_branch
        %241 = sbr.rel (%p239) target = $region24
      $region23: #{decoder_forward.10} parent=11 // pred_region
        _
      $region24: #{decoder_forward.10} parent=11 // pred_fallthru
        _
      // Predicated region
      $region25: #{decoder_forward.10} parent=11 // pred_check
        %p242 = pneg %p124
      $region26: #{decoder_forward.10} parent=11 // pred_check_branch
        %244 = sbr.rel (%p242) target = $region28
      $region27: #{decoder_forward.10} parent=11 // pred_region
        _
      $region28: #{decoder_forward.10} parent=11 // pred_fallthru
        _
      // Predicated region
      $region29: #{decoder_forward.10} parent=11 // pred_check
        %p245 = pneg %p145
      $region30: #{decoder_forward.10} parent=11 // pred_check_branch
        %247 = sbr.rel (%p245) target = $region32
      $region31: #{decoder_forward.10} parent=11 // pred_region
        _
      $region32: #{decoder_forward.10} parent=11 // pred_fallthru
        _
      // Predicated region
      $region33: #{decoder_forward.10} parent=11 // pred_check
        %p248 = pneg %p166
      $region34: #{decoder_forward.10} parent=11 // pred_check_branch
        %250 = sbr.rel (%p248) target = $region36
      $region35: #{decoder_forward.10} parent=11 // pred_region
        _
      $region36: #{decoder_forward.10} parent=11 // pred_fallthru
        _
    $region12: #{decoder_forward.10} parent=5 // pred_fallthru
      _
    %p251 = scmp.lt.s32.totalorder %s14, 2
    // Predicated region
    $region37: #{decoder_forward.10} parent=5 // pred_check
      %p252 = pneg %p251
    $region38: #{decoder_forward.10} parent=5 // pred_check_branch
      %254 = sbr.rel (%p252) target = $region40
    $region39: #{decoder_forward.10} parent=5 // pred_region
      // Predicated region
      $region41: #{decoder_forward.10} parent=39 // pred_check
        %p255 = pneg %p34
      $region42: #{decoder_forward.10} parent=39 // pred_check_branch
        %257 = sbr.rel (%p255) target = $region44
      $region43: #{decoder_forward.10} parent=39 // pred_region
        %p258 = scmp.lt.s32.totalorder %s14, 1
        %s259 = scalar_select %p258, %s14, 1
        %s260 = smul.addr %s259, 8
        %s261 = scalar_lea.vmem %s0, %s260
      $region44: #{decoder_forward.10} parent=39 // pred_fallthru
        _
      // Predicated region
      $region45: #{decoder_forward.10} parent=39 // pred_check
        %p262 = pneg %p186
      $region46: #{decoder_forward.10} parent=39 // pred_check_branch
        %264 = sbr.rel (%p262) target = $region48
      $region47: #{decoder_forward.10} parent=39 // pred_region
        %p265 = scmp.lt.s32.totalorder %s14, 1
        %s266 = scalar_select %p265, %s14, 1
        %s267 = smul.addr %s266, 8
        %s268 = scalar_lea.vmem %s7, %s267
      $region48: #{decoder_forward.10} parent=39 // pred_fallthru
        _
    $region40: #{decoder_forward.10} parent=5 // pred_fallthru
      _
    %p269 = scmp.le.s32.totalorder 1, %s14
    %p270 = scmp.lt.s32.totalorder %s14, 3
    %p271 = pnand %p269, %p270
    %p272 = pneg %p271
    // Predicated region
    $region49: #{decoder_forward.10} parent=5 // pred_check
      _
    $region50: #{decoder_forward.10} parent=5 // pred_check_branch
      %274 = sbr.rel (%p271) target = $region52
    $region51: #{decoder_forward.10} parent=5 // pred_region
      %s275 = ssub.s32 %s14, 1
      %p276 = scmp.lt.s32.totalorder %s19, 1
      %s277 = scalar_select %p276, %s19, 1
      %s278 = smul.addr %s277, 8
      %s279 = scalar_lea.vmem %s0, %s278
      %p280 = pneg %p40
      %p281 = pneg %p37
      %p282 = pneg %p61
      %p283 = pneg %p58
      %p284 = pneg %p82
      %p285 = pneg %p79
      %p286 = pneg %p103
      %p287 = pneg %p100
      %p288 = pneg %p124
      %p289 = pneg %p121
      %p290 = pneg %p145
      %p291 = pneg %p142
      %p292 = pneg %p166
      %p293 = pneg %p163
      %p294 = scmp.lt.s32.totalorder %s19, 1
      %s295 = scalar_select %p294, %s19, 1
      %s296 = smul.addr %s295, 8
      %s297 = scalar_lea.vmem %s7, %s296
      %p298 = pneg %p192
      %p299 = pneg %p189
      %p300 = pneg %p218
      %p301 = pneg %p215
      %p302 = scmp.lt.s32.totalorder %s19, 1
      %s303 = scalar_select %p302, %s19, 1
      %s304 = smul.addr %s303, 8
      %s305 = scalar_lea.vmem %s8, %s304
      %p306 = scmp.lt.s32.totalorder %s19, 1
      %s307 = scalar_select %p306, %s19, 1
      %s308 = smul.addr %s307, 8
      %s309 = scalar_lea.vmem %s0, %s308
      %p310 = scmp.lt.s32.totalorder %s19, 1
      %s311 = scalar_select %p310, %s19, 1
      %s312 = smul.addr %s311, 8
      %s313 = scalar_lea.vmem %s7, %s312
      %p314 = scmp.lt.s32.totalorder %s19, 1
      %s315 = scalar_select %p314, %s19, 1
      %s316 = smul.addr %s315, 8
      %s317 = scalar_lea.vmem %s8, %s316
      %v319 = vld [vmem:[%s309] sm:$0xff]
      %v320 = vld [vmem:[%s1] sm:$0x1]
      %v321 = vld [vmem:[%s2] sm:$0x1]
      %vm322 = vcmask 261120
      %v323 = vsel %vm322, %v319, 0.0
      %324 = vadd.xlane.f32.xlu0 %v323
      %v325 = vpop.xlane.xlu0 %324
      %v326 = vrcp.pop 32.0
      %v327 = vmul.f32 %v325, %v326
      %v328 = vsub.f32 %v319, %v327
      %v329 = vmul.f32 %v328, %v328
      %v330 = vsel %vm322, %v329, 0.0
      %331 = vadd.xlane.f32.xlu0 %v330
      %v332 = vpop.xlane.xlu0 %331
      %v333 = vmul.f32 %v332, 0.032258064
      %v334 = vrsqrt.pop %v333
      %v335 = vmul.f32 %v333, %v334
      %vm336 = vcmp.eq.f32.partialorder %v333, inf
      %v337 = vsel %vm336, %v333, %v335
      %vm338 = vcmp.eq.f32.partialorder %v333, 0.0
      %v339 = vand.u32 %v333, 2147483648
      %v340 = vsel %vm338, %v339, %v337
      %v341 = vadd.f32 %v340, 1e-06
      %v342 = vrcp.pop %v341
      %v343 = vmul.f32 1.0, %v342
      %v345 = vlaneseq
      %v346 = vshrl.u32 %v345, 7
      %v347 = vsub.s32 0, %v346
      %v348 = vrot.slane %v320, %v347
      %v350 = vmul.f32 %v348, %v328
      %v351 = vmul.f32 %v350, %v343
      %v353 = vlaneseq
      %v354 = vshrl.u32 %v353, 7
      %v355 = vsub.s32 0, %v354
      %v356 = vrot.slane %v321, %v355
      %v358 = vadd.f32 %v351, %v356
      %v359 = vpack.c.bf16 %v358, %v358
      %v360 = vld [vmem:[%s3] sm:$0xf]
      %v361 = vld [vmem:[%s3 + $0x4] sm:$0xf]
      %v362 = vld [vmem:[%s3 + $0x8] sm:$0xf]
      %v363 = vld [vmem:[%s3 + $0xc] sm:$0xf]
      %v364 = vld [vmem:[%s4] sm:$0x1]
      %v366 = vlaneseq
      %v367 = vshrl.u32 %v366, 7
      %v368 = vsub.s32 0, %v367
      %v369 = vrot.slane %v364, %v368
      %v375 = vunpack.c.l.b16 %v360
      %v376 = vunpack.c.l.b16 %v361
      %v377 = vunpack.c.l.b16 %v362
      %v378 = vunpack.c.l.b16 %v363
      %v379 = vpack.c.b16 %v376, %v375
      %v380 = vpack.c.b16 %v378, %v377
      %v384 = vsel %vm322, %v359, 0
      %386 = vmatprep.subr.bf16.mxu0 0
      %387 = vmatpush1.bf16.msra.mxu0 0
      %388 = vmatprep.subr.bf16.mxu0 0
      %389 = vmatpush1.bf16.msra.mxu0 0
      %390 = vmatprep.subr.bf16.mxu0 0
      %391 = vmatpush1.bf16.msra.mxu0 0
      %392 = vmatprep.subr.bf16.mxu0 0
      %393 = vmatpush1.bf16.msra.mxu0 0
      %394 = vmatprep.subr.bf16.mxu0 0
      %395 = vmatpush1.bf16.msra.mxu0 0
      %396 = vmatprep.subr.bf16.mxu0 0
      %397 = vmatpush1.bf16.msra.mxu0 0
      %398 = vmatprep.subr.bf16.mxu0 0
      %399 = vmatpush1.bf16.msra.mxu0 %v380
      %400 = vmatprep.subr.bf16.mxu0 0
      %401 = vmatpush1.bf16.msra.mxu0 %v379
      %402 = vmatprep.subr.bf16.mxu0 0
      %403 = vmatpush2.bf16.msra.mxu0 0
      %404 = vmatprep.subr.bf16.mxu0 0
      %405 = vmatpush2.bf16.msra.mxu0 0
      %406 = vmatprep.subr.bf16.mxu0 0
      %407 = vmatpush2.bf16.msra.mxu0 0
      %408 = vmatprep.subr.bf16.mxu0 0
      %409 = vmatpush2.bf16.msra.mxu0 0
      %410 = vmatprep.subr.bf16.mxu0 0
      %411 = vmatpush2.bf16.msra.mxu0 0
      %412 = vmatprep.subr.bf16.mxu0 0
      %413 = vmatpush2.bf16.msra.mxu0 0
      %414 = vmatprep.subr.bf16.mxu0 0
      %415 = vmatpush2.bf16.msra.mxu0 0
      %416 = vmatprep.subr.bf16.mxu0 0
      %417 = vmatpush2.bf16.msra.mxu0 0
      %418 = vmatprep.mubr.bf16.mxu0 0
      %419 = vmatmul.mubr.bf16.gmra.mxu0 %v384
      %v420 = vpop.f32.mrf.mxu0
      %v421 = vadd.f32 %v369, %v420
      %v422 = vpop.f32.mrf.mxu0
      %v423 = vpop.f32.mrf.mxu0
      %v424 = vpop.f32.mrf.mxu0
      %425 = vdwg.mxu0
      %v426 = vmul.f32 %v421, 0.35355338
      %v427 = vld [vmem:[%s313] sm:$0xff]
      %vm428 = vcmp.eq.f32.partialorder %v427, 0.0
      %v429 = vpack.c.bf16 %v426, %v426
      %v430 = vpack.c.bf16 %v421, %v421
      %432 = vrot.lane.b32.xlu0 %v430, 96
      %v433 = vpop.permute.xlu0 %432
      %vm434 = vcmask 64512
      %v436 = vsel %vm434, %v429, 0
      %v439 = vsel %vm434, %v433, 0
      %441 = vmatprep.subr.bf16.mxu0 0
      %442 = vmatpush1.bf16.xpose.msra.mxu0 0
      %443 = vmatprep.subr.bf16.mxu0 0
      %444 = vmatpush1.bf16.xpose.msra.mxu0 0
      %445 = vmatprep.subr.bf16.mxu0 0
      %446 = vmatpush1.bf16.xpose.msra.mxu0 0
      %447 = vmatprep.subr.bf16.mxu0 0
      %448 = vmatpush1.bf16.xpose.msra.mxu0 0
      %449 = vmatprep.subr.bf16.mxu0 0
      %450 = vmatpush1.bf16.xpose.msra.mxu0 0
      %451 = vmatprep.subr.bf16.mxu0 0
      %452 = vmatpush1.bf16.xpose.msra.mxu0 0
      %453 = vmatprep.subr.bf16.mxu0 0
      %454 = vmatpush1.bf16.xpose.msra.mxu0 0
      %455 = vmatprep.subr.bf16.mxu0 0
      %456 = vmatpush1.bf16.xpose.msra.mxu0 %v439
      %457 = vmatprep.subr.bf16.mxu0 0
      %458 = vmatpush2.bf16.xpose.msra.mxu0 0
      %459 = vmatprep.subr.bf16.mxu0 0
      %460 = vmatpush2.bf16.xpose.msra.mxu0 0
      %461 = vmatprep.subr.bf16.mxu0 0
      %462 = vmatpush2.bf16.xpose.msra.mxu0 0
      %463 = vmatprep.subr.bf16.mxu0 0
      %464 = vmatpush2.bf16.xpose.msra.mxu0 0
      %465 = vmatprep.subr.bf16.mxu0 0
      %466 = vmatpush2.bf16.xpose.msra.mxu0 0
      %467 = vmatprep.subr.bf16.mxu0 0
      %468 = vmatpush2.bf16.xpose.msra.mxu0 0
      %469 = vmatprep.subr.bf16.mxu0 0
      %470 = vmatpush2.bf16.xpose.msra.mxu0 0
      %471 = vmatprep.subr.bf16.mxu0 0
      %472 = vmatpush2.bf16.xpose.msra.mxu0 0
      %473 = vmatprep.mubr.bf16.mxu0 0
      %474 = vmatmul.mubr.bf16.gmra.mxu0 %v436
      %v475 = vpop.f32.mrf.mxu0
      %v476 = vadd.f32 0.0, %v475
      %v477 = vpop.f32.mrf.mxu0
      %v478 = vpop.f32.mrf.mxu0
      %v479 = vpop.f32.mrf.mxu0
      %480 = vdwg.mxu0
      %v481 = vsel %vm428, -1e+09, %v476
      %v482 = vsel %vm434, %v481, -inf
      %483 = vmax.xlane.f32.xlu0 %v482
      %v484 = vpop.xlane.xlu0 %483
      %v485 = vsub.f32 %v481, %v484
      %v486 = vmul.f32 %v485, 1.442695
      %v487 = vpow.pop %v486
      %v488 = vsel %vm434, %v487, 0.0
      %489 = vadd.xlane.f32.xlu0 %v488
      %v490 = vpop.xlane.xlu0 %489
      %v491 = vrcp.pop %v490
      %v492 = vmul.f32 %v487, %v491
      %v493 = vpack.c.bf16 %v492, %v492
      %494 = vrot.lane.b32.xlu0 %v430, 64
      %v495 = vpop.permute.xlu0 %494
      %v497 = vsel %vm434, %v493, 0
      %vm499 = vcmask 1043456
      %v501 = vsel %vm499, %v495, 0
      %503 = vmatprep.subr.bf16.mxu0 0
      %504 = vmatpush1.bf16.msra.mxu0 0
      %505 = vmatprep.subr.bf16.mxu0 0
      %506 = vmatpush1.bf16.msra.mxu0 0
      %507 = vmatprep.subr.bf16.mxu0 0
      %508 = vmatpush1.bf16.msra.mxu0 0
      %509 = vmatprep.subr.bf16.mxu0 0
      %510 = vmatpush1.bf16.msra.mxu0 0
      %511 = vmatprep.subr.bf16.mxu0 0
      %512 = vmatpush1.bf16.msra.mxu0 0
      %513 = vmatprep.subr.bf16.mxu0 0
      %514 = vmatpush1.bf16.msra.mxu0 0
      %515 = vmatprep.subr.bf16.mxu0 0
      %516 = vmatpush1.bf16.msra.mxu0 0
      %517 = vmatprep.subr.bf16.mxu0 0
      %518 = vmatpush1.bf16.msra.mxu0 %v501
      %519 = vmatprep.subr.bf16.mxu0 0
      %520 = vmatpush2.bf16.msra.mxu0 0
      %521 = vmatprep.subr.bf16.mxu0 0
      %522 = vmatpush2.bf16.msra.mxu0 0
      %523 = vmatprep.subr.bf16.mxu0 0
      %524 = vmatpush2.bf16.msra.mxu0 0
      %525 = vmatprep.subr.bf16.mxu0 0
      %526 = vmatpush2.bf16.msra.mxu0 0
      %527 = vmatprep.subr.bf16.mxu0 0
      %528 = vmatpush2.bf16.msra.mxu0 0
      %529 = vmatprep.subr.bf16.mxu0 0
      %530 = vmatpush2.bf16.msra.mxu0 0
      %531 = vmatprep.subr.bf16.mxu0 0
      %532 = vmatpush2.bf16.msra.mxu0 0
      %533 = vmatprep.subr.bf16.mxu0 0
      %534 = vmatpush2.bf16.msra.mxu0 0
      %535 = vmatprep.mubr.bf16.mxu0 0
      %536 = vmatmul.mubr.bf16.gmra.mxu0 %v497
      %v537 = vpop.f32.mrf.mxu0
      %v538 = vadd.f32 0.0, %v537
      %v539 = vpop.f32.mrf.mxu0
      %v540 = vpop.f32.mrf.mxu0
      %v541 = vpop.f32.mrf.mxu0
      %542 = vdwg.mxu0
      %543 = vst.msk [vmem:[#allocation2] sm:$0xff] %vm434, %v538
      %545 = vrot.lane.b32.xlu0 %v429, 120
      %v546 = vpop.permute.xlu0 %545
      %547 = vrot.lane.b32.xlu0 %v430, 88
      %v548 = vpop.permute.xlu0 %547
      %v550 = vsel %vm434, %v546, 0
      %v553 = vsel %vm434, %v548, 0
      %555 = vmatprep.subr.bf16.mxu0 0
      %556 = vmatpush1.bf16.xpose.msra.mxu0 0
      %557 = vmatprep.subr.bf16.mxu0 0
      %558 = vmatpush1.bf16.xpose.msra.mxu0 0
      %559 = vmatprep.subr.bf16.mxu0 0
      %560 = vmatpush1.bf16.xpose.msra.mxu0 0
      %561 = vmatprep.subr.bf16.mxu0 0
      %562 = vmatpush1.bf16.xpose.msra.mxu0 0
      %563 = vmatprep.subr.bf16.mxu0 0
      %564 = vmatpush1.bf16.xpose.msra.mxu0 0
      %565 = vmatprep.subr.bf16.mxu0 0
      %566 = vmatpush1.bf16.xpose.msra.mxu0 0
      %567 = vmatprep.subr.bf16.mxu0 0
      %568 = vmatpush1.bf16.xpose.msra.mxu0 0
      %569 = vmatprep.subr.bf16.mxu0 0
      %570 = vmatpush1.bf16.xpose.msra.mxu0 %v553
      %571 = vmatprep.subr.bf16.mxu0 0
      %572 = vmatpush2.bf16.xpose.msra.mxu0 0
      %573 = vmatprep.subr.bf16.mxu0 0
      %574 = vmatpush2.bf16.xpose.msra.mxu0 0
      %575 = vmatprep.subr.bf16.mxu0 0
      %576 = vmatpush2.bf16.xpose.msra.mxu0 0
      %577 = vmatprep.subr.bf16.mxu0 0
      %578 = vmatpush2.bf16.xpose.msra.mxu0 0
      %579 = vmatprep.subr.bf16.mxu0 0
      %580 = vmatpush2.bf16.xpose.msra.mxu0 0
      %581 = vmatprep.subr.bf16.mxu0 0
      %582 = vmatpush2.bf16.xpose.msra.mxu0 0
      %583 = vmatprep.subr.bf16.mxu0 0
      %584 = vmatpush2.bf16.xpose.msra.mxu0 0
      %585 = vmatprep.subr.bf16.mxu0 0
      %586 = vmatpush2.bf16.xpose.msra.mxu0 0
      %587 = vmatprep.mubr.bf16.mxu0 0
      %588 = vmatmul.mubr.bf16.gmra.mxu0 %v550
      %v589 = vpop.f32.mrf.mxu0
      %v590 = vadd.f32 0.0, %v589
      %v591 = vpop.f32.mrf.mxu0
      %v592 = vpop.f32.mrf.mxu0
      %v593 = vpop.f32.mrf.mxu0
      %594 = vdwg.mxu0
      %v595 = vsel %vm428, -1e+09, %v590
      %v596 = vsel %vm434, %v595, -inf
      %597 = vmax.xlane.f32.xlu0 %v596
      %v598 = vpop.xlane.xlu0 %597
      %v599 = vsub.f32 %v595, %v598
      %v600 = vmul.f32 %v599, 1.442695
      %v601 = vpow.pop %v600
      %v602 = vsel %vm434, %v601, 0.0
      %603 = vadd.xlane.f32.xlu0 %v602
      %v604 = vpop.xlane.xlu0 %603
      %v605 = vrcp.pop %v604
      %v606 = vmul.f32 %v601, %v605
      %v607 = vpack.c.bf16 %v606, %v606
      %608 = vrot.lane.b32.xlu0 %v430, 56
      %v609 = vpop.permute.xlu0 %608
      %v611 = vsel %vm434, %v607, 0
      %v614 = vsel %vm499, %v609, 0
      %616 = vmatprep.subr.bf16.mxu0 0
      %617 = vmatpush1.bf16.msra.mxu0 0
      %618 = vmatprep.subr.bf16.mxu0 0
      %619 = vmatpush1.bf16.msra.mxu0 0
      %620 = vmatprep.subr.bf16.mxu0 0
      %621 = vmatpush1.bf16.msra.mxu0 0
      %622 = vmatprep.subr.bf16.mxu0 0
      %623 = vmatpush1.bf16.msra.mxu0 0
      %624 = vmatprep.subr.bf16.mxu0 0
      %625 = vmatpush1.bf16.msra.mxu0 0
      %626 = vmatprep.subr.bf16.mxu0 0
      %627 = vmatpush1.bf16.msra.mxu0 0
      %628 = vmatprep.subr.bf16.mxu0 0
      %629 = vmatpush1.bf16.msra.mxu0 0
      %630 = vmatprep.subr.bf16.mxu0 0
      %631 = vmatpush1.bf16.msra.mxu0 %v614
      %632 = vmatprep.subr.bf16.mxu0 0
      %633 = vmatpush2.bf16.msra.mxu0 0
      %634 = vmatprep.subr.bf16.mxu0 0
      %635 = vmatpush2.bf16.msra.mxu0 0
      %636 = vmatprep.subr.bf16.mxu0 0
      %637 = vmatpush2.bf16.msra.mxu0 0
      %638 = vmatprep.subr.bf16.mxu0 0
      %639 = vmatpush2.bf16.msra.mxu0 0
      %640 = vmatprep.subr.bf16.mxu0 0
      %641 = vmatpush2.bf16.msra.mxu0 0
      %642 = vmatprep.subr.bf16.mxu0 0
      %643 = vmatpush2.bf16.msra.mxu0 0
      %644 = vmatprep.subr.bf16.mxu0 0
      %645 = vmatpush2.bf16.msra.mxu0 0
      %646 = vmatprep.subr.bf16.mxu0 0
      %647 = vmatpush2.bf16.msra.mxu0 0
      %648 = vmatprep.mubr.bf16.mxu0 0
      %649 = vmatmul.mubr.bf16.gmra.mxu0 %v611
      %v650 = vpop.f32.mrf.mxu0
      %v651 = vadd.f32 0.0, %v650
      %v652 = vpop.f32.mrf.mxu0
      %v653 = vpop.f32.mrf.mxu0
      %v654 = vpop.f32.mrf.mxu0
      %655 = vdwg.mxu0
      %657 = vrot.lane.b32.xlu0 %v651, 8
      %v658 = vpop.permute.xlu0 %657
      %vm660 = vcmask 130112
      %661 = vst.msk [vmem:[#allocation2] sm:$0xff] %vm660, %v658
      %662 = vrot.lane.b32.xlu0 %v429, 112
      %v663 = vpop.permute.xlu0 %662
      %664 = vrot.lane.b32.xlu0 %v430, 80
      %v665 = vpop.permute.xlu0 %664
      %v667 = vsel %vm434, %v663, 0
      %v670 = vsel %vm434, %v665, 0
      %672 = vmatprep.subr.bf16.mxu0 0
      %673 = vmatpush1.bf16.xpose.msra.mxu0 0
      %674 = vmatprep.subr.bf16.mxu0 0
      %675 = vmatpush1.bf16.xpose.msra.mxu0 0
      %676 = vmatprep.subr.bf16.mxu0 0
      %677 = vmatpush1.bf16.xpose.msra.mxu0 0
      %678 = vmatprep.subr.bf16.mxu0 0
      %679 = vmatpush1.bf16.xpose.msra.mxu0 0
      %680 = vmatprep.subr.bf16.mxu0 0
      %681 = vmatpush1.bf16.xpose.msra.mxu0 0
      %682 = vmatprep.subr.bf16.mxu0 0
      %683 = vmatpush1.bf16.xpose.msra.mxu0 0
      %684 = vmatprep.subr.bf16.mxu0 0
      %685 = vmatpush1.bf16.xpose.msra.mxu0 0
      %686 = vmatprep.subr.bf16.mxu0 0
      %687 = vmatpush1.bf16.xpose.msra.mxu0 %v670
      %688 = vmatprep.subr.bf16.mxu0 0
      %689 = vmatpush2.bf16.xpose.msra.mxu0 0
      %690 = vmatprep.subr.bf16.mxu0 0
      %691 = vmatpush2.bf16.xpose.msra.mxu0 0
      %692 = vmatprep.subr.bf16.mxu0 0
      %693 = vmatpush2.bf16.xpose.msra.mxu0 0
      %694 = vmatprep.subr.bf16.mxu0 0
      %695 = vmatpush2.bf16.xpose.msra.mxu0 0
      %696 = vmatprep.subr.bf16.mxu0 0
      %697 = vmatpush2.bf16.xpose.msra.mxu0 0
      %698 = vmatprep.subr.bf16.mxu0 0
      %699 = vmatpush2.bf16.xpose.msra.mxu0 0
      %700 = vmatprep.subr.bf16.mxu0 0
      %701 = vmatpush2.bf16.xpose.msra.mxu0 0
      %702 = vmatprep.subr.bf16.mxu0 0
      %703 = vmatpush2.bf16.xpose.msra.mxu0 0
      %704 = vmatprep.mubr.bf16.mxu0 0
      %705 = vmatmul.mubr.bf16.gmra.mxu0 %v667
      %v706 = vpop.f32.mrf.mxu0
      %v707 = vadd.f32 0.0, %v706
      %v708 = vpop.f32.mrf.mxu0
      %v709 = vpop.f32.mrf.mxu0
      %v710 = vpop.f32.mrf.mxu0
      %711 = vdwg.mxu0
      %v712 = vsel %vm428, -1e+09, %v707
      %v713 = vsel %vm434, %v712, -inf
      %714 = vmax.xlane.f32.xlu0 %v713
      %v715 = vpop.xlane.xlu0 %714
      %v716 = vsub.f32 %v712, %v715
      %v717 = vmul.f32 %v716, 1.442695
      %v718 = vpow.pop %v717
      %v719 = vsel %vm434, %v718, 0.0
      %720 = vadd.xlane.f32.xlu0 %v719
      %v721 = vpop.xlane.xlu0 %720
      %v722 = vrcp.pop %v721
      %v723 = vmul.f32 %v718, %v722
      %v724 = vpack.c.bf16 %v723, %v723
      %725 = vrot.lane.b32.xlu0 %v430, 48
      %v726 = vpop.permute.xlu0 %725
      %v728 = vsel %vm434, %v724, 0
      %v731 = vsel %vm499, %v726, 0
      %733 = vmatprep.subr.bf16.mxu0 0
      %734 = vmatpush1.bf16.msra.mxu0 0
      %735 = vmatprep.subr.bf16.mxu0 0
      %736 = vmatpush1.bf16.msra.mxu0 0
      %737 = vmatprep.subr.bf16.mxu0 0
      %738 = vmatpush1.bf16.msra.mxu0 0
      %739 = vmatprep.subr.bf16.mxu0 0
      %740 = vmatpush1.bf16.msra.mxu0 0
      %741 = vmatprep.subr.bf16.mxu0 0
      %742 = vmatpush1.bf16.msra.mxu0 0
      %743 = vmatprep.subr.bf16.mxu0 0
      %744 = vmatpush1.bf16.msra.mxu0 0
      %745 = vmatprep.subr.bf16.mxu0 0
      %746 = vmatpush1.bf16.msra.mxu0 0
      %747 = vmatprep.subr.bf16.mxu0 0
      %748 = vmatpush1.bf16.msra.mxu0 %v731
      %749 = vmatprep.subr.bf16.mxu0 0
      %750 = vmatpush2.bf16.msra.mxu0 0
      %751 = vmatprep.subr.bf16.mxu0 0
      %752 = vmatpush2.bf16.msra.mxu0 0
      %753 = vmatprep.subr.bf16.mxu0 0
      %754 = vmatpush2.bf16.msra.mxu0 0
      %755 = vmatprep.subr.bf16.mxu0 0
      %756 = vmatpush2.bf16.msra.mxu0 0
      %757 = vmatprep.subr.bf16.mxu0 0
      %758 = vmatpush2.bf16.msra.mxu0 0
      %759 = vmatprep.subr.bf16.mxu0 0
      %760 = vmatpush2.bf16.msra.mxu0 0
      %761 = vmatprep.subr.bf16.mxu0 0
      %762 = vmatpush2.bf16.msra.mxu0 0
      %763 = vmatprep.subr.bf16.mxu0 0
      %764 = vmatpush2.bf16.msra.mxu0 0
      %765 = vmatprep.mubr.bf16.mxu0 0
      %766 = vmatmul.mubr.bf16.gmra.mxu0 %v728
      %v767 = vpop.f32.mrf.mxu0
      %v768 = vadd.f32 0.0, %v767
      %v769 = vpop.f32.mrf.mxu0
      %v770 = vpop.f32.mrf.mxu0
      %v771 = vpop.f32.mrf.mxu0
      %772 = vdwg.mxu0
      %774 = vrot.lane.b32.xlu0 %v768, 16
      %v775 = vpop.permute.xlu0 %774
      %vm777 = vcmask 195712
      %778 = vst.msk [vmem:[#allocation2] sm:$0xff] %vm777, %v775
      %779 = vrot.lane.b32.xlu0 %v429, 104
      %v780 = vpop.permute.xlu0 %779
      %781 = vrot.lane.b32.xlu0 %v430, 72
      %v782 = vpop.permute.xlu0 %781
      %v784 = vsel %vm434, %v780, 0
      %v787 = vsel %vm434, %v782, 0
      %789 = vmatprep.subr.bf16.mxu0 0
      %790 = vmatpush1.bf16.xpose.msra.mxu0 0
      %791 = vmatprep.subr.bf16.mxu0 0
      %792 = vmatpush1.bf16.xpose.msra.mxu0 0
      %793 = vmatprep.subr.bf16.mxu0 0
      %794 = vmatpush1.bf16.xpose.msra.mxu0 0
      %795 = vmatprep.subr.bf16.mxu0 0
      %796 = vmatpush1.bf16.xpose.msra.mxu0 0
      %797 = vmatprep.subr.bf16.mxu0 0
      %798 = vmatpush1.bf16.xpose.msra.mxu0 0
      %799 = vmatprep.subr.bf16.mxu0 0
      %800 = vmatpush1.bf16.xpose.msra.mxu0 0
      %801 = vmatprep.subr.bf16.mxu0 0
      %802 = vmatpush1.bf16.xpose.msra.mxu0 0
      %803 = vmatprep.subr.bf16.mxu0 0
      %804 = vmatpush1.bf16.xpose.msra.mxu0 %v787
      %805 = vmatprep.subr.bf16.mxu0 0
      %806 = vmatpush2.bf16.xpose.msra.mxu0 0
      %807 = vmatprep.subr.bf16.mxu0 0
      %808 = vmatpush2.bf16.xpose.msra.mxu0 0
      %809 = vmatprep.subr.bf16.mxu0 0
      %810 = vmatpush2.bf16.xpose.msra.mxu0 0
      %811 = vmatprep.subr.bf16.mxu0 0
      %812 = vmatpush2.bf16.xpose.msra.mxu0 0
      %813 = vmatprep.subr.bf16.mxu0 0
      %814 = vmatpush2.bf16.xpose.msra.mxu0 0
      %815 = vmatprep.subr.bf16.mxu0 0
      %816 = vmatpush2.bf16.xpose.msra.mxu0 0
      %817 = vmatprep.subr.bf16.mxu0 0
      %818 = vmatpush2.bf16.xpose.msra.mxu0 0
      %819 = vmatprep.subr.bf16.mxu0 0
      %820 = vmatpush2.bf16.xpose.msra.mxu0 0
      %821 = vmatprep.mubr.bf16.mxu0 0
      %822 = vmatmul.mubr.bf16.gmra.mxu0 %v784
      %v823 = vpop.f32.mrf.mxu0
      %v824 = vadd.f32 0.0, %v823
      %v825 = vpop.f32.mrf.mxu0
      %v826 = vpop.f32.mrf.mxu0
      %v827 = vpop.f32.mrf.mxu0
      %828 = vdwg.mxu0
      %v829 = vsel %vm428, -1e+09, %v824
      %v830 = vsel %vm434, %v829, -inf
      %831 = vmax.xlane.f32.xlu0 %v830
      %v832 = vpop.xlane.xlu0 %831
      %v833 = vsub.f32 %v829, %v832
      %v834 = vmul.f32 %v833, 1.442695
      %v835 = vpow.pop %v834
      %v836 = vsel %vm434, %v835, 0.0
      %837 = vadd.xlane.f32.xlu0 %v836
      %v838 = vpop.xlane.xlu0 %837
      %v839 = vrcp.pop %v838
      %v840 = vmul.f32 %v835, %v839
      %v841 = vpack.c.bf16 %v840, %v840
      %842 = vrot.lane.b32.xlu0 %v430, 40
      %v843 = vpop.permute.xlu0 %842
      %v845 = vsel %vm434, %v841, 0
      %v848 = vsel %vm499, %v843, 0
      %850 = vmatprep.subr.bf16.mxu0 0
      %851 = vmatpush1.bf16.msra.mxu0 0
      %852 = vmatprep.subr.bf16.mxu0 0
      %853 = vmatpush1.bf16.msra.mxu0 0
      %854 = vmatprep.subr.bf16.mxu0 0
      %855 = vmatpush1.bf16.msra.mxu0 0
      %856 = vmatprep.subr.bf16.mxu0 0
      %857 = vmatpush1.bf16.msra.mxu0 0
      %858 = vmatprep.subr.bf16.mxu0 0
      %859 = vmatpush1.bf16.msra.mxu0 0
      %860 = vmatprep.subr.bf16.mxu0 0
      %861 = vmatpush1.bf16.msra.mxu0 0
      %862 = vmatprep.subr.bf16.mxu0 0
      %863 = vmatpush1.bf16.msra.mxu0 0
      %864 = vmatprep.subr.bf16.mxu0 0
      %865 = vmatpush1.bf16.msra.mxu0 %v848
      %866 = vmatprep.subr.bf16.mxu0 0
      %867 = vmatpush2.bf16.msra.mxu0 0
      %868 = vmatprep.subr.bf16.mxu0 0
      %869 = vmatpush2.bf16.msra.mxu0 0
      %870 = vmatprep.subr.bf16.mxu0 0
      %871 = vmatpush2.bf16.msra.mxu0 0
      %872 = vmatprep.subr.bf16.mxu0 0
      %873 = vmatpush2.bf16.msra.mxu0 0
      %874 = vmatprep.subr.bf16.mxu0 0
      %875 = vmatpush2.bf16.msra.mxu0 0
      %876 = vmatprep.subr.bf16.mxu0 0
      %877 = vmatpush2.bf16.msra.mxu0 0
      %878 = vmatprep.subr.bf16.mxu0 0
      %879 = vmatpush2.bf16.msra.mxu0 0
      %880 = vmatprep.subr.bf16.mxu0 0
      %881 = vmatpush2.bf16.msra.mxu0 0
      %882 = vmatprep.mubr.bf16.mxu0 0
      %883 = vmatmul.mubr.bf16.gmra.mxu0 %v845
      %v884 = vpop.f32.mrf.mxu0
      %v885 = vadd.f32 0.0, %v884
      %v886 = vpop.f32.mrf.mxu0
      %v887 = vpop.f32.mrf.mxu0
      %v888 = vpop.f32.mrf.mxu0
      %889 = vdwg.mxu0
      %891 = vrot.lane.b32.xlu0 %v885, 24
      %v892 = vpop.permute.xlu0 %891
      %vm894 = vcmask 261312
      %895 = vst.msk [vmem:[#allocation2] sm:$0xff] %vm894, %v892
      %v896 = vld [vmem:[#allocation2] sm:$0xff]
      %v897 = vpack.c.bf16 %v896, %v896
      %v898 = vld [vmem:[%s5] sm:$0xf]
      %v899 = vld [vmem:[%s5 + $0x4] sm:$0xf]
      %v900 = vld [vmem:[%s5 + $0x8] sm:$0xf]
      %v901 = vld [vmem:[%s5 + $0xc] sm:$0xf]
      %v906 = vunpack.c.l.b16 %v898
      %v907 = vunpack.c.l.b16 %v899
      %v908 = vunpack.c.l.b16 %v900
      %v909 = vunpack.c.l.b16 %v901
      %v910 = vpack.c.b16 %v907, %v906
      %v911 = vpack.c.b16 %v909, %v908
      %v915 = vsel %vm322, %v897, 0
      %917 = vmatprep.subr.bf16.mxu0 0
      %918 = vmatpush1.bf16.msra.mxu0 0
      %919 = vmatprep.subr.bf16.mxu0 0
      %920 = vmatpush1.bf16.msra.mxu0 0
      %921 = vmatprep.subr.bf16.mxu0 0
      %922 = vmatpush1.bf16.msra.mxu0 0
      %923 = vmatprep.subr.bf16.mxu0 0
      %924 = vmatpush1.bf16.msra.mxu0 0
      %925 = vmatprep.subr.bf16.mxu0 0
      %926 = vmatpush1.bf16.msra.mxu0 0
      %927 = vmatprep.subr.bf16.mxu0 0
      %928 = vmatpush1.bf16.msra.mxu0 0
      %929 = vmatprep.subr.bf16.mxu0 0
      %930 = vmatpush1.bf16.msra.mxu0 %v911
      %931 = vmatprep.subr.bf16.mxu0 0
      %932 = vmatpush1.bf16.msra.mxu0 %v910
      %933 = vmatprep.subr.bf16.mxu0 0
      %934 = vmatpush2.bf16.msra.mxu0 0
      %935 = vmatprep.subr.bf16.mxu0 0
      %936 = vmatpush2.bf16.msra.mxu0 0
      %937 = vmatprep.subr.bf16.mxu0 0
      %938 = vmatpush2.bf16.msra.mxu0 0
      %939 = vmatprep.subr.bf16.mxu0 0
      %940 = vmatpush2.bf16.msra.mxu0 0
      %941 = vmatprep.subr.bf16.mxu0 0
      %942 = vmatpush2.bf16.msra.mxu0 0
      %943 = vmatprep.subr.bf16.mxu0 0
      %944 = vmatpush2.bf16.msra.mxu0 0
      %945 = vmatprep.subr.bf16.mxu0 0
      %946 = vmatpush2.bf16.msra.mxu0 0
      %947 = vmatprep.subr.bf16.mxu0 0
      %948 = vmatpush2.bf16.msra.mxu0 0
      %949 = vmatprep.mubr.bf16.mxu0 0
      %950 = vmatmul.mubr.bf16.gmra.mxu0 %v915
      %v951 = vpop.f32.mrf.mxu0
      %v952 = vadd.f32 0.0, %v951
      %v953 = vpop.f32.mrf.mxu0
      %v954 = vpop.f32.mrf.mxu0
      %v955 = vpop.f32.mrf.mxu0
      %956 = vdwg.mxu0
      %v957 = vadd.f32 %v319, %v952
      %v958 = vld [vmem:[%s6] sm:$0x1]
      %v960 = vlaneseq
      %v961 = vshrl.u32 %v960, 7
      %v962 = vsub.s32 0, %v961
      %v963 = vrot.slane %v958, %v962
      %v965 = vadd.f32 %v957, %v963
      %966 = vst.msk [vmem:[%s317] sm:$0xff] %vm322, %v965
      %p967 = scmp.lt.s32.totalorder %s19, 1
      %s968 = scalar_select %p967, %s19, 1
      %s969 = smul.addr %s968, 8
      %s970 = scalar_lea.vmem %s8, %s969
      // Predicated region
      $region53: #{decoder_forward.10} parent=51 // pred_check
        %p971 = pneg %p215
      $region54: #{decoder_forward.10} parent=51 // pred_check_branch
        %973 = sbr.rel (%p971) target = $region56
      $region55: #{decoder_forward.10} parent=51 // pred_region
        _
      $region56: #{decoder_forward.10} parent=51 // pred_fallthru
        _
    $region52: #{decoder_forward.10} parent=5 // pred_fallthru
      _
    %p974 = scmp.le.s32.totalorder 2, %s14
    // Predicated region
    $region57: #{decoder_forward.10} parent=5 // pred_check
      %p975 = pneg %p974
    $region58: #{decoder_forward.10} parent=5 // pred_check_branch
      %977 = sbr.rel (%p975) target = $region60
    $region59: #{decoder_forward.10} parent=5 // pred_region
      %s978 = ssub.s32 %s14, 2
      // Predicated region
      $region61: #{decoder_forward.10} parent=59 // pred_check
        %p979 = pneg %p221
      $region62: #{decoder_forward.10} parent=59 // pred_check_branch
        %981 = sbr.rel (%p979) target = $region64
      $region63: #{decoder_forward.10} parent=59 // pred_region
        %p982 = scmp.lt.s32.totalorder %s20, 1
        %s983 = scalar_select %p982, %s20, 1
        %s984 = smul.addr %s983, 8
        %s985 = scalar_lea.vmem %s8, %s984
      $region64: #{decoder_forward.10} parent=59 // pred_fallthru
        _
    $region60: #{decoder_forward.10} parent=5 // pred_fallthru
      _
  $region6: #{decoder_forward.10} parent=0 // loop_footer
    %s18 = sadd.s32 1, %s14
  $region7: #{decoder_forward.10} parent=0 // loop_footer_branch
    %13 = sbr.rel target = $region3
  $region8: #{decoder_forward.10} parent=0 // loop_exit
    _

// kernel: decoder_forward.13
$region0: #{decoder_forward.13}
  #allocation0 [shape = 'u32[]', space=smem, size = 0x4, offset = 0x4, fixed_abs, tag = 'smem constant byte address 0x4 - core index']
  #allocation1 [shape = 'u32[144,128]{1,0:T(1,128)}', space=vmem, size = 0x12000, scoped, tag = 'internal scratch']
  %s0 = inlined_call_operand.vmem [shape: f32[2,8,32], index: 0, kind: input, shape index: {}]
  %s1 = inlined_call_operand.vmem [shape: f32[1,32], index: 1, kind: input, shape index: {}]
  %s2 = inlined_call_operand.vmem [shape: f32[1,32], index: 2, kind: input, shape index: {}]
  %s3 = inlined_call_operand.hbm [shape: f32[2,8,32], index: 3, kind: output, shape index: {}]
  %s4 = sld [smem:[#allocation0]]
  $region45: #{decoder_forward.13} parent=0
    _
  %s6 = ssub.s32 1, %s4
  %s7 = scalar_select 0, %s6, %s4
  $region1: #{decoder_forward.13} parent=0
    #allocation2 [shape = 'u8[8192]{0}', space=vmem, size = 0x2000, scoped, tag = 'output window, operand 0']
    #allocation3 [shape = 's32[2]{0}', space=sflag, size = 0x8, scoped, tag = 'scoped memory for decoder_forward.13']
    %8 = vsyncpa [#allocation3], 0
    %s9 = scalar_lea.sflag [#allocation3], 1
    %10 = vsyncpa %s9, 0
    loop: start=0, step=1, limit=4
    $region2: #{decoder_forward.13} parent=1 // loop_pre_header
      _
    $region3: #{decoder_forward.13} parent=1 // loop_header
      %s12 = sphi 0, %s16
      %p13 = scmp.ge.s32.totalorder %s12, 4
      %s22 = sphi 0, %s24
      %s25 = sphi 0, %s22
      %s26 = sphi 0, %s25
      %s42 = sphi 0, %s26
      %s46 = sphi 0, %s46
      %s48 = sphi 0, %s46
      %s49 = sphi 0, %s48
      %s63 = sphi 0, %s49
      %s67 = sphi 0, %s67
      %s69 = sphi 0, %s67
      %s70 = sphi 0, %s69
      %s84 = sphi 0, %s70
      %s90 = sphi 0, %s92
      %s93 = sphi 0, %s90
      %s94 = sphi 0, %s93
      %s110 = sphi 0, %s94
    $region4: #{decoder_forward.13} parent=1 // loop_header_branch
      %15 = sbr.rel (%p13) target = $region8
    $region5: #{decoder_forward.13} parent=1 // loop_body
      %s17 = ssub.s32 %s12, 1
      %s18 = ssub.s32 %s12, 2
      %s19 = sadd.s32 %s12, 1
      %s20 = ssub.s32 %s12, %s19
      %p21 = scmp.eq.s32.totalorder %s20, 0
      %s23 = sadd.s32 %s22, 1
      %s24 = scalar_select %p21, %s22, %s23
      %p27 = pneg %p21
      %p28 = scmp.eq.s32.totalorder %s12, 1
      %p29 = por %p27, %p28
      %p30 = scmp.ne.s32.totalorder %s22, %s25
      %p31 = scmp.eq.s32.totalorder %s12, 0
      %p32 = por %p30, %p31
      %p33 = scmp.ne.s32.totalorder %s22, %s25
      %p34 = scmp.eq.s32.totalorder %s17, 1
      %p35 = por %p33, %p34
      %p36 = scmp.ne.s32.totalorder %s25, %s26
      %p37 = scmp.eq.s32.totalorder %s17, 0
      %p38 = por %p36, %p37
      %p39 = scmp.ne.s32.totalorder %s25, %s26
      %p40 = scmp.eq.s32.totalorder %s18, 1
      %p41 = por %p39, %p40
      %p43 = scmp.ne.s32.totalorder %s26, %s42
      %p44 = scmp.eq.s32.totalorder %s18, 0
      %p45 = por %p43, %p44
      %s47 = sadd.s32 %s46, 1
      %p50 = scmp.eq.s32.totalorder %s12, 1
      %p51 = scmp.ne.s32.totalorder %s46, %s48
      %p52 = scmp.eq.s32.totalorder %s12, 0
      %p53 = por %p51, %p52
      %p54 = scmp.ne.s32.totalorder %s46, %s48
      %p55 = scmp.eq.s32.totalorder %s17, 1
      %p56 = por %p54, %p55
      %p57 = scmp.ne.s32.totalorder %s48, %s49
      %p58 = scmp.eq.s32.totalorder %s17, 0
      %p59 = por %p57, %p58
      %p60 = scmp.ne.s32.totalorder %s48, %s49
      %p61 = scmp.eq.s32.totalorder %s18, 1
      %p62 = por %p60, %p61
      %p64 = scmp.ne.s32.totalorder %s49, %s63
      %p65 = scmp.eq.s32.totalorder %s18, 0
      %p66 = por %p64, %p65
      %s68 = sadd.s32 %s67, 1
      %p71 = scmp.eq.s32.totalorder %s12, 1
      %p72 = scmp.ne.s32.totalorder %s67, %s69
      %p73 = scmp.eq.s32.totalorder %s12, 0
      %p74 = por %p72, %p73
      %p75 = scmp.ne.s32.totalorder %s67, %s69
      %p76 = scmp.eq.s32.totalorder %s17, 1
      %p77 = por %p75, %p76
      %p78 = scmp.ne.s32.totalorder %s69, %s70
      %p79 = scmp.eq.s32.totalorder %s17, 0
      %p80 = por %p78, %p79
      %p81 = scmp.ne.s32.totalorder %s69, %s70
      %p82 = scmp.eq.s32.totalorder %s18, 1
      %p83 = por %p81, %p82
      %p85 = scmp.ne.s32.totalorder %s70, %s84
      %p86 = scmp.eq.s32.totalorder %s18, 0
      %p87 = por %p85, %p86
      %s88 = ssub.s32 %s12, %s19
      %p89 = scmp.eq.s32.totalorder %s88, 0
      %s91 = sadd.s32 %s90, 1
      %s92 = scalar_select %p89, %s90, %s91
      %p95 = pneg %p89
      %p96 = scmp.eq.s32.totalorder %s12, 1
      %p97 = por %p95, %p96
      %p98 = scmp.ne.s32.totalorder %s90, %s93
      %p99 = scmp.eq.s32.totalorder %s12, 0
      %p100 = por %p98, %p99
      %p101 = scmp.ne.s32.totalorder %s90, %s93
      %p102 = scmp.eq.s32.totalorder %s17, 1
      %p103 = por %p101, %p102
      %p104 = scmp.ne.s32.totalorder %s93, %s94
      %p105 = scmp.eq.s32.totalorder %s17, 0
      %p106 = por %p104, %p105
      %p107 = scmp.ne.s32.totalorder %s93, %s94
      %p108 = scmp.eq.s32.totalorder %s18, 1
      %p109 = por %p107, %p108
      %p111 = scmp.ne.s32.totalorder %s94, %s110
      %p112 = scmp.eq.s32.totalorder %s18, 0
      %p113 = por %p111, %p112
      %p114 = scmp.le.s32.totalorder 1, %s12
      %p115 = scmp.lt.s32.totalorder %s12, 3
      %p116 = pnand %p114, %p115
      %p117 = pneg %p116
      // Predicated region
      $region9: #{decoder_forward.13} parent=5 // pred_check
        _
      $region10: #{decoder_forward.13} parent=5 // pred_check_branch
        %119 = sbr.rel (%p116) target = $region12
      $region11: #{decoder_forward.13} parent=5 // pred_region
        %s120 = ssub.s32 %s12, 1
        // Predicated region
        $region13: #{decoder_forward.13} parent=11 // pred_check
          %p121 = pneg %p59
        $region14: #{decoder_forward.13} parent=11 // pred_check_branch
          %123 = sbr.rel (%p121) target = $region16
        $region15: #{decoder_forward.13} parent=11 // pred_region
          _
        $region16: #{decoder_forward.13} parent=11 // pred_fallthru
          _
        // Predicated region
        $region17: #{decoder_forward.13} parent=11 // pred_check
          %p124 = pneg %p80
        $region18: #{decoder_forward.13} parent=11 // pred_check_branch
          %126 = sbr.rel (%p124) target = $region20
        $region19: #{decoder_forward.13} parent=11 // pred_region
          _
        $region20: #{decoder_forward.13} parent=11 // pred_fallthru
          _
      $region12: #{decoder_forward.13} parent=5 // pred_fallthru
        _
      %p127 = scmp.lt.s32.totalorder %s12, 2
      // Predicated region
      $region21: #{decoder_forward.13} parent=5 // pred_check
        %p128 = pneg %p127
      $region22: #{decoder_forward.13} parent=5 // pred_check_branch
        %130 = sbr.rel (%p128) target = $region24
      $region23: #{decoder_forward.13} parent=5 // pred_region
        // Predicated region
        $region25: #{decoder_forward.13} parent=23 // pred_check
          %p131 = pneg %p32
        $region26: #{decoder_forward.13} parent=23 // pred_check_branch
          %133 = sbr.rel (%p131) target = $region28
        $region27: #{decoder_forward.13} parent=23 // pred_region
          %p134 = scmp.lt.s32.totalorder %s12, 1
          %s135 = scalar_select %p134, %s12, 1
          %s136 = smul.addr %s135, 8
          %s137 = scalar_lea.vmem %s0, %s136
        $region28: #{decoder_forward.13} parent=23 // pred_fallthru
          _
      $region24: #{decoder_forward.13} parent=5 // pred_fallthru
        _
      %p138 = scmp.le.s32.totalorder 1, %s12
      %p139 = scmp.lt.s32.totalorder %s12, 3
      %p140 = pnand %p138, %p139
      %p141 = pneg %p140
      // Predicated region
      $region29: #{decoder_forward.13} parent=5 // pred_check
        _
      $region30: #{decoder_forward.13} parent=5 // pred_check_branch
        %143 = sbr.rel (%p140) target = $region32
      $region31: #{decoder_forward.13} parent=5 // pred_region
        %s144 = ssub.s32 %s12, 1
        %p145 = scmp.lt.s32.totalorder %s17, 1
        %s146 = scalar_select %p145, %s17, 1
        %s147 = smul.addr %s146, 8
        %s148 = scalar_lea.vmem %s0, %s147
        %p149 = pneg %p38
        %p150 = pneg %p35
        %p151 = pneg %p59
        %p152 = pneg %p56
        %p153 = pneg %p80
        %p154 = pneg %p77
        %p155 = pneg %p106
        %p156 = pneg %p103
        %s157 = sand.u32 %s93, 1
        %s158 = scalar_lea.sflag [#allocation3], %s157
        %s159 = sand.u32 %s93, 1
        %s160 = smul.addr %s159, 8
        %s161 = scalar_lea.vmem [#allocation2], %s160
        %p162 = scmp.lt.s32.totalorder %s17, 1
        %s163 = scalar_select %p162, %s17, 1
        %s164 = smul.addr %s163, 8
        %s165 = scalar_lea.vmem %s0, %s164
        %v166 = vld [vmem:[%s165] sm:$0xff]
        %v167 = vld [vmem:[%s1] sm:$0x1]
        %v168 = vld [vmem:[%s2] sm:$0x1]
        %vm169 = vcmask 261120
        %v170 = vsel %vm169, %v166, 0.0
        %171 = vadd.xlane.f32.xlu0 %v170
        %v172 = vpop.xlane.xlu0 %171
        %v173 = vrcp.pop 32.0
        %v174 = vmul.f32 %v172, %v173
        %v175 = vsub.f32 %v166, %v174
        %v176 = vmul.f32 %v175, %v175
        %v177 = vsel %vm169, %v176, 0.0
        %178 = vadd.xlane.f32.xlu0 %v177
        %v179 = vpop.xlane.xlu0 %178
        %v180 = vmul.f32 %v179, 0.032258064
        %v181 = vrsqrt.pop %v180
        %v182 = vmul.f32 %v180, %v181
        %vm183 = vcmp.eq.f32.partialorder %v180, inf
        %v184 = vsel %vm183, %v180, %v182
        %vm185 = vcmp.eq.f32.partialorder %v180, 0.0
        %v186 = vand.u32 %v180, 2147483648
        %v187 = vsel %vm185, %v186, %v184
        %v188 = vadd.f32 %v187, 1e-06
        %v189 = vrcp.pop %v188
        %v190 = vmul.f32 1.0, %v189
        %v192 = vlaneseq
        %v193 = vshrl.u32 %v192, 7
        %v194 = vsub.s32 0, %v193
        %v195 = vrot.slane %v167, %v194
        %v197 = vmul.f32 %v195, %v175
        %v198 = vmul.f32 %v197, %v190
        %v200 = vlaneseq
        %v201 = vshrl.u32 %v200, 7
        %v202 = vsub.s32 0, %v201
        %v203 = vrot.slane %v168, %v202
        %v205 = vadd.f32 %v198, %v203
        %206 = vst.msk [vmem:[%s161] sm:$0xff] %vm169, %v205
        %s207 = sand.u32 %s93, 1
        %s208 = scalar_lea.sflag [#allocation3], %s207
        %s209 = sand.u32 %s93, 1
        %s210 = smul.addr %s209, 8
        %s211 = scalar_lea.vmem [#allocation2], %s210
        // Predicated region
        $region33: #{decoder_forward.13} parent=31 // pred_check
          %p212 = pneg %p103
        $region34: #{decoder_forward.13} parent=31 // pred_check_branch
          %214 = sbr.rel (%p212) target = $region36
        $region35: #{decoder_forward.13} parent=31 // pred_region
          %s216 = ssub.s32 128, 128
          %217 = vsyncadd %s208, %s216
          %s218 = smul.addr %s17, 128
          %s219 = scalar_lea.hbm %s3, %s218
          %s221 = sshll.u32 %s211, 4
          %s222 = int_to_ptr.vmem [resolvable:$true] %s221
          %224 = dma.vmem_to_hbm [thread:$0]  %s222, 128, %s219, %s208
        $region36: #{decoder_forward.13} parent=31 // pred_fallthru
          _
      $region32: #{decoder_forward.13} parent=5 // pred_fallthru
        _
      %p225 = scmp.le.s32.totalorder 2, %s12
      // Predicated region
      $region37: #{decoder_forward.13} parent=5 // pred_check
        %p226 = pneg %p225
      $region38: #{decoder_forward.13} parent=5 // pred_check_branch
        %228 = sbr.rel (%p226) target = $region40
      $region39: #{decoder_forward.13} parent=5 // pred_region
        %s229 = ssub.s32 %s12, 2
        // Predicated region
        $region41: #{decoder_forward.13} parent=39 // pred_check
          %p230 = pneg %p109
        $region42: #{decoder_forward.13} parent=39 // pred_check_branch
          %232 = sbr.rel (%p230) target = $region44
        $region43: #{decoder_forward.13} parent=39 // pred_region
          %s233 = sand.u32 %s94, 1
          %s234 = scalar_lea.sflag [#allocation3], %s233
          %s235 = sand.u32 %s94, 1
          %s236 = smul.addr %s235, 8
          %s237 = scalar_lea.vmem [#allocation2], %s236
          %238 = dma.done %s234, 128
        $region44: #{decoder_forward.13} parent=39 // pred_fallthru
          _
      $region40: #{decoder_forward.13} parent=5 // pred_fallthru
        _
    $region6: #{decoder_forward.13} parent=1 // loop_footer
      %s16 = sadd.s32 1, %s12
    $region7: #{decoder_forward.13} parent=1 // loop_footer_branch
      %11 = sbr.rel target = $region3
    $region8: #{decoder_forward.13} parent=1 // loop_exit
      _
    %239 = vsyncpa [#allocation3], 1
    %s240 = scalar_lea.sflag [#allocation3], 1
    %241 = vsyncpa %s240, 1

// kernel: decoder_forward.11
$region0: #{decoder_forward.11}
  #allocation0 [shape = 'u32[]', space=smem, size = 0x4, offset = 0x4, fixed_abs, tag = 'smem constant byte address 0x4 - core index']
  #allocation1 [shape = 'u32[144,128]{1,0:T(1,128)}', space=vmem, size = 0x12000, scoped, tag = 'internal scratch']
  #allocation2 [shape = 'f32[8,32]{1,0:T(8,128)}', space=vmem, size = 0x1000, scoped, tag = 'scratch operand']
  %s0 = inlined_call_operand.vmem [shape: f32[2,8,32], index: 0, kind: input, shape index: {}]
  %s1 = inlined_call_operand.vmem [shape: f32[2,8,32], index: 1, kind: input, shape index: {}]
  %s2 = inlined_call_operand.vmem [shape: f32[1,32], index: 2, kind: input, shape index: {}]
  %s3 = inlined_call_operand.vmem [shape: f32[1,32], index: 3, kind: input, shape index: {}]
  %s4 = inlined_call_operand.vmem [shape: bf16[32,32], index: 4, kind: input, shape index: {}]
  %s5 = inlined_call_operand.vmem [shape: f32[1,32], index: 5, kind: input, shape index: {}]
  %s6 = inlined_call_operand.vmem [shape: bf16[32,64], index: 6, kind: input, shape index: {}]
  %s7 = inlined_call_operand.vmem [shape: f32[1,64], index: 7, kind: input, shape index: {}]
  %s8 = inlined_call_operand.vmem [shape: bf16[32,32], index: 8, kind: input, shape index: {}]
  %s9 = inlined_call_operand.vmem [shape: f32[1,32], index: 9, kind: input, shape index: {}]
  %s10 = inlined_call_operand.vmem [shape: f32[2,1,8,8], index: 10, kind: input, shape index: {}]
  %s11 = inlined_call_operand.vmem [shape: f32[2,8,32], index: 11, kind: output, shape index: {}]
  %s12 = sld [smem:[#allocation0]]
  $region77: #{decoder_forward.11} parent=0
    _
  %s14 = ssub.s32 1, %s12
  %s15 = scalar_select 0, %s14, %s12
  loop: start=0, step=1, limit=4
  $region2: #{decoder_forward.11} parent=0 // loop_pre_header
    _
  $region3: #{decoder_forward.11} parent=0 // loop_header
    %s17 = sphi 0, %s21
    %p18 = scmp.ge.s32.totalorder %s17, 4
    %s27 = sphi 0, %s29
    %s30 = sphi 0, %s27
    %s31 = sphi 0, %s30
    %s47 = sphi 0, %s31
    %s53 = sphi 0, %s55
    %s56 = sphi 0, %s53
    %s57 = sphi 0, %s56
    %s73 = sphi 0, %s57
    %s77 = sphi 0, %s77
    %s79 = sphi 0, %s77
    %s80 = sphi 0, %s79
    %s94 = sphi 0, %s80
    %s98 = sphi 0, %s98
    %s100 = sphi 0, %s98
    %s101 = sphi 0, %s100
    %s115 = sphi 0, %s101
    %s119 = sphi 0, %s119
    %s121 = sphi 0, %s119
    %s122 = sphi 0, %s121
    %s136 = sphi 0, %s122
    %s140 = sphi 0, %s140
    %s142 = sphi 0, %s140
    %s143 = sphi 0, %s142
    %s157 = sphi 0, %s143
    %s161 = sphi 0, %s161
    %s163 = sphi 0, %s161
    %s164 = sphi 0, %s163
    %s178 = sphi 0, %s164
    %s182 = sphi 0, %s182
    %s184 = sphi 0, %s182
    %s185 = sphi 0, %s184
    %s199 = sphi 0, %s185
    %s203 = sphi 0, %s203
    %s205 = sphi 0, %s203
    %s206 = sphi 0, %s205
    %s220 = sphi 0, %s206
    %s224 = sphi 0, %s224
    %s226 = sphi 0, %s224
    %s227 = sphi 0, %s226
    %s241 = sphi 0, %s227
    %s247 = sphi 0, %s249
    %s250 = sphi 0, %s247
    %s251 = sphi 0, %s250
    %s267 = sphi 0, %s251
    %s273 = sphi 0, %s275
    %s276 = sphi 0, %s273
    %s277 = sphi 0, %s276
    %s293 = sphi 0, %s277
  $region4: #{decoder_forward.11} parent=0 // loop_header_branch
    %20 = sbr.rel (%p18) target = $region8
  $region5: #{decoder_forward.11} parent=0 // loop_body
    %s22 = ssub.s32 %s17, 1
    %s23 = ssub.s32 %s17, 2
    %s24 = sadd.s32 %s17, 1
    %s25 = ssub.s32 %s17, %s24
    %p26 = scmp.eq.s32.totalorder %s25, 0
    %s28 = sadd.s32 %s27, 1
    %s29 = scalar_select %p26, %s27, %s28
    %p32 = pneg %p26
    %p33 = scmp.eq.s32.totalorder %s17, 1
    %p34 = por %p32, %p33
    %p35 = scmp.ne.s32.totalorder %s27, %s30
    %p36 = scmp.eq.s32.totalorder %s17, 0
    %p37 = por %p35, %p36
    %p38 = scmp.ne.s32.totalorder %s27, %s30
    %p39 = scmp.eq.s32.totalorder %s22, 1
    %p40 = por %p38, %p39
    %p41 = scmp.ne.s32.totalorder %s30, %s31
    %p42 = scmp.eq.s32.totalorder %s22, 0
    %p43 = por %p41, %p42
    %p44 = scmp.ne.s32.totalorder %s30, %s31
    %p45 = scmp.eq.s32.totalorder %s23, 1
    %p46 = por %p44, %p45
    %p48 = scmp.ne.s32.totalorder %s31, %s47
    %p49 = scmp.eq.s32.totalorder %s23, 0
    %p50 = por %p48, %p49
    %s51 = ssub.s32 %s17, %s24
    %p52 = scmp.eq.s32.totalorder %s51, 0
    %s54 = sadd.s32 %s53, 1
    %s55 = scalar_select %p52, %s53, %s54
    %p58 = pneg %p52
    %p59 = scmp.eq.s32.totalorder %s17, 1
    %p60 = por %p58, %p59
    %p61 = scmp.ne.s32.totalorder %s53, %s56
    %p62 = scmp.eq.s32.totalorder %s17, 0
    %p63 = por %p61, %p62
    %p64 = scmp.ne.s32.totalorder %s53, %s56
    %p65 = scmp.eq.s32.totalorder %s22, 1
    %p66 = por %p64, %p65
    %p67 = scmp.ne.s32.totalorder %s56, %s57
    %p68 = scmp.eq.s32.totalorder %s22, 0
    %p69 = por %p67, %p68
    %p70 = scmp.ne.s32.totalorder %s56, %s57
    %p71 = scmp.eq.s32.totalorder %s23, 1
    %p72 = por %p70, %p71
    %p74 = scmp.ne.s32.totalorder %s57, %s73
    %p75 = scmp.eq.s32.totalorder %s23, 0
    %p76 = por %p74, %p75
    %s78 = sadd.s32 %s77, 1
    %p81 = scmp.eq.s32.totalorder %s17, 1
    %p82 = scmp.ne.s32.totalorder %s77, %s79
    %p83 = scmp.eq.s32.totalorder %s17, 0
    %p84 = por %p82, %p83
    %p85 = scmp.ne.s32.totalorder %s77, %s79
    %p86 = scmp.eq.s32.totalorder %s22, 1
    %p87 = por %p85, %p86
    %p88 = scmp.ne.s32.totalorder %s79, %s80
    %p89 = scmp.eq.s32.totalorder %s22, 0
    %p90 = por %p88, %p89
    %p91 = scmp.ne.s32.totalorder %s79, %s80
    %p92 = scmp.eq.s32.totalorder %s23, 1
    %p93 = por %p91, %p92
    %p95 = scmp.ne.s32.totalorder %s80, %s94
    %p96 = scmp.eq.s32.totalorder %s23, 0
    %p97 = por %p95, %p96
    %s99 = sadd.s32 %s98, 1
    %p102 = scmp.eq.s32.totalorder %s17, 1
    %p103 = scmp.ne.s32.totalorder %s98, %s100
    %p104 = scmp.eq.s32.totalorder %s17, 0
    %p105 = por %p103, %p104
    %p106 = scmp.ne.s32.totalorder %s98, %s100
    %p107 = scmp.eq.s32.totalorder %s22, 1
    %p108 = por %p106, %p107
    %p109 = scmp.ne.s32.totalorder %s100, %s101
    %p110 = scmp.eq.s32.totalorder %s22, 0
    %p111 = por %p109, %p110
    %p112 = scmp.ne.s32.totalorder %s100, %s101
    %p113 = scmp.eq.s32.totalorder %s23, 1
    %p114 = por %p112, %p113
    %p116 = scmp.ne.s32.totalorder %s101, %s115
    %p117 = scmp.eq.s32.totalorder %s23, 0
    %p118 = por %p116, %p117
    %s120 = sadd.s32 %s119, 1
    %p123 = scmp.eq.s32.totalorder %s17, 1
    %p124 = scmp.ne.s32.totalorder %s119, %s121
    %p125 = scmp.eq.s32.totalorder %s17, 0
    %p126 = por %p124, %p125
    %p127 = scmp.ne.s32.totalorder %s119, %s121
    %p128 = scmp.eq.s32.totalorder %s22, 1
    %p129 = por %p127, %p128
    %p130 = scmp.ne.s32.totalorder %s121, %s122
    %p131 = scmp.eq.s32.totalorder %s22, 0
    %p132 = por %p130, %p131
    %p133 = scmp.ne.s32.totalorder %s121, %s122
    %p134 = scmp.eq.s32.totalorder %s23, 1
    %p135 = por %p133, %p134
    %p137 = scmp.ne.s32.totalorder %s122, %s136
    %p138 = scmp.eq.s32.totalorder %s23, 0
    %p139 = por %p137, %p138
    %s141 = sadd.s32 %s140, 1
    %p144 = scmp.eq.s32.totalorder %s17, 1
    %p145 = scmp.ne.s32.totalorder %s140, %s142
    %p146 = scmp.eq.s32.totalorder %s17, 0
    %p147 = por %p145, %p146
    %p148 = scmp.ne.s32.totalorder %s140, %s142
    %p149 = scmp.eq.s32.totalorder %s22, 1
    %p150 = por %p148, %p149
    %p151 = scmp.ne.s32.totalorder %s142, %s143
    %p152 = scmp.eq.s32.totalorder %s22, 0
    %p153 = por %p151, %p152
    %p154 = scmp.ne.s32.totalorder %s142, %s143
    %p155 = scmp.eq.s32.totalorder %s23, 1
    %p156 = por %p154, %p155
    %p158 = scmp.ne.s32.totalorder %s143, %s157
    %p159 = scmp.eq.s32.totalorder %s23, 0
    %p160 = por %p158, %p159
    %s162 = sadd.s32 %s161, 1
    %p165 = scmp.eq.s32.totalorder %s17, 1
    %p166 = scmp.ne.s32.totalorder %s161, %s163
    %p167 = scmp.eq.s32.totalorder %s17, 0
    %p168 = por %p166, %p167
    %p169 = scmp.ne.s32.totalorder %s161, %s163
    %p170 = scmp.eq.s32.totalorder %s22, 1
    %p171 = por %p169, %p170
    %p172 = scmp.ne.s32.totalorder %s163, %s164
    %p173 = scmp.eq.s32.totalorder %s22, 0
    %p174 = por %p172, %p173
    %p175 = scmp.ne.s32.totalorder %s163, %s164
    %p176 = scmp.eq.s32.totalorder %s23, 1
    %p177 = por %p175, %p176
    %p179 = scmp.ne.s32.totalorder %s164, %s178
    %p180 = scmp.eq.s32.totalorder %s23, 0
    %p181 = por %p179, %p180
    %s183 = sadd.s32 %s182, 1
    %p186 = scmp.eq.s32.totalorder %s17, 1
    %p187 = scmp.ne.s32.totalorder %s182, %s184
    %p188 = scmp.eq.s32.totalorder %s17, 0
    %p189 = por %p187, %p188
    %p190 = scmp.ne.s32.totalorder %s182, %s184
    %p191 = scmp.eq.s32.totalorder %s22, 1
    %p192 = por %p190, %p191
    %p193 = scmp.ne.s32.totalorder %s184, %s185
    %p194 = scmp.eq.s32.totalorder %s22, 0
    %p195 = por %p193, %p194
    %p196 = scmp.ne.s32.totalorder %s184, %s185
    %p197 = scmp.eq.s32.totalorder %s23, 1
    %p198 = por %p196, %p197
    %p200 = scmp.ne.s32.totalorder %s185, %s199
    %p201 = scmp.eq.s32.totalorder %s23, 0
    %p202 = por %p200, %p201
    %s204 = sadd.s32 %s203, 1
    %p207 = scmp.eq.s32.totalorder %s17, 1
    %p208 = scmp.ne.s32.totalorder %s203, %s205
    %p209 = scmp.eq.s32.totalorder %s17, 0
    %p210 = por %p208, %p209
    %p211 = scmp.ne.s32.totalorder %s203, %s205
    %p212 = scmp.eq.s32.totalorder %s22, 1
    %p213 = por %p211, %p212
    %p214 = scmp.ne.s32.totalorder %s205, %s206
    %p215 = scmp.eq.s32.totalorder %s22, 0
    %p216 = por %p214, %p215
    %p217 = scmp.ne.s32.totalorder %s205, %s206
    %p218 = scmp.eq.s32.totalorder %s23, 1
    %p219 = por %p217, %p218
    %p221 = scmp.ne.s32.totalorder %s206, %s220
    %p222 = scmp.eq.s32.totalorder %s23, 0
    %p223 = por %p221, %p222
    %s225 = sadd.s32 %s224, 1
    %p228 = scmp.eq.s32.totalorder %s17, 1
    %p229 = scmp.ne.s32.totalorder %s224, %s226
    %p230 = scmp.eq.s32.totalorder %s17, 0
    %p231 = por %p229, %p230
    %p232 = scmp.ne.s32.totalorder %s224, %s226
    %p233 = scmp.eq.s32.totalorder %s22, 1
    %p234 = por %p232, %p233
    %p235 = scmp.ne.s32.totalorder %s226, %s227
    %p236 = scmp.eq.s32.totalorder %s22, 0
    %p237 = por %p235, %p236
    %p238 = scmp.ne.s32.totalorder %s226, %s227
    %p239 = scmp.eq.s32.totalorder %s23, 1
    %p240 = por %p238, %p239
    %p242 = scmp.ne.s32.totalorder %s227, %s241
    %p243 = scmp.eq.s32.totalorder %s23, 0
    %p244 = por %p242, %p243
    %s245 = ssub.s32 %s17, %s24
    %p246 = scmp.eq.s32.totalorder %s245, 0
    %s248 = sadd.s32 %s247, 1
    %s249 = scalar_select %p246, %s247, %s248
    %p252 = pneg %p246
    %p253 = scmp.eq.s32.totalorder %s17, 1
    %p254 = por %p252, %p253
    %p255 = scmp.ne.s32.totalorder %s247, %s250
    %p256 = scmp.eq.s32.totalorder %s17, 0
    %p257 = por %p255, %p256
    %p258 = scmp.ne.s32.totalorder %s247, %s250
    %p259 = scmp.eq.s32.totalorder %s22, 1
    %p260 = por %p258, %p259
    %p261 = scmp.ne.s32.totalorder %s250, %s251
    %p262 = scmp.eq.s32.totalorder %s22, 0
    %p263 = por %p261, %p262
    %p264 = scmp.ne.s32.totalorder %s250, %s251
    %p265 = scmp.eq.s32.totalorder %s23, 1
    %p266 = por %p264, %p265
    %p268 = scmp.ne.s32.totalorder %s251, %s267
    %p269 = scmp.eq.s32.totalorder %s23, 0
    %p270 = por %p268, %p269
    %s271 = ssub.s32 %s17, %s24
    %p272 = scmp.eq.s32.totalorder %s271, 0
    %s274 = sadd.s32 %s273, 1
    %s275 = scalar_select %p272, %s273, %s274
    %p278 = pneg %p272
    %p279 = scmp.eq.s32.totalorder %s17, 1
    %p280 = por %p278, %p279
    %p281 = scmp.ne.s32.totalorder %s273, %s276
    %p282 = scmp.eq.s32.totalorder %s17, 0
    %p283 = por %p281, %p282
    %p284 = scmp.ne.s32.totalorder %s273, %s276
    %p285 = scmp.eq.s32.totalorder %s22, 1
    %p286 = por %p284, %p285
    %p287 = scmp.ne.s32.totalorder %s276, %s277
    %p288 = scmp.eq.s32.totalorder %s22, 0
    %p289 = por %p287, %p288
    %p290 = scmp.ne.s32.totalorder %s276, %s277
    %p291 = scmp.eq.s32.totalorder %s23, 1
    %p292 = por %p290, %p291
    %p294 = scmp.ne.s32.totalorder %s277, %s293
    %p295 = scmp.eq.s32.totalorder %s23, 0
    %p296 = por %p294, %p295
    %p297 = scmp.le.s32.totalorder 1, %s17
    %p298 = scmp.lt.s32.totalorder %s17, 3
    %p299 = pnand %p297, %p298
    %p300 = pneg %p299
    // Predicated region
    $region9: #{decoder_forward.11} parent=5 // pred_check
      _
    $region10: #{decoder_forward.11} parent=5 // pred_check_branch
      %302 = sbr.rel (%p299) target = $region12
    $region11: #{decoder_forward.11} parent=5 // pred_region
      %s303 = ssub.s32 %s17, 1
      // Predicated region
      $region13: #{decoder_forward.11} parent=11 // pred_check
        %p304 = pneg %p90
      $region14: #{decoder_forward.11} parent=11 // pred_check_branch
        %306 = sbr.rel (%p304) target = $region16
      $region15: #{decoder_forward.11} parent=11 // pred_region
        _
      $region16: #{decoder_forward.11} parent=11 // pred_fallthru
        _
      // Predicated region
      $region17: #{decoder_forward.11} parent=11 // pred_check
        %p307 = pneg %p111
      $region18: #{decoder_forward.11} parent=11 // pred_check_branch
        %309 = sbr.rel (%p307) target = $region20
      $region19: #{decoder_forward.11} parent=11 // pred_region
        _
      $region20: #{decoder_forward.11} parent=11 // pred_fallthru
        _
      // Predicated region
      $region21: #{decoder_forward.11} parent=11 // pred_check
        %p310 = pneg %p132
      $region22: #{decoder_forward.11} parent=11 // pred_check_branch
        %312 = sbr.rel (%p310) target = $region24
      $region23: #{decoder_forward.11} parent=11 // pred_region
        _
      $region24: #{decoder_forward.11} parent=11 // pred_fallthru
        _
      // Predicated region
      $region25: #{decoder_forward.11} parent=11 // pred_check
        %p313 = pneg %p153
      $region26: #{decoder_forward.11} parent=11 // pred_check_branch
        %315 = sbr.rel (%p313) target = $region28
      $region27: #{decoder_forward.11} parent=11 // pred_region
        _
      $region28: #{decoder_forward.11} parent=11 // pred_fallthru
        _
      // Predicated region
      $region29: #{decoder_forward.11} parent=11 // pred_check
        %p316 = pneg %p174
      $region30: #{decoder_forward.11} parent=11 // pred_check_branch
        %318 = sbr.rel (%p316) target = $region32
      $region31: #{decoder_forward.11} parent=11 // pred_region
        _
      $region32: #{decoder_forward.11} parent=11 // pred_fallthru
        _
      // Predicated region
      $region33: #{decoder_forward.11} parent=11 // pred_check
        %p319 = pneg %p195
      $region34: #{decoder_forward.11} parent=11 // pred_check_branch
        %321 = sbr.rel (%p319) target = $region36
      $region35: #{decoder_forward.11} parent=11 // pred_region
        _
      $region36: #{decoder_forward.11} parent=11 // pred_fallthru
        _
      // Predicated region
      $region37: #{decoder_forward.11} parent=11 // pred_check
        %p322 = pneg %p216
      $region38: #{decoder_forward.11} parent=11 // pred_check_branch
        %324 = sbr.rel (%p322) target = $region40
      $region39: #{decoder_forward.11} parent=11 // pred_region
        _
      $region40: #{decoder_forward.11} parent=11 // pred_fallthru
        _
      // Predicated region
      $region41: #{decoder_forward.11} parent=11 // pred_check
        %p325 = pneg %p237
      $region42: #{decoder_forward.11} parent=11 // pred_check_branch
        %327 = sbr.rel (%p325) target = $region44
      $region43: #{decoder_forward.11} parent=11 // pred_region
        _
      $region44: #{decoder_forward.11} parent=11 // pred_fallthru
        _
    $region12: #{decoder_forward.11} parent=5 // pred_fallthru
      _
    %p328 = scmp.lt.s32.totalorder %s17, 2
    // Predicated region
    $region45: #{decoder_forward.11} parent=5 // pred_check
      %p329 = pneg %p328
    $region46: #{decoder_forward.11} parent=5 // pred_check_branch
      %331 = sbr.rel (%p329) target = $region48
    $region47: #{decoder_forward.11} parent=5 // pred_region
      // Predicated region
      $region49: #{decoder_forward.11} parent=47 // pred_check
        %p332 = pneg %p37
      $region50: #{decoder_forward.11} parent=47 // pred_check_branch
        %334 = sbr.rel (%p332) target = $region52
      $region51: #{decoder_forward.11} parent=47 // pred_region
        %p335 = scmp.lt.s32.totalorder %s17, 1
        %s336 = scalar_select %p335, %s17, 1
        %s337 = smul.addr %s336, 8
        %s338 = scalar_lea.vmem %s0, %s337
      $region52: #{decoder_forward.11} parent=47 // pred_fallthru
        _
      // Predicated region
      $region53: #{decoder_forward.11} parent=47 // pred_check
        %p339 = pneg %p63
      $region54: #{decoder_forward.11} parent=47 // pred_check_branch
        %341 = sbr.rel (%p339) target = $region56
      $region55: #{decoder_forward.11} parent=47 // pred_region
        %p342 = scmp.lt.s32.totalorder %s17, 1
        %s343 = scalar_select %p342, %s17, 1
        %s344 = smul.addr %s343, 8
        %s345 = scalar_lea.vmem %s1, %s344
      $region56: #{decoder_forward.11} parent=47 // pred_fallthru
        _
      // Predicated region
      $region57: #{decoder_forward.11} parent=47 // pred_check
        %p346 = pneg %p257
      $region58: #{decoder_forward.11} parent=47 // pred_check_branch
        %348 = sbr.rel (%p346) target = $region60
      $region59: #{decoder_forward.11} parent=47 // pred_region
        %p349 = scmp.lt.s32.totalorder %s17, 1
        %s350 = scalar_select %p349, %s17, 1
        %s351 = smul.addr %s350, 8
        %s352 = scalar_lea.vmem %s10, %s351
      $region60: #{decoder_forward.11} parent=47 // pred_fallthru
        _
    $region48: #{decoder_forward.11} parent=5 // pred_fallthru
      _
    %p353 = scmp.le.s32.totalorder 1, %s17
    %p354 = scmp.lt.s32.totalorder %s17, 3
    %p355 = pnand %p353, %p354
    %p356 = pneg %p355
    // Predicated region
    $region61: #{decoder_forward.11} parent=5 // pred_check
      _
    $region62: #{decoder_forward.11} parent=5 // pred_check_branch
      %358 = sbr.rel (%p355) target = $region64
    $region63: #{decoder_forward.11} parent=5 // pred_region
      %s359 = ssub.s32 %s17, 1
      %p360 = scmp.lt.s32.totalorder %s22, 1
      %s361 = scalar_select %p360, %s22, 1
      %s362 = smul.addr %s361, 8
      %s363 = scalar_lea.vmem %s0, %s362
      %p364 = pneg %p43
      %p365 = pneg %p40
      %p366 = scmp.lt.s32.totalorder %s22, 1
      %s367 = scalar_select %p366, %s22, 1
      %s368 = smul.addr %s367, 8
      %s369 = scalar_lea.vmem %s1, %s368
      %p370 = pneg %p69
      %p371 = pneg %p66
      %p372 = pneg %p90
      %p373 = pneg %p87
      %p374 = pneg %p111
      %p375 = pneg %p108
      %p376 = pneg %p132
      %p377 = pneg %p129
      %p378 = pneg %p153
      %p379 = pneg %p150
      %p380 = pneg %p174
      %p381 = pneg %p171
      %p382 = pneg %p195
      %p383 = pneg %p192
      %p384 = pneg %p216
      %p385 = pneg %p213
      %p386 = pneg %p237
      %p387 = pneg %p234
      %p388 = scmp.lt.s32.totalorder %s22, 1
      %s389 = scalar_select %p388, %s22, 1
      %s390 = smul.addr %s389, 8
      %s391 = scalar_lea.vmem %s10, %s390
      %p392 = pneg %p263
      %p393 = pneg %p260
      %p394 = pneg %p289
      %p395 = pneg %p286
      %p396 = scmp.lt.s32.totalorder %s22, 1
      %s397 = scalar_select %p396, %s22, 1
      %s398 = smul.addr %s397, 8
      %s399 = scalar_lea.vmem %s11, %s398
      %p400 = scmp.lt.s32.totalorder %s22, 1
      %s401 = scalar_select %p400, %s22, 1
      %s402 = smul.addr %s401, 8
      %s403 = scalar_lea.vmem %s0, %s402
      %p404 = scmp.lt.s32.totalorder %s22, 1
      %s405 = scalar_select %p404, %s22, 1
      %s406 = smul.addr %s405, 8
      %s407 = scalar_lea.vmem %s1, %s406
      %p408 = scmp.lt.s32.totalorder %s22, 1
      %s409 = scalar_select %p408, %s22, 1
      %s410 = smul.addr %s409, 8
      %s411 = scalar_lea.vmem %s10, %s410
      %p412 = scmp.lt.s32.totalorder %s22, 1
      %s413 = scalar_select %p412, %s22, 1
      %s414 = smul.addr %s413, 8
      %s415 = scalar_lea.vmem %s11, %s414
      %v417 = vld [vmem:[%s403] sm:$0xff]
      %v418 = vld [vmem:[%s407] sm:$0xff]
      %v419 = vld [vmem:[%s2] sm:$0x1]
      %v420 = vld [vmem:[%s3] sm:$0x1]
      %vm421 = vcmask 261120
      %v422 = vsel %vm421, %v417, 0.0
      %423 = vadd.xlane.f32.xlu0 %v422
      %v424 = vpop.xlane.xlu0 %423
      %v425 = vrcp.pop 32.0
      %v426 = vmul.f32 %v424, %v425
      %v427 = vsub.f32 %v417, %v426
      %v428 = vmul.f32 %v427, %v427
      %v429 = vsel %vm421, %v428, 0.0
      %430 = vadd.xlane.f32.xlu0 %v429
      %v431 = vpop.xlane.xlu0 %430
      %v432 = vmul.f32 %v431, 0.032258064
      %v433 = vrsqrt.pop %v432
      %v434 = vmul.f32 %v432, %v433
      %vm435 = vcmp.eq.f32.partialorder %v432, inf
      %v436 = vsel %vm435, %v432, %v434
      %vm437 = vcmp.eq.f32.partialorder %v432, 0.0
      %v438 = vand.u32 %v432, 2147483648
      %v439 = vsel %vm437, %v438, %v436
      %v440 = vadd.f32 %v439, 1e-06
      %v441 = vrcp.pop %v440
      %v442 = vmul.f32 1.0, %v441
      %v444 = vlaneseq
      %v445 = vshrl.u32 %v444, 7
      %v446 = vsub.s32 0, %v445
      %v447 = vrot.slane %v419, %v446
      %v449 = vmul.f32 %v447, %v427
      %v450 = vmul.f32 %v449, %v442
      %v452 = vlaneseq
      %v453 = vshrl.u32 %v452, 7
      %v454 = vsub.s32 0, %v453
      %v455 = vrot.slane %v420, %v454
      %v457 = vadd.f32 %v450, %v455
      %v458 = vpack.c.bf16 %v457, %v457
      %v459 = vld [vmem:[%s4] sm:$0xf]
      %v460 = vld [vmem:[%s4 + $0x4] sm:$0xf]
      %v461 = vld [vmem:[%s4 + $0x8] sm:$0xf]
      %v462 = vld [vmem:[%s4 + $0xc] sm:$0xf]
      %v463 = vld [vmem:[%s5] sm:$0x1]
      %v465 = vlaneseq
      %v466 = vshrl.u32 %v465, 7
      %v467 = vsub.s32 0, %v466
      %v468 = vrot.slane %v463, %v467
      %v474 = vunpack.c.l.b16 %v459
      %v475 = vunpack.c.l.b16 %v460
      %v476 = vunpack.c.l.b16 %v461
      %v477 = vunpack.c.l.b16 %v462
      %v478 = vpack.c.b16 %v475, %v474
      %v479 = vpack.c.b16 %v477, %v476
      %v483 = vsel %vm421, %v458, 0
      %485 = vmatprep.subr.bf16.mxu0 0
      %486 = vmatpush1.bf16.msra.mxu0 0
      %487 = vmatprep.subr.bf16.mxu0 0
      %488 = vmatpush1.bf16.msra.mxu0 0
      %489 = vmatprep.subr.bf16.mxu0 0
      %490 = vmatpush1.bf16.msra.mxu0 0
      %491 = vmatprep.subr.bf16.mxu0 0
      %492 = vmatpush1.bf16.msra.mxu0 0
      %493 = vmatprep.subr.bf16.mxu0 0
      %494 = vmatpush1.bf16.msra.mxu0 0
      %495 = vmatprep.subr.bf16.mxu0 0
      %496 = vmatpush1.bf16.msra.mxu0 0
      %497 = vmatprep.subr.bf16.mxu0 0
      %498 = vmatpush1.bf16.msra.mxu0 %v479
      %499 = vmatprep.subr.bf16.mxu0 0
      %500 = vmatpush1.bf16.msra.mxu0 %v478
      %501 = vmatprep.subr.bf16.mxu0 0
      %502 = vmatpush2.bf16.msra.mxu0 0
      %503 = vmatprep.subr.bf16.mxu0 0
      %504 = vmatpush2.bf16.msra.mxu0 0
      %505 = vmatprep.subr.bf16.mxu0 0
      %506 = vmatpush2.bf16.msra.mxu0 0
      %507 = vmatprep.subr.bf16.mxu0 0
      %508 = vmatpush2.bf16.msra.mxu0 0
      %509 = vmatprep.subr.bf16.mxu0 0
      %510 = vmatpush2.bf16.msra.mxu0 0
      %511 = vmatprep.subr.bf16.mxu0 0
      %512 = vmatpush2.bf16.msra.mxu0 0
      %513 = vmatprep.subr.bf16.mxu0 0
      %514 = vmatpush2.bf16.msra.mxu0 0
      %515 = vmatprep.subr.bf16.mxu0 0
      %516 = vmatpush2.bf16.msra.mxu0 0
      %517 = vmatprep.mubr.bf16.mxu0 0
      %518 = vmatmul.mubr.bf16.gmra.mxu0 %v483
      %v519 = vpop.f32.mrf.mxu0
      %v520 = vadd.f32 %v468, %v519
      %v521 = vpop.f32.mrf.mxu0
      %v522 = vpop.f32.mrf.mxu0
      %v523 = vpop.f32.mrf.mxu0
      %524 = vdwg.mxu0
      %v525 = vmul.f32 %v520, 0.35355338
      %v526 = vpack.c.bf16 %v418, %v418
      %v527 = vld [vmem:[%s6] sm:$0xf]
      %v528 = vld [vmem:[%s6 + $0x4] sm:$0xf]
      %v529 = vld [vmem:[%s6 + $0x8] sm:$0xf]
      %v530 = vld [vmem:[%s6 + $0xc] sm:$0xf]
      %v531 = vld [vmem:[%s7] sm:$0x1]
      %v533 = vlaneseq
      %v534 = vshrl.u32 %v533, 7
      %v535 = vsub.s32 0, %v534
      %v536 = vrot.slane %v531, %v535
      %v542 = vunpack.c.l.b16 %v527
      %v543 = vunpack.c.l.b16 %v528
      %v544 = vunpack.c.l.b16 %v529
      %v545 = vunpack.c.l.b16 %v530
      %v546 = vpack.c.b16 %v543, %v542
      %v547 = vpack.c.b16 %v545, %v544
      %v551 = vsel %vm421, %v526, 0
      %553 = vmatprep.subr.bf16.mxu0 0
      %554 = vmatpush1.bf16.msra.mxu0 0
      %555 = vmatprep.subr.bf16.mxu0 0
      %556 = vmatpush1.bf16.msra.mxu0 0
      %557 = vmatprep.subr.bf16.mxu0 0
      %558 = vmatpush1.bf16.msra.mxu0 0
      %559 = vmatprep.subr.bf16.mxu0 0
      %560 = vmatpush1.bf16.msra.mxu0 0
      %561 = vmatprep.subr.bf16.mxu0 0
      %562 = vmatpush1.bf16.msra.mxu0 0
      %563 = vmatprep.subr.bf16.mxu0 0
      %564 = vmatpush1.bf16.msra.mxu0 0
      %565 = vmatprep.subr.bf16.mxu0 0
      %566 = vmatpush1.bf16.msra.mxu0 %v547
      %567 = vmatprep.subr.bf16.mxu0 0
      %568 = vmatpush1.bf16.msra.mxu0 %v546
      %569 = vmatprep.subr.bf16.mxu0 0
      %570 = vmatpush2.bf16.msra.mxu0 0
      %571 = vmatprep.subr.bf16.mxu0 0
      %572 = vmatpush2.bf16.msra.mxu0 0
      %573 = vmatprep.subr.bf16.mxu0 0
      %574 = vmatpush2.bf16.msra.mxu0 0
      %575 = vmatprep.subr.bf16.mxu0 0
      %576 = vmatpush2.bf16.msra.mxu0 0
      %577 = vmatprep.subr.bf16.mxu0 0
      %578 = vmatpush2.bf16.msra.mxu0 0
      %579 = vmatprep.subr.bf16.mxu0 0
      %580 = vmatpush2.bf16.msra.mxu0 0
      %581 = vmatprep.subr.bf16.mxu0 0
      %582 = vmatpush2.bf16.msra.mxu0 0
      %583 = vmatprep.subr.bf16.mxu0 0
      %584 = vmatpush2.bf16.msra.mxu0 0
      %585 = vmatprep.mubr.bf16.mxu0 0
      %586 = vmatmul.mubr.bf16.gmra.mxu0 %v551
      %v587 = vpop.f32.mrf.mxu0
      %v588 = vadd.f32 %v536, %v587
      %v589 = vpop.f32.mrf.mxu0
      %v590 = vpop.f32.mrf.mxu0
      %v591 = vpop.f32.mrf.mxu0
      %592 = vdwg.mxu0
      %v593 = vld [vmem:[%s411] sm:$0xff]
      %vm594 = vcmp.eq.f32.partialorder %v593, 0.0
      %v595 = vpack.c.bf16 %v525, %v525
      %v596 = vpack.c.bf16 %v588, %v588
      %vm597 = vcmask 64512
      %v599 = vsel %vm597, %v595, 0
      %v602 = vsel %vm597, %v596, 0
      %604 = vmatprep.subr.bf16.mxu0 0
      %605 = vmatpush1.bf16.xpose.msra.mxu0 0
      %606 = vmatprep.subr.bf16.mxu0 0
      %607 = vmatpush1.bf16.xpose.msra.mxu0 0
      %608 = vmatprep.subr.bf16.mxu0 0
      %609 = vmatpush1.bf16.xpose.msra.mxu0 0
      %610 = vmatprep.subr.bf16.mxu0 0
      %611 = vmatpush1.bf16.xpose.msra.mxu0 0
      %612 = vmatprep.subr.bf16.mxu0 0
      %613 = vmatpush1.bf16.xpose.msra.mxu0 0
      %614 = vmatprep.subr.bf16.mxu0 0
      %615 = vmatpush1.bf16.xpose.msra.mxu0 0
      %616 = vmatprep.subr.bf16.mxu0 0
      %617 = vmatpush1.bf16.xpose.msra.mxu0 0
      %618 = vmatprep.subr.bf16.mxu0 0
      %619 = vmatpush1.bf16.xpose.msra.mxu0 %v602
      %620 = vmatprep.subr.bf16.mxu0 0
      %621 = vmatpush2.bf16.xpose.msra.mxu0 0
      %622 = vmatprep.subr.bf16.mxu0 0
      %623 = vmatpush2.bf16.xpose.msra.mxu0 0
      %624 = vmatprep.subr.bf16.mxu0 0
      %625 = vmatpush2.bf16.xpose.msra.mxu0 0
      %626 = vmatprep.subr.bf16.mxu0 0
      %627 = vmatpush2.bf16.xpose.msra.mxu0 0
      %628 = vmatprep.subr.bf16.mxu0 0
      %629 = vmatpush2.bf16.xpose.msra.mxu0 0
      %630 = vmatprep.subr.bf16.mxu0 0
      %631 = vmatpush2.bf16.xpose.msra.mxu0 0
      %632 = vmatprep.subr.bf16.mxu0 0
      %633 = vmatpush2.bf16.xpose.msra.mxu0 0
      %634 = vmatprep.subr.bf16.mxu0 0
      %635 = vmatpush2.bf16.xpose.msra.mxu0 0
      %636 = vmatprep.mubr.bf16.mxu0 0
      %637 = vmatmul.mubr.bf16.gmra.mxu0 %v599
      %v638 = vpop.f32.mrf.mxu0
      %v639 = vadd.f32 0.0, %v638
      %v640 = vpop.f32.mrf.mxu0
      %v641 = vpop.f32.mrf.mxu0
      %v642 = vpop.f32.mrf.mxu0
      %643 = vdwg.mxu0
      %v644 = vsel %vm594, -1e+09, %v639
      %v645 = vsel %vm597, %v644, -inf
      %646 = vmax.xlane.f32.xlu0 %v645
      %v647 = vpop.xlane.xlu0 %646
      %v648 = vsub.f32 %v644, %v647
      %v649 = vmul.f32 %v648, 1.442695
      %v650 = vpow.pop %v649
      %v651 = vsel %vm597, %v650, 0.0
      %652 = vadd.xlane.f32.xlu0 %v651
      %v653 = vpop.xlane.xlu0 %652
      %v654 = vrcp.pop %v653
      %v655 = vmul.f32 %v650, %v654
      %v656 = vpack.c.bf16 %v655, %v655
      %658 = vrot.lane.b32.xlu0 %v596, 96
      %v659 = vpop.permute.xlu0 %658
      %v661 = vsel %vm597, %v656, 0
      %vm663 = vcmask 1043456
      %v665 = vsel %vm663, %v659, 0
      %667 = vmatprep.subr.bf16.mxu0 0
      %668 = vmatpush1.bf16.msra.mxu0 0
      %669 = vmatprep.subr.bf16.mxu0 0
      %670 = vmatpush1.bf16.msra.mxu0 0
      %671 = vmatprep.subr.bf16.mxu0 0
      %672 = vmatpush1.bf16.msra.mxu0 0
      %673 = vmatprep.subr.bf16.mxu0 0
      %674 = vmatpush1.bf16.msra.mxu0 0
      %675 = vmatprep.subr.bf16.mxu0 0
      %676 = vmatpush1.bf16.msra.mxu0 0
      %677 = vmatprep.subr.bf16.mxu0 0
      %678 = vmatpush1.bf16.msra.mxu0 0
      %679 = vmatprep.subr.bf16.mxu0 0
      %680 = vmatpush1.bf16.msra.mxu0 0
      %681 = vmatprep.subr.bf16.mxu0 0
      %682 = vmatpush1.bf16.msra.mxu0 %v665
      %683 = vmatprep.subr.bf16.mxu0 0
      %684 = vmatpush2.bf16.msra.mxu0 0
      %685 = vmatprep.subr.bf16.mxu0 0
      %686 = vmatpush2.bf16.msra.mxu0 0
      %687 = vmatprep.subr.bf16.mxu0 0
      %688 = vmatpush2.bf16.msra.mxu0 0
      %689 = vmatprep.subr.bf16.mxu0 0
      %690 = vmatpush2.bf16.msra.mxu0 0
      %691 = vmatprep.subr.bf16.mxu0 0
      %692 = vmatpush2.bf16.msra.mxu0 0
      %693 = vmatprep.subr.bf16.mxu0 0
      %694 = vmatpush2.bf16.msra.mxu0 0
      %695 = vmatprep.subr.bf16.mxu0 0
      %696 = vmatpush2.bf16.msra.mxu0 0
      %697 = vmatprep.subr.bf16.mxu0 0
      %698 = vmatpush2.bf16.msra.mxu0 0
      %699 = vmatprep.mubr.bf16.mxu0 0
      %700 = vmatmul.mubr.bf16.gmra.mxu0 %v661
      %v701 = vpop.f32.mrf.mxu0
      %v702 = vadd.f32 0.0, %v701
      %v703 = vpop.f32.mrf.mxu0
      %v704 = vpop.f32.mrf.mxu0
      %v705 = vpop.f32.mrf.mxu0
      %706 = vdwg.mxu0
      %707 = vst.msk [vmem:[#allocation2] sm:$0xff] %vm597, %v702
      %709 = vrot.lane.b32.xlu0 %v595, 120
      %v710 = vpop.permute.xlu0 %709
      %711 = vrot.lane.b32.xlu0 %v596, 120
      %v712 = vpop.permute.xlu0 %711
      %v714 = vsel %vm597, %v710, 0
      %v717 = vsel %vm597, %v712, 0
      %719 = vmatprep.subr.bf16.mxu0 0
      %720 = vmatpush1.bf16.xpose.msra.mxu0 0
      %721 = vmatprep.subr.bf16.mxu0 0
      %722 = vmatpush1.bf16.xpose.msra.mxu0 0
      %723 = vmatprep.subr.bf16.mxu0 0
      %724 = vmatpush1.bf16.xpose.msra.mxu0 0
      %725 = vmatprep.subr.bf16.mxu0 0
      %726 = vmatpush1.bf16.xpose.msra.mxu0 0
      %727 = vmatprep.subr.bf16.mxu0 0
      %728 = vmatpush1.bf16.xpose.msra.mxu0 0
      %729 = vmatprep.subr.bf16.mxu0 0
      %730 = vmatpush1.bf16.xpose.msra.mxu0 0
      %731 = vmatprep.subr.bf16.mxu0 0
      %732 = vmatpush1.bf16.xpose.msra.mxu0 0
      %733 = vmatprep.subr.bf16.mxu0 0
      %734 = vmatpush1.bf16.xpose.msra.mxu0 %v717
      %735 = vmatprep.subr.bf16.mxu0 0
      %736 = vmatpush2.bf16.xpose.msra.mxu0 0
      %737 = vmatprep.subr.bf16.mxu0 0
      %738 = vmatpush2.bf16.xpose.msra.mxu0 0
      %739 = vmatprep.subr.bf16.mxu0 0
      %740 = vmatpush2.bf16.xpose.msra.mxu0 0
      %741 = vmatprep.subr.bf16.mxu0 0
      %742 = vmatpush2.bf16.xpose.msra.mxu0 0
      %743 = vmatprep.subr.bf16.mxu0 0
      %744 = vmatpush2.bf16.xpose.msra.mxu0 0
      %745 = vmatprep.subr.bf16.mxu0 0
      %746 = vmatpush2.bf16.xpose.msra.mxu0 0
      %747 = vmatprep.subr.bf16.mxu0 0
      %748 = vmatpush2.bf16.xpose.msra.mxu0 0
      %749 = vmatprep.subr.bf16.mxu0 0
      %750 = vmatpush2.bf16.xpose.msra.mxu0 0
      %751 = vmatprep.mubr.bf16.mxu0 0
      %752 = vmatmul.mubr.bf16.gmra.mxu0 %v714
      %v753 = vpop.f32.mrf.mxu0
      %v754 = vadd.f32 0.0, %v753
      %v755 = vpop.f32.mrf.mxu0
      %v756 = vpop.f32.mrf.mxu0
      %v757 = vpop.f32.mrf.mxu0
      %758 = vdwg.mxu0
      %v759 = vsel %vm594, -1e+09, %v754
      %v760 = vsel %vm597, %v759, -inf
      %761 = vmax.xlane.f32.xlu0 %v760
      %v762 = vpop.xlane.xlu0 %761
      %v763 = vsub.f32 %v759, %v762
      %v764 = vmul.f32 %v763, 1.442695
      %v765 = vpow.pop %v764
      %v766 = vsel %vm597, %v765, 0.0
      %767 = vadd.xlane.f32.xlu0 %v766
      %v768 = vpop.xlane.xlu0 %767
      %v769 = vrcp.pop %v768
      %v770 = vmul.f32 %v765, %v769
      %v771 = vpack.c.bf16 %v770, %v770
      %772 = vrot.lane.b32.xlu0 %v596, 88
      %v773 = vpop.permute.xlu0 %772
      %v775 = vsel %vm597, %v771, 0
      %v778 = vsel %vm663, %v773, 0
      %780 = vmatprep.subr.bf16.mxu0 0
      %781 = vmatpush1.bf16.msra.mxu0 0
      %782 = vmatprep.subr.bf16.mxu0 0
      %783 = vmatpush1.bf16.msra.mxu0 0
      %784 = vmatprep.subr.bf16.mxu0 0
      %785 = vmatpush1.bf16.msra.mxu0 0
      %786 = vmatprep.subr.bf16.mxu0 0
      %787 = vmatpush1.bf16.msra.mxu0 0
      %788 = vmatprep.subr.bf16.mxu0 0
      %789 = vmatpush1.bf16.msra.mxu0 0
      %790 = vmatprep.subr.bf16.mxu0 0
      %791 = vmatpush1.bf16.msra.mxu0 0
      %792 = vmatprep.subr.bf16.mxu0 0
      %793 = vmatpush1.bf16.msra.mxu0 0
      %794 = vmatprep.subr.bf16.mxu0 0
      %795 = vmatpush1.bf16.msra.mxu0 %v778
      %796 = vmatprep.subr.bf16.mxu0 0
      %797 = vmatpush2.bf16.msra.mxu0 0
      %798 = vmatprep.subr.bf16.mxu0 0
      %799 = vmatpush2.bf16.msra.mxu0 0
      %800 = vmatprep.subr.bf16.mxu0 0
      %801 = vmatpush2.bf16.msra.mxu0 0
      %802 = vmatprep.subr.bf16.mxu0 0
      %803 = vmatpush2.bf16.msra.mxu0 0
      %804 = vmatprep.subr.bf16.mxu0 0
      %805 = vmatpush2.bf16.msra.mxu0 0
      %806 = vmatprep.subr.bf16.mxu0 0
      %807 = vmatpush2.bf16.msra.mxu0 0
      %808 = vmatprep.subr.bf16.mxu0 0
      %809 = vmatpush2.bf16.msra.mxu0 0
      %810 = vmatprep.subr.bf16.mxu0 0
      %811 = vmatpush2.bf16.msra.mxu0 0
      %812 = vmatprep.mubr.bf16.mxu0 0
      %813 = vmatmul.mubr.bf16.gmra.mxu0 %v775
      %v814 = vpop.f32.mrf.mxu0
      %v815 = vadd.f32 0.0, %v814
      %v816 = vpop.f32.mrf.mxu0
      %v817 = vpop.f32.mrf.mxu0
      %v818 = vpop.f32.mrf.mxu0
      %819 = vdwg.mxu0
      %821 = vrot.lane.b32.xlu0 %v815, 8
      %v822 = vpop.permute.xlu0 %821
      %vm824 = vcmask 130112
      %825 = vst.msk [vmem:[#allocation2] sm:$0xff] %vm824, %v822
      %826 = vrot.lane.b32.xlu0 %v595, 112
      %v827 = vpop.permute.xlu0 %826
      %828 = vrot.lane.b32.xlu0 %v596, 112
      %v829 = vpop.permute.xlu0 %828
      %v831 = vsel %vm597, %v827, 0
      %v834 = vsel %vm597, %v829, 0
      %836 = vmatprep.subr.bf16.mxu0 0
      %837 = vmatpush1.bf16.xpose.msra.mxu0 0
      %838 = vmatprep.subr.bf16.mxu0 0
      %839 = vmatpush1.bf16.xpose.msra.mxu0 0
      %840 = vmatprep.subr.bf16.mxu0 0
      %841 = vmatpush1.bf16.xpose.msra.mxu0 0
      %842 = vmatprep.subr.bf16.mxu0 0
      %843 = vmatpush1.bf16.xpose.msra.mxu0 0
      %844 = vmatprep.subr.bf16.mxu0 0
      %845 = vmatpush1.bf16.xpose.msra.mxu0 0
      %846 = vmatprep.subr.bf16.mxu0 0
      %847 = vmatpush1.bf16.xpose.msra.mxu0 0
      %848 = vmatprep.subr.bf16.mxu0 0
      %849 = vmatpush1.bf16.xpose.msra.mxu0 0
      %850 = vmatprep.subr.bf16.mxu0 0
      %851 = vmatpush1.bf16.xpose.msra.mxu0 %v834
      %852 = vmatprep.subr.bf16.mxu0 0
      %853 = vmatpush2.bf16.xpose.msra.mxu0 0
      %854 = vmatprep.subr.bf16.mxu0 0
      %855 = vmatpush2.bf16.xpose.msra.mxu0 0
      %856 = vmatprep.subr.bf16.mxu0 0
      %857 = vmatpush2.bf16.xpose.msra.mxu0 0
      %858 = vmatprep.subr.bf16.mxu0 0
      %859 = vmatpush2.bf16.xpose.msra.mxu0 0
      %860 = vmatprep.subr.bf16.mxu0 0
      %861 = vmatpush2.bf16.xpose.msra.mxu0 0
      %862 = vmatprep.subr.bf16.mxu0 0
      %863 = vmatpush2.bf16.xpose.msra.mxu0 0
      %864 = vmatprep.subr.bf16.mxu0 0
      %865 = vmatpush2.bf16.xpose.msra.mxu0 0
      %866 = vmatprep.subr.bf16.mxu0 0
      %867 = vmatpush2.bf16.xpose.msra.mxu0 0
      %868 = vmatprep.mubr.bf16.mxu0 0
      %869 = vmatmul.mubr.bf16.gmra.mxu0 %v831
      %v870 = vpop.f32.mrf.mxu0
      %v871 = vadd.f32 0.0, %v870
      %v872 = vpop.f32.mrf.mxu0
      %v873 = vpop.f32.mrf.mxu0
      %v874 = vpop.f32.mrf.mxu0
      %875 = vdwg.mxu0
      %v876 = vsel %vm594, -1e+09, %v871
      %v877 = vsel %vm597, %v876, -inf
      %878 = vmax.xlane.f32.xlu0 %v877
      %v879 = vpop.xlane.xlu0 %878
      %v880 = vsub.f32 %v876, %v879
      %v881 = vmul.f32 %v880, 1.442695
      %v882 = vpow.pop %v881
      %v883 = vsel %vm597, %v882, 0.0
      %884 = vadd.xlane.f32.xlu0 %v883
      %v885 = vpop.xlane.xlu0 %884
      %v886 = vrcp.pop %v885
      %v887 = vmul.f32 %v882, %v886
      %v888 = vpack.c.bf16 %v887, %v887
      %889 = vrot.lane.b32.xlu0 %v596, 80
      %v890 = vpop.permute.xlu0 %889
      %v892 = vsel %vm597, %v888, 0
      %v895 = vsel %vm663, %v890, 0
      %897 = vmatprep.subr.bf16.mxu0 0
      %898 = vmatpush1.bf16.msra.mxu0 0
      %899 = vmatprep.subr.bf16.mxu0 0
      %900 = vmatpush1.bf16.msra.mxu0 0
      %901 = vmatprep.subr.bf16.mxu0 0
      %902 = vmatpush1.bf16.msra.mxu0 0
      %903 = vmatprep.subr.bf16.mxu0 0
      %904 = vmatpush1.bf16.msra.mxu0 0
      %905 = vmatprep.subr.bf16.mxu0 0
      %906 = vmatpush1.bf16.msra.mxu0 0
      %907 = vmatprep.subr.bf16.mxu0 0
      %908 = vmatpush1.bf16.msra.mxu0 0
      %909 = vmatprep.subr.bf16.mxu0 0
      %910 = vmatpush1.bf16.msra.mxu0 0
      %911 = vmatprep.subr.bf16.mxu0 0
      %912 = vmatpush1.bf16.msra.mxu0 %v895
      %913 = vmatprep.subr.bf16.mxu0 0
      %914 = vmatpush2.bf16.msra.mxu0 0
      %915 = vmatprep.subr.bf16.mxu0 0
      %916 = vmatpush2.bf16.msra.mxu0 0
      %917 = vmatprep.subr.bf16.mxu0 0
      %918 = vmatpush2.bf16.msra.mxu0 0
      %919 = vmatprep.subr.bf16.mxu0 0
      %920 = vmatpush2.bf16.msra.mxu0 0
      %921 = vmatprep.subr.bf16.mxu0 0
      %922 = vmatpush2.bf16.msra.mxu0 0
      %923 = vmatprep.subr.bf16.mxu0 0
      %924 = vmatpush2.bf16.msra.mxu0 0
      %925 = vmatprep.subr.bf16.mxu0 0
      %926 = vmatpush2.bf16.msra.mxu0 0
      %927 = vmatprep.subr.bf16.mxu0 0
      %928 = vmatpush2.bf16.msra.mxu0 0
      %929 = vmatprep.mubr.bf16.mxu0 0
      %930 = vmatmul.mubr.bf16.gmra.mxu0 %v892
      %v931 = vpop.f32.mrf.mxu0
      %v932 = vadd.f32 0.0, %v931
      %v933 = vpop.f32.mrf.mxu0
      %v934 = vpop.f32.mrf.mxu0
      %v935 = vpop.f32.mrf.mxu0
      %936 = vdwg.mxu0
      %938 = vrot.lane.b32.xlu0 %v932, 16
      %v939 = vpop.permute.xlu0 %938
      %vm941 = vcmask 195712
      %942 = vst.msk [vmem:[#allocation2] sm:$0xff] %vm941, %v939
      %943 = vrot.lane.b32.xlu0 %v595, 104
      %v944 = vpop.permute.xlu0 %943
      %945 = vrot.lane.b32.xlu0 %v596, 104
      %v946 = vpop.permute.xlu0 %945
      %v948 = vsel %vm597, %v944, 0
      %v951 = vsel %vm597, %v946, 0
      %953 = vmatprep.subr.bf16.mxu0 0
      %954 = vmatpush1.bf16.xpose.msra.mxu0 0
      %955 = vmatprep.subr.bf16.mxu0 0
      %956 = vmatpush1.bf16.xpose.msra.mxu0 0
      %957 = vmatprep.subr.bf16.mxu0 0
      %958 = vmatpush1.bf16.xpose.msra.mxu0 0
      %959 = vmatprep.subr.bf16.mxu0 0
      %960 = vmatpush1.bf16.xpose.msra.mxu0 0
      %961 = vmatprep.subr.bf16.mxu0 0
      %962 = vmatpush1.bf16.xpose.msra.mxu0 0
      %963 = vmatprep.subr.bf16.mxu0 0
      %964 = vmatpush1.bf16.xpose.msra.mxu0 0
      %965 = vmatprep.subr.bf16.mxu0 0
      %966 = vmatpush1.bf16.xpose.msra.mxu0 0
      %967 = vmatprep.subr.bf16.mxu0 0
      %968 = vmatpush1.bf16.xpose.msra.mxu0 %v951
      %969 = vmatprep.subr.bf16.mxu0 0
      %970 = vmatpush2.bf16.xpose.msra.mxu0 0
      %971 = vmatprep.subr.bf16.mxu0 0
      %972 = vmatpush2.bf16.xpose.msra.mxu0 0
      %973 = vmatprep.subr.bf16.mxu0 0
      %974 = vmatpush2.bf16.xpose.msra.mxu0 0
      %975 = vmatprep.subr.bf16.mxu0 0
      %976 = vmatpush2.bf16.xpose.msra.mxu0 0
      %977 = vmatprep.subr.bf16.mxu0 0
      %978 = vmatpush2.bf16.xpose.msra.mxu0 0
      %979 = vmatprep.subr.bf16.mxu0 0
      %980 = vmatpush2.bf16.xpose.msra.mxu0 0
      %981 = vmatprep.subr.bf16.mxu0 0
      %982 = vmatpush2.bf16.xpose.msra.mxu0 0
      %983 = vmatprep.subr.bf16.mxu0 0
      %984 = vmatpush2.bf16.xpose.msra.mxu0 0
      %985 = vmatprep.mubr.bf16.mxu0 0
      %986 = vmatmul.mubr.bf16.gmra.mxu0 %v948
      %v987 = vpop.f32.mrf.mxu0
      %v988 = vadd.f32 0.0, %v987
      %v989 = vpop.f32.mrf.mxu0
      %v990 = vpop.f32.mrf.mxu0
      %v991 = vpop.f32.mrf.mxu0
      %992 = vdwg.mxu0
      %v993 = vsel %vm594, -1e+09, %v988
      %v994 = vsel %vm597, %v993, -inf
      %995 = vmax.xlane.f32.xlu0 %v994
      %v996 = vpop.xlane.xlu0 %995
      %v997 = vsub.f32 %v993, %v996
      %v998 = vmul.f32 %v997, 1.442695
      %v999 = vpow.pop %v998
      %v1000 = vsel %vm597, %v999, 0.0
      %1001 = vadd.xlane.f32.xlu0 %v1000
      %v1002 = vpop.xlane.xlu0 %1001
      %v1003 = vrcp.pop %v1002
      %v1004 = vmul.f32 %v999, %v1003
      %v1005 = vpack.c.bf16 %v1004, %v1004
      %1006 = vrot.lane.b32.xlu0 %v596, 72
      %v1007 = vpop.permute.xlu0 %1006
      %v1009 = vsel %vm597, %v1005, 0
      %v1012 = vsel %vm663, %v1007, 0
      %1014 = vmatprep.subr.bf16.mxu0 0
      %1015 = vmatpush1.bf16.msra.mxu0 0
      %1016 = vmatprep.subr.bf16.mxu0 0
      %1017 = vmatpush1.bf16.msra.mxu0 0
      %1018 = vmatprep.subr.bf16.mxu0 0
      %1019 = vmatpush1.bf16.msra.mxu0 0
      %1020 = vmatprep.subr.bf16.mxu0 0
      %1021 = vmatpush1.bf16.msra.mxu0 0
      %1022 = vmatprep.subr.bf16.mxu0 0
      %1023 = vmatpush1.bf16.msra.mxu0 0
      %1024 = vmatprep.subr.bf16.mxu0 0
      %1025 = vmatpush1.bf16.msra.mxu0 0
      %1026 = vmatprep.subr.bf16.mxu0 0
      %1027 = vmatpush1.bf16.msra.mxu0 0
      %1028 = vmatprep.subr.bf16.mxu0 0
      %1029 = vmatpush1.bf16.msra.mxu0 %v1012
      %1030 = vmatprep.subr.bf16.mxu0 0
      %1031 = vmatpush2.bf16.msra.mxu0 0
      %1032 = vmatprep.subr.bf16.mxu0 0
      %1033 = vmatpush2.bf16.msra.mxu0 0
      %1034 = vmatprep.subr.bf16.mxu0 0
      %1035 = vmatpush2.bf16.msra.mxu0 0
      %1036 = vmatprep.subr.bf16.mxu0 0
      %1037 = vmatpush2.bf16.msra.mxu0 0
      %1038 = vmatprep.subr.bf16.mxu0 0
      %1039 = vmatpush2.bf16.msra.mxu0 0
      %1040 = vmatprep.subr.bf16.mxu0 0
      %1041 = vmatpush2.bf16.msra.mxu0 0
      %1042 = vmatprep.subr.bf16.mxu0 0
      %1043 = vmatpush2.bf16.msra.mxu0 0
      %1044 = vmatprep.subr.bf16.mxu0 0
      %1045 = vmatpush2.bf16.msra.mxu0 0
      %1046 = vmatprep.mubr.bf16.mxu0 0
      %1047 = vmatmul.mubr.bf16.gmra.mxu0 %v1009
      %v1048 = vpop.f32.mrf.mxu0
      %v1049 = vadd.f32 0.0, %v1048
      %v1050 = vpop.f32.mrf.mxu0
      %v1051 = vpop.f32.mrf.mxu0
      %v1052 = vpop.f32.mrf.mxu0
      %1053 = vdwg.mxu0
      %1055 = vrot.lane.b32.xlu0 %v1049, 24
      %v1056 = vpop.permute.xlu0 %1055
      %vm1058 = vcmask 261312
      %1059 = vst.msk [vmem:[#allocation2] sm:$0xff] %vm1058, %v1056
      %v1060 = vld [vmem:[#allocation2] sm:$0xff]
      %v1061 = vpack.c.bf16 %v1060, %v1060
      %v1062 = vld [vmem:[%s8] sm:$0xf]
      %v1063 = vld [vmem:[%s8 + $0x4] sm:$0xf]
      %v1064 = vld [vmem:[%s8 + $0x8] sm:$0xf]
      %v1065 = vld [vmem:[%s8 + $0xc] sm:$0xf]
      %v1070 = vunpack.c.l.b16 %v1062
      %v1071 = vunpack.c.l.b16 %v1063
      %v1072 = vunpack.c.l.b16 %v1064
      %v1073 = vunpack.c.l.b16 %v1065
      %v1074 = vpack.c.b16 %v1071, %v1070
      %v1075 = vpack.c.b16 %v1073, %v1072
      %v1079 = vsel %vm421, %v1061, 0
      %1081 = vmatprep.subr.bf16.mxu0 0
      %1082 = vmatpush1.bf16.msra.mxu0 0
      %1083 = vmatprep.subr.bf16.mxu0 0
      %1084 = vmatpush1.bf16.msra.mxu0 0
      %1085 = vmatprep.subr.bf16.mxu0 0
      %1086 = vmatpush1.bf16.msra.mxu0 0
      %1087 = vmatprep.subr.bf16.mxu0 0
      %1088 = vmatpush1.bf16.msra.mxu0 0
      %1089 = vmatprep.subr.bf16.mxu0 0
      %1090 = vmatpush1.bf16.msra.mxu0 0
      %1091 = vmatprep.subr.bf16.mxu0 0
      %1092 = vmatpush1.bf16.msra.mxu0 0
      %1093 = vmatprep.subr.bf16.mxu0 0
      %1094 = vmatpush1.bf16.msra.mxu0 %v1075
      %1095 = vmatprep.subr.bf16.mxu0 0
      %1096 = vmatpush1.bf16.msra.mxu0 %v1074
      %1097 = vmatprep.subr.bf16.mxu0 0
      %1098 = vmatpush2.bf16.msra.mxu0 0
      %1099 = vmatprep.subr.bf16.mxu0 0
      %1100 = vmatpush2.bf16.msra.mxu0 0
      %1101 = vmatprep.subr.bf16.mxu0 0
      %1102 = vmatpush2.bf16.msra.mxu0 0
      %1103 = vmatprep.subr.bf16.mxu0 0
      %1104 = vmatpush2.bf16.msra.mxu0 0
      %1105 = vmatprep.subr.bf16.mxu0 0
      %1106 = vmatpush2.bf16.msra.mxu0 0
      %1107 = vmatprep.subr.bf16.mxu0 0
      %1108 = vmatpush2.bf16.msra.mxu0 0
      %1109 = vmatprep.subr.bf16.mxu0 0
      %1110 = vmatpush2.bf16.msra.mxu0 0
      %1111 = vmatprep.subr.bf16.mxu0 0
      %1112 = vmatpush2.bf16.msra.mxu0 0
      %1113 = vmatprep.mubr.bf16.mxu0 0
      %1114 = vmatmul.mubr.bf16.gmra.mxu0 %v1079
      %v1115 = vpop.f32.mrf.mxu0
      %v1116 = vadd.f32 0.0, %v1115
      %v1117 = vpop.f32.mrf.mxu0
      %v1118 = vpop.f32.mrf.mxu0
      %v1119 = vpop.f32.mrf.mxu0
      %1120 = vdwg.mxu0
      %v1121 = vadd.f32 %v417, %v1116
      %v1122 = vld [vmem:[%s9] sm:$0x1]
      %v1124 = vlaneseq
      %v1125 = vshrl.u32 %v1124, 7
      %v1126 = vsub.s32 0, %v1125
      %v1127 = vrot.slane %v1122, %v1126
      %v1129 = vadd.f32 %v1121, %v1127
      %1130 = vst.msk [vmem:[%s415] sm:$0xff] %vm421, %v1129
      %p1131 = scmp.lt.s32.totalorder %s22, 1
      %s1132 = scalar_select %p1131, %s22, 1
      %s1133 = smul.addr %s1132, 8
      %s1134 = scalar_lea.vmem %s11, %s1133
      // Predicated region
      $region65: #{decoder_forward.11} parent=63 // pred_check
        %p1135 = pneg %p286
      $region66: #{decoder_forward.11} parent=63 // pred_check_branch
        %1137 = sbr.rel (%p1135) target = $region68
      $region67: #{decoder_forward.11} parent=63 // pred_region
        _
      $region68: #{decoder_forward.11} parent=63 // pred_fallthru
        _
    $region64: #{decoder_forward.11} parent=5 // pred_fallthru
      _
    %p1138 = scmp.le.s32.totalorder 2, %s17
    // Predicated region
    $region69: #{decoder_forward.11} parent=5 // pred_check
      %p1139 = pneg %p1138
    $region70: #{decoder_forward.11} parent=5 // pred_check_branch
      %1141 = sbr.rel (%p1139) target = $region72
    $region71: #{decoder_forward.11} parent=5 // pred_region
      %s1142 = ssub.s32 %s17, 2
      // Predicated region
      $region73: #{decoder_forward.11} parent=71 // pred_check
        %p1143 = pneg %p292
      $region74: #{decoder_forward.11} parent=71 // pred_check_branch
        %1145 = sbr.rel (%p1143) target = $region76
      $region75: #{decoder_forward.11} parent=71 // pred_region
        %p1146 = scmp.lt.s32.totalorder %s23, 1
        %s1147 = scalar_select %p1146, %s23, 1
        %s1148 = smul.addr %s1147, 8
        %s1149 = scalar_lea.vmem %s11, %s1148
      $region76: #{decoder_forward.11} parent=71 // pred_fallthru
        _
    $region72: #{decoder_forward.11} parent=5 // pred_fallthru
      _
  $region6: #{decoder_forward.11} parent=0 // loop_footer
    %s21 = sadd.s32 1, %s17
  $region7: #{decoder_forward.11} parent=0 // loop_footer_branch
    %16 = sbr.rel target = $region3
  $region8: #{decoder_forward.11} parent=0 // loop_exit
    _

</llo_original>
